<compile_context>
chip_gen: v7x
topology: tpu7x:2x2x1
jax: 0.10.0
libtpu: 0.0.40
codegen_flags: <defaults>
</compile_context>

<pallas_src>
import jax
import jax.numpy as jnp
from jax.experimental import pallas as pl
from jax.experimental.pallas import tpu as pltpu


_VMEM_LIMIT = 32 * 1024 * 1024  # comfortably below v7x's 64 MiB physical VMEM


# ---------------------------------------------------------------------------
# Pallas kernels
# ---------------------------------------------------------------------------
def _conv_relu_pool_kernel(x_ref, m_ref, b_ref, o_ref):
    """Fused 3x3 SAME conv + bias + ReLU + 2x2/2 maxpool for one image.

    x_ref: (1, 2, Ho+1, Wp*Cin) f32   -- [even | odd] rows of the zero-padded image
    m_ref: (3, 2, Wp*Cin, Wo*Cout) bf16 -- banded conv matrices [tap dh, col parity]
    b_ref: (1, Wo*Cout) f32            -- bias tiled over pooled columns
    o_ref: (1, Ho, Wo*Cout) f32        -- pooled output (NHWC flattened on (W,C))
    """
    ho = o_ref.shape[1]
    n_out = o_ref.shape[2]

    xe = x_ref[0, 0].astype(jnp.bfloat16)   # (Ho+1, Wp*Cin)  even padded rows
    xo = x_ref[0, 1].astype(jnp.bfloat16)   # (Ho+1, Wp*Cin)  odd  padded rows
    e0, e1 = xe[:ho], xe[1:]
    o0, o1 = xo[:ho], xo[1:]

    # LHS row-slabs per (output-row parity, tap dh):
    #   even conv rows 2i   use padded rows 2i, 2i+1, 2i+2 -> e0, o0, e1
    #   odd  conv rows 2i+1 use padded rows 2i+1, 2i+2, 2i+3 -> o0, e1, o1
    lhs = ((e0, o0, e1), (o0, e1, o1))

    pooled = None
    for rp in range(2):          # output-row parity
        for cp in range(2):      # output-column parity
            acc = jnp.zeros((ho, n_out), jnp.float32)
            for dh in range(3):  # vertical tap
                acc += jnp.dot(lhs[rp][dh], m_ref[dh, cp],
                               preferred_element_type=jnp.float32)
            pooled = acc if pooled is None else jnp.maximum(pooled, acc)

    # max-pool commutes with the per-channel bias and ReLU.
    o_ref[0] = jnp.maximum(pooled + b_ref[...], 0.0).astype(o_ref.dtype)


def _mlp_head_kernel(x_ref, w1_ref, b1_ref, w2_ref, b2_ref, o_ref):
    # x: (TM, K) f32; w1: (K, 128) bf16; w2: (128, 128) bf16 (fc2 padded 10->128).
    x = x_ref[...].astype(jnp.bfloat16)
    h = jnp.dot(x, w1_ref[...], preferred_element_type=jnp.float32) + b1_ref[...]
    h = jnp.maximum(h, 0.0).astype(jnp.bfloat16)
    y = jnp.dot(h, w2_ref[...], preferred_element_type=jnp.float32) + b2_ref[...]
    o_ref[...] = y.astype(o_ref.dtype)


# ---------------------------------------------------------------------------
# Wrappers around pallas_call
# ---------------------------------------------------------------------------
def conv_relu_pool(x_nhwc, m, b_tiled):
    """x_nhwc: (B, H, W, Cin); returns (B, H//2, (W//2)*Cout) f32 (NHWC-flattened)."""
    B, H, W, Cin = x_nhwc.shape
    assert H % 2 == 0 and W % 2 == 0
    Hp, Wp = H + 2, W + 2
    Ho = H // 2
    WpC = Wp * Cin
    WoCout = m.shape[-1]

    # Cheap XLA prep (single pass over a small tensor): zero-pad, flatten (W,Cin)
    # onto lanes, split even/odd rows so the kernel never needs strided access.
    xp = jnp.pad(x_nhwc, ((0, 0), (1, 1), (1, 1), (0, 0))).reshape(B, Hp, WpC)
    x_eo = jnp.stack([xp[:, 0::2, :], xp[:, 1::2, :]], axis=1)  # (B, 2, Ho+1, WpC)

    flops = int(2 * B * 12 * Ho * WpC * WoCout)
    bytes_accessed = int(x_eo.size * 4 + m.size * 2 + b_tiled.size * 4
                         + B * Ho * WoCout * 4)

    return pl.pallas_call(
        _conv_relu_pool_kernel,
        out_shape=jax.ShapeDtypeStruct((B, Ho, WoCout), jnp.float32),
        grid=(B,),
        in_specs=[
            pl.BlockSpec((1, 2, Ho + 1, WpC), lambda i: (i, 0, 0, 0)),
            pl.BlockSpec((3, 2, WpC, WoCout), lambda i: (0, 0, 0, 0)),  # resident
            pl.BlockSpec((1, WoCout), lambda i: (0, 0)),                # resident
        ],
        out_specs=pl.BlockSpec((1, Ho, WoCout), lambda i: (i, 0, 0)),
        compiler_params=pltpu.CompilerParams(
            dimension_semantics=("parallel",),
            vmem_limit_bytes=_VMEM_LIMIT),
        cost_estimate=pl.CostEstimate(flops=flops, transcendentals=0,
                                      bytes_accessed=bytes_accessed),
    )(x_eo, m, b_tiled)


def mlp_head(x, w1, b1, w2p, b2p):
    """relu(x @ w1 + b1) @ w2p + b2p, gridded over M with resident weights."""
    M, K = x.shape
    N1 = w1.shape[1]
    N2 = w2p.shape[1]

    TM = 256 if M >= 256 else max(8, ((M + 7) // 8) * 8)
    Mpad = ((M + TM - 1) // TM) * TM
    if Mpad != M:
        x = jnp.pad(x, ((0, Mpad - M), (0, 0)))

    flops = int(2 * Mpad * (K * N1 + N1 * N2))
    bytes_accessed = int(Mpad * K * 4 + w1.size * 2 + w2p.size * 2
                         + (b1.size + b2p.size) * 4 + Mpad * N2 * 4)

    out = pl.pallas_call(
        _mlp_head_kernel,
        out_shape=jax.ShapeDtypeStruct((Mpad, N2), jnp.float32),
        grid=(Mpad // TM,),
        in_specs=[
            pl.BlockSpec((TM, K), lambda i: (i, 0)),
            pl.BlockSpec((K, N1), lambda i: (0, 0)),   # resident fc1 weight
            pl.BlockSpec((1, N1), lambda i: (0, 0)),
            pl.BlockSpec((N1, N2), lambda i: (0, 0)),  # resident fc2 weight (padded)
            pl.BlockSpec((1, N2), lambda i: (0, 0)),
        ],
        out_specs=pl.BlockSpec((TM, N2), lambda i: (i, 0)),
        compiler_params=pltpu.CompilerParams(
            dimension_semantics=("parallel",),
            vmem_limit_bytes=_VMEM_LIMIT),
        cost_estimate=pl.CostEstimate(flops=flops, transcendentals=0,
                                      bytes_accessed=bytes_accessed),
    )(x, w1, b1, w2p, b2p)
    return out[:M]


# ---------------------------------------------------------------------------
# Parameter construction (one-time weight preprocessing)
# ---------------------------------------------------------------------------
def init_params(key):
    """Raw parameters. Conv weights are HWIO; fc1_w rows are in NHWC-flatten
    order (h, w, c).  To load PyTorch weights: conv w = W_t.transpose(2,3,1,0);
    fc1_w = W_t.reshape(128,64,7,7).transpose(2,3,1,0).reshape(3136,128)."""
    ks = jax.random.split(key, 8)

    def normal(k, shape, scale):
        return scale * jax.random.normal(k, shape, dtype=jnp.float32)

    return {
        "conv1_w": normal(ks[0], (3, 3, 1, 32), 0.10),
        "conv1_b": normal(ks[1], (32,), 0.10),
        "conv2_w": normal(ks[2], (3, 3, 32, 64), 0.05),
        "conv2_b": normal(ks[3], (64,), 0.05),
        "fc1_w":   normal(ks[4], (7 * 7 * 64, 128), 0.02),
        "fc1_b":   normal(ks[5], (128,), 0.02),
        "fc2_w":   normal(ks[6], (128, 10), 0.05),
        "fc2_b":   normal(ks[7], (10,), 0.05),
    }


def _banded_conv_mats(w, H):
    """Build (3, 2, (H+2)*Cin, (H//2)*Cout) bf16 banded matrices for the fused
    conv+pool kernel.  Index [dh, col-parity]; column group j of parity p maps
    to conv output column w = 2j + p."""
    Cin, Cout = int(w.shape[2]), int(w.shape[3])
    Wp, Wd = H + 2, H
    mats = []
    for dh in range(3):
        base = w[dh].reshape(3 * Cin, Cout)                        # rows = (dw, ci)
        base = jnp.pad(base, ((0, (Wp - 3) * Cin), (0, 0)))        # (Wp*Cin, Cout)
        cols = [jnp.roll(base, wi * Cin, axis=0) for wi in range(Wd)]
        even = jnp.concatenate(cols[0::2], axis=1)                 # (Wp*Cin, Wo*Cout)
        odd = jnp.concatenate(cols[1::2], axis=1)
        mats.append(jnp.stack([even, odd], axis=0))
    return jnp.stack(mats, axis=0).astype(jnp.bfloat16)


def prepare_params(raw):
    """One-time conversion of raw params into kernel-friendly layout."""
    def tiled_bias(b, Wo):
        return jnp.tile(b, (Wo,)).reshape(1, -1).astype(jnp.float32)

    w2p = jnp.zeros((128, 128), jnp.float32).at[:, :10].set(raw["fc2_w"])
    b2p = jnp.zeros((1, 128), jnp.float32).at[0, :10].set(raw["fc2_b"])
    return {
        "conv1_m": _banded_conv_mats(raw["conv1_w"], 28),
        "conv1_b": tiled_bias(raw["conv1_b"], 14),
        "conv2_m": _banded_conv_mats(raw["conv2_w"], 14),
        "conv2_b": tiled_bias(raw["conv2_b"], 7),
        "fc1_w": raw["fc1_w"].astype(jnp.bfloat16),
        "fc1_b": raw["fc1_b"].reshape(1, 128).astype(jnp.float32),
        "fc2_w": w2p.astype(jnp.bfloat16),
        "fc2_b": b2p,
    }


# ---------------------------------------------------------------------------
# Forward passes
# ---------------------------------------------------------------------------
def digit_classifier_forward(kp, x_nchw):
    # x_nchw: (B, 1, 28, 28)
    x = jnp.transpose(x_nchw, (0, 2, 3, 1))                       # NHWC (B,28,28,1)
    B = x.shape[0]
    y1 = conv_relu_pool(x, kp["conv1_m"], kp["conv1_b"])          # (B,14,14*32)
    y1 = y1.reshape(B, 14, 14, 32)
    y2 = conv_relu_pool(y1, kp["conv2_m"], kp["conv2_b"])         # (B,7,7*64)
    feats = y2.reshape(B, 7 * 7 * 64)   # NHWC flatten; NCHW permutation folded into fc1_w
    logits = mlp_head(feats, kp["fc1_w"], kp["fc1_b"], kp["fc2_w"], kp["fc2_b"])
    return logits[:, :10]


def reference_forward(raw, x_nchw):
    """Pure-JAX f32 reference (sanity check for the Pallas path)."""
    x = jnp.transpose(x_nchw, (0, 2, 3, 1))

    def conv(x, w, b):
        y = jax.lax.conv_general_dilated(
            x, w, window_strides=(1, 1), padding="SAME",
            dimension_numbers=("NHWC", "HWIO", "NHWC"))
        return jax.nn.relu(y + b)

    def pool(x):
        return jax.lax.reduce_window(x, -jnp.inf, jax.lax.max,
                                     (1, 2, 2, 1), (1, 2, 2, 1), "VALID")

    x = pool(conv(x, raw["conv1_w"], raw["conv1_b"]))
    x = pool(conv(x, raw["conv2_w"], raw["conv2_b"]))
    B = x.shape[0]
    feats = x.reshape(B, 7 * 7 * 64)                  # NHWC flatten (matches fc1_w layout)
    h = jax.nn.relu(feats @ raw["fc1_w"] + raw["fc1_b"])
    return h @ raw["fc2_w"] + raw["fc2_b"]


if __name__ == "__main__":
    key = jax.random.PRNGKey(0)
    pkey, xkey = jax.random.split(key)
    raw = init_params(pkey)
    kp = prepare_params(raw)

    # MNIST-style input implied by the module (Linear expects 64*7*7).
    x = jax.random.normal(xkey, (2, 1, 28, 28), dtype=jnp.float32)

    fwd = jax.jit(digit_classifier_forward)
    out = jax.block_until_ready(fwd(kp, x))
    assert out.shape == (2, 10), out.shape

    ref = reference_forward(raw, x)
    max_err = float(jnp.max(jnp.abs(out - ref)))
    assert jnp.allclose(out, ref, atol=2e-2, rtol=2e-2), max_err

    print("KERNEL_OK")
</pallas_src>

<mosaic_0001>
module attributes {stable_mosaic.version = 11 : i64} {
  func.func @_conv_relu_pool_kernel(%arg0: i32, %arg1: memref<1x2x15x30xf32, #tpu.memory_space<vmem>>, %arg2: memref<3x2x30x448xbf16, #tpu.memory_space<vmem>>, %arg3: memref<1x448xf32, #tpu.memory_space<vmem>>, %arg4: memref<1x14x448xf32, #tpu.memory_space<vmem>>) attributes {dimension_semantics = [#tpu.dimension_semantics<parallel>], iteration_bounds = array<i64: 2>, scalar_prefetch = 0 : i64, scratch_operands = 0 : i64, tpu.core_type = #tpu.core_type<tc>, window_params = [{transform_indices = @transform_0, window_bounds = array<i64: 1, 2, 15, 30>}, {pipeline_mode = #tpu.pipeline_mode<synchronous>, transform_indices = @transform_1, window_bounds = array<i64: 3, 2, 30, 448>}, {pipeline_mode = #tpu.pipeline_mode<synchronous>, transform_indices = @transform_2, window_bounds = array<i64: 1, 448>}, {transform_indices = @transform_3, window_bounds = array<i64: 1, 14, 448>}]} {
    %c0 = arith.constant 0 : index
    %c0_0 = arith.constant 0 : index
    %c0_1 = arith.constant 0 : index
    %c0_2 = arith.constant 0 : index
    %0 = vector.load %arg1[%c0, %c0_0, %c0_1, %c0_2] : memref<1x2x15x30xf32, #tpu.memory_space<vmem>>, vector<1x1x15x30xf32>
    %1 = vector.shape_cast %0 : vector<1x1x15x30xf32> to vector<15x30xf32>
    %2 = arith.truncf %1 : vector<15x30xf32> to vector<15x30xbf16>
    %c0_3 = arith.constant 0 : index
    %c1 = arith.constant 1 : index
    %c0_4 = arith.constant 0 : index
    %c0_5 = arith.constant 0 : index
    %3 = vector.load %arg1[%c0_3, %c1, %c0_4, %c0_5] : memref<1x2x15x30xf32, #tpu.memory_space<vmem>>, vector<1x1x15x30xf32>
    %4 = vector.shape_cast %3 : vector<1x1x15x30xf32> to vector<15x30xf32>
    %5 = arith.truncf %4 : vector<15x30xf32> to vector<15x30xbf16>
    %6 = vector.extract_strided_slice %2 {offsets = [0, 0], sizes = [14, 30], strides = [1, 1]} : vector<15x30xbf16> to vector<14x30xbf16>
    %7 = vector.extract_strided_slice %2 {offsets = [1, 0], sizes = [14, 30], strides = [1, 1]} : vector<15x30xbf16> to vector<14x30xbf16>
    %8 = vector.extract_strided_slice %5 {offsets = [0, 0], sizes = [14, 30], strides = [1, 1]} : vector<15x30xbf16> to vector<14x30xbf16>
    %9 = vector.extract_strided_slice %5 {offsets = [1, 0], sizes = [14, 30], strides = [1, 1]} : vector<15x30xbf16> to vector<14x30xbf16>
    %cst = arith.constant 0.000000e+00 : f32
    %10 = vector.broadcast %cst : f32 to vector<14x448xf32>
    %c0_6 = arith.constant 0 : index
    %c0_7 = arith.constant 0 : index
    %c0_8 = arith.constant 0 : index
    %c0_9 = arith.constant 0 : index
    %11 = vector.load %arg2[%c0_6, %c0_7, %c0_8, %c0_9] : memref<3x2x30x448xbf16, #tpu.memory_space<vmem>>, vector<1x1x30x448xbf16>
    %12 = vector.shape_cast %11 : vector<1x1x30x448xbf16> to vector<30x448xbf16>
    %cst_10 = arith.constant dense<0.000000e+00> : vector<14x448xf32>
    %13 = tpu.matmul %6, %12, %cst_10 {dimension_numbers = #tpu.dot_dimension_numbers<[1], [0], [0], [1], [0, 0, 1, 1], [], []>} : vector<14x30xbf16>, vector<30x448xbf16>, vector<14x448xf32> -> vector<14x448xf32>
    %14 = arith.addf %10, %13 : vector<14x448xf32>
    %c1_11 = arith.constant 1 : index
    %c0_12 = arith.constant 0 : index
    %c0_13 = arith.constant 0 : index
    %c0_14 = arith.constant 0 : index
    %15 = vector.load %arg2[%c1_11, %c0_12, %c0_13, %c0_14] : memref<3x2x30x448xbf16, #tpu.memory_space<vmem>>, vector<1x1x30x448xbf16>
    %16 = vector.shape_cast %15 : vector<1x1x30x448xbf16> to vector<30x448xbf16>
    %cst_15 = arith.constant dense<0.000000e+00> : vector<14x448xf32>
    %17 = tpu.matmul %8, %16, %cst_15 {dimension_numbers = #tpu.dot_dimension_numbers<[1], [0], [0], [1], [0, 0, 1, 1], [], []>} : vector<14x30xbf16>, vector<30x448xbf16>, vector<14x448xf32> -> vector<14x448xf32>
    %18 = arith.addf %14, %17 : vector<14x448xf32>
    %c2 = arith.constant 2 : index
    %c0_16 = arith.constant 0 : index
    %c0_17 = arith.constant 0 : index
    %c0_18 = arith.constant 0 : index
    %19 = vector.load %arg2[%c2, %c0_16, %c0_17, %c0_18] : memref<3x2x30x448xbf16, #tpu.memory_space<vmem>>, vector<1x1x30x448xbf16>
    %20 = vector.shape_cast %19 : vector<1x1x30x448xbf16> to vector<30x448xbf16>
    %cst_19 = arith.constant dense<0.000000e+00> : vector<14x448xf32>
    %21 = tpu.matmul %7, %20, %cst_19 {dimension_numbers = #tpu.dot_dimension_numbers<[1], [0], [0], [1], [0, 0, 1, 1], [], []>} : vector<14x30xbf16>, vector<30x448xbf16>, vector<14x448xf32> -> vector<14x448xf32>
    %22 = arith.addf %18, %21 : vector<14x448xf32>
    %cst_20 = arith.constant 0.000000e+00 : f32
    %23 = vector.broadcast %cst_20 : f32 to vector<14x448xf32>
    %c0_21 = arith.constant 0 : index
    %c1_22 = arith.constant 1 : index
    %c0_23 = arith.constant 0 : index
    %c0_24 = arith.constant 0 : index
    %24 = vector.load %arg2[%c0_21, %c1_22, %c0_23, %c0_24] : memref<3x2x30x448xbf16, #tpu.memory_space<vmem>>, vector<1x1x30x448xbf16>
    %25 = vector.shape_cast %24 : vector<1x1x30x448xbf16> to vector<30x448xbf16>
    %cst_25 = arith.constant dense<0.000000e+00> : vector<14x448xf32>
    %26 = tpu.matmul %6, %25, %cst_25 {dimension_numbers = #tpu.dot_dimension_numbers<[1], [0], [0], [1], [0, 0, 1, 1], [], []>} : vector<14x30xbf16>, vector<30x448xbf16>, vector<14x448xf32> -> vector<14x448xf32>
    %27 = arith.addf %23, %26 : vector<14x448xf32>
    %c1_26 = arith.constant 1 : index
    %c1_27 = arith.constant 1 : index
    %c0_28 = arith.constant 0 : index
    %c0_29 = arith.constant 0 : index
    %28 = vector.load %arg2[%c1_26, %c1_27, %c0_28, %c0_29] : memref<3x2x30x448xbf16, #tpu.memory_space<vmem>>, vector<1x1x30x448xbf16>
    %29 = vector.shape_cast %28 : vector<1x1x30x448xbf16> to vector<30x448xbf16>
    %cst_30 = arith.constant dense<0.000000e+00> : vector<14x448xf32>
    %30 = tpu.matmul %8, %29, %cst_30 {dimension_numbers = #tpu.dot_dimension_numbers<[1], [0], [0], [1], [0, 0, 1, 1], [], []>} : vector<14x30xbf16>, vector<30x448xbf16>, vector<14x448xf32> -> vector<14x448xf32>
    %31 = arith.addf %27, %30 : vector<14x448xf32>
    %c2_31 = arith.constant 2 : index
    %c1_32 = arith.constant 1 : index
    %c0_33 = arith.constant 0 : index
    %c0_34 = arith.constant 0 : index
    %32 = vector.load %arg2[%c2_31, %c1_32, %c0_33, %c0_34] : memref<3x2x30x448xbf16, #tpu.memory_space<vmem>>, vector<1x1x30x448xbf16>
    %33 = vector.shape_cast %32 : vector<1x1x30x448xbf16> to vector<30x448xbf16>
    %cst_35 = arith.constant dense<0.000000e+00> : vector<14x448xf32>
    %34 = tpu.matmul %7, %33, %cst_35 {dimension_numbers = #tpu.dot_dimension_numbers<[1], [0], [0], [1], [0, 0, 1, 1], [], []>} : vector<14x30xbf16>, vector<30x448xbf16>, vector<14x448xf32> -> vector<14x448xf32>
    %35 = arith.addf %31, %34 : vector<14x448xf32>
    %36 = arith.maximumf %22, %35 : vector<14x448xf32>
    %cst_36 = arith.constant 0.000000e+00 : f32
    %37 = vector.broadcast %cst_36 : f32 to vector<14x448xf32>
    %c0_37 = arith.constant 0 : index
    %c0_38 = arith.constant 0 : index
    %c0_39 = arith.constant 0 : index
    %c0_40 = arith.constant 0 : index
    %38 = vector.load %arg2[%c0_37, %c0_38, %c0_39, %c0_40] : memref<3x2x30x448xbf16, #tpu.memory_space<vmem>>, vector<1x1x30x448xbf16>
    %39 = vector.shape_cast %38 : vector<1x1x30x448xbf16> to vector<30x448xbf16>
    %cst_41 = arith.constant dense<0.000000e+00> : vector<14x448xf32>
    %40 = tpu.matmul %8, %39, %cst_41 {dimension_numbers = #tpu.dot_dimension_numbers<[1], [0], [0], [1], [0, 0, 1, 1], [], []>} : vector<14x30xbf16>, vector<30x448xbf16>, vector<14x448xf32> -> vector<14x448xf32>
    %41 = arith.addf %37, %40 : vector<14x448xf32>
    %c1_42 = arith.constant 1 : index
    %c0_43 = arith.constant 0 : index
    %c0_44 = arith.constant 0 : index
    %c0_45 = arith.constant 0 : index
    %42 = vector.load %arg2[%c1_42, %c0_43, %c0_44, %c0_45] : memref<3x2x30x448xbf16, #tpu.memory_space<vmem>>, vector<1x1x30x448xbf16>
    %43 = vector.shape_cast %42 : vector<1x1x30x448xbf16> to vector<30x448xbf16>
    %cst_46 = arith.constant dense<0.000000e+00> : vector<14x448xf32>
    %44 = tpu.matmul %7, %43, %cst_46 {dimension_numbers = #tpu.dot_dimension_numbers<[1], [0], [0], [1], [0, 0, 1, 1], [], []>} : vector<14x30xbf16>, vector<30x448xbf16>, vector<14x448xf32> -> vector<14x448xf32>
    %45 = arith.addf %41, %44 : vector<14x448xf32>
    %c2_47 = arith.constant 2 : index
    %c0_48 = arith.constant 0 : index
    %c0_49 = arith.constant 0 : index
    %c0_50 = arith.constant 0 : index
    %46 = vector.load %arg2[%c2_47, %c0_48, %c0_49, %c0_50] : memref<3x2x30x448xbf16, #tpu.memory_space<vmem>>, vector<1x1x30x448xbf16>
    %47 = vector.shape_cast %46 : vector<1x1x30x448xbf16> to vector<30x448xbf16>
    %cst_51 = arith.constant dense<0.000000e+00> : vector<14x448xf32>
    %48 = tpu.matmul %9, %47, %cst_51 {dimension_numbers = #tpu.dot_dimension_numbers<[1], [0], [0], [1], [0, 0, 1, 1], [], []>} : vector<14x30xbf16>, vector<30x448xbf16>, vector<14x448xf32> -> vector<14x448xf32>
    %49 = arith.addf %45, %48 : vector<14x448xf32>
    %50 = arith.maximumf %36, %49 : vector<14x448xf32>
    %cst_52 = arith.constant 0.000000e+00 : f32
    %51 = vector.broadcast %cst_52 : f32 to vector<14x448xf32>
    %c0_53 = arith.constant 0 : index
    %c1_54 = arith.constant 1 : index
    %c0_55 = arith.constant 0 : index
    %c0_56 = arith.constant 0 : index
    %52 = vector.load %arg2[%c0_53, %c1_54, %c0_55, %c0_56] : memref<3x2x30x448xbf16, #tpu.memory_space<vmem>>, vector<1x1x30x448xbf16>
    %53 = vector.shape_cast %52 : vector<1x1x30x448xbf16> to vector<30x448xbf16>
    %cst_57 = arith.constant dense<0.000000e+00> : vector<14x448xf32>
    %54 = tpu.matmul %8, %53, %cst_57 {dimension_numbers = #tpu.dot_dimension_numbers<[1], [0], [0], [1], [0, 0, 1, 1], [], []>} : vector<14x30xbf16>, vector<30x448xbf16>, vector<14x448xf32> -> vector<14x448xf32>
    %55 = arith.addf %51, %54 : vector<14x448xf32>
    %c1_58 = arith.constant 1 : index
    %c1_59 = arith.constant 1 : index
    %c0_60 = arith.constant 0 : index
    %c0_61 = arith.constant 0 : index
    %56 = vector.load %arg2[%c1_58, %c1_59, %c0_60, %c0_61] : memref<3x2x30x448xbf16, #tpu.memory_space<vmem>>, vector<1x1x30x448xbf16>
    %57 = vector.shape_cast %56 : vector<1x1x30x448xbf16> to vector<30x448xbf16>
    %cst_62 = arith.constant dense<0.000000e+00> : vector<14x448xf32>
    %58 = tpu.matmul %7, %57, %cst_62 {dimension_numbers = #tpu.dot_dimension_numbers<[1], [0], [0], [1], [0, 0, 1, 1], [], []>} : vector<14x30xbf16>, vector<30x448xbf16>, vector<14x448xf32> -> vector<14x448xf32>
    %59 = arith.addf %55, %58 : vector<14x448xf32>
    %c2_63 = arith.constant 2 : index
    %c1_64 = arith.constant 1 : index
    %c0_65 = arith.constant 0 : index
    %c0_66 = arith.constant 0 : index
    %60 = vector.load %arg2[%c2_63, %c1_64, %c0_65, %c0_66] : memref<3x2x30x448xbf16, #tpu.memory_space<vmem>>, vector<1x1x30x448xbf16>
    %61 = vector.shape_cast %60 : vector<1x1x30x448xbf16> to vector<30x448xbf16>
    %cst_67 = arith.constant dense<0.000000e+00> : vector<14x448xf32>
    %62 = tpu.matmul %9, %61, %cst_67 {dimension_numbers = #tpu.dot_dimension_numbers<[1], [0], [0], [1], [0, 0, 1, 1], [], []>} : vector<14x30xbf16>, vector<30x448xbf16>, vector<14x448xf32> -> vector<14x448xf32>
    %63 = arith.addf %59, %62 : vector<14x448xf32>
    %64 = arith.maximumf %50, %63 : vector<14x448xf32>
    %c0_68 = arith.constant 0 : index
    %c0_69 = arith.constant 0 : index
    %65 = vector.load %arg3[%c0_68, %c0_69] : memref<1x448xf32, #tpu.memory_space<vmem>>, vector<1x448xf32>
    %66 = vector.broadcast %65 : vector<1x448xf32> to vector<14x448xf32>
    %67 = arith.addf %64, %66 : vector<14x448xf32>
    %cst_70 = arith.constant 0.000000e+00 : f32
    %68 = vector.broadcast %cst_70 : f32 to vector<14x448xf32>
    %69 = arith.maximumf %67, %68 : vector<14x448xf32>
    %c0_71 = arith.constant 0 : index
    %c0_72 = arith.constant 0 : index
    %c0_73 = arith.constant 0 : index
    %70 = vector.load %arg4[%c0_71, %c0_72, %c0_73] : memref<1x14x448xf32, #tpu.memory_space<vmem>>, vector<1x14x448xf32>
    %71 = vector.shape_cast %70 : vector<1x14x448xf32> to vector<14x448xf32>
    %72 = vector.shape_cast %69 : vector<14x448xf32> to vector<1x14x448xf32>
    tpu.vector_store %arg4[%c0_71, %c0_72, %c0_73], %72 {strides = array<i32>} : memref<1x14x448xf32, #tpu.memory_space<vmem>>, vector<1x14x448xf32>,
    return
  }
  func.func @transform_0(%arg0: i32) -> (i32, i32, i32, i32) {
    %c0_i32 = arith.constant 0 : i32
    %c0_i32_0 = arith.constant 0 : i32
    %c0_i32_1 = arith.constant 0 : i32
    %c0_i32_2 = arith.constant 0 : i32
    return %arg0, %c0_i32, %c0_i32_0, %c0_i32_1 : i32, i32, i32, i32
  }
  func.func @transform_1(%arg0: i32) -> (i32, i32, i32, i32) {
    %c0_i32 = arith.constant 0 : i32
    %c0_i32_0 = arith.constant 0 : i32
    %c0_i32_1 = arith.constant 0 : i32
    %c0_i32_2 = arith.constant 0 : i32
    %c0_i32_3 = arith.constant 0 : i32
    return %c0_i32, %c0_i32_0, %c0_i32_1, %c0_i32_2 : i32, i32, i32, i32
  }
  func.func @transform_2(%arg0: i32) -> (i32, i32) {
    %c0_i32 = arith.constant 0 : i32
    %c0_i32_0 = arith.constant 0 : i32
    %c0_i32_1 = arith.constant 0 : i32
    return %c0_i32, %c0_i32_0 : i32, i32
  }
  func.func @transform_3(%arg0: i32) -> (i32, i32, i32) {
    %c0_i32 = arith.constant 0 : i32
    %c0_i32_0 = arith.constant 0 : i32
    %c0_i32_1 = arith.constant 0 : i32
    return %arg0, %c0_i32, %c0_i32_0 : i32, i32, i32
  }
}

module attributes {stable_mosaic.version = 11 : i64} {
  func.func @_conv_relu_pool_kernel(%arg0: i32, %arg1: memref<1x2x8x512xf32, #tpu.memory_space<vmem>>, %arg2: memref<3x2x512x448xbf16, #tpu.memory_space<vmem>>, %arg3: memref<1x448xf32, #tpu.memory_space<vmem>>, %arg4: memref<1x7x448xf32, #tpu.memory_space<vmem>>) attributes {dimension_semantics = [#tpu.dimension_semantics<parallel>], iteration_bounds = array<i64: 2>, scalar_prefetch = 0 : i64, scratch_operands = 0 : i64, tpu.core_type = #tpu.core_type<tc>, window_params = [{transform_indices = @transform_0, window_bounds = array<i64: 1, 2, 8, 512>}, {pipeline_mode = #tpu.pipeline_mode<synchronous>, transform_indices = @transform_1, window_bounds = array<i64: 3, 2, 512, 448>}, {pipeline_mode = #tpu.pipeline_mode<synchronous>, transform_indices = @transform_2, window_bounds = array<i64: 1, 448>}, {transform_indices = @transform_3, window_bounds = array<i64: 1, 7, 448>}]} {
    %c0 = arith.constant 0 : index
    %c0_0 = arith.constant 0 : index
    %c0_1 = arith.constant 0 : index
    %c0_2 = arith.constant 0 : index
    %0 = vector.load %arg1[%c0, %c0_0, %c0_1, %c0_2] : memref<1x2x8x512xf32, #tpu.memory_space<vmem>>, vector<1x1x8x512xf32>
    %1 = vector.shape_cast %0 : vector<1x1x8x512xf32> to vector<8x512xf32>
    %2 = arith.truncf %1 : vector<8x512xf32> to vector<8x512xbf16>
    %c0_3 = arith.constant 0 : index
    %c1 = arith.constant 1 : index
    %c0_4 = arith.constant 0 : index
    %c0_5 = arith.constant 0 : index
    %3 = vector.load %arg1[%c0_3, %c1, %c0_4, %c0_5] : memref<1x2x8x512xf32, #tpu.memory_space<vmem>>, vector<1x1x8x512xf32>
    %4 = vector.shape_cast %3 : vector<1x1x8x512xf32> to vector<8x512xf32>
    %5 = arith.truncf %4 : vector<8x512xf32> to vector<8x512xbf16>
    %6 = vector.extract_strided_slice %2 {offsets = [0, 0], sizes = [7, 512], strides = [1, 1]} : vector<8x512xbf16> to vector<7x512xbf16>
    %7 = vector.extract_strided_slice %2 {offsets = [1, 0], sizes = [7, 512], strides = [1, 1]} : vector<8x512xbf16> to vector<7x512xbf16>
    %8 = vector.extract_strided_slice %5 {offsets = [0, 0], sizes = [7, 512], strides = [1, 1]} : vector<8x512xbf16> to vector<7x512xbf16>
    %9 = vector.extract_strided_slice %5 {offsets = [1, 0], sizes = [7, 512], strides = [1, 1]} : vector<8x512xbf16> to vector<7x512xbf16>
    %cst = arith.constant 0.000000e+00 : f32
    %10 = vector.broadcast %cst : f32 to vector<7x448xf32>
    %c0_6 = arith.constant 0 : index
    %c0_7 = arith.constant 0 : index
    %c0_8 = arith.constant 0 : index
    %c0_9 = arith.constant 0 : index
    %11 = vector.load %arg2[%c0_6, %c0_7, %c0_8, %c0_9] : memref<3x2x512x448xbf16, #tpu.memory_space<vmem>>, vector<1x1x512x448xbf16>
    %12 = vector.shape_cast %11 : vector<1x1x512x448xbf16> to vector<512x448xbf16>
    %cst_10 = arith.constant dense<0.000000e+00> : vector<7x448xf32>
    %13 = tpu.matmul %6, %12, %cst_10 {dimension_numbers = #tpu.dot_dimension_numbers<[1], [0], [0], [1], [0, 0, 1, 1], [], []>} : vector<7x512xbf16>, vector<512x448xbf16>, vector<7x448xf32> -> vector<7x448xf32>
    %14 = arith.addf %10, %13 : vector<7x448xf32>
    %c1_11 = arith.constant 1 : index
    %c0_12 = arith.constant 0 : index
    %c0_13 = arith.constant 0 : index
    %c0_14 = arith.constant 0 : index
    %15 = vector.load %arg2[%c1_11, %c0_12, %c0_13, %c0_14] : memref<3x2x512x448xbf16, #tpu.memory_space<vmem>>, vector<1x1x512x448xbf16>
    %16 = vector.shape_cast %15 : vector<1x1x512x448xbf16> to vector<512x448xbf16>
    %cst_15 = arith.constant dense<0.000000e+00> : vector<7x448xf32>
    %17 = tpu.matmul %8, %16, %cst_15 {dimension_numbers = #tpu.dot_dimension_numbers<[1], [0], [0], [1], [0, 0, 1, 1], [], []>} : vector<7x512xbf16>, vector<512x448xbf16>, vector<7x448xf32> -> vector<7x448xf32>
    %18 = arith.addf %14, %17 : vector<7x448xf32>
    %c2 = arith.constant 2 : index
    %c0_16 = arith.constant 0 : index
    %c0_17 = arith.constant 0 : index
    %c0_18 = arith.constant 0 : index
    %19 = vector.load %arg2[%c2, %c0_16, %c0_17, %c0_18] : memref<3x2x512x448xbf16, #tpu.memory_space<vmem>>, vector<1x1x512x448xbf16>
    %20 = vector.shape_cast %19 : vector<1x1x512x448xbf16> to vector<512x448xbf16>
    %cst_19 = arith.constant dense<0.000000e+00> : vector<7x448xf32>
    %21 = tpu.matmul %7, %20, %cst_19 {dimension_numbers = #tpu.dot_dimension_numbers<[1], [0], [0], [1], [0, 0, 1, 1], [], []>} : vector<7x512xbf16>, vector<512x448xbf16>, vector<7x448xf32> -> vector<7x448xf32>
    %22 = arith.addf %18, %21 : vector<7x448xf32>
    %cst_20 = arith.constant 0.000000e+00 : f32
    %23 = vector.broadcast %cst_20 : f32 to vector<7x448xf32>
    %c0_21 = arith.constant 0 : index
    %c1_22 = arith.constant 1 : index
    %c0_23 = arith.constant 0 : index
    %c0_24 = arith.constant 0 : index
    %24 = vector.load %arg2[%c0_21, %c1_22, %c0_23, %c0_24] : memref<3x2x512x448xbf16, #tpu.memory_space<vmem>>, vector<1x1x512x448xbf16>
    %25 = vector.shape_cast %24 : vector<1x1x512x448xbf16> to vector<512x448xbf16>
    %cst_25 = arith.constant dense<0.000000e+00> : vector<7x448xf32>
    %26 = tpu.matmul %6, %25, %cst_25 {dimension_numbers = #tpu.dot_dimension_numbers<[1], [0], [0], [1], [0, 0, 1, 1], [], []>} : vector<7x512xbf16>, vector<512x448xbf16>, vector<7x448xf32> -> vector<7x448xf32>
    %27 = arith.addf %23, %26 : vector<7x448xf32>
    %c1_26 = arith.constant 1 : index
    %c1_27 = arith.constant 1 : index
    %c0_28 = arith.constant 0 : index
    %c0_29 = arith.constant 0 : index
    %28 = vector.load %arg2[%c1_26, %c1_27, %c0_28, %c0_29] : memref<3x2x512x448xbf16, #tpu.memory_space<vmem>>, vector<1x1x512x448xbf16>
    %29 = vector.shape_cast %28 : vector<1x1x512x448xbf16> to vector<512x448xbf16>
    %cst_30 = arith.constant dense<0.000000e+00> : vector<7x448xf32>
    %30 = tpu.matmul %8, %29, %cst_30 {dimension_numbers = #tpu.dot_dimension_numbers<[1], [0], [0], [1], [0, 0, 1, 1], [], []>} : vector<7x512xbf16>, vector<512x448xbf16>, vector<7x448xf32> -> vector<7x448xf32>
    %31 = arith.addf %27, %30 : vector<7x448xf32>
    %c2_31 = arith.constant 2 : index
    %c1_32 = arith.constant 1 : index
    %c0_33 = arith.constant 0 : index
    %c0_34 = arith.constant 0 : index
    %32 = vector.load %arg2[%c2_31, %c1_32, %c0_33, %c0_34] : memref<3x2x512x448xbf16, #tpu.memory_space<vmem>>, vector<1x1x512x448xbf16>
    %33 = vector.shape_cast %32 : vector<1x1x512x448xbf16> to vector<512x448xbf16>
    %cst_35 = arith.constant dense<0.000000e+00> : vector<7x448xf32>
    %34 = tpu.matmul %7, %33, %cst_35 {dimension_numbers = #tpu.dot_dimension_numbers<[1], [0], [0], [1], [0, 0, 1, 1], [], []>} : vector<7x512xbf16>, vector<512x448xbf16>, vector<7x448xf32> -> vector<7x448xf32>
    %35 = arith.addf %31, %34 : vector<7x448xf32>
    %36 = arith.maximumf %22, %35 : vector<7x448xf32>
    %cst_36 = arith.constant 0.000000e+00 : f32
    %37 = vector.broadcast %cst_36 : f32 to vector<7x448xf32>
    %c0_37 = arith.constant 0 : index
    %c0_38 = arith.constant 0 : index
    %c0_39 = arith.constant 0 : index
    %c0_40 = arith.constant 0 : index
    %38 = vector.load %arg2[%c0_37, %c0_38, %c0_39, %c0_40] : memref<3x2x512x448xbf16, #tpu.memory_space<vmem>>, vector<1x1x512x448xbf16>
    %39 = vector.shape_cast %38 : vector<1x1x512x448xbf16> to vector<512x448xbf16>
    %cst_41 = arith.constant dense<0.000000e+00> : vector<7x448xf32>
    %40 = tpu.matmul %8, %39, %cst_41 {dimension_numbers = #tpu.dot_dimension_numbers<[1], [0], [0], [1], [0, 0, 1, 1], [], []>} : vector<7x512xbf16>, vector<512x448xbf16>, vector<7x448xf32> -> vector<7x448xf32>
    %41 = arith.addf %37, %40 : vector<7x448xf32>
    %c1_42 = arith.constant 1 : index
    %c0_43 = arith.constant 0 : index
    %c0_44 = arith.constant 0 : index
    %c0_45 = arith.constant 0 : index
    %42 = vector.load %arg2[%c1_42, %c0_43, %c0_44, %c0_45] : memref<3x2x512x448xbf16, #tpu.memory_space<vmem>>, vector<1x1x512x448xbf16>
    %43 = vector.shape_cast %42 : vector<1x1x512x448xbf16> to vector<512x448xbf16>
    %cst_46 = arith.constant dense<0.000000e+00> : vector<7x448xf32>
    %44 = tpu.matmul %7, %43, %cst_46 {dimension_numbers = #tpu.dot_dimension_numbers<[1], [0], [0], [1], [0, 0, 1, 1], [], []>} : vector<7x512xbf16>, vector<512x448xbf16>, vector<7x448xf32> -> vector<7x448xf32>
    %45 = arith.addf %41, %44 : vector<7x448xf32>
    %c2_47 = arith.constant 2 : index
    %c0_48 = arith.constant 0 : index
    %c0_49 = arith.constant 0 : index
    %c0_50 = arith.constant 0 : index
    %46 = vector.load %arg2[%c2_47, %c0_48, %c0_49, %c0_50] : memref<3x2x512x448xbf16, #tpu.memory_space<vmem>>, vector<1x1x512x448xbf16>
    %47 = vector.shape_cast %46 : vector<1x1x512x448xbf16> to vector<512x448xbf16>
    %cst_51 = arith.constant dense<0.000000e+00> : vector<7x448xf32>
    %48 = tpu.matmul %9, %47, %cst_51 {dimension_numbers = #tpu.dot_dimension_numbers<[1], [0], [0], [1], [0, 0, 1, 1], [], []>} : vector<7x512xbf16>, vector<512x448xbf16>, vector<7x448xf32> -> vector<7x448xf32>
    %49 = arith.addf %45, %48 : vector<7x448xf32>
    %50 = arith.maximumf %36, %49 : vector<7x448xf32>
    %cst_52 = arith.constant 0.000000e+00 : f32
    %51 = vector.broadcast %cst_52 : f32 to vector<7x448xf32>
    %c0_53 = arith.constant 0 : index
    %c1_54 = arith.constant 1 : index
    %c0_55 = arith.constant 0 : index
    %c0_56 = arith.constant 0 : index
    %52 = vector.load %arg2[%c0_53, %c1_54, %c0_55, %c0_56] : memref<3x2x512x448xbf16, #tpu.memory_space<vmem>>, vector<1x1x512x448xbf16>
    %53 = vector.shape_cast %52 : vector<1x1x512x448xbf16> to vector<512x448xbf16>
    %cst_57 = arith.constant dense<0.000000e+00> : vector<7x448xf32>
    %54 = tpu.matmul %8, %53, %cst_57 {dimension_numbers = #tpu.dot_dimension_numbers<[1], [0], [0], [1], [0, 0, 1, 1], [], []>} : vector<7x512xbf16>, vector<512x448xbf16>, vector<7x448xf32> -> vector<7x448xf32>
    %55 = arith.addf %51, %54 : vector<7x448xf32>
    %c1_58 = arith.constant 1 : index
    %c1_59 = arith.constant 1 : index
    %c0_60 = arith.constant 0 : index
    %c0_61 = arith.constant 0 : index
    %56 = vector.load %arg2[%c1_58, %c1_59, %c0_60, %c0_61] : memref<3x2x512x448xbf16, #tpu.memory_space<vmem>>, vector<1x1x512x448xbf16>
    %57 = vector.shape_cast %56 : vector<1x1x512x448xbf16> to vector<512x448xbf16>
    %cst_62 = arith.constant dense<0.000000e+00> : vector<7x448xf32>
    %58 = tpu.matmul %7, %57, %cst_62 {dimension_numbers = #tpu.dot_dimension_numbers<[1], [0], [0], [1], [0, 0, 1, 1], [], []>} : vector<7x512xbf16>, vector<512x448xbf16>, vector<7x448xf32> -> vector<7x448xf32>
    %59 = arith.addf %55, %58 : vector<7x448xf32>
    %c2_63 = arith.constant 2 : index
    %c1_64 = arith.constant 1 : index
    %c0_65 = arith.constant 0 : index
    %c0_66 = arith.constant 0 : index
    %60 = vector.load %arg2[%c2_63, %c1_64, %c0_65, %c0_66] : memref<3x2x512x448xbf16, #tpu.memory_space<vmem>>, vector<1x1x512x448xbf16>
    %61 = vector.shape_cast %60 : vector<1x1x512x448xbf16> to vector<512x448xbf16>
    %cst_67 = arith.constant dense<0.000000e+00> : vector<7x448xf32>
    %62 = tpu.matmul %9, %61, %cst_67 {dimension_numbers = #tpu.dot_dimension_numbers<[1], [0], [0], [1], [0, 0, 1, 1], [], []>} : vector<7x512xbf16>, vector<512x448xbf16>, vector<7x448xf32> -> vector<7x448xf32>
    %63 = arith.addf %59, %62 : vector<7x448xf32>
    %64 = arith.maximumf %50, %63 : vector<7x448xf32>
    %c0_68 = arith.constant 0 : index
    %c0_69 = arith.constant 0 : index
    %65 = vector.load %arg3[%c0_68, %c0_69] : memref<1x448xf32, #tpu.memory_space<vmem>>, vector<1x448xf32>
    %66 = vector.broadcast %65 : vector<1x448xf32> to vector<7x448xf32>
    %67 = arith.addf %64, %66 : vector<7x448xf32>
    %cst_70 = arith.constant 0.000000e+00 : f32
    %68 = vector.broadcast %cst_70 : f32 to vector<7x448xf32>
    %69 = arith.maximumf %67, %68 : vector<7x448xf32>
    %c0_71 = arith.constant 0 : index
    %c0_72 = arith.constant 0 : index
    %c0_73 = arith.constant 0 : index
    %70 = vector.load %arg4[%c0_71, %c0_72, %c0_73] : memref<1x7x448xf32, #tpu.memory_space<vmem>>, vector<1x7x448xf32>
    %71 = vector.shape_cast %70 : vector<1x7x448xf32> to vector<7x448xf32>
    %72 = vector.shape_cast %69 : vector<7x448xf32> to vector<1x7x448xf32>
    tpu.vector_store %arg4[%c0_71, %c0_72, %c0_73], %72 {strides = array<i32>} : memref<1x7x448xf32, #tpu.memory_space<vmem>>, vector<1x7x448xf32>,
    return
  }
  func.func @transform_0(%arg0: i32) -> (i32, i32, i32, i32) {
    %c0_i32 = arith.constant 0 : i32
    %c0_i32_0 = arith.constant 0 : i32
    %c0_i32_1 = arith.constant 0 : i32
    %c0_i32_2 = arith.constant 0 : i32
    return %arg0, %c0_i32, %c0_i32_0, %c0_i32_1 : i32, i32, i32, i32
  }
  func.func @transform_1(%arg0: i32) -> (i32, i32, i32, i32) {
    %c0_i32 = arith.constant 0 : i32
    %c0_i32_0 = arith.constant 0 : i32
    %c0_i32_1 = arith.constant 0 : i32
    %c0_i32_2 = arith.constant 0 : i32
    %c0_i32_3 = arith.constant 0 : i32
    return %c0_i32, %c0_i32_0, %c0_i32_1, %c0_i32_2 : i32, i32, i32, i32
  }
  func.func @transform_2(%arg0: i32) -> (i32, i32) {
    %c0_i32 = arith.constant 0 : i32
    %c0_i32_0 = arith.constant 0 : i32
    %c0_i32_1 = arith.constant 0 : i32
    return %c0_i32, %c0_i32_0 : i32, i32
  }
  func.func @transform_3(%arg0: i32) -> (i32, i32, i32) {
    %c0_i32 = arith.constant 0 : i32
    %c0_i32_0 = arith.constant 0 : i32
    %c0_i32_1 = arith.constant 0 : i32
    return %arg0, %c0_i32, %c0_i32_0 : i32, i32, i32
  }
}

module attributes {stable_mosaic.version = 11 : i64} {
  func.func @_mlp_head_kernel(%arg0: i32, %arg1: memref<8x3136xf32, #tpu.memory_space<vmem>>, %arg2: memref<3136x128xbf16, #tpu.memory_space<vmem>>, %arg3: memref<1x128xf32, #tpu.memory_space<vmem>>, %arg4: memref<128x128xbf16, #tpu.memory_space<vmem>>, %arg5: memref<1x128xf32, #tpu.memory_space<vmem>>, %arg6: memref<8x128xf32, #tpu.memory_space<vmem>>) attributes {dimension_semantics = [#tpu.dimension_semantics<parallel>], iteration_bounds = array<i64: 1>, scalar_prefetch = 0 : i64, scratch_operands = 0 : i64, tpu.core_type = #tpu.core_type<tc>, window_params = [{transform_indices = @transform_0, window_bounds = array<i64: 8, 3136>}, {pipeline_mode = #tpu.pipeline_mode<synchronous>, transform_indices = @transform_1, window_bounds = array<i64: 3136, 128>}, {pipeline_mode = #tpu.pipeline_mode<synchronous>, transform_indices = @transform_2, window_bounds = array<i64: 1, 128>}, {pipeline_mode = #tpu.pipeline_mode<synchronous>, transform_indices = @transform_3, window_bounds = array<i64: 128, 128>}, {pipeline_mode = #tpu.pipeline_mode<synchronous>, transform_indices = @transform_4, window_bounds = array<i64: 1, 128>}, {transform_indices = @transform_5, window_bounds = array<i64: 8, 128>}]} {
    %c0 = arith.constant 0 : index
    %c0_0 = arith.constant 0 : index
    %0 = vector.load %arg1[%c0, %c0_0] : memref<8x3136xf32, #tpu.memory_space<vmem>>, vector<8x3136xf32>
    %1 = arith.truncf %0 : vector<8x3136xf32> to vector<8x3136xbf16>
    %c0_1 = arith.constant 0 : index
    %c0_2 = arith.constant 0 : index
    %2 = vector.load %arg2[%c0_1, %c0_2] : memref<3136x128xbf16, #tpu.memory_space<vmem>>, vector<3136x128xbf16>
    %cst = arith.constant dense<0.000000e+00> : vector<8x128xf32>
    %3 = tpu.matmul %1, %2, %cst {dimension_numbers = #tpu.dot_dimension_numbers<[1], [0], [0], [1], [0, 0, 1, 1], [], []>} : vector<8x3136xbf16>, vector<3136x128xbf16>, vector<8x128xf32> -> vector<8x128xf32>
    %c0_3 = arith.constant 0 : index
    %c0_4 = arith.constant 0 : index
    %4 = vector.load %arg3[%c0_3, %c0_4] : memref<1x128xf32, #tpu.memory_space<vmem>>, vector<1x128xf32>
    %5 = vector.broadcast %4 : vector<1x128xf32> to vector<8x128xf32>
    %6 = arith.addf %3, %5 : vector<8x128xf32>
    %cst_5 = arith.constant 0.000000e+00 : f32
    %7 = vector.broadcast %cst_5 : f32 to vector<8x128xf32>
    %8 = arith.maximumf %6, %7 : vector<8x128xf32>
    %9 = arith.truncf %8 : vector<8x128xf32> to vector<8x128xbf16>
    %c0_6 = arith.constant 0 : index
    %c0_7 = arith.constant 0 : index
    %10 = vector.load %arg4[%c0_6, %c0_7] : memref<128x128xbf16, #tpu.memory_space<vmem>>, vector<128x128xbf16>
    %cst_8 = arith.constant dense<0.000000e+00> : vector<8x128xf32>
    %11 = tpu.matmul %9, %10, %cst_8 {dimension_numbers = #tpu.dot_dimension_numbers<[1], [0], [0], [1], [0, 0, 1, 1], [], []>} : vector<8x128xbf16>, vector<128x128xbf16>, vector<8x128xf32> -> vector<8x128xf32>
    %c0_9 = arith.constant 0 : index
    %c0_10 = arith.constant 0 : index
    %12 = vector.load %arg5[%c0_9, %c0_10] : memref<1x128xf32, #tpu.memory_space<vmem>>, vector<1x128xf32>
    %13 = vector.broadcast %12 : vector<1x128xf32> to vector<8x128xf32>
    %14 = arith.addf %11, %13 : vector<8x128xf32>
    %c0_11 = arith.constant 0 : index
    %c0_12 = arith.constant 0 : index
    %15 = vector.load %arg6[%c0_11, %c0_12] : memref<8x128xf32, #tpu.memory_space<vmem>>, vector<8x128xf32>
    tpu.vector_store %arg6[%c0_11, %c0_12], %14 {strides = array<i32>} : memref<8x128xf32, #tpu.memory_space<vmem>>, vector<8x128xf32>,
    return
  }
  func.func @transform_0(%arg0: i32) -> (i32, i32) {
    %c0_i32 = arith.constant 0 : i32
    %c0_i32_0 = arith.constant 0 : i32
    return %arg0, %c0_i32 : i32, i32
  }
  func.func @transform_1(%arg0: i32) -> (i32, i32) {
    %c0_i32 = arith.constant 0 : i32
    %c0_i32_0 = arith.constant 0 : i32
    %c0_i32_1 = arith.constant 0 : i32
    return %c0_i32, %c0_i32_0 : i32, i32
  }
  func.func @transform_2(%arg0: i32) -> (i32, i32) {
    %c0_i32 = arith.constant 0 : i32
    %c0_i32_0 = arith.constant 0 : i32
    %c0_i32_1 = arith.constant 0 : i32
    return %c0_i32, %c0_i32_0 : i32, i32
  }
  func.func @transform_3(%arg0: i32) -> (i32, i32) {
    %c0_i32 = arith.constant 0 : i32
    %c0_i32_0 = arith.constant 0 : i32
    %c0_i32_1 = arith.constant 0 : i32
    return %c0_i32, %c0_i32_0 : i32, i32
  }
  func.func @transform_4(%arg0: i32) -> (i32, i32) {
    %c0_i32 = arith.constant 0 : i32
    %c0_i32_0 = arith.constant 0 : i32
    %c0_i32_1 = arith.constant 0 : i32
    return %c0_i32, %c0_i32_0 : i32, i32
  }
  func.func @transform_5(%arg0: i32) -> (i32, i32) {
    %c0_i32 = arith.constant 0 : i32
    %c0_i32_0 = arith.constant 0 : i32
    return %arg0, %c0_i32 : i32, i32
  }
}

</mosaic_0001>

<llo_original>
// kernel: digit_classifier_forward.3
$region0: #{digit_classifier_forward.3}
  #allocation0 [shape = 'u32[]', space=smem, size = 0x4, offset = 0x4, fixed_abs, tag = 'smem constant byte address 0x4 - core index']
  #allocation1 [shape = 'u32[144,128]{1,0:T(1,128)}', space=vmem, size = 0x12000, scoped, tag = 'internal scratch']
  %s0 = inlined_call_operand.vmem [shape: f32[2,2,15,30], index: 0, kind: input, shape index: {}]
  %s1 = inlined_call_operand.vmem [shape: bf16[3,2,30,448], index: 1, kind: input, shape index: {}]
  %s2 = inlined_call_operand.hbm [shape: f32[1,448], index: 2, kind: input, shape index: {}]
  %s3 = inlined_call_operand.vmem [shape: f32[2,14,448], index: 3, kind: output, shape index: {}]
  %s4 = sld [smem:[#allocation0]]
  $region49: #{digit_classifier_forward.3} parent=0
    _
  %s6 = ssub.s32 1, %s4
  %s7 = scalar_select 0, %s6, %s4
  $region1: #{digit_classifier_forward.3} parent=0
    #allocation2 [shape = 'u8[2048]{0}', space=vmem, size = 0x800, scoped, tag = 'input window, operand 2, single buffered']
    #allocation3 [shape = 's32[2]{0}', space=sflag, size = 0x8, scoped, tag = 'scoped memory for digit_classifier_forward.3']
    %8 = vsyncpa [#allocation3], 0
    loop: start=0, step=1, limit=4
    $region2: #{digit_classifier_forward.3} parent=1 // loop_pre_header
      _
    $region3: #{digit_classifier_forward.3} parent=1 // loop_header
      %s10 = sphi 0, %s14
      %p11 = scmp.ge.s32.totalorder %s10, 4
      %s20 = sphi 0, %s22
      %s23 = sphi 0, %s20
      %s24 = sphi 0, %s23
      %s40 = sphi 0, %s24
      %s44 = sphi 0, %s44
      %s46 = sphi 0, %s44
      %s47 = sphi 0, %s46
      %s61 = sphi 0, %s47
      %s65 = sphi 0, %s65
      %s67 = sphi 0, %s65
      %s68 = sphi 0, %s67
      %s82 = sphi 0, %s68
      %s88 = sphi 0, %s90
      %s91 = sphi 0, %s88
      %s92 = sphi 0, %s91
      %s108 = sphi 0, %s92
    $region4: #{digit_classifier_forward.3} parent=1 // loop_header_branch
      %13 = sbr.rel (%p11) target = $region8
    $region5: #{digit_classifier_forward.3} parent=1 // loop_body
      %s15 = ssub.s32 %s10, 1
      %s16 = ssub.s32 %s10, 2
      %s17 = sadd.s32 %s10, 1
      %s18 = ssub.s32 %s10, %s17
      %p19 = scmp.eq.s32.totalorder %s18, 0
      %s21 = sadd.s32 %s20, 1
      %s22 = scalar_select %p19, %s20, %s21
      %p25 = pneg %p19
      %p26 = scmp.eq.s32.totalorder %s10, 1
      %p27 = por %p25, %p26
      %p28 = scmp.ne.s32.totalorder %s20, %s23
      %p29 = scmp.eq.s32.totalorder %s10, 0
      %p30 = por %p28, %p29
      %p31 = scmp.ne.s32.totalorder %s20, %s23
      %p32 = scmp.eq.s32.totalorder %s15, 1
      %p33 = por %p31, %p32
      %p34 = scmp.ne.s32.totalorder %s23, %s24
      %p35 = scmp.eq.s32.totalorder %s15, 0
      %p36 = por %p34, %p35
      %p37 = scmp.ne.s32.totalorder %s23, %s24
      %p38 = scmp.eq.s32.totalorder %s16, 1
      %p39 = por %p37, %p38
      %p41 = scmp.ne.s32.totalorder %s24, %s40
      %p42 = scmp.eq.s32.totalorder %s16, 0
      %p43 = por %p41, %p42
      %s45 = sadd.s32 %s44, 1
      %p48 = scmp.eq.s32.totalorder %s10, 1
      %p49 = scmp.ne.s32.totalorder %s44, %s46
      %p50 = scmp.eq.s32.totalorder %s10, 0
      %p51 = por %p49, %p50
      %p52 = scmp.ne.s32.totalorder %s44, %s46
      %p53 = scmp.eq.s32.totalorder %s15, 1
      %p54 = por %p52, %p53
      %p55 = scmp.ne.s32.totalorder %s46, %s47
      %p56 = scmp.eq.s32.totalorder %s15, 0
      %p57 = por %p55, %p56
      %p58 = scmp.ne.s32.totalorder %s46, %s47
      %p59 = scmp.eq.s32.totalorder %s16, 1
      %p60 = por %p58, %p59
      %p62 = scmp.ne.s32.totalorder %s47, %s61
      %p63 = scmp.eq.s32.totalorder %s16, 0
      %p64 = por %p62, %p63
      %s66 = sadd.s32 %s65, 1
      %p69 = scmp.eq.s32.totalorder %s10, 1
      %p70 = scmp.ne.s32.totalorder %s65, %s67
      %p71 = scmp.eq.s32.totalorder %s10, 0
      %p72 = por %p70, %p71
      %p73 = scmp.ne.s32.totalorder %s65, %s67
      %p74 = scmp.eq.s32.totalorder %s15, 1
      %p75 = por %p73, %p74
      %p76 = scmp.ne.s32.totalorder %s67, %s68
      %p77 = scmp.eq.s32.totalorder %s15, 0
      %p78 = por %p76, %p77
      %p79 = scmp.ne.s32.totalorder %s67, %s68
      %p80 = scmp.eq.s32.totalorder %s16, 1
      %p81 = por %p79, %p80
      %p83 = scmp.ne.s32.totalorder %s68, %s82
      %p84 = scmp.eq.s32.totalorder %s16, 0
      %p85 = por %p83, %p84
      %s86 = ssub.s32 %s10, %s17
      %p87 = scmp.eq.s32.totalorder %s86, 0
      %s89 = sadd.s32 %s88, 1
      %s90 = scalar_select %p87, %s88, %s89
      %p93 = pneg %p87
      %p94 = scmp.eq.s32.totalorder %s10, 1
      %p95 = por %p93, %p94
      %p96 = scmp.ne.s32.totalorder %s88, %s91
      %p97 = scmp.eq.s32.totalorder %s10, 0
      %p98 = por %p96, %p97
      %p99 = scmp.ne.s32.totalorder %s88, %s91
      %p100 = scmp.eq.s32.totalorder %s15, 1
      %p101 = por %p99, %p100
      %p102 = scmp.ne.s32.totalorder %s91, %s92
      %p103 = scmp.eq.s32.totalorder %s15, 0
      %p104 = por %p102, %p103
      %p105 = scmp.ne.s32.totalorder %s91, %s92
      %p106 = scmp.eq.s32.totalorder %s16, 1
      %p107 = por %p105, %p106
      %p109 = scmp.ne.s32.totalorder %s92, %s108
      %p110 = scmp.eq.s32.totalorder %s16, 0
      %p111 = por %p109, %p110
      %p112 = scmp.le.s32.totalorder 1, %s10
      %p113 = scmp.lt.s32.totalorder %s10, 3
      %p114 = pnand %p112, %p113
      %p115 = pneg %p114
      // Predicated region
      $region9: #{digit_classifier_forward.3} parent=5 // pred_check
        _
      $region10: #{digit_classifier_forward.3} parent=5 // pred_check_branch
        %117 = sbr.rel (%p114) target = $region12
      $region11: #{digit_classifier_forward.3} parent=5 // pred_region
        %s118 = ssub.s32 %s10, 1
        // Predicated region
        $region13: #{digit_classifier_forward.3} parent=11 // pred_check
          %p119 = pneg %p57
        $region14: #{digit_classifier_forward.3} parent=11 // pred_check_branch
          %121 = sbr.rel (%p119) target = $region16
        $region15: #{digit_classifier_forward.3} parent=11 // pred_region
          _
        $region16: #{digit_classifier_forward.3} parent=11 // pred_fallthru
          _
        // Predicated region
        $region17: #{digit_classifier_forward.3} parent=11 // pred_check
          %p122 = pneg %p78
        $region18: #{digit_classifier_forward.3} parent=11 // pred_check_branch
          %124 = sbr.rel (%p122) target = $region20
        $region19: #{digit_classifier_forward.3} parent=11 // pred_region
          %s126 = ssub.s32 64, 64
          %127 = vsyncadd [#allocation3], %s126
          %s129 = sshll.u32 [#allocation2], 4
          %s130 = int_to_ptr.vmem [resolvable:$true] %s129
          %132 = dma.hbm_to_vmem [thread:$0]  %s2, 64, %s130, [#allocation3]
        $region20: #{digit_classifier_forward.3} parent=11 // pred_fallthru
          _
      $region12: #{digit_classifier_forward.3} parent=5 // pred_fallthru
        _
      %p133 = scmp.lt.s32.totalorder %s10, 2
      // Predicated region
      $region21: #{digit_classifier_forward.3} parent=5 // pred_check
        %p134 = pneg %p133
      $region22: #{digit_classifier_forward.3} parent=5 // pred_check_branch
        %136 = sbr.rel (%p134) target = $region24
      $region23: #{digit_classifier_forward.3} parent=5 // pred_region
        // Predicated region
        $region25: #{digit_classifier_forward.3} parent=23 // pred_check
          %p137 = pneg %p30
        $region26: #{digit_classifier_forward.3} parent=23 // pred_check_branch
          %139 = sbr.rel (%p137) target = $region28
        $region27: #{digit_classifier_forward.3} parent=23 // pred_region
          %p140 = scmp.lt.s32.totalorder %s10, 1
          %s141 = scalar_select %p140, %s10, 1
          %s142 = smul.addr %s141, 4
          %s143 = smul.addr %s142, 8
          %s144 = scalar_lea.vmem %s0, %s143
        $region28: #{digit_classifier_forward.3} parent=23 // pred_fallthru
          _
      $region24: #{digit_classifier_forward.3} parent=5 // pred_fallthru
        _
      %p145 = scmp.le.s32.totalorder 1, %s10
      %p146 = scmp.lt.s32.totalorder %s10, 3
      %p147 = pnand %p145, %p146
      %p148 = pneg %p147
      // Predicated region
      $region29: #{digit_classifier_forward.3} parent=5 // pred_check
        _
      $region30: #{digit_classifier_forward.3} parent=5 // pred_check_branch
        %150 = sbr.rel (%p147) target = $region32
      $region31: #{digit_classifier_forward.3} parent=5 // pred_region
        %s151 = ssub.s32 %s10, 1
        // Predicated region
        $region33: #{digit_classifier_forward.3} parent=31 // pred_check
          %p152 = pneg %p78
        $region34: #{digit_classifier_forward.3} parent=31 // pred_check_branch
          %154 = sbr.rel (%p152) target = $region36
        $region35: #{digit_classifier_forward.3} parent=31 // pred_region
          %155 = dma.done [#allocation3], 64
        $region36: #{digit_classifier_forward.3} parent=31 // pred_fallthru
          _
        %p156 = scmp.lt.s32.totalorder %s15, 1
        %s157 = scalar_select %p156, %s15, 1
        %s158 = smul.addr %s157, 4
        %s159 = smul.addr %s158, 8
        %s160 = scalar_lea.vmem %s0, %s159
        %p161 = pneg %p36
        %p162 = pneg %p33
        %p163 = pneg %p57
        %p164 = pneg %p54
        %p165 = pneg %p78
        %p166 = pneg %p75
        %p167 = pneg %p104
        %p168 = pneg %p101
        %p169 = scmp.lt.s32.totalorder %s15, 1
        %s170 = scalar_select %p169, %s15, 1
        %s171 = smul.addr %s170, 8
        %s172 = smul.addr %s171, 8
        %s173 = scalar_lea.vmem %s3, %s172
        %p174 = scmp.lt.s32.totalorder %s15, 1
        %s175 = scalar_select %p174, %s15, 1
        %s176 = smul.addr %s175, 4
        %s177 = smul.addr %s176, 8
        %s178 = scalar_lea.vmem %s0, %s177
        %p179 = scmp.lt.s32.totalorder %s15, 1
        %s180 = scalar_select %p179, %s15, 1
        %s181 = smul.addr %s180, 8
        %s182 = smul.addr %s181, 8
        %s183 = scalar_lea.vmem %s3, %s182
        %v185 = vld [vmem:[%s178] sm:$0xff]
        %v186 = vld [vmem:[%s178 + $0x8] sm:$0x7f]
        %v187 = vpack.c.bf16 %v186, %v185
        %s188 = scalar_lea.vmem %s178, 16
        %v189 = vld [vmem:[%s188] sm:$0xff]
        %v190 = vld [vmem:[%s188 + $0x8] sm:$0x7f]
        %v191 = vpack.c.bf16 %v190, %v189
        %v192 = vld [vmem:[%s1] sm:$0xff]
        %v193 = vld [vmem:[%s1 + $0x8] sm:$0xff]
        %v194 = vld [vmem:[%s1 + $0x10] sm:$0xff]
        %v195 = vld [vmem:[%s1 + $0x18] sm:$0xff]
        %v196 = vld [vmem:[%s1 + $0x20] sm:$0xff]
        %v197 = vld [vmem:[%s1 + $0x28] sm:$0xff]
        %v198 = vld [vmem:[%s1 + $0x30] sm:$0x77]
        %v199 = vld [vmem:[%s1 + $0x38] sm:$0x77]
        %s200 = scalar_lea.vmem %s1, 128
        %v201 = vld [vmem:[%s200] sm:$0xff]
        %v202 = vld [vmem:[%s200 + $0x8] sm:$0xff]
        %v203 = vld [vmem:[%s200 + $0x10] sm:$0xff]
        %v204 = vld [vmem:[%s200 + $0x18] sm:$0xff]
        %v205 = vld [vmem:[%s200 + $0x20] sm:$0xff]
        %v206 = vld [vmem:[%s200 + $0x28] sm:$0xff]
        %v207 = vld [vmem:[%s200 + $0x30] sm:$0x77]
        %v208 = vld [vmem:[%s200 + $0x38] sm:$0x77]
        %v217 = vunpack.c.l.b16 %v201
        %v218 = vunpack.c.h.b16 %v201
        %v219 = vunpack.c.l.b16 %v202
        %v220 = vunpack.c.h.b16 %v202
        %v221 = vunpack.c.l.b16 %v203
        %v222 = vunpack.c.h.b16 %v203
        %v223 = vunpack.c.l.b16 %v204
        %v224 = vunpack.c.h.b16 %v204
        %v225 = vunpack.c.l.b16 %v205
        %v226 = vunpack.c.h.b16 %v205
        %v227 = vunpack.c.l.b16 %v206
        %v228 = vunpack.c.h.b16 %v206
        %v229 = vunpack.c.l.b16 %v207
        %v230 = vunpack.c.h.b16 %v207
        %v231 = vunpack.c.l.b16 %v208
        %v232 = vunpack.c.h.b16 %v208
        %v233 = vpack.c.b16 %v221, %v217
        %v234 = vpack.c.b16 %v222, %v218
        %v235 = vpack.c.b16 %v223, %v219
        %v236 = vpack.c.b16 %v224, %v220
        %v237 = vpack.c.b16 %v229, %v225
        %v238 = vpack.c.b16 %v230, %v226
        %v239 = vpack.c.b16 %v231, %v227
        %v240 = vpack.c.b16 %v232, %v228
        %vm245 = vcmask 244736
        %v247 = vsel %vm245, %v191, 0
        %vm249 = vcmask 1046528
        %v251 = vsel %vm249, %v237, 0
        %v254 = vsel %vm249, %v238, 0
        %v257 = vsel %vm249, %v239, 0
        %v260 = vsel %vm249, %v240, 0
        %262 = vmatprep.subr.bf16.mxu0 %v234
        %263 = vmatpush1.bf16.msra.mxu0 %v233
        %264 = vmatprep.subr.bf16.mxu0 %v254
        %265 = vmatpush1.bf16.msra.mxu0 %v251
        %266 = vmatprep.subr.bf16.mxu0 0
        %267 = vmatpush1.bf16.msra.mxu0 0
        %268 = vmatprep.subr.bf16.mxu0 0
        %269 = vmatpush1.bf16.msra.mxu0 0
        %270 = vmatprep.subr.bf16.mxu0 0
        %271 = vmatpush1.bf16.msra.mxu0 0
        %272 = vmatprep.subr.bf16.mxu0 0
        %273 = vmatpush1.bf16.msra.mxu0 0
        %274 = vmatprep.subr.bf16.mxu0 0
        %275 = vmatpush1.bf16.msra.mxu0 0
        %276 = vmatprep.subr.bf16.mxu0 0
        %277 = vmatpush1.bf16.msra.mxu0 0
        %278 = vmatprep.subr.bf16.mxu0 0
        %279 = vmatpush1.bf16.msra.mxu0 0
        %280 = vmatprep.subr.bf16.mxu0 0
        %281 = vmatpush1.bf16.msra.mxu0 0
        %282 = vmatprep.subr.bf16.mxu0 0
        %283 = vmatpush1.bf16.msra.mxu0 0
        %284 = vmatprep.subr.bf16.mxu0 0
        %285 = vmatpush1.bf16.msra.mxu0 0
        %286 = vmatprep.subr.bf16.mxu0 0
        %287 = vmatpush1.bf16.msra.mxu0 0
        %288 = vmatprep.subr.bf16.mxu0 0
        %289 = vmatpush1.bf16.msra.mxu0 0
        %290 = vmatprep.subr.bf16.mxu0 0
        %291 = vmatpush1.bf16.msra.mxu0 0
        %292 = vmatprep.subr.bf16.mxu0 0
        %293 = vmatpush1.bf16.msra.mxu0 0
        %294 = vmatprep.mubr.bf16.mxu0 0
        %295 = vmatmul.mubr.bf16.gmra.mrb[0].mxu0 %v247
        %v296 = vpop.f32.mrb[0].mxu0
        %v297 = vadd.f32 0.0, %v296
        %v298 = vpop.f32.mrb[0].mxu0
        %v299 = vadd.f32 0.0, %v298
        %v300 = vpop.f32.mrb[0].mxu0
        %v301 = vadd.f32 0.0, %v300
        %v302 = vpop.f32.mrb[0].mxu0
        %v303 = vadd.f32 0.0, %v302
        %304 = vdwg.mxu0
        %305 = vmatprep.subr.bf16.mxu0 %v236
        %306 = vmatpush1.bf16.msra.mxu0 %v235
        %307 = vmatprep.subr.bf16.mxu0 %v260
        %308 = vmatpush1.bf16.msra.mxu0 %v257
        %309 = vmatprep.subr.bf16.mxu0 0
        %310 = vmatpush1.bf16.msra.mxu0 0
        %311 = vmatprep.subr.bf16.mxu0 0
        %312 = vmatpush1.bf16.msra.mxu0 0
        %313 = vmatprep.subr.bf16.mxu0 0
        %314 = vmatpush1.bf16.msra.mxu0 0
        %315 = vmatprep.subr.bf16.mxu0 0
        %316 = vmatpush1.bf16.msra.mxu0 0
        %317 = vmatprep.subr.bf16.mxu0 0
        %318 = vmatpush1.bf16.msra.mxu0 0
        %319 = vmatprep.subr.bf16.mxu0 0
        %320 = vmatpush1.bf16.msra.mxu0 0
        %321 = vmatprep.subr.bf16.mxu0 0
        %322 = vmatpush1.bf16.msra.mxu0 0
        %323 = vmatprep.subr.bf16.mxu0 0
        %324 = vmatpush1.bf16.msra.mxu0 0
        %325 = vmatprep.subr.bf16.mxu0 0
        %326 = vmatpush1.bf16.msra.mxu0 0
        %327 = vmatprep.subr.bf16.mxu0 0
        %328 = vmatpush1.bf16.msra.mxu0 0
        %329 = vmatprep.subr.bf16.mxu0 0
        %330 = vmatpush1.bf16.msra.mxu0 0
        %331 = vmatprep.subr.bf16.mxu0 0
        %332 = vmatpush1.bf16.msra.mxu0 0
        %333 = vmatprep.subr.bf16.mxu0 0
        %334 = vmatpush1.bf16.msra.mxu0 0
        %335 = vmatprep.subr.bf16.mxu0 0
        %336 = vmatpush1.bf16.msra.mxu0 0
        %337 = vmatprep.mubr.bf16.mxu0 0
        %338 = vmatmul.mubr.bf16.gmra.mrb[0].mxu0 %v247
        %v339 = vpop.f32.mrb[0].mxu0
        %v340 = vadd.f32 0.0, %v339
        %v341 = vpop.f32.mrb[0].mxu0
        %v342 = vadd.f32 0.0, %v341
        %v343 = vpop.f32.mrb[0].mxu0
        %v344 = vadd.f32 0.0, %v343
        %v345 = vpop.f32.mrb[0].mxu0
        %v346 = vadd.f32 0.0, %v345
        %347 = vdwg.mxu0
        %v356 = vunpack.c.l.b16 %v192
        %v357 = vunpack.c.h.b16 %v192
        %v358 = vunpack.c.l.b16 %v193
        %v359 = vunpack.c.h.b16 %v193
        %v360 = vunpack.c.l.b16 %v194
        %v361 = vunpack.c.h.b16 %v194
        %v362 = vunpack.c.l.b16 %v195
        %v363 = vunpack.c.h.b16 %v195
        %v364 = vunpack.c.l.b16 %v196
        %v365 = vunpack.c.h.b16 %v196
        %v366 = vunpack.c.l.b16 %v197
        %v367 = vunpack.c.h.b16 %v197
        %v368 = vunpack.c.l.b16 %v198
        %v369 = vunpack.c.h.b16 %v198
        %v370 = vunpack.c.l.b16 %v199
        %v371 = vunpack.c.h.b16 %v199
        %v372 = vpack.c.b16 %v360, %v356
        %v373 = vpack.c.b16 %v361, %v357
        %v374 = vpack.c.b16 %v362, %v358
        %v375 = vpack.c.b16 %v363, %v359
        %v376 = vpack.c.b16 %v368, %v364
        %v377 = vpack.c.b16 %v369, %v365
        %v378 = vpack.c.b16 %v370, %v366
        %v379 = vpack.c.b16 %v371, %v367
        %v385 = vsel %vm245, %v187, 0
        %v388 = vsel %vm249, %v376, 0
        %v391 = vsel %vm249, %v377, 0
        %v394 = vsel %vm249, %v378, 0
        %v397 = vsel %vm249, %v379, 0
        %399 = vmatprep.subr.bf16.mxu0 %v373
        %400 = vmatpush1.bf16.msra.mxu0 %v372
        %401 = vmatprep.subr.bf16.mxu0 %v391
        %402 = vmatpush1.bf16.msra.mxu0 %v388
        %403 = vmatprep.subr.bf16.mxu0 0
        %404 = vmatpush1.bf16.msra.mxu0 0
        %405 = vmatprep.subr.bf16.mxu0 0
        %406 = vmatpush1.bf16.msra.mxu0 0
        %407 = vmatprep.subr.bf16.mxu0 0
        %408 = vmatpush1.bf16.msra.mxu0 0
        %409 = vmatprep.subr.bf16.mxu0 0
        %410 = vmatpush1.bf16.msra.mxu0 0
        %411 = vmatprep.subr.bf16.mxu0 0
        %412 = vmatpush1.bf16.msra.mxu0 0
        %413 = vmatprep.subr.bf16.mxu0 0
        %414 = vmatpush1.bf16.msra.mxu0 0
        %415 = vmatprep.subr.bf16.mxu0 0
        %416 = vmatpush1.bf16.msra.mxu0 0
        %417 = vmatprep.subr.bf16.mxu0 0
        %418 = vmatpush1.bf16.msra.mxu0 0
        %419 = vmatprep.subr.bf16.mxu0 0
        %420 = vmatpush1.bf16.msra.mxu0 0
        %421 = vmatprep.subr.bf16.mxu0 0
        %422 = vmatpush1.bf16.msra.mxu0 0
        %423 = vmatprep.subr.bf16.mxu0 0
        %424 = vmatpush1.bf16.msra.mxu0 0
        %425 = vmatprep.subr.bf16.mxu0 0
        %426 = vmatpush1.bf16.msra.mxu0 0
        %427 = vmatprep.subr.bf16.mxu0 0
        %428 = vmatpush1.bf16.msra.mxu0 0
        %429 = vmatprep.subr.bf16.mxu0 0
        %430 = vmatpush1.bf16.msra.mxu0 0
        %431 = vmatprep.mubr.bf16.mxu0 0
        %432 = vmatmul.mubr.bf16.gmra.mrb[0].mxu0 %v385
        %v433 = vpop.f32.mrb[0].mxu0
        %v434 = vadd.f32 %v297, %v433
        %v435 = vpop.f32.mrb[0].mxu0
        %v436 = vadd.f32 %v299, %v435
        %v437 = vpop.f32.mrb[0].mxu0
        %v438 = vadd.f32 %v301, %v437
        %v439 = vpop.f32.mrb[0].mxu0
        %v440 = vadd.f32 %v303, %v439
        %441 = vdwg.mxu0
        %442 = vmatprep.subr.bf16.mxu0 %v375
        %443 = vmatpush1.bf16.msra.mxu0 %v374
        %444 = vmatprep.subr.bf16.mxu0 %v397
        %445 = vmatpush1.bf16.msra.mxu0 %v394
        %446 = vmatprep.subr.bf16.mxu0 0
        %447 = vmatpush1.bf16.msra.mxu0 0
        %448 = vmatprep.subr.bf16.mxu0 0
        %449 = vmatpush1.bf16.msra.mxu0 0
        %450 = vmatprep.subr.bf16.mxu0 0
        %451 = vmatpush1.bf16.msra.mxu0 0
        %452 = vmatprep.subr.bf16.mxu0 0
        %453 = vmatpush1.bf16.msra.mxu0 0
        %454 = vmatprep.subr.bf16.mxu0 0
        %455 = vmatpush1.bf16.msra.mxu0 0
        %456 = vmatprep.subr.bf16.mxu0 0
        %457 = vmatpush1.bf16.msra.mxu0 0
        %458 = vmatprep.subr.bf16.mxu0 0
        %459 = vmatpush1.bf16.msra.mxu0 0
        %460 = vmatprep.subr.bf16.mxu0 0
        %461 = vmatpush1.bf16.msra.mxu0 0
        %462 = vmatprep.subr.bf16.mxu0 0
        %463 = vmatpush1.bf16.msra.mxu0 0
        %464 = vmatprep.subr.bf16.mxu0 0
        %465 = vmatpush1.bf16.msra.mxu0 0
        %466 = vmatprep.subr.bf16.mxu0 0
        %467 = vmatpush1.bf16.msra.mxu0 0
        %468 = vmatprep.subr.bf16.mxu0 0
        %469 = vmatpush1.bf16.msra.mxu0 0
        %470 = vmatprep.subr.bf16.mxu0 0
        %471 = vmatpush1.bf16.msra.mxu0 0
        %472 = vmatprep.subr.bf16.mxu0 0
        %473 = vmatpush1.bf16.msra.mxu0 0
        %474 = vmatprep.mubr.bf16.mxu0 0
        %475 = vmatmul.mubr.bf16.gmra.mrb[0].mxu0 %v385
        %v476 = vpop.f32.mrb[0].mxu0
        %v477 = vadd.f32 %v340, %v476
        %v478 = vpop.f32.mrb[0].mxu0
        %v479 = vadd.f32 %v342, %v478
        %v480 = vpop.f32.mrb[0].mxu0
        %v481 = vadd.f32 %v344, %v480
        %v482 = vpop.f32.mrb[0].mxu0
        %v483 = vadd.f32 %v346, %v482
        %484 = vdwg.mxu0
        %s485 = scalar_lea.vmem %s1, 256
        %v486 = vld [vmem:[%s485] sm:$0xff]
        %v487 = vld [vmem:[%s485 + $0x8] sm:$0xff]
        %v488 = vld [vmem:[%s485 + $0x10] sm:$0xff]
        %v489 = vld [vmem:[%s485 + $0x18] sm:$0xff]
        %v490 = vld [vmem:[%s485 + $0x20] sm:$0xff]
        %v491 = vld [vmem:[%s485 + $0x28] sm:$0xff]
        %v492 = vld [vmem:[%s485 + $0x30] sm:$0x77]
        %v493 = vld [vmem:[%s485 + $0x38] sm:$0x77]
        %v494 = vshrl.u32 %v187, 16
        %v496 = vshll.u32 %v187, 16
        %v498 = vrot.slane %v496, 1
        %v499 = vor.u32 %v494, %v498
        %v508 = vunpack.c.l.b16 %v486
        %v509 = vunpack.c.h.b16 %v486
        %v510 = vunpack.c.l.b16 %v487
        %v511 = vunpack.c.h.b16 %v487
        %v512 = vunpack.c.l.b16 %v488
        %v513 = vunpack.c.h.b16 %v488
        %v514 = vunpack.c.l.b16 %v489
        %v515 = vunpack.c.h.b16 %v489
        %v516 = vunpack.c.l.b16 %v490
        %v517 = vunpack.c.h.b16 %v490
        %v518 = vunpack.c.l.b16 %v491
        %v519 = vunpack.c.h.b16 %v491
        %v520 = vunpack.c.l.b16 %v492
        %v521 = vunpack.c.h.b16 %v492
        %v522 = vunpack.c.l.b16 %v493
        %v523 = vunpack.c.h.b16 %v493
        %v524 = vpack.c.b16 %v512, %v508
        %v525 = vpack.c.b16 %v513, %v509
        %v526 = vpack.c.b16 %v514, %v510
        %v527 = vpack.c.b16 %v515, %v511
        %v528 = vpack.c.b16 %v520, %v516
        %v529 = vpack.c.b16 %v521, %v517
        %v530 = vpack.c.b16 %v522, %v518
        %v531 = vpack.c.b16 %v523, %v519
        %v537 = vsel %vm245, %v499, 0
        %v540 = vsel %vm249, %v528, 0
        %v543 = vsel %vm249, %v529, 0
        %v546 = vsel %vm249, %v530, 0
        %v549 = vsel %vm249, %v531, 0
        %551 = vmatprep.subr.bf16.mxu0 %v525
        %552 = vmatpush1.bf16.msra.mxu0 %v524
        %553 = vmatprep.subr.bf16.mxu0 %v543
        %554 = vmatpush1.bf16.msra.mxu0 %v540
        %555 = vmatprep.subr.bf16.mxu0 0
        %556 = vmatpush1.bf16.msra.mxu0 0
        %557 = vmatprep.subr.bf16.mxu0 0
        %558 = vmatpush1.bf16.msra.mxu0 0
        %559 = vmatprep.subr.bf16.mxu0 0
        %560 = vmatpush1.bf16.msra.mxu0 0
        %561 = vmatprep.subr.bf16.mxu0 0
        %562 = vmatpush1.bf16.msra.mxu0 0
        %563 = vmatprep.subr.bf16.mxu0 0
        %564 = vmatpush1.bf16.msra.mxu0 0
        %565 = vmatprep.subr.bf16.mxu0 0
        %566 = vmatpush1.bf16.msra.mxu0 0
        %567 = vmatprep.subr.bf16.mxu0 0
        %568 = vmatpush1.bf16.msra.mxu0 0
        %569 = vmatprep.subr.bf16.mxu0 0
        %570 = vmatpush1.bf16.msra.mxu0 0
        %571 = vmatprep.subr.bf16.mxu0 0
        %572 = vmatpush1.bf16.msra.mxu0 0
        %573 = vmatprep.subr.bf16.mxu0 0
        %574 = vmatpush1.bf16.msra.mxu0 0
        %575 = vmatprep.subr.bf16.mxu0 0
        %576 = vmatpush1.bf16.msra.mxu0 0
        %577 = vmatprep.subr.bf16.mxu0 0
        %578 = vmatpush1.bf16.msra.mxu0 0
        %579 = vmatprep.subr.bf16.mxu0 0
        %580 = vmatpush1.bf16.msra.mxu0 0
        %581 = vmatprep.subr.bf16.mxu0 0
        %582 = vmatpush1.bf16.msra.mxu0 0
        %583 = vmatprep.mubr.bf16.mxu0 0
        %584 = vmatmul.mubr.bf16.gmra.mrb[0].mxu0 %v537
        %v585 = vpop.f32.mrb[0].mxu0
        %v586 = vadd.f32 0.0, %v585
        %v587 = vpop.f32.mrb[0].mxu0
        %v588 = vadd.f32 0.0, %v587
        %v589 = vpop.f32.mrb[0].mxu0
        %v590 = vadd.f32 0.0, %v589
        %v591 = vpop.f32.mrb[0].mxu0
        %v592 = vadd.f32 0.0, %v591
        %593 = vdwg.mxu0
        %594 = vmatprep.subr.bf16.mxu0 %v527
        %595 = vmatpush1.bf16.msra.mxu0 %v526
        %596 = vmatprep.subr.bf16.mxu0 %v549
        %597 = vmatpush1.bf16.msra.mxu0 %v546
        %598 = vmatprep.subr.bf16.mxu0 0
        %599 = vmatpush1.bf16.msra.mxu0 0
        %600 = vmatprep.subr.bf16.mxu0 0
        %601 = vmatpush1.bf16.msra.mxu0 0
        %602 = vmatprep.subr.bf16.mxu0 0
        %603 = vmatpush1.bf16.msra.mxu0 0
        %604 = vmatprep.subr.bf16.mxu0 0
        %605 = vmatpush1.bf16.msra.mxu0 0
        %606 = vmatprep.subr.bf16.mxu0 0
        %607 = vmatpush1.bf16.msra.mxu0 0
        %608 = vmatprep.subr.bf16.mxu0 0
        %609 = vmatpush1.bf16.msra.mxu0 0
        %610 = vmatprep.subr.bf16.mxu0 0
        %611 = vmatpush1.bf16.msra.mxu0 0
        %612 = vmatprep.subr.bf16.mxu0 0
        %613 = vmatpush1.bf16.msra.mxu0 0
        %614 = vmatprep.subr.bf16.mxu0 0
        %615 = vmatpush1.bf16.msra.mxu0 0
        %616 = vmatprep.subr.bf16.mxu0 0
        %617 = vmatpush1.bf16.msra.mxu0 0
        %618 = vmatprep.subr.bf16.mxu0 0
        %619 = vmatpush1.bf16.msra.mxu0 0
        %620 = vmatprep.subr.bf16.mxu0 0
        %621 = vmatpush1.bf16.msra.mxu0 0
        %622 = vmatprep.subr.bf16.mxu0 0
        %623 = vmatpush1.bf16.msra.mxu0 0
        %624 = vmatprep.subr.bf16.mxu0 0
        %625 = vmatpush1.bf16.msra.mxu0 0
        %626 = vmatprep.mubr.bf16.mxu0 0
        %627 = vmatmul.mubr.bf16.gmra.mrb[0].mxu0 %v537
        %v628 = vpop.f32.mrb[0].mxu0
        %v629 = vadd.f32 0.0, %v628
        %v630 = vpop.f32.mrb[0].mxu0
        %v631 = vadd.f32 0.0, %v630
        %v632 = vpop.f32.mrb[0].mxu0
        %v633 = vadd.f32 0.0, %v632
        %v634 = vpop.f32.mrb[0].mxu0
        %v635 = vadd.f32 0.0, %v634
        %636 = vdwg.mxu0
        %v637 = vadd.f32 %v434, %v586
        %v638 = vadd.f32 %v436, %v588
        %v639 = vadd.f32 %v477, %v629
        %v640 = vadd.f32 %v479, %v631
        %v641 = vadd.f32 %v438, %v590
        %v642 = vadd.f32 %v440, %v592
        %v643 = vadd.f32 %v481, %v633
        %v644 = vadd.f32 %v483, %v635
        %s645 = scalar_lea.vmem %s1, 64
        %v646 = vld [vmem:[%s645] sm:$0xff]
        %v647 = vld [vmem:[%s645 + $0x8] sm:$0xff]
        %v648 = vld [vmem:[%s645 + $0x10] sm:$0xff]
        %v649 = vld [vmem:[%s645 + $0x18] sm:$0xff]
        %v650 = vld [vmem:[%s645 + $0x20] sm:$0xff]
        %v651 = vld [vmem:[%s645 + $0x28] sm:$0xff]
        %v652 = vld [vmem:[%s645 + $0x30] sm:$0x77]
        %v653 = vld [vmem:[%s645 + $0x38] sm:$0x77]
        %s654 = scalar_lea.vmem %s1, 192
        %v655 = vld [vmem:[%s654] sm:$0xff]
        %v656 = vld [vmem:[%s654 + $0x8] sm:$0xff]
        %v657 = vld [vmem:[%s654 + $0x10] sm:$0xff]
        %v658 = vld [vmem:[%s654 + $0x18] sm:$0xff]
        %v659 = vld [vmem:[%s654 + $0x20] sm:$0xff]
        %v660 = vld [vmem:[%s654 + $0x28] sm:$0xff]
        %v661 = vld [vmem:[%s654 + $0x30] sm:$0x77]
        %v662 = vld [vmem:[%s654 + $0x38] sm:$0x77]
        %v671 = vunpack.c.l.b16 %v655
        %v672 = vunpack.c.h.b16 %v655
        %v673 = vunpack.c.l.b16 %v656
        %v674 = vunpack.c.h.b16 %v656
        %v675 = vunpack.c.l.b16 %v657
        %v676 = vunpack.c.h.b16 %v657
        %v677 = vunpack.c.l.b16 %v658
        %v678 = vunpack.c.h.b16 %v658
        %v679 = vunpack.c.l.b16 %v659
        %v680 = vunpack.c.h.b16 %v659
        %v681 = vunpack.c.l.b16 %v660
        %v682 = vunpack.c.h.b16 %v660
        %v683 = vunpack.c.l.b16 %v661
        %v684 = vunpack.c.h.b16 %v661
        %v685 = vunpack.c.l.b16 %v662
        %v686 = vunpack.c.h.b16 %v662
        %v687 = vpack.c.b16 %v675, %v671
        %v688 = vpack.c.b16 %v676, %v672
        %v689 = vpack.c.b16 %v677, %v673
        %v690 = vpack.c.b16 %v678, %v674
        %v691 = vpack.c.b16 %v683, %v679
        %v692 = vpack.c.b16 %v684, %v680
        %v693 = vpack.c.b16 %v685, %v681
        %v694 = vpack.c.b16 %v686, %v682
        %v700 = vsel %vm249, %v691, 0
        %v703 = vsel %vm249, %v692, 0
        %v706 = vsel %vm249, %v693, 0
        %v709 = vsel %vm249, %v694, 0
        %711 = vmatprep.subr.bf16.mxu0 %v688
        %712 = vmatpush1.bf16.msra.mxu0 %v687
        %713 = vmatprep.subr.bf16.mxu0 %v703
        %714 = vmatpush1.bf16.msra.mxu0 %v700
        %715 = vmatprep.subr.bf16.mxu0 0
        %716 = vmatpush1.bf16.msra.mxu0 0
        %717 = vmatprep.subr.bf16.mxu0 0
        %718 = vmatpush1.bf16.msra.mxu0 0
        %719 = vmatprep.subr.bf16.mxu0 0
        %720 = vmatpush1.bf16.msra.mxu0 0
        %721 = vmatprep.subr.bf16.mxu0 0
        %722 = vmatpush1.bf16.msra.mxu0 0
        %723 = vmatprep.subr.bf16.mxu0 0
        %724 = vmatpush1.bf16.msra.mxu0 0
        %725 = vmatprep.subr.bf16.mxu0 0
        %726 = vmatpush1.bf16.msra.mxu0 0
        %727 = vmatprep.subr.bf16.mxu0 0
        %728 = vmatpush1.bf16.msra.mxu0 0
        %729 = vmatprep.subr.bf16.mxu0 0
        %730 = vmatpush1.bf16.msra.mxu0 0
        %731 = vmatprep.subr.bf16.mxu0 0
        %732 = vmatpush1.bf16.msra.mxu0 0
        %733 = vmatprep.subr.bf16.mxu0 0
        %734 = vmatpush1.bf16.msra.mxu0 0
        %735 = vmatprep.subr.bf16.mxu0 0
        %736 = vmatpush1.bf16.msra.mxu0 0
        %737 = vmatprep.subr.bf16.mxu0 0
        %738 = vmatpush1.bf16.msra.mxu0 0
        %739 = vmatprep.subr.bf16.mxu0 0
        %740 = vmatpush1.bf16.msra.mxu0 0
        %741 = vmatprep.subr.bf16.mxu0 0
        %742 = vmatpush1.bf16.msra.mxu0 0
        %743 = vmatprep.mubr.bf16.mxu0 0
        %744 = vmatmul.mubr.bf16.gmra.mrb[0].mxu0 %v247
        %v745 = vpop.f32.mrb[0].mxu0
        %v746 = vadd.f32 0.0, %v745
        %v747 = vpop.f32.mrb[0].mxu0
        %v748 = vadd.f32 0.0, %v747
        %v749 = vpop.f32.mrb[0].mxu0
        %v750 = vadd.f32 0.0, %v749
        %v751 = vpop.f32.mrb[0].mxu0
        %v752 = vadd.f32 0.0, %v751
        %753 = vdwg.mxu0
        %754 = vmatprep.subr.bf16.mxu0 %v690
        %755 = vmatpush1.bf16.msra.mxu0 %v689
        %756 = vmatprep.subr.bf16.mxu0 %v709
        %757 = vmatpush1.bf16.msra.mxu0 %v706
        %758 = vmatprep.subr.bf16.mxu0 0
        %759 = vmatpush1.bf16.msra.mxu0 0
        %760 = vmatprep.subr.bf16.mxu0 0
        %761 = vmatpush1.bf16.msra.mxu0 0
        %762 = vmatprep.subr.bf16.mxu0 0
        %763 = vmatpush1.bf16.msra.mxu0 0
        %764 = vmatprep.subr.bf16.mxu0 0
        %765 = vmatpush1.bf16.msra.mxu0 0
        %766 = vmatprep.subr.bf16.mxu0 0
        %767 = vmatpush1.bf16.msra.mxu0 0
        %768 = vmatprep.subr.bf16.mxu0 0
        %769 = vmatpush1.bf16.msra.mxu0 0
        %770 = vmatprep.subr.bf16.mxu0 0
        %771 = vmatpush1.bf16.msra.mxu0 0
        %772 = vmatprep.subr.bf16.mxu0 0
        %773 = vmatpush1.bf16.msra.mxu0 0
        %774 = vmatprep.subr.bf16.mxu0 0
        %775 = vmatpush1.bf16.msra.mxu0 0
        %776 = vmatprep.subr.bf16.mxu0 0
        %777 = vmatpush1.bf16.msra.mxu0 0
        %778 = vmatprep.subr.bf16.mxu0 0
        %779 = vmatpush1.bf16.msra.mxu0 0
        %780 = vmatprep.subr.bf16.mxu0 0
        %781 = vmatpush1.bf16.msra.mxu0 0
        %782 = vmatprep.subr.bf16.mxu0 0
        %783 = vmatpush1.bf16.msra.mxu0 0
        %784 = vmatprep.subr.bf16.mxu0 0
        %785 = vmatpush1.bf16.msra.mxu0 0
        %786 = vmatprep.mubr.bf16.mxu0 0
        %787 = vmatmul.mubr.bf16.gmra.mrb[0].mxu0 %v247
        %v788 = vpop.f32.mrb[0].mxu0
        %v789 = vadd.f32 0.0, %v788
        %v790 = vpop.f32.mrb[0].mxu0
        %v791 = vadd.f32 0.0, %v790
        %v792 = vpop.f32.mrb[0].mxu0
        %v793 = vadd.f32 0.0, %v792
        %v794 = vpop.f32.mrb[0].mxu0
        %v795 = vadd.f32 0.0, %v794
        %796 = vdwg.mxu0
        %v805 = vunpack.c.l.b16 %v646
        %v806 = vunpack.c.h.b16 %v646
        %v807 = vunpack.c.l.b16 %v647
        %v808 = vunpack.c.h.b16 %v647
        %v809 = vunpack.c.l.b16 %v648
        %v810 = vunpack.c.h.b16 %v648
        %v811 = vunpack.c.l.b16 %v649
        %v812 = vunpack.c.h.b16 %v649
        %v813 = vunpack.c.l.b16 %v650
        %v814 = vunpack.c.h.b16 %v650
        %v815 = vunpack.c.l.b16 %v651
        %v816 = vunpack.c.h.b16 %v651
        %v817 = vunpack.c.l.b16 %v652
        %v818 = vunpack.c.h.b16 %v652
        %v819 = vunpack.c.l.b16 %v653
        %v820 = vunpack.c.h.b16 %v653
        %v821 = vpack.c.b16 %v809, %v805
        %v822 = vpack.c.b16 %v810, %v806
        %v823 = vpack.c.b16 %v811, %v807
        %v824 = vpack.c.b16 %v812, %v808
        %v825 = vpack.c.b16 %v817, %v813
        %v826 = vpack.c.b16 %v818, %v814
        %v827 = vpack.c.b16 %v819, %v815
        %v828 = vpack.c.b16 %v820, %v816
        %v834 = vsel %vm249, %v825, 0
        %v837 = vsel %vm249, %v826, 0
        %v840 = vsel %vm249, %v827, 0
        %v843 = vsel %vm249, %v828, 0
        %845 = vmatprep.subr.bf16.mxu0 %v822
        %846 = vmatpush1.bf16.msra.mxu0 %v821
        %847 = vmatprep.subr.bf16.mxu0 %v837
        %848 = vmatpush1.bf16.msra.mxu0 %v834
        %849 = vmatprep.subr.bf16.mxu0 0
        %850 = vmatpush1.bf16.msra.mxu0 0
        %851 = vmatprep.subr.bf16.mxu0 0
        %852 = vmatpush1.bf16.msra.mxu0 0
        %853 = vmatprep.subr.bf16.mxu0 0
        %854 = vmatpush1.bf16.msra.mxu0 0
        %855 = vmatprep.subr.bf16.mxu0 0
        %856 = vmatpush1.bf16.msra.mxu0 0
        %857 = vmatprep.subr.bf16.mxu0 0
        %858 = vmatpush1.bf16.msra.mxu0 0
        %859 = vmatprep.subr.bf16.mxu0 0
        %860 = vmatpush1.bf16.msra.mxu0 0
        %861 = vmatprep.subr.bf16.mxu0 0
        %862 = vmatpush1.bf16.msra.mxu0 0
        %863 = vmatprep.subr.bf16.mxu0 0
        %864 = vmatpush1.bf16.msra.mxu0 0
        %865 = vmatprep.subr.bf16.mxu0 0
        %866 = vmatpush1.bf16.msra.mxu0 0
        %867 = vmatprep.subr.bf16.mxu0 0
        %868 = vmatpush1.bf16.msra.mxu0 0
        %869 = vmatprep.subr.bf16.mxu0 0
        %870 = vmatpush1.bf16.msra.mxu0 0
        %871 = vmatprep.subr.bf16.mxu0 0
        %872 = vmatpush1.bf16.msra.mxu0 0
        %873 = vmatprep.subr.bf16.mxu0 0
        %874 = vmatpush1.bf16.msra.mxu0 0
        %875 = vmatprep.subr.bf16.mxu0 0
        %876 = vmatpush1.bf16.msra.mxu0 0
        %877 = vmatprep.mubr.bf16.mxu0 0
        %878 = vmatmul.mubr.bf16.gmra.mrb[0].mxu0 %v385
        %v879 = vpop.f32.mrb[0].mxu0
        %v880 = vadd.f32 %v746, %v879
        %v881 = vpop.f32.mrb[0].mxu0
        %v882 = vadd.f32 %v748, %v881
        %v883 = vpop.f32.mrb[0].mxu0
        %v884 = vadd.f32 %v750, %v883
        %v885 = vpop.f32.mrb[0].mxu0
        %v886 = vadd.f32 %v752, %v885
        %887 = vdwg.mxu0
        %888 = vmatprep.subr.bf16.mxu0 %v824
        %889 = vmatpush1.bf16.msra.mxu0 %v823
        %890 = vmatprep.subr.bf16.mxu0 %v843
        %891 = vmatpush1.bf16.msra.mxu0 %v840
        %892 = vmatprep.subr.bf16.mxu0 0
        %893 = vmatpush1.bf16.msra.mxu0 0
        %894 = vmatprep.subr.bf16.mxu0 0
        %895 = vmatpush1.bf16.msra.mxu0 0
        %896 = vmatprep.subr.bf16.mxu0 0
        %897 = vmatpush1.bf16.msra.mxu0 0
        %898 = vmatprep.subr.bf16.mxu0 0
        %899 = vmatpush1.bf16.msra.mxu0 0
        %900 = vmatprep.subr.bf16.mxu0 0
        %901 = vmatpush1.bf16.msra.mxu0 0
        %902 = vmatprep.subr.bf16.mxu0 0
        %903 = vmatpush1.bf16.msra.mxu0 0
        %904 = vmatprep.subr.bf16.mxu0 0
        %905 = vmatpush1.bf16.msra.mxu0 0
        %906 = vmatprep.subr.bf16.mxu0 0
        %907 = vmatpush1.bf16.msra.mxu0 0
        %908 = vmatprep.subr.bf16.mxu0 0
        %909 = vmatpush1.bf16.msra.mxu0 0
        %910 = vmatprep.subr.bf16.mxu0 0
        %911 = vmatpush1.bf16.msra.mxu0 0
        %912 = vmatprep.subr.bf16.mxu0 0
        %913 = vmatpush1.bf16.msra.mxu0 0
        %914 = vmatprep.subr.bf16.mxu0 0
        %915 = vmatpush1.bf16.msra.mxu0 0
        %916 = vmatprep.subr.bf16.mxu0 0
        %917 = vmatpush1.bf16.msra.mxu0 0
        %918 = vmatprep.subr.bf16.mxu0 0
        %919 = vmatpush1.bf16.msra.mxu0 0
        %920 = vmatprep.mubr.bf16.mxu0 0
        %921 = vmatmul.mubr.bf16.gmra.mrb[0].mxu0 %v385
        %v922 = vpop.f32.mrb[0].mxu0
        %v923 = vadd.f32 %v789, %v922
        %v924 = vpop.f32.mrb[0].mxu0
        %v925 = vadd.f32 %v791, %v924
        %v926 = vpop.f32.mrb[0].mxu0
        %v927 = vadd.f32 %v793, %v926
        %v928 = vpop.f32.mrb[0].mxu0
        %v929 = vadd.f32 %v795, %v928
        %930 = vdwg.mxu0
        %s931 = scalar_lea.vmem %s1, 320
        %v932 = vld [vmem:[%s931] sm:$0xff]
        %v933 = vld [vmem:[%s931 + $0x8] sm:$0xff]
        %v934 = vld [vmem:[%s931 + $0x10] sm:$0xff]
        %v935 = vld [vmem:[%s931 + $0x18] sm:$0xff]
        %v936 = vld [vmem:[%s931 + $0x20] sm:$0xff]
        %v937 = vld [vmem:[%s931 + $0x28] sm:$0xff]
        %v938 = vld [vmem:[%s931 + $0x30] sm:$0x77]
        %v939 = vld [vmem:[%s931 + $0x38] sm:$0x77]
        %v948 = vunpack.c.l.b16 %v932
        %v949 = vunpack.c.h.b16 %v932
        %v950 = vunpack.c.l.b16 %v933
        %v951 = vunpack.c.h.b16 %v933
        %v952 = vunpack.c.l.b16 %v934
        %v953 = vunpack.c.h.b16 %v934
        %v954 = vunpack.c.l.b16 %v935
        %v955 = vunpack.c.h.b16 %v935
        %v956 = vunpack.c.l.b16 %v936
        %v957 = vunpack.c.h.b16 %v936
        %v958 = vunpack.c.l.b16 %v937
        %v959 = vunpack.c.h.b16 %v937
        %v960 = vunpack.c.l.b16 %v938
        %v961 = vunpack.c.h.b16 %v938
        %v962 = vunpack.c.l.b16 %v939
        %v963 = vunpack.c.h.b16 %v939
        %v964 = vpack.c.b16 %v952, %v948
        %v965 = vpack.c.b16 %v953, %v949
        %v966 = vpack.c.b16 %v954, %v950
        %v967 = vpack.c.b16 %v955, %v951
        %v968 = vpack.c.b16 %v960, %v956
        %v969 = vpack.c.b16 %v961, %v957
        %v970 = vpack.c.b16 %v962, %v958
        %v971 = vpack.c.b16 %v963, %v959
        %v977 = vsel %vm249, %v968, 0
        %v980 = vsel %vm249, %v969, 0
        %v983 = vsel %vm249, %v970, 0
        %v986 = vsel %vm249, %v971, 0
        %988 = vmatprep.subr.bf16.mxu0 %v965
        %989 = vmatpush1.bf16.msra.mxu0 %v964
        %990 = vmatprep.subr.bf16.mxu0 %v980
        %991 = vmatpush1.bf16.msra.mxu0 %v977
        %992 = vmatprep.subr.bf16.mxu0 0
        %993 = vmatpush1.bf16.msra.mxu0 0
        %994 = vmatprep.subr.bf16.mxu0 0
        %995 = vmatpush1.bf16.msra.mxu0 0
        %996 = vmatprep.subr.bf16.mxu0 0
        %997 = vmatpush1.bf16.msra.mxu0 0
        %998 = vmatprep.subr.bf16.mxu0 0
        %999 = vmatpush1.bf16.msra.mxu0 0
        %1000 = vmatprep.subr.bf16.mxu0 0
        %1001 = vmatpush1.bf16.msra.mxu0 0
        %1002 = vmatprep.subr.bf16.mxu0 0
        %1003 = vmatpush1.bf16.msra.mxu0 0
        %1004 = vmatprep.subr.bf16.mxu0 0
        %1005 = vmatpush1.bf16.msra.mxu0 0
        %1006 = vmatprep.subr.bf16.mxu0 0
        %1007 = vmatpush1.bf16.msra.mxu0 0
        %1008 = vmatprep.subr.bf16.mxu0 0
        %1009 = vmatpush1.bf16.msra.mxu0 0
        %1010 = vmatprep.subr.bf16.mxu0 0
        %1011 = vmatpush1.bf16.msra.mxu0 0
        %1012 = vmatprep.subr.bf16.mxu0 0
        %1013 = vmatpush1.bf16.msra.mxu0 0
        %1014 = vmatprep.subr.bf16.mxu0 0
        %1015 = vmatpush1.bf16.msra.mxu0 0
        %1016 = vmatprep.subr.bf16.mxu0 0
        %1017 = vmatpush1.bf16.msra.mxu0 0
        %1018 = vmatprep.subr.bf16.mxu0 0
        %1019 = vmatpush1.bf16.msra.mxu0 0
        %1020 = vmatprep.mubr.bf16.mxu0 0
        %1021 = vmatmul.mubr.bf16.gmra.mrb[0].mxu0 %v537
        %v1022 = vpop.f32.mrb[0].mxu0
        %v1023 = vadd.f32 0.0, %v1022
        %v1024 = vpop.f32.mrb[0].mxu0
        %v1025 = vadd.f32 0.0, %v1024
        %v1026 = vpop.f32.mrb[0].mxu0
        %v1027 = vadd.f32 0.0, %v1026
        %v1028 = vpop.f32.mrb[0].mxu0
        %v1029 = vadd.f32 0.0, %v1028
        %1030 = vdwg.mxu0
        %1031 = vmatprep.subr.bf16.mxu0 %v967
        %1032 = vmatpush1.bf16.msra.mxu0 %v966
        %1033 = vmatprep.subr.bf16.mxu0 %v986
        %1034 = vmatpush1.bf16.msra.mxu0 %v983
        %1035 = vmatprep.subr.bf16.mxu0 0
        %1036 = vmatpush1.bf16.msra.mxu0 0
        %1037 = vmatprep.subr.bf16.mxu0 0
        %1038 = vmatpush1.bf16.msra.mxu0 0
        %1039 = vmatprep.subr.bf16.mxu0 0
        %1040 = vmatpush1.bf16.msra.mxu0 0
        %1041 = vmatprep.subr.bf16.mxu0 0
        %1042 = vmatpush1.bf16.msra.mxu0 0
        %1043 = vmatprep.subr.bf16.mxu0 0
        %1044 = vmatpush1.bf16.msra.mxu0 0
        %1045 = vmatprep.subr.bf16.mxu0 0
        %1046 = vmatpush1.bf16.msra.mxu0 0
        %1047 = vmatprep.subr.bf16.mxu0 0
        %1048 = vmatpush1.bf16.msra.mxu0 0
        %1049 = vmatprep.subr.bf16.mxu0 0
        %1050 = vmatpush1.bf16.msra.mxu0 0
        %1051 = vmatprep.subr.bf16.mxu0 0
        %1052 = vmatpush1.bf16.msra.mxu0 0
        %1053 = vmatprep.subr.bf16.mxu0 0
        %1054 = vmatpush1.bf16.msra.mxu0 0
        %1055 = vmatprep.subr.bf16.mxu0 0
        %1056 = vmatpush1.bf16.msra.mxu0 0
        %1057 = vmatprep.subr.bf16.mxu0 0
        %1058 = vmatpush1.bf16.msra.mxu0 0
        %1059 = vmatprep.subr.bf16.mxu0 0
        %1060 = vmatpush1.bf16.msra.mxu0 0
        %1061 = vmatprep.subr.bf16.mxu0 0
        %1062 = vmatpush1.bf16.msra.mxu0 0
        %1063 = vmatprep.mubr.bf16.mxu0 0
        %1064 = vmatmul.mubr.bf16.gmra.mrb[0].mxu0 %v537
        %v1065 = vpop.f32.mrb[0].mxu0
        %v1066 = vadd.f32 0.0, %v1065
        %v1067 = vpop.f32.mrb[0].mxu0
        %v1068 = vadd.f32 0.0, %v1067
        %v1069 = vpop.f32.mrb[0].mxu0
        %v1070 = vadd.f32 0.0, %v1069
        %v1071 = vpop.f32.mrb[0].mxu0
        %v1072 = vadd.f32 0.0, %v1071
        %1073 = vdwg.mxu0
        %v1074 = vadd.f32 %v880, %v1023
        %v1075 = vadd.f32 %v882, %v1025
        %v1076 = vadd.f32 %v923, %v1066
        %v1077 = vadd.f32 %v925, %v1068
        %v1078 = vadd.f32 %v884, %v1027
        %v1079 = vadd.f32 %v886, %v1029
        %v1080 = vadd.f32 %v927, %v1070
        %v1081 = vadd.f32 %v929, %v1072
        %v1082 = vmax.f32 %v637, %v1074
        %v1083 = vmax.f32 %v638, %v1075
        %v1084 = vmax.f32 %v639, %v1076
        %v1085 = vmax.f32 %v640, %v1077
        %v1086 = vmax.f32 %v641, %v1078
        %v1087 = vmax.f32 %v642, %v1079
        %v1088 = vmax.f32 %v643, %v1080
        %v1089 = vmax.f32 %v644, %v1081
        %1090 = vmatprep.subr.bf16.mxu0 %v234
        %1091 = vmatpush1.bf16.msra.mxu0 %v233
        %1092 = vmatprep.subr.bf16.mxu0 %v254
        %1093 = vmatpush1.bf16.msra.mxu0 %v251
        %1094 = vmatprep.subr.bf16.mxu0 0
        %1095 = vmatpush1.bf16.msra.mxu0 0
        %1096 = vmatprep.subr.bf16.mxu0 0
        %1097 = vmatpush1.bf16.msra.mxu0 0
        %1098 = vmatprep.subr.bf16.mxu0 0
        %1099 = vmatpush1.bf16.msra.mxu0 0
        %1100 = vmatprep.subr.bf16.mxu0 0
        %1101 = vmatpush1.bf16.msra.mxu0 0
        %1102 = vmatprep.subr.bf16.mxu0 0
        %1103 = vmatpush1.bf16.msra.mxu0 0
        %1104 = vmatprep.subr.bf16.mxu0 0
        %1105 = vmatpush1.bf16.msra.mxu0 0
        %1106 = vmatprep.subr.bf16.mxu0 0
        %1107 = vmatpush1.bf16.msra.mxu0 0
        %1108 = vmatprep.subr.bf16.mxu0 0
        %1109 = vmatpush1.bf16.msra.mxu0 0
        %1110 = vmatprep.subr.bf16.mxu0 0
        %1111 = vmatpush1.bf16.msra.mxu0 0
        %1112 = vmatprep.subr.bf16.mxu0 0
        %1113 = vmatpush1.bf16.msra.mxu0 0
        %1114 = vmatprep.subr.bf16.mxu0 0
        %1115 = vmatpush1.bf16.msra.mxu0 0
        %1116 = vmatprep.subr.bf16.mxu0 0
        %1117 = vmatpush1.bf16.msra.mxu0 0
        %1118 = vmatprep.subr.bf16.mxu0 0
        %1119 = vmatpush1.bf16.msra.mxu0 0
        %1120 = vmatprep.subr.bf16.mxu0 0
        %1121 = vmatpush1.bf16.msra.mxu0 0
        %1122 = vmatprep.mubr.bf16.mxu0 0
        %1123 = vmatmul.mubr.bf16.gmra.mrb[0].mxu0 %v537
        %v1124 = vpop.f32.mrb[0].mxu0
        %v1125 = vadd.f32 0.0, %v1124
        %v1126 = vpop.f32.mrb[0].mxu0
        %v1127 = vadd.f32 0.0, %v1126
        %v1128 = vpop.f32.mrb[0].mxu0
        %v1129 = vadd.f32 0.0, %v1128
        %v1130 = vpop.f32.mrb[0].mxu0
        %v1131 = vadd.f32 0.0, %v1130
        %1132 = vdwg.mxu0
        %1133 = vmatprep.subr.bf16.mxu0 %v236
        %1134 = vmatpush1.bf16.msra.mxu0 %v235
        %1135 = vmatprep.subr.bf16.mxu0 %v260
        %1136 = vmatpush1.bf16.msra.mxu0 %v257
        %1137 = vmatprep.subr.bf16.mxu0 0
        %1138 = vmatpush1.bf16.msra.mxu0 0
        %1139 = vmatprep.subr.bf16.mxu0 0
        %1140 = vmatpush1.bf16.msra.mxu0 0
        %1141 = vmatprep.subr.bf16.mxu0 0
        %1142 = vmatpush1.bf16.msra.mxu0 0
        %1143 = vmatprep.subr.bf16.mxu0 0
        %1144 = vmatpush1.bf16.msra.mxu0 0
        %1145 = vmatprep.subr.bf16.mxu0 0
        %1146 = vmatpush1.bf16.msra.mxu0 0
        %1147 = vmatprep.subr.bf16.mxu0 0
        %1148 = vmatpush1.bf16.msra.mxu0 0
        %1149 = vmatprep.subr.bf16.mxu0 0
        %1150 = vmatpush1.bf16.msra.mxu0 0
        %1151 = vmatprep.subr.bf16.mxu0 0
        %1152 = vmatpush1.bf16.msra.mxu0 0
        %1153 = vmatprep.subr.bf16.mxu0 0
        %1154 = vmatpush1.bf16.msra.mxu0 0
        %1155 = vmatprep.subr.bf16.mxu0 0
        %1156 = vmatpush1.bf16.msra.mxu0 0
        %1157 = vmatprep.subr.bf16.mxu0 0
        %1158 = vmatpush1.bf16.msra.mxu0 0
        %1159 = vmatprep.subr.bf16.mxu0 0
        %1160 = vmatpush1.bf16.msra.mxu0 0
        %1161 = vmatprep.subr.bf16.mxu0 0
        %1162 = vmatpush1.bf16.msra.mxu0 0
        %1163 = vmatprep.subr.bf16.mxu0 0
        %1164 = vmatpush1.bf16.msra.mxu0 0
        %1165 = vmatprep.mubr.bf16.mxu0 0
        %1166 = vmatmul.mubr.bf16.gmra.mrb[0].mxu0 %v537
        %v1167 = vpop.f32.mrb[0].mxu0
        %v1168 = vadd.f32 0.0, %v1167
        %v1169 = vpop.f32.mrb[0].mxu0
        %v1170 = vadd.f32 0.0, %v1169
        %v1171 = vpop.f32.mrb[0].mxu0
        %v1172 = vadd.f32 0.0, %v1171
        %v1173 = vpop.f32.mrb[0].mxu0
        %v1174 = vadd.f32 0.0, %v1173
        %1175 = vdwg.mxu0
        %1176 = vmatprep.subr.bf16.mxu0 %v373
        %1177 = vmatpush1.bf16.msra.mxu0 %v372
        %1178 = vmatprep.subr.bf16.mxu0 %v391
        %1179 = vmatpush1.bf16.msra.mxu0 %v388
        %1180 = vmatprep.subr.bf16.mxu0 0
        %1181 = vmatpush1.bf16.msra.mxu0 0
        %1182 = vmatprep.subr.bf16.mxu0 0
        %1183 = vmatpush1.bf16.msra.mxu0 0
        %1184 = vmatprep.subr.bf16.mxu0 0
        %1185 = vmatpush1.bf16.msra.mxu0 0
        %1186 = vmatprep.subr.bf16.mxu0 0
        %1187 = vmatpush1.bf16.msra.mxu0 0
        %1188 = vmatprep.subr.bf16.mxu0 0
        %1189 = vmatpush1.bf16.msra.mxu0 0
        %1190 = vmatprep.subr.bf16.mxu0 0
        %1191 = vmatpush1.bf16.msra.mxu0 0
        %1192 = vmatprep.subr.bf16.mxu0 0
        %1193 = vmatpush1.bf16.msra.mxu0 0
        %1194 = vmatprep.subr.bf16.mxu0 0
        %1195 = vmatpush1.bf16.msra.mxu0 0
        %1196 = vmatprep.subr.bf16.mxu0 0
        %1197 = vmatpush1.bf16.msra.mxu0 0
        %1198 = vmatprep.subr.bf16.mxu0 0
        %1199 = vmatpush1.bf16.msra.mxu0 0
        %1200 = vmatprep.subr.bf16.mxu0 0
        %1201 = vmatpush1.bf16.msra.mxu0 0
        %1202 = vmatprep.subr.bf16.mxu0 0
        %1203 = vmatpush1.bf16.msra.mxu0 0
        %1204 = vmatprep.subr.bf16.mxu0 0
        %1205 = vmatpush1.bf16.msra.mxu0 0
        %1206 = vmatprep.subr.bf16.mxu0 0
        %1207 = vmatpush1.bf16.msra.mxu0 0
        %1208 = vmatprep.mubr.bf16.mxu0 0
        %1209 = vmatmul.mubr.bf16.gmra.mrb[0].mxu0 %v247
        %v1210 = vpop.f32.mrb[0].mxu0
        %v1211 = vadd.f32 %v1125, %v1210
        %v1212 = vpop.f32.mrb[0].mxu0
        %v1213 = vadd.f32 %v1127, %v1212
        %v1214 = vpop.f32.mrb[0].mxu0
        %v1215 = vadd.f32 %v1129, %v1214
        %v1216 = vpop.f32.mrb[0].mxu0
        %v1217 = vadd.f32 %v1131, %v1216
        %1218 = vdwg.mxu0
        %1219 = vmatprep.subr.bf16.mxu0 %v375
        %1220 = vmatpush1.bf16.msra.mxu0 %v374
        %1221 = vmatprep.subr.bf16.mxu0 %v397
        %1222 = vmatpush1.bf16.msra.mxu0 %v394
        %1223 = vmatprep.subr.bf16.mxu0 0
        %1224 = vmatpush1.bf16.msra.mxu0 0
        %1225 = vmatprep.subr.bf16.mxu0 0
        %1226 = vmatpush1.bf16.msra.mxu0 0
        %1227 = vmatprep.subr.bf16.mxu0 0
        %1228 = vmatpush1.bf16.msra.mxu0 0
        %1229 = vmatprep.subr.bf16.mxu0 0
        %1230 = vmatpush1.bf16.msra.mxu0 0
        %1231 = vmatprep.subr.bf16.mxu0 0
        %1232 = vmatpush1.bf16.msra.mxu0 0
        %1233 = vmatprep.subr.bf16.mxu0 0
        %1234 = vmatpush1.bf16.msra.mxu0 0
        %1235 = vmatprep.subr.bf16.mxu0 0
        %1236 = vmatpush1.bf16.msra.mxu0 0
        %1237 = vmatprep.subr.bf16.mxu0 0
        %1238 = vmatpush1.bf16.msra.mxu0 0
        %1239 = vmatprep.subr.bf16.mxu0 0
        %1240 = vmatpush1.bf16.msra.mxu0 0
        %1241 = vmatprep.subr.bf16.mxu0 0
        %1242 = vmatpush1.bf16.msra.mxu0 0
        %1243 = vmatprep.subr.bf16.mxu0 0
        %1244 = vmatpush1.bf16.msra.mxu0 0
        %1245 = vmatprep.subr.bf16.mxu0 0
        %1246 = vmatpush1.bf16.msra.mxu0 0
        %1247 = vmatprep.subr.bf16.mxu0 0
        %1248 = vmatpush1.bf16.msra.mxu0 0
        %1249 = vmatprep.subr.bf16.mxu0 0
        %1250 = vmatpush1.bf16.msra.mxu0 0
        %1251 = vmatprep.mubr.bf16.mxu0 0
        %1252 = vmatmul.mubr.bf16.gmra.mrb[0].mxu0 %v247
        %v1253 = vpop.f32.mrb[0].mxu0
        %v1254 = vadd.f32 %v1168, %v1253
        %v1255 = vpop.f32.mrb[0].mxu0
        %v1256 = vadd.f32 %v1170, %v1255
        %v1257 = vpop.f32.mrb[0].mxu0
        %v1258 = vadd.f32 %v1172, %v1257
        %v1259 = vpop.f32.mrb[0].mxu0
        %v1260 = vadd.f32 %v1174, %v1259
        %1261 = vdwg.mxu0
        %v1262 = vshrl.u32 %v191, 16
        %v1264 = vshll.u32 %v191, 16
        %v1266 = vrot.slane %v1264, 1
        %v1267 = vor.u32 %v1262, %v1266
        %v1269 = vsel %vm245, %v1267, 0
        %1271 = vmatprep.subr.bf16.mxu0 %v525
        %1272 = vmatpush1.bf16.msra.mxu0 %v524
        %1273 = vmatprep.subr.bf16.mxu0 %v543
        %1274 = vmatpush1.bf16.msra.mxu0 %v540
        %1275 = vmatprep.subr.bf16.mxu0 0
        %1276 = vmatpush1.bf16.msra.mxu0 0
        %1277 = vmatprep.subr.bf16.mxu0 0
        %1278 = vmatpush1.bf16.msra.mxu0 0
        %1279 = vmatprep.subr.bf16.mxu0 0
        %1280 = vmatpush1.bf16.msra.mxu0 0
        %1281 = vmatprep.subr.bf16.mxu0 0
        %1282 = vmatpush1.bf16.msra.mxu0 0
        %1283 = vmatprep.subr.bf16.mxu0 0
        %1284 = vmatpush1.bf16.msra.mxu0 0
        %1285 = vmatprep.subr.bf16.mxu0 0
        %1286 = vmatpush1.bf16.msra.mxu0 0
        %1287 = vmatprep.subr.bf16.mxu0 0
        %1288 = vmatpush1.bf16.msra.mxu0 0
        %1289 = vmatprep.subr.bf16.mxu0 0
        %1290 = vmatpush1.bf16.msra.mxu0 0
        %1291 = vmatprep.subr.bf16.mxu0 0
        %1292 = vmatpush1.bf16.msra.mxu0 0
        %1293 = vmatprep.subr.bf16.mxu0 0
        %1294 = vmatpush1.bf16.msra.mxu0 0
        %1295 = vmatprep.subr.bf16.mxu0 0
        %1296 = vmatpush1.bf16.msra.mxu0 0
        %1297 = vmatprep.subr.bf16.mxu0 0
        %1298 = vmatpush1.bf16.msra.mxu0 0
        %1299 = vmatprep.subr.bf16.mxu0 0
        %1300 = vmatpush1.bf16.msra.mxu0 0
        %1301 = vmatprep.subr.bf16.mxu0 0
        %1302 = vmatpush1.bf16.msra.mxu0 0
        %1303 = vmatprep.mubr.bf16.mxu0 0
        %1304 = vmatmul.mubr.bf16.gmra.mrb[0].mxu0 %v1269
        %v1305 = vpop.f32.mrb[0].mxu0
        %v1306 = vadd.f32 0.0, %v1305
        %v1307 = vpop.f32.mrb[0].mxu0
        %v1308 = vadd.f32 0.0, %v1307
        %v1309 = vpop.f32.mrb[0].mxu0
        %v1310 = vadd.f32 0.0, %v1309
        %v1311 = vpop.f32.mrb[0].mxu0
        %v1312 = vadd.f32 0.0, %v1311
        %1313 = vdwg.mxu0
        %1314 = vmatprep.subr.bf16.mxu0 %v527
        %1315 = vmatpush1.bf16.msra.mxu0 %v526
        %1316 = vmatprep.subr.bf16.mxu0 %v549
        %1317 = vmatpush1.bf16.msra.mxu0 %v546
        %1318 = vmatprep.subr.bf16.mxu0 0
        %1319 = vmatpush1.bf16.msra.mxu0 0
        %1320 = vmatprep.subr.bf16.mxu0 0
        %1321 = vmatpush1.bf16.msra.mxu0 0
        %1322 = vmatprep.subr.bf16.mxu0 0
        %1323 = vmatpush1.bf16.msra.mxu0 0
        %1324 = vmatprep.subr.bf16.mxu0 0
        %1325 = vmatpush1.bf16.msra.mxu0 0
        %1326 = vmatprep.subr.bf16.mxu0 0
        %1327 = vmatpush1.bf16.msra.mxu0 0
        %1328 = vmatprep.subr.bf16.mxu0 0
        %1329 = vmatpush1.bf16.msra.mxu0 0
        %1330 = vmatprep.subr.bf16.mxu0 0
        %1331 = vmatpush1.bf16.msra.mxu0 0
        %1332 = vmatprep.subr.bf16.mxu0 0
        %1333 = vmatpush1.bf16.msra.mxu0 0
        %1334 = vmatprep.subr.bf16.mxu0 0
        %1335 = vmatpush1.bf16.msra.mxu0 0
        %1336 = vmatprep.subr.bf16.mxu0 0
        %1337 = vmatpush1.bf16.msra.mxu0 0
        %1338 = vmatprep.subr.bf16.mxu0 0
        %1339 = vmatpush1.bf16.msra.mxu0 0
        %1340 = vmatprep.subr.bf16.mxu0 0
        %1341 = vmatpush1.bf16.msra.mxu0 0
        %1342 = vmatprep.subr.bf16.mxu0 0
        %1343 = vmatpush1.bf16.msra.mxu0 0
        %1344 = vmatprep.subr.bf16.mxu0 0
        %1345 = vmatpush1.bf16.msra.mxu0 0
        %1346 = vmatprep.mubr.bf16.mxu0 0
        %1347 = vmatmul.mubr.bf16.gmra.mrb[0].mxu0 %v1269
        %v1348 = vpop.f32.mrb[0].mxu0
        %v1349 = vadd.f32 0.0, %v1348
        %v1350 = vpop.f32.mrb[0].mxu0
        %v1351 = vadd.f32 0.0, %v1350
        %v1352 = vpop.f32.mrb[0].mxu0
        %v1353 = vadd.f32 0.0, %v1352
        %v1354 = vpop.f32.mrb[0].mxu0
        %v1355 = vadd.f32 0.0, %v1354
        %1356 = vdwg.mxu0
        %v1357 = vadd.f32 %v1211, %v1306
        %v1358 = vadd.f32 %v1213, %v1308
        %v1359 = vadd.f32 %v1254, %v1349
        %v1360 = vadd.f32 %v1256, %v1351
        %v1361 = vadd.f32 %v1215, %v1310
        %v1362 = vadd.f32 %v1217, %v1312
        %v1363 = vadd.f32 %v1258, %v1353
        %v1364 = vadd.f32 %v1260, %v1355
        %v1365 = vmax.f32 %v1082, %v1357
        %v1366 = vmax.f32 %v1083, %v1358
        %v1367 = vmax.f32 %v1084, %v1359
        %v1368 = vmax.f32 %v1085, %v1360
        %v1369 = vmax.f32 %v1086, %v1361
        %v1370 = vmax.f32 %v1087, %v1362
        %v1371 = vmax.f32 %v1088, %v1363
        %v1372 = vmax.f32 %v1089, %v1364
        %1373 = vmatprep.subr.bf16.mxu0 %v688
        %1374 = vmatpush1.bf16.msra.mxu0 %v687
        %1375 = vmatprep.subr.bf16.mxu0 %v703
        %1376 = vmatpush1.bf16.msra.mxu0 %v700
        %1377 = vmatprep.subr.bf16.mxu0 0
        %1378 = vmatpush1.bf16.msra.mxu0 0
        %1379 = vmatprep.subr.bf16.mxu0 0
        %1380 = vmatpush1.bf16.msra.mxu0 0
        %1381 = vmatprep.subr.bf16.mxu0 0
        %1382 = vmatpush1.bf16.msra.mxu0 0
        %1383 = vmatprep.subr.bf16.mxu0 0
        %1384 = vmatpush1.bf16.msra.mxu0 0
        %1385 = vmatprep.subr.bf16.mxu0 0
        %1386 = vmatpush1.bf16.msra.mxu0 0
        %1387 = vmatprep.subr.bf16.mxu0 0
        %1388 = vmatpush1.bf16.msra.mxu0 0
        %1389 = vmatprep.subr.bf16.mxu0 0
        %1390 = vmatpush1.bf16.msra.mxu0 0
        %1391 = vmatprep.subr.bf16.mxu0 0
        %1392 = vmatpush1.bf16.msra.mxu0 0
        %1393 = vmatprep.subr.bf16.mxu0 0
        %1394 = vmatpush1.bf16.msra.mxu0 0
        %1395 = vmatprep.subr.bf16.mxu0 0
        %1396 = vmatpush1.bf16.msra.mxu0 0
        %1397 = vmatprep.subr.bf16.mxu0 0
        %1398 = vmatpush1.bf16.msra.mxu0 0
        %1399 = vmatprep.subr.bf16.mxu0 0
        %1400 = vmatpush1.bf16.msra.mxu0 0
        %1401 = vmatprep.subr.bf16.mxu0 0
        %1402 = vmatpush1.bf16.msra.mxu0 0
        %1403 = vmatprep.subr.bf16.mxu0 0
        %1404 = vmatpush1.bf16.msra.mxu0 0
        %1405 = vmatprep.mubr.bf16.mxu0 0
        %1406 = vmatmul.mubr.bf16.gmra.mrb[0].mxu0 %v537
        %v1407 = vpop.f32.mrb[0].mxu0
        %v1408 = vadd.f32 0.0, %v1407
        %v1409 = vpop.f32.mrb[0].mxu0
        %v1410 = vadd.f32 0.0, %v1409
        %v1411 = vpop.f32.mrb[0].mxu0
        %v1412 = vadd.f32 0.0, %v1411
        %v1413 = vpop.f32.mrb[0].mxu0
        %v1414 = vadd.f32 0.0, %v1413
        %1415 = vdwg.mxu0
        %1416 = vmatprep.subr.bf16.mxu0 %v690
        %1417 = vmatpush1.bf16.msra.mxu0 %v689
        %1418 = vmatprep.subr.bf16.mxu0 %v709
        %1419 = vmatpush1.bf16.msra.mxu0 %v706
        %1420 = vmatprep.subr.bf16.mxu0 0
        %1421 = vmatpush1.bf16.msra.mxu0 0
        %1422 = vmatprep.subr.bf16.mxu0 0
        %1423 = vmatpush1.bf16.msra.mxu0 0
        %1424 = vmatprep.subr.bf16.mxu0 0
        %1425 = vmatpush1.bf16.msra.mxu0 0
        %1426 = vmatprep.subr.bf16.mxu0 0
        %1427 = vmatpush1.bf16.msra.mxu0 0
        %1428 = vmatprep.subr.bf16.mxu0 0
        %1429 = vmatpush1.bf16.msra.mxu0 0
        %1430 = vmatprep.subr.bf16.mxu0 0
        %1431 = vmatpush1.bf16.msra.mxu0 0
        %1432 = vmatprep.subr.bf16.mxu0 0
        %1433 = vmatpush1.bf16.msra.mxu0 0
        %1434 = vmatprep.subr.bf16.mxu0 0
        %1435 = vmatpush1.bf16.msra.mxu0 0
        %1436 = vmatprep.subr.bf16.mxu0 0
        %1437 = vmatpush1.bf16.msra.mxu0 0
        %1438 = vmatprep.subr.bf16.mxu0 0
        %1439 = vmatpush1.bf16.msra.mxu0 0
        %1440 = vmatprep.subr.bf16.mxu0 0
        %1441 = vmatpush1.bf16.msra.mxu0 0
        %1442 = vmatprep.subr.bf16.mxu0 0
        %1443 = vmatpush1.bf16.msra.mxu0 0
        %1444 = vmatprep.subr.bf16.mxu0 0
        %1445 = vmatpush1.bf16.msra.mxu0 0
        %1446 = vmatprep.subr.bf16.mxu0 0
        %1447 = vmatpush1.bf16.msra.mxu0 0
        %1448 = vmatprep.mubr.bf16.mxu0 0
        %1449 = vmatmul.mubr.bf16.gmra.mrb[0].mxu0 %v537
        %v1450 = vpop.f32.mrb[0].mxu0
        %v1451 = vadd.f32 0.0, %v1450
        %v1452 = vpop.f32.mrb[0].mxu0
        %v1453 = vadd.f32 0.0, %v1452
        %v1454 = vpop.f32.mrb[0].mxu0
        %v1455 = vadd.f32 0.0, %v1454
        %v1456 = vpop.f32.mrb[0].mxu0
        %v1457 = vadd.f32 0.0, %v1456
        %1458 = vdwg.mxu0
        %1459 = vmatprep.subr.bf16.mxu0 %v822
        %1460 = vmatpush1.bf16.msra.mxu0 %v821
        %1461 = vmatprep.subr.bf16.mxu0 %v837
        %1462 = vmatpush1.bf16.msra.mxu0 %v834
        %1463 = vmatprep.subr.bf16.mxu0 0
        %1464 = vmatpush1.bf16.msra.mxu0 0
        %1465 = vmatprep.subr.bf16.mxu0 0
        %1466 = vmatpush1.bf16.msra.mxu0 0
        %1467 = vmatprep.subr.bf16.mxu0 0
        %1468 = vmatpush1.bf16.msra.mxu0 0
        %1469 = vmatprep.subr.bf16.mxu0 0
        %1470 = vmatpush1.bf16.msra.mxu0 0
        %1471 = vmatprep.subr.bf16.mxu0 0
        %1472 = vmatpush1.bf16.msra.mxu0 0
        %1473 = vmatprep.subr.bf16.mxu0 0
        %1474 = vmatpush1.bf16.msra.mxu0 0
        %1475 = vmatprep.subr.bf16.mxu0 0
        %1476 = vmatpush1.bf16.msra.mxu0 0
        %1477 = vmatprep.subr.bf16.mxu0 0
        %1478 = vmatpush1.bf16.msra.mxu0 0
        %1479 = vmatprep.subr.bf16.mxu0 0
        %1480 = vmatpush1.bf16.msra.mxu0 0
        %1481 = vmatprep.subr.bf16.mxu0 0
        %1482 = vmatpush1.bf16.msra.mxu0 0
        %1483 = vmatprep.subr.bf16.mxu0 0
        %1484 = vmatpush1.bf16.msra.mxu0 0
        %1485 = vmatprep.subr.bf16.mxu0 0
        %1486 = vmatpush1.bf16.msra.mxu0 0
        %1487 = vmatprep.subr.bf16.mxu0 0
        %1488 = vmatpush1.bf16.msra.mxu0 0
        %1489 = vmatprep.subr.bf16.mxu0 0
        %1490 = vmatpush1.bf16.msra.mxu0 0
        %1491 = vmatprep.mubr.bf16.mxu0 0
        %1492 = vmatmul.mubr.bf16.gmra.mrb[0].mxu0 %v247
        %v1493 = vpop.f32.mrb[0].mxu0
        %v1494 = vadd.f32 %v1408, %v1493
        %v1495 = vpop.f32.mrb[0].mxu0
        %v1496 = vadd.f32 %v1410, %v1495
        %v1497 = vpop.f32.mrb[0].mxu0
        %v1498 = vadd.f32 %v1412, %v1497
        %v1499 = vpop.f32.mrb[0].mxu0
        %v1500 = vadd.f32 %v1414, %v1499
        %1501 = vdwg.mxu0
        %1502 = vmatprep.subr.bf16.mxu0 %v824
        %1503 = vmatpush1.bf16.msra.mxu0 %v823
        %1504 = vmatprep.subr.bf16.mxu0 %v843
        %1505 = vmatpush1.bf16.msra.mxu0 %v840
        %1506 = vmatprep.subr.bf16.mxu0 0
        %1507 = vmatpush1.bf16.msra.mxu0 0
        %1508 = vmatprep.subr.bf16.mxu0 0
        %1509 = vmatpush1.bf16.msra.mxu0 0
        %1510 = vmatprep.subr.bf16.mxu0 0
        %1511 = vmatpush1.bf16.msra.mxu0 0
        %1512 = vmatprep.subr.bf16.mxu0 0
        %1513 = vmatpush1.bf16.msra.mxu0 0
        %1514 = vmatprep.subr.bf16.mxu0 0
        %1515 = vmatpush1.bf16.msra.mxu0 0
        %1516 = vmatprep.subr.bf16.mxu0 0
        %1517 = vmatpush1.bf16.msra.mxu0 0
        %1518 = vmatprep.subr.bf16.mxu0 0
        %1519 = vmatpush1.bf16.msra.mxu0 0
        %1520 = vmatprep.subr.bf16.mxu0 0
        %1521 = vmatpush1.bf16.msra.mxu0 0
        %1522 = vmatprep.subr.bf16.mxu0 0
        %1523 = vmatpush1.bf16.msra.mxu0 0
        %1524 = vmatprep.subr.bf16.mxu0 0
        %1525 = vmatpush1.bf16.msra.mxu0 0
        %1526 = vmatprep.subr.bf16.mxu0 0
        %1527 = vmatpush1.bf16.msra.mxu0 0
        %1528 = vmatprep.subr.bf16.mxu0 0
        %1529 = vmatpush1.bf16.msra.mxu0 0
        %1530 = vmatprep.subr.bf16.mxu0 0
        %1531 = vmatpush1.bf16.msra.mxu0 0
        %1532 = vmatprep.subr.bf16.mxu0 0
        %1533 = vmatpush1.bf16.msra.mxu0 0
        %1534 = vmatprep.mubr.bf16.mxu0 0
        %1535 = vmatmul.mubr.bf16.gmra.mrb[0].mxu0 %v247
        %v1536 = vpop.f32.mrb[0].mxu0
        %v1537 = vadd.f32 %v1451, %v1536
        %v1538 = vpop.f32.mrb[0].mxu0
        %v1539 = vadd.f32 %v1453, %v1538
        %v1540 = vpop.f32.mrb[0].mxu0
        %v1541 = vadd.f32 %v1455, %v1540
        %v1542 = vpop.f32.mrb[0].mxu0
        %v1543 = vadd.f32 %v1457, %v1542
        %1544 = vdwg.mxu0
        %1545 = vmatprep.subr.bf16.mxu0 %v965
        %1546 = vmatpush1.bf16.msra.mxu0 %v964
        %1547 = vmatprep.subr.bf16.mxu0 %v980
        %1548 = vmatpush1.bf16.msra.mxu0 %v977
        %1549 = vmatprep.subr.bf16.mxu0 0
        %1550 = vmatpush1.bf16.msra.mxu0 0
        %1551 = vmatprep.subr.bf16.mxu0 0
        %1552 = vmatpush1.bf16.msra.mxu0 0
        %1553 = vmatprep.subr.bf16.mxu0 0
        %1554 = vmatpush1.bf16.msra.mxu0 0
        %1555 = vmatprep.subr.bf16.mxu0 0
        %1556 = vmatpush1.bf16.msra.mxu0 0
        %1557 = vmatprep.subr.bf16.mxu0 0
        %1558 = vmatpush1.bf16.msra.mxu0 0
        %1559 = vmatprep.subr.bf16.mxu0 0
        %1560 = vmatpush1.bf16.msra.mxu0 0
        %1561 = vmatprep.subr.bf16.mxu0 0
        %1562 = vmatpush1.bf16.msra.mxu0 0
        %1563 = vmatprep.subr.bf16.mxu0 0
        %1564 = vmatpush1.bf16.msra.mxu0 0
        %1565 = vmatprep.subr.bf16.mxu0 0
        %1566 = vmatpush1.bf16.msra.mxu0 0
        %1567 = vmatprep.subr.bf16.mxu0 0
        %1568 = vmatpush1.bf16.msra.mxu0 0
        %1569 = vmatprep.subr.bf16.mxu0 0
        %1570 = vmatpush1.bf16.msra.mxu0 0
        %1571 = vmatprep.subr.bf16.mxu0 0
        %1572 = vmatpush1.bf16.msra.mxu0 0
        %1573 = vmatprep.subr.bf16.mxu0 0
        %1574 = vmatpush1.bf16.msra.mxu0 0
        %1575 = vmatprep.subr.bf16.mxu0 0
        %1576 = vmatpush1.bf16.msra.mxu0 0
        %1577 = vmatprep.mubr.bf16.mxu0 0
        %1578 = vmatmul.mubr.bf16.gmra.mrb[0].mxu0 %v1269
        %v1579 = vpop.f32.mrb[0].mxu0
        %v1580 = vadd.f32 0.0, %v1579
        %v1581 = vpop.f32.mrb[0].mxu0
        %v1582 = vadd.f32 0.0, %v1581
        %v1583 = vpop.f32.mrb[0].mxu0
        %v1584 = vadd.f32 0.0, %v1583
        %v1585 = vpop.f32.mrb[0].mxu0
        %v1586 = vadd.f32 0.0, %v1585
        %1587 = vdwg.mxu0
        %1588 = vmatprep.subr.bf16.mxu0 %v967
        %1589 = vmatpush1.bf16.msra.mxu0 %v966
        %1590 = vmatprep.subr.bf16.mxu0 %v986
        %1591 = vmatpush1.bf16.msra.mxu0 %v983
        %1592 = vmatprep.subr.bf16.mxu0 0
        %1593 = vmatpush1.bf16.msra.mxu0 0
        %1594 = vmatprep.subr.bf16.mxu0 0
        %1595 = vmatpush1.bf16.msra.mxu0 0
        %1596 = vmatprep.subr.bf16.mxu0 0
        %1597 = vmatpush1.bf16.msra.mxu0 0
        %1598 = vmatprep.subr.bf16.mxu0 0
        %1599 = vmatpush1.bf16.msra.mxu0 0
        %1600 = vmatprep.subr.bf16.mxu0 0
        %1601 = vmatpush1.bf16.msra.mxu0 0
        %1602 = vmatprep.subr.bf16.mxu0 0
        %1603 = vmatpush1.bf16.msra.mxu0 0
        %1604 = vmatprep.subr.bf16.mxu0 0
        %1605 = vmatpush1.bf16.msra.mxu0 0
        %1606 = vmatprep.subr.bf16.mxu0 0
        %1607 = vmatpush1.bf16.msra.mxu0 0
        %1608 = vmatprep.subr.bf16.mxu0 0
        %1609 = vmatpush1.bf16.msra.mxu0 0
        %1610 = vmatprep.subr.bf16.mxu0 0
        %1611 = vmatpush1.bf16.msra.mxu0 0
        %1612 = vmatprep.subr.bf16.mxu0 0
        %1613 = vmatpush1.bf16.msra.mxu0 0
        %1614 = vmatprep.subr.bf16.mxu0 0
        %1615 = vmatpush1.bf16.msra.mxu0 0
        %1616 = vmatprep.subr.bf16.mxu0 0
        %1617 = vmatpush1.bf16.msra.mxu0 0
        %1618 = vmatprep.subr.bf16.mxu0 0
        %1619 = vmatpush1.bf16.msra.mxu0 0
        %1620 = vmatprep.mubr.bf16.mxu0 0
        %1621 = vmatmul.mubr.bf16.gmra.mrb[0].mxu0 %v1269
        %v1622 = vpop.f32.mrb[0].mxu0
        %v1623 = vadd.f32 0.0, %v1622
        %v1624 = vpop.f32.mrb[0].mxu0
        %v1625 = vadd.f32 0.0, %v1624
        %v1626 = vpop.f32.mrb[0].mxu0
        %v1627 = vadd.f32 0.0, %v1626
        %v1628 = vpop.f32.mrb[0].mxu0
        %v1629 = vadd.f32 0.0, %v1628
        %1630 = vdwg.mxu0
        %v1631 = vadd.f32 %v1494, %v1580
        %v1632 = vadd.f32 %v1496, %v1582
        %v1633 = vadd.f32 %v1537, %v1623
        %v1634 = vadd.f32 %v1539, %v1625
        %v1635 = vadd.f32 %v1498, %v1584
        %v1636 = vadd.f32 %v1500, %v1586
        %v1637 = vadd.f32 %v1541, %v1627
        %v1638 = vadd.f32 %v1543, %v1629
        %v1639 = vmax.f32 %v1365, %v1631
        %v1640 = vmax.f32 %v1366, %v1632
        %v1641 = vmax.f32 %v1367, %v1633
        %v1642 = vmax.f32 %v1368, %v1634
        %v1643 = vmax.f32 %v1369, %v1635
        %v1644 = vmax.f32 %v1370, %v1636
        %v1645 = vmax.f32 %v1371, %v1637
        %v1646 = vmax.f32 %v1372, %v1638
        %v1647 = vld [vmem:[#allocation2] sm:$0xf]
        %v1649 = vlaneseq
        %v1650 = vshrl.u32 %v1649, 7
        %v1651 = vsub.s32 0, %v1650
        %v1652 = vrot.slane %v1647, %v1651
        %v1653 = vlaneseq
        %v1654 = vshrl.u32 %v1653, 7
        %v1655 = vsub.s32 1, %v1654
        %v1656 = vrot.slane %v1647, %v1655
        %v1657 = vlaneseq
        %v1658 = vshrl.u32 %v1657, 7
        %v1659 = vsub.s32 2, %v1658
        %v1660 = vrot.slane %v1647, %v1659
        %v1661 = vlaneseq
        %v1662 = vshrl.u32 %v1661, 7
        %v1663 = vsub.s32 3, %v1662
        %v1664 = vrot.slane %v1647, %v1663
        %v1669 = vadd.f32 %v1639, %v1652
        %v1670 = vadd.f32 %v1640, %v1656
        %v1671 = vadd.f32 %v1641, %v1660
        %v1672 = vadd.f32 %v1642, %v1664
        %v1673 = vadd.f32 %v1643, %v1652
        %v1674 = vadd.f32 %v1644, %v1656
        %v1675 = vadd.f32 %v1645, %v1660
        %v1676 = vadd.f32 %v1646, %v1664
        %v1677 = vmax.f32 %v1669, 0.0
        %v1678 = vmax.f32 %v1670, 0.0
        %v1679 = vmax.f32 %v1671, 0.0
        %v1680 = vmax.f32 %v1672, 0.0
        %v1681 = vmax.f32 %v1673, 0.0
        %v1682 = vmax.f32 %v1674, 0.0
        %v1683 = vmax.f32 %v1675, 0.0
        %v1684 = vmax.f32 %v1676, 0.0
        %1685 = vst [vmem:[%s183] sm:$0xff] %v1677
        %1686 = vst [vmem:[%s183 + $0x8] sm:$0xff] %v1678
        %1687 = vst [vmem:[%s183 + $0x10] sm:$0xff] %v1679
        %vm1688 = vcmask 523264
        %1689 = vst.msk [vmem:[%s183 + $0x18] sm:$0xff] %vm1688, %v1680
        %1690 = vst [vmem:[%s183 + $0x20] sm:$0x3f] %v1681
        %1691 = vst [vmem:[%s183 + $0x28] sm:$0x3f] %v1682
        %1692 = vst [vmem:[%s183 + $0x30] sm:$0x3f] %v1683
        %vm1693 = vcmask 521216
        %1694 = vst.msk [vmem:[%s183 + $0x38] sm:$0x3f] %vm1693, %v1684
        %p1695 = scmp.lt.s32.totalorder %s15, 1
        %s1696 = scalar_select %p1695, %s15, 1
        %s1697 = smul.addr %s1696, 8
        %s1698 = smul.addr %s1697, 8
        %s1699 = scalar_lea.vmem %s3, %s1698
        // Predicated region
        $region37: #{digit_classifier_forward.3} parent=31 // pred_check
          %p1700 = pneg %p101
        $region38: #{digit_classifier_forward.3} parent=31 // pred_check_branch
          %1702 = sbr.rel (%p1700) target = $region40
        $region39: #{digit_classifier_forward.3} parent=31 // pred_region
          _
        $region40: #{digit_classifier_forward.3} parent=31 // pred_fallthru
          _
      $region32: #{digit_classifier_forward.3} parent=5 // pred_fallthru
        _
      %p1703 = scmp.le.s32.totalorder 2, %s10
      // Predicated region
      $region41: #{digit_classifier_forward.3} parent=5 // pred_check
        %p1704 = pneg %p1703
      $region42: #{digit_classifier_forward.3} parent=5 // pred_check_branch
        %1706 = sbr.rel (%p1704) target = $region44
      $region43: #{digit_classifier_forward.3} parent=5 // pred_region
        %s1707 = ssub.s32 %s10, 2
        // Predicated region
        $region45: #{digit_classifier_forward.3} parent=43 // pred_check
          %p1708 = pneg %p107
        $region46: #{digit_classifier_forward.3} parent=43 // pred_check_branch
          %1710 = sbr.rel (%p1708) target = $region48
        $region47: #{digit_classifier_forward.3} parent=43 // pred_region
          %p1711 = scmp.lt.s32.totalorder %s16, 1
          %s1712 = scalar_select %p1711, %s16, 1
          %s1713 = smul.addr %s1712, 8
          %s1714 = smul.addr %s1713, 8
          %s1715 = scalar_lea.vmem %s3, %s1714
        $region48: #{digit_classifier_forward.3} parent=43 // pred_fallthru
          _
      $region44: #{digit_classifier_forward.3} parent=5 // pred_fallthru
        _
    $region6: #{digit_classifier_forward.3} parent=1 // loop_footer
      %s14 = sadd.s32 1, %s10
    $region7: #{digit_classifier_forward.3} parent=1 // loop_footer_branch
      %9 = sbr.rel target = $region3
    $region8: #{digit_classifier_forward.3} parent=1 // loop_exit
      _
    %1716 = vsyncpa [#allocation3], 1
    %s1717 = scalar_lea.sflag [#allocation3], 1
    %1718 = vsyncpa %s1717, 1

// kernel: digit_classifier_forward.5
$region0: #{digit_classifier_forward.5}
  #allocation0 [shape = 'u32[]', space=smem, size = 0x4, offset = 0x4, fixed_abs, tag = 'smem constant byte address 0x4 - core index']
  #allocation1 [shape = 'u32[144,128]{1,0:T(1,128)}', space=vmem, size = 0x12000, scoped, tag = 'internal scratch']
  %s0 = inlined_call_operand.vmem [shape: f32[8,3136], index: 0, kind: input, shape index: {}]
  %s1 = inlined_call_operand.vmem [shape: bf16[3136,128], index: 1, kind: input, shape index: {}]
  %s2 = inlined_call_operand.vmem [shape: f32[1,128], index: 2, kind: input, shape index: {}]
  %s3 = inlined_call_operand.vmem [shape: bf16[128,128], index: 3, kind: input, shape index: {}]
  %s4 = inlined_call_operand.vmem [shape: f32[1,128], index: 4, kind: input, shape index: {}]
  %s5 = inlined_call_operand.vmem [shape: f32[8,128], index: 5, kind: output, shape index: {}]
  %s6 = sld [smem:[#allocation0]]
  $region30: #{digit_classifier_forward.5} parent=0
    _
  %s8 = ssub.s32 1, %s6
  %s9 = scalar_select 0, %s8, %s6
  // Predicated region
  $region2: #{digit_classifier_forward.5} parent=0 // pred_check
    _
  $region3: #{digit_classifier_forward.5} parent=0 // pred_check_branch
    %11 = sbr.rel (0) target = $region5
  $region4: #{digit_classifier_forward.5} parent=0 // pred_region
    _
  $region5: #{digit_classifier_forward.5} parent=0 // pred_fallthru
    _
  // Predicated region
  $region6: #{digit_classifier_forward.5} parent=0 // pred_check
    _
  $region7: #{digit_classifier_forward.5} parent=0 // pred_check_branch
    %13 = sbr.rel (0) target = $region9
  $region8: #{digit_classifier_forward.5} parent=0 // pred_region
    _
  $region9: #{digit_classifier_forward.5} parent=0 // pred_fallthru
    _
  // Predicated region
  $region10: #{digit_classifier_forward.5} parent=0 // pred_check
    _
  $region11: #{digit_classifier_forward.5} parent=0 // pred_check_branch
    %15 = sbr.rel (0) target = $region13
  $region12: #{digit_classifier_forward.5} parent=0 // pred_region
    _
  $region13: #{digit_classifier_forward.5} parent=0 // pred_fallthru
    _
  // Predicated region
  $region14: #{digit_classifier_forward.5} parent=0 // pred_check
    _
  $region15: #{digit_classifier_forward.5} parent=0 // pred_check_branch
    %17 = sbr.rel (0) target = $region17
  $region16: #{digit_classifier_forward.5} parent=0 // pred_region
    _
  $region17: #{digit_classifier_forward.5} parent=0 // pred_fallthru
    _
  // Predicated region
  $region18: #{digit_classifier_forward.5} parent=0 // pred_check
    _
  $region19: #{digit_classifier_forward.5} parent=0 // pred_check_branch
    %19 = sbr.rel (0) target = $region21
  $region20: #{digit_classifier_forward.5} parent=0 // pred_region
    _
  $region21: #{digit_classifier_forward.5} parent=0 // pred_fallthru
    _
  %v21 = vld [vmem:[%s0] sm:$0xff]
  %v22 = vld [vmem:[%s0 + $0x8] sm:$0xff]
  %v23 = vld [vmem:[%s0 + $0x10] sm:$0xff]
  %v24 = vld [vmem:[%s0 + $0x18] sm:$0xff]
  %v25 = vld [vmem:[%s0 + $0x20] sm:$0xff]
  %v26 = vld [vmem:[%s0 + $0x28] sm:$0xff]
  %v27 = vld [vmem:[%s0 + $0x30] sm:$0xff]
  %v28 = vld [vmem:[%s0 + $0x38] sm:$0xff]
  %v29 = vld [vmem:[%s0 + $0x40] sm:$0xff]
  %v30 = vld [vmem:[%s0 + $0x48] sm:$0xff]
  %v31 = vld [vmem:[%s0 + $0x50] sm:$0xff]
  %v32 = vld [vmem:[%s0 + $0x58] sm:$0xff]
  %v33 = vld [vmem:[%s0 + $0x60] sm:$0xff]
  %v34 = vld [vmem:[%s0 + $0x68] sm:$0xff]
  %v35 = vld [vmem:[%s0 + $0x70] sm:$0xff]
  %v36 = vld [vmem:[%s0 + $0x78] sm:$0xff]
  %v37 = vld [vmem:[%s0 + $0x80] sm:$0xff]
  %v38 = vld [vmem:[%s0 + $0x88] sm:$0xff]
  %v39 = vld [vmem:[%s0 + $0x90] sm:$0xff]
  %v40 = vld [vmem:[%s0 + $0x98] sm:$0xff]
  %v41 = vld [vmem:[%s0 + $0xa0] sm:$0xff]
  %v42 = vld [vmem:[%s0 + $0xa8] sm:$0xff]
  %v43 = vld [vmem:[%s0 + $0xb0] sm:$0xff]
  %v44 = vld [vmem:[%s0 + $0xb8] sm:$0xff]
  %v45 = vld [vmem:[%s0 + $0xc0] sm:$0xff]
  %v46 = vpack.c.bf16 %v21, %v21
  %v47 = vpack.c.bf16 %v22, %v22
  %v48 = vpack.c.bf16 %v23, %v23
  %v49 = vpack.c.bf16 %v24, %v24
  %v50 = vpack.c.bf16 %v25, %v25
  %v51 = vpack.c.bf16 %v26, %v26
  %v52 = vpack.c.bf16 %v27, %v27
  %v53 = vpack.c.bf16 %v28, %v28
  %v54 = vpack.c.bf16 %v29, %v29
  %v55 = vpack.c.bf16 %v30, %v30
  %v56 = vpack.c.bf16 %v31, %v31
  %v57 = vpack.c.bf16 %v32, %v32
  %v58 = vpack.c.bf16 %v33, %v33
  %v59 = vpack.c.bf16 %v34, %v34
  %v60 = vpack.c.bf16 %v35, %v35
  %v61 = vpack.c.bf16 %v36, %v36
  %v62 = vpack.c.bf16 %v37, %v37
  %v63 = vpack.c.bf16 %v38, %v38
  %v64 = vpack.c.bf16 %v39, %v39
  %v65 = vpack.c.bf16 %v40, %v40
  %v66 = vpack.c.bf16 %v41, %v41
  %v67 = vpack.c.bf16 %v42, %v42
  %v68 = vpack.c.bf16 %v43, %v43
  %v69 = vpack.c.bf16 %v44, %v44
  %v70 = vpack.c.bf16 %v45, %v45
  %v71 = vld [vmem:[%s1] sm:$0xf]
  %v72 = vld [vmem:[%s1 + $0x4] sm:$0xf]
  %v73 = vld [vmem:[%s1 + $0x8] sm:$0xf]
  %v74 = vld [vmem:[%s1 + $0xc] sm:$0xf]
  %v75 = vld [vmem:[%s1 + $0x10] sm:$0xf]
  %v76 = vld [vmem:[%s1 + $0x14] sm:$0xf]
  %v77 = vld [vmem:[%s1 + $0x18] sm:$0xf]
  %v78 = vld [vmem:[%s1 + $0x1c] sm:$0xf]
  %v79 = vld [vmem:[%s1 + $0x20] sm:$0xf]
  %v80 = vld [vmem:[%s1 + $0x24] sm:$0xf]
  %v81 = vld [vmem:[%s1 + $0x28] sm:$0xf]
  %v82 = vld [vmem:[%s1 + $0x2c] sm:$0xf]
  %v83 = vld [vmem:[%s1 + $0x30] sm:$0xf]
  %v84 = vld [vmem:[%s1 + $0x34] sm:$0xf]
  %v85 = vld [vmem:[%s1 + $0x38] sm:$0xf]
  %v86 = vld [vmem:[%s1 + $0x3c] sm:$0xf]
  %v87 = vld [vmem:[%s1 + $0x40] sm:$0xf]
  %v88 = vld [vmem:[%s1 + $0x44] sm:$0xf]
  %v89 = vld [vmem:[%s1 + $0x48] sm:$0xf]
  %v90 = vld [vmem:[%s1 + $0x4c] sm:$0xf]
  %v91 = vld [vmem:[%s1 + $0x50] sm:$0xf]
  %v92 = vld [vmem:[%s1 + $0x54] sm:$0xf]
  %v93 = vld [vmem:[%s1 + $0x58] sm:$0xf]
  %v94 = vld [vmem:[%s1 + $0x5c] sm:$0xf]
  %v95 = vld [vmem:[%s1 + $0x60] sm:$0xf]
  %v96 = vld [vmem:[%s1 + $0x64] sm:$0xf]
  %v97 = vld [vmem:[%s1 + $0x68] sm:$0xf]
  %v98 = vld [vmem:[%s1 + $0x6c] sm:$0xf]
  %v99 = vld [vmem:[%s1 + $0x70] sm:$0xf]
  %v100 = vld [vmem:[%s1 + $0x74] sm:$0xf]
  %v101 = vld [vmem:[%s1 + $0x78] sm:$0xf]
  %v102 = vld [vmem:[%s1 + $0x7c] sm:$0xf]
  %v103 = vld [vmem:[%s1 + $0x80] sm:$0xf]
  %v104 = vld [vmem:[%s1 + $0x84] sm:$0xf]
  %v105 = vld [vmem:[%s1 + $0x88] sm:$0xf]
  %v106 = vld [vmem:[%s1 + $0x8c] sm:$0xf]
  %v107 = vld [vmem:[%s1 + $0x90] sm:$0xf]
  %v108 = vld [vmem:[%s1 + $0x94] sm:$0xf]
  %v109 = vld [vmem:[%s1 + $0x98] sm:$0xf]
  %v110 = vld [vmem:[%s1 + $0x9c] sm:$0xf]
  %v111 = vld [vmem:[%s1 + $0xa0] sm:$0xf]
  %v112 = vld [vmem:[%s1 + $0xa4] sm:$0xf]
  %v113 = vld [vmem:[%s1 + $0xa8] sm:$0xf]
  %v114 = vld [vmem:[%s1 + $0xac] sm:$0xf]
  %v115 = vld [vmem:[%s1 + $0xb0] sm:$0xf]
  %v116 = vld [vmem:[%s1 + $0xb4] sm:$0xf]
  %v117 = vld [vmem:[%s1 + $0xb8] sm:$0xf]
  %v118 = vld [vmem:[%s1 + $0xbc] sm:$0xf]
  %v119 = vld [vmem:[%s1 + $0xc0] sm:$0xf]
  %v120 = vld [vmem:[%s1 + $0xc4] sm:$0xf]
  %v121 = vld [vmem:[%s1 + $0xc8] sm:$0xf]
  %v122 = vld [vmem:[%s1 + $0xcc] sm:$0xf]
  %v123 = vld [vmem:[%s1 + $0xd0] sm:$0xf]
  %v124 = vld [vmem:[%s1 + $0xd4] sm:$0xf]
  %v125 = vld [vmem:[%s1 + $0xd8] sm:$0xf]
  %v126 = vld [vmem:[%s1 + $0xdc] sm:$0xf]
  %v127 = vld [vmem:[%s1 + $0xe0] sm:$0xf]
  %v128 = vld [vmem:[%s1 + $0xe4] sm:$0xf]
  %v129 = vld [vmem:[%s1 + $0xe8] sm:$0xf]
  %v130 = vld [vmem:[%s1 + $0xec] sm:$0xf]
  %v131 = vld [vmem:[%s1 + $0xf0] sm:$0xf]
  %v132 = vld [vmem:[%s1 + $0xf4] sm:$0xf]
  %v133 = vld [vmem:[%s1 + $0xf8] sm:$0xf]
  %v134 = vld [vmem:[%s1 + $0xfc] sm:$0xf]
  %v135 = vld [vmem:[%s1 + $0x100] sm:$0xf]
  %v136 = vld [vmem:[%s1 + $0x104] sm:$0xf]
  %v137 = vld [vmem:[%s1 + $0x108] sm:$0xf]
  %v138 = vld [vmem:[%s1 + $0x10c] sm:$0xf]
  %v139 = vld [vmem:[%s1 + $0x110] sm:$0xf]
  %v140 = vld [vmem:[%s1 + $0x114] sm:$0xf]
  %v141 = vld [vmem:[%s1 + $0x118] sm:$0xf]
  %v142 = vld [vmem:[%s1 + $0x11c] sm:$0xf]
  %v143 = vld [vmem:[%s1 + $0x120] sm:$0xf]
  %v144 = vld [vmem:[%s1 + $0x124] sm:$0xf]
  %v145 = vld [vmem:[%s1 + $0x128] sm:$0xf]
  %v146 = vld [vmem:[%s1 + $0x12c] sm:$0xf]
  %v147 = vld [vmem:[%s1 + $0x130] sm:$0xf]
  %v148 = vld [vmem:[%s1 + $0x134] sm:$0xf]
  %v149 = vld [vmem:[%s1 + $0x138] sm:$0xf]
  %v150 = vld [vmem:[%s1 + $0x13c] sm:$0xf]
  %v151 = vld [vmem:[%s1 + $0x140] sm:$0xf]
  %v152 = vld [vmem:[%s1 + $0x144] sm:$0xf]
  %v153 = vld [vmem:[%s1 + $0x148] sm:$0xf]
  %v154 = vld [vmem:[%s1 + $0x14c] sm:$0xf]
  %v155 = vld [vmem:[%s1 + $0x150] sm:$0xf]
  %v156 = vld [vmem:[%s1 + $0x154] sm:$0xf]
  %v157 = vld [vmem:[%s1 + $0x158] sm:$0xf]
  %v158 = vld [vmem:[%s1 + $0x15c] sm:$0xf]
  %v159 = vld [vmem:[%s1 + $0x160] sm:$0xf]
  %v160 = vld [vmem:[%s1 + $0x164] sm:$0xf]
  %v161 = vld [vmem:[%s1 + $0x168] sm:$0xf]
  %v162 = vld [vmem:[%s1 + $0x16c] sm:$0xf]
  %v163 = vld [vmem:[%s1 + $0x170] sm:$0xf]
  %v164 = vld [vmem:[%s1 + $0x174] sm:$0xf]
  %v165 = vld [vmem:[%s1 + $0x178] sm:$0xf]
  %v166 = vld [vmem:[%s1 + $0x17c] sm:$0xf]
  %v167 = vld [vmem:[%s1 + $0x180] sm:$0xf]
  %v168 = vld [vmem:[%s1 + $0x184] sm:$0xf]
  %v169 = vld [vmem:[%s1 + $0x188] sm:$0xf]
  %v170 = vld [vmem:[%s1 + $0x18c] sm:$0xf]
  %v171 = vld [vmem:[%s1 + $0x190] sm:$0xf]
  %v172 = vld [vmem:[%s1 + $0x194] sm:$0xf]
  %v173 = vld [vmem:[%s1 + $0x198] sm:$0xf]
  %v174 = vld [vmem:[%s1 + $0x19c] sm:$0xf]
  %v175 = vld [vmem:[%s1 + $0x1a0] sm:$0xf]
  %v176 = vld [vmem:[%s1 + $0x1a4] sm:$0xf]
  %v177 = vld [vmem:[%s1 + $0x1a8] sm:$0xf]
  %v178 = vld [vmem:[%s1 + $0x1ac] sm:$0xf]
  %v179 = vld [vmem:[%s1 + $0x1b0] sm:$0xf]
  %v180 = vld [vmem:[%s1 + $0x1b4] sm:$0xf]
  %v181 = vld [vmem:[%s1 + $0x1b8] sm:$0xf]
  %v182 = vld [vmem:[%s1 + $0x1bc] sm:$0xf]
  %v183 = vld [vmem:[%s1 + $0x1c0] sm:$0xf]
  %v184 = vld [vmem:[%s1 + $0x1c4] sm:$0xf]
  %v185 = vld [vmem:[%s1 + $0x1c8] sm:$0xf]
  %v186 = vld [vmem:[%s1 + $0x1cc] sm:$0xf]
  %v187 = vld [vmem:[%s1 + $0x1d0] sm:$0xf]
  %v188 = vld [vmem:[%s1 + $0x1d4] sm:$0xf]
  %v189 = vld [vmem:[%s1 + $0x1d8] sm:$0xf]
  %v190 = vld [vmem:[%s1 + $0x1dc] sm:$0xf]
  %v191 = vld [vmem:[%s1 + $0x1e0] sm:$0xf]
  %v192 = vld [vmem:[%s1 + $0x1e4] sm:$0xf]
  %v193 = vld [vmem:[%s1 + $0x1e8] sm:$0xf]
  %v194 = vld [vmem:[%s1 + $0x1ec] sm:$0xf]
  %v195 = vld [vmem:[%s1 + $0x1f0] sm:$0xf]
  %v196 = vld [vmem:[%s1 + $0x1f4] sm:$0xf]
  %v197 = vld [vmem:[%s1 + $0x1f8] sm:$0xf]
  %v198 = vld [vmem:[%s1 + $0x1fc] sm:$0xf]
  %v199 = vld [vmem:[%s1 + $0x200] sm:$0xf]
  %v200 = vld [vmem:[%s1 + $0x204] sm:$0xf]
  %v201 = vld [vmem:[%s1 + $0x208] sm:$0xf]
  %v202 = vld [vmem:[%s1 + $0x20c] sm:$0xf]
  %v203 = vld [vmem:[%s1 + $0x210] sm:$0xf]
  %v204 = vld [vmem:[%s1 + $0x214] sm:$0xf]
  %v205 = vld [vmem:[%s1 + $0x218] sm:$0xf]
  %v206 = vld [vmem:[%s1 + $0x21c] sm:$0xf]
  %v207 = vld [vmem:[%s1 + $0x220] sm:$0xf]
  %v208 = vld [vmem:[%s1 + $0x224] sm:$0xf]
  %v209 = vld [vmem:[%s1 + $0x228] sm:$0xf]
  %v210 = vld [vmem:[%s1 + $0x22c] sm:$0xf]
  %v211 = vld [vmem:[%s1 + $0x230] sm:$0xf]
  %v212 = vld [vmem:[%s1 + $0x234] sm:$0xf]
  %v213 = vld [vmem:[%s1 + $0x238] sm:$0xf]
  %v214 = vld [vmem:[%s1 + $0x23c] sm:$0xf]
  %v215 = vld [vmem:[%s1 + $0x240] sm:$0xf]
  %v216 = vld [vmem:[%s1 + $0x244] sm:$0xf]
  %v217 = vld [vmem:[%s1 + $0x248] sm:$0xf]
  %v218 = vld [vmem:[%s1 + $0x24c] sm:$0xf]
  %v219 = vld [vmem:[%s1 + $0x250] sm:$0xf]
  %v220 = vld [vmem:[%s1 + $0x254] sm:$0xf]
  %v221 = vld [vmem:[%s1 + $0x258] sm:$0xf]
  %v222 = vld [vmem:[%s1 + $0x25c] sm:$0xf]
  %v223 = vld [vmem:[%s1 + $0x260] sm:$0xf]
  %v224 = vld [vmem:[%s1 + $0x264] sm:$0xf]
  %v225 = vld [vmem:[%s1 + $0x268] sm:$0xf]
  %v226 = vld [vmem:[%s1 + $0x26c] sm:$0xf]
  %v227 = vld [vmem:[%s1 + $0x270] sm:$0xf]
  %v228 = vld [vmem:[%s1 + $0x274] sm:$0xf]
  %v229 = vld [vmem:[%s1 + $0x278] sm:$0xf]
  %v230 = vld [vmem:[%s1 + $0x27c] sm:$0xf]
  %v231 = vld [vmem:[%s1 + $0x280] sm:$0xf]
  %v232 = vld [vmem:[%s1 + $0x284] sm:$0xf]
  %v233 = vld [vmem:[%s1 + $0x288] sm:$0xf]
  %v234 = vld [vmem:[%s1 + $0x28c] sm:$0xf]
  %v235 = vld [vmem:[%s1 + $0x290] sm:$0xf]
  %v236 = vld [vmem:[%s1 + $0x294] sm:$0xf]
  %v237 = vld [vmem:[%s1 + $0x298] sm:$0xf]
  %v238 = vld [vmem:[%s1 + $0x29c] sm:$0xf]
  %v239 = vld [vmem:[%s1 + $0x2a0] sm:$0xf]
  %v240 = vld [vmem:[%s1 + $0x2a4] sm:$0xf]
  %v241 = vld [vmem:[%s1 + $0x2a8] sm:$0xf]
  %v242 = vld [vmem:[%s1 + $0x2ac] sm:$0xf]
  %v243 = vld [vmem:[%s1 + $0x2b0] sm:$0xf]
  %v244 = vld [vmem:[%s1 + $0x2b4] sm:$0xf]
  %v245 = vld [vmem:[%s1 + $0x2b8] sm:$0xf]
  %v246 = vld [vmem:[%s1 + $0x2bc] sm:$0xf]
  %v247 = vld [vmem:[%s1 + $0x2c0] sm:$0xf]
  %v248 = vld [vmem:[%s1 + $0x2c4] sm:$0xf]
  %v249 = vld [vmem:[%s1 + $0x2c8] sm:$0xf]
  %v250 = vld [vmem:[%s1 + $0x2cc] sm:$0xf]
  %v251 = vld [vmem:[%s1 + $0x2d0] sm:$0xf]
  %v252 = vld [vmem:[%s1 + $0x2d4] sm:$0xf]
  %v253 = vld [vmem:[%s1 + $0x2d8] sm:$0xf]
  %v254 = vld [vmem:[%s1 + $0x2dc] sm:$0xf]
  %v255 = vld [vmem:[%s1 + $0x2e0] sm:$0xf]
  %v256 = vld [vmem:[%s1 + $0x2e4] sm:$0xf]
  %v257 = vld [vmem:[%s1 + $0x2e8] sm:$0xf]
  %v258 = vld [vmem:[%s1 + $0x2ec] sm:$0xf]
  %v259 = vld [vmem:[%s1 + $0x2f0] sm:$0xf]
  %v260 = vld [vmem:[%s1 + $0x2f4] sm:$0xf]
  %v261 = vld [vmem:[%s1 + $0x2f8] sm:$0xf]
  %v262 = vld [vmem:[%s1 + $0x2fc] sm:$0xf]
  %v263 = vld [vmem:[%s1 + $0x300] sm:$0xf]
  %v264 = vld [vmem:[%s1 + $0x304] sm:$0xf]
  %v265 = vld [vmem:[%s1 + $0x308] sm:$0xf]
  %v266 = vld [vmem:[%s1 + $0x30c] sm:$0xf]
  %v267 = vld [vmem:[%s1 + $0x310] sm:$0xf]
  %v268 = vld [vmem:[%s1 + $0x314] sm:$0xf]
  %v269 = vld [vmem:[%s1 + $0x318] sm:$0xf]
  %v270 = vld [vmem:[%s1 + $0x31c] sm:$0xf]
  %v271 = vld [vmem:[%s1 + $0x320] sm:$0xf]
  %v272 = vld [vmem:[%s1 + $0x324] sm:$0xf]
  %v273 = vld [vmem:[%s1 + $0x328] sm:$0xf]
  %v274 = vld [vmem:[%s1 + $0x32c] sm:$0xf]
  %v275 = vld [vmem:[%s1 + $0x330] sm:$0xf]
  %v276 = vld [vmem:[%s1 + $0x334] sm:$0xf]
  %v277 = vld [vmem:[%s1 + $0x338] sm:$0xf]
  %v278 = vld [vmem:[%s1 + $0x33c] sm:$0xf]
  %v279 = vld [vmem:[%s1 + $0x340] sm:$0xf]
  %v280 = vld [vmem:[%s1 + $0x344] sm:$0xf]
  %v281 = vld [vmem:[%s1 + $0x348] sm:$0xf]
  %v282 = vld [vmem:[%s1 + $0x34c] sm:$0xf]
  %v283 = vld [vmem:[%s1 + $0x350] sm:$0xf]
  %v284 = vld [vmem:[%s1 + $0x354] sm:$0xf]
  %v285 = vld [vmem:[%s1 + $0x358] sm:$0xf]
  %v286 = vld [vmem:[%s1 + $0x35c] sm:$0xf]
  %v287 = vld [vmem:[%s1 + $0x360] sm:$0xf]
  %v288 = vld [vmem:[%s1 + $0x364] sm:$0xf]
  %v289 = vld [vmem:[%s1 + $0x368] sm:$0xf]
  %v290 = vld [vmem:[%s1 + $0x36c] sm:$0xf]
  %v291 = vld [vmem:[%s1 + $0x370] sm:$0xf]
  %v292 = vld [vmem:[%s1 + $0x374] sm:$0xf]
  %v293 = vld [vmem:[%s1 + $0x378] sm:$0xf]
  %v294 = vld [vmem:[%s1 + $0x37c] sm:$0xf]
  %v295 = vld [vmem:[%s1 + $0x380] sm:$0xf]
  %v296 = vld [vmem:[%s1 + $0x384] sm:$0xf]
  %v297 = vld [vmem:[%s1 + $0x388] sm:$0xf]
  %v298 = vld [vmem:[%s1 + $0x38c] sm:$0xf]
  %v299 = vld [vmem:[%s1 + $0x390] sm:$0xf]
  %v300 = vld [vmem:[%s1 + $0x394] sm:$0xf]
  %v301 = vld [vmem:[%s1 + $0x398] sm:$0xf]
  %v302 = vld [vmem:[%s1 + $0x39c] sm:$0xf]
  %v303 = vld [vmem:[%s1 + $0x3a0] sm:$0xf]
  %v304 = vld [vmem:[%s1 + $0x3a4] sm:$0xf]
  %v305 = vld [vmem:[%s1 + $0x3a8] sm:$0xf]
  %v306 = vld [vmem:[%s1 + $0x3ac] sm:$0xf]
  %v307 = vld [vmem:[%s1 + $0x3b0] sm:$0xf]
  %v308 = vld [vmem:[%s1 + $0x3b4] sm:$0xf]
  %v309 = vld [vmem:[%s1 + $0x3b8] sm:$0xf]
  %v310 = vld [vmem:[%s1 + $0x3bc] sm:$0xf]
  %v311 = vld [vmem:[%s1 + $0x3c0] sm:$0xf]
  %v312 = vld [vmem:[%s1 + $0x3c4] sm:$0xf]
  %v313 = vld [vmem:[%s1 + $0x3c8] sm:$0xf]
  %v314 = vld [vmem:[%s1 + $0x3cc] sm:$0xf]
  %v315 = vld [vmem:[%s1 + $0x3d0] sm:$0xf]
  %v316 = vld [vmem:[%s1 + $0x3d4] sm:$0xf]
  %v317 = vld [vmem:[%s1 + $0x3d8] sm:$0xf]
  %v318 = vld [vmem:[%s1 + $0x3dc] sm:$0xf]
  %v319 = vld [vmem:[%s1 + $0x3e0] sm:$0xf]
  %v320 = vld [vmem:[%s1 + $0x3e4] sm:$0xf]
  %v321 = vld [vmem:[%s1 + $0x3e8] sm:$0xf]
  %v322 = vld [vmem:[%s1 + $0x3ec] sm:$0xf]
  %v323 = vld [vmem:[%s1 + $0x3f0] sm:$0xf]
  %v324 = vld [vmem:[%s1 + $0x3f4] sm:$0xf]
  %v325 = vld [vmem:[%s1 + $0x3f8] sm:$0xf]
  %v326 = vld [vmem:[%s1 + $0x3fc] sm:$0xf]
  %v327 = vld [vmem:[%s1 + $0x400] sm:$0xf]
  %v328 = vld [vmem:[%s1 + $0x404] sm:$0xf]
  %v329 = vld [vmem:[%s1 + $0x408] sm:$0xf]
  %v330 = vld [vmem:[%s1 + $0x40c] sm:$0xf]
  %v331 = vld [vmem:[%s1 + $0x410] sm:$0xf]
  %v332 = vld [vmem:[%s1 + $0x414] sm:$0xf]
  %v333 = vld [vmem:[%s1 + $0x418] sm:$0xf]
  %v334 = vld [vmem:[%s1 + $0x41c] sm:$0xf]
  %v335 = vld [vmem:[%s1 + $0x420] sm:$0xf]
  %v336 = vld [vmem:[%s1 + $0x424] sm:$0xf]
  %v337 = vld [vmem:[%s1 + $0x428] sm:$0xf]
  %v338 = vld [vmem:[%s1 + $0x42c] sm:$0xf]
  %v339 = vld [vmem:[%s1 + $0x430] sm:$0xf]
  %v340 = vld [vmem:[%s1 + $0x434] sm:$0xf]
  %v341 = vld [vmem:[%s1 + $0x438] sm:$0xf]
  %v342 = vld [vmem:[%s1 + $0x43c] sm:$0xf]
  %v343 = vld [vmem:[%s1 + $0x440] sm:$0xf]
  %v344 = vld [vmem:[%s1 + $0x444] sm:$0xf]
  %v345 = vld [vmem:[%s1 + $0x448] sm:$0xf]
  %v346 = vld [vmem:[%s1 + $0x44c] sm:$0xf]
  %v347 = vld [vmem:[%s1 + $0x450] sm:$0xf]
  %v348 = vld [vmem:[%s1 + $0x454] sm:$0xf]
  %v349 = vld [vmem:[%s1 + $0x458] sm:$0xf]
  %v350 = vld [vmem:[%s1 + $0x45c] sm:$0xf]
  %v351 = vld [vmem:[%s1 + $0x460] sm:$0xf]
  %v352 = vld [vmem:[%s1 + $0x464] sm:$0xf]
  %v353 = vld [vmem:[%s1 + $0x468] sm:$0xf]
  %v354 = vld [vmem:[%s1 + $0x46c] sm:$0xf]
  %v355 = vld [vmem:[%s1 + $0x470] sm:$0xf]
  %v356 = vld [vmem:[%s1 + $0x474] sm:$0xf]
  %v357 = vld [vmem:[%s1 + $0x478] sm:$0xf]
  %v358 = vld [vmem:[%s1 + $0x47c] sm:$0xf]
  %v359 = vld [vmem:[%s1 + $0x480] sm:$0xf]
  %v360 = vld [vmem:[%s1 + $0x484] sm:$0xf]
  %v361 = vld [vmem:[%s1 + $0x488] sm:$0xf]
  %v362 = vld [vmem:[%s1 + $0x48c] sm:$0xf]
  %v363 = vld [vmem:[%s1 + $0x490] sm:$0xf]
  %v364 = vld [vmem:[%s1 + $0x494] sm:$0xf]
  %v365 = vld [vmem:[%s1 + $0x498] sm:$0xf]
  %v366 = vld [vmem:[%s1 + $0x49c] sm:$0xf]
  %v367 = vld [vmem:[%s1 + $0x4a0] sm:$0xf]
  %v368 = vld [vmem:[%s1 + $0x4a4] sm:$0xf]
  %v369 = vld [vmem:[%s1 + $0x4a8] sm:$0xf]
  %v370 = vld [vmem:[%s1 + $0x4ac] sm:$0xf]
  %v371 = vld [vmem:[%s1 + $0x4b0] sm:$0xf]
  %v372 = vld [vmem:[%s1 + $0x4b4] sm:$0xf]
  %v373 = vld [vmem:[%s1 + $0x4b8] sm:$0xf]
  %v374 = vld [vmem:[%s1 + $0x4bc] sm:$0xf]
  %v375 = vld [vmem:[%s1 + $0x4c0] sm:$0xf]
  %v376 = vld [vmem:[%s1 + $0x4c4] sm:$0xf]
  %v377 = vld [vmem:[%s1 + $0x4c8] sm:$0xf]
  %v378 = vld [vmem:[%s1 + $0x4cc] sm:$0xf]
  %v379 = vld [vmem:[%s1 + $0x4d0] sm:$0xf]
  %v380 = vld [vmem:[%s1 + $0x4d4] sm:$0xf]
  %v381 = vld [vmem:[%s1 + $0x4d8] sm:$0xf]
  %v382 = vld [vmem:[%s1 + $0x4dc] sm:$0xf]
  %v383 = vld [vmem:[%s1 + $0x4e0] sm:$0xf]
  %v384 = vld [vmem:[%s1 + $0x4e4] sm:$0xf]
  %v385 = vld [vmem:[%s1 + $0x4e8] sm:$0xf]
  %v386 = vld [vmem:[%s1 + $0x4ec] sm:$0xf]
  %v387 = vld [vmem:[%s1 + $0x4f0] sm:$0xf]
  %v388 = vld [vmem:[%s1 + $0x4f4] sm:$0xf]
  %v389 = vld [vmem:[%s1 + $0x4f8] sm:$0xf]
  %v390 = vld [vmem:[%s1 + $0x4fc] sm:$0xf]
  %v391 = vld [vmem:[%s1 + $0x500] sm:$0xf]
  %v392 = vld [vmem:[%s1 + $0x504] sm:$0xf]
  %v393 = vld [vmem:[%s1 + $0x508] sm:$0xf]
  %v394 = vld [vmem:[%s1 + $0x50c] sm:$0xf]
  %v395 = vld [vmem:[%s1 + $0x510] sm:$0xf]
  %v396 = vld [vmem:[%s1 + $0x514] sm:$0xf]
  %v397 = vld [vmem:[%s1 + $0x518] sm:$0xf]
  %v398 = vld [vmem:[%s1 + $0x51c] sm:$0xf]
  %v399 = vld [vmem:[%s1 + $0x520] sm:$0xf]
  %v400 = vld [vmem:[%s1 + $0x524] sm:$0xf]
  %v401 = vld [vmem:[%s1 + $0x528] sm:$0xf]
  %v402 = vld [vmem:[%s1 + $0x52c] sm:$0xf]
  %v403 = vld [vmem:[%s1 + $0x530] sm:$0xf]
  %v404 = vld [vmem:[%s1 + $0x534] sm:$0xf]
  %v405 = vld [vmem:[%s1 + $0x538] sm:$0xf]
  %v406 = vld [vmem:[%s1 + $0x53c] sm:$0xf]
  %v407 = vld [vmem:[%s1 + $0x540] sm:$0xf]
  %v408 = vld [vmem:[%s1 + $0x544] sm:$0xf]
  %v409 = vld [vmem:[%s1 + $0x548] sm:$0xf]
  %v410 = vld [vmem:[%s1 + $0x54c] sm:$0xf]
  %v411 = vld [vmem:[%s1 + $0x550] sm:$0xf]
  %v412 = vld [vmem:[%s1 + $0x554] sm:$0xf]
  %v413 = vld [vmem:[%s1 + $0x558] sm:$0xf]
  %v414 = vld [vmem:[%s1 + $0x55c] sm:$0xf]
  %v415 = vld [vmem:[%s1 + $0x560] sm:$0xf]
  %v416 = vld [vmem:[%s1 + $0x564] sm:$0xf]
  %v417 = vld [vmem:[%s1 + $0x568] sm:$0xf]
  %v418 = vld [vmem:[%s1 + $0x56c] sm:$0xf]
  %v419 = vld [vmem:[%s1 + $0x570] sm:$0xf]
  %v420 = vld [vmem:[%s1 + $0x574] sm:$0xf]
  %v421 = vld [vmem:[%s1 + $0x578] sm:$0xf]
  %v422 = vld [vmem:[%s1 + $0x57c] sm:$0xf]
  %v423 = vld [vmem:[%s1 + $0x580] sm:$0xf]
  %v424 = vld [vmem:[%s1 + $0x584] sm:$0xf]
  %v425 = vld [vmem:[%s1 + $0x588] sm:$0xf]
  %v426 = vld [vmem:[%s1 + $0x58c] sm:$0xf]
  %v427 = vld [vmem:[%s1 + $0x590] sm:$0xf]
  %v428 = vld [vmem:[%s1 + $0x594] sm:$0xf]
  %v429 = vld [vmem:[%s1 + $0x598] sm:$0xf]
  %v430 = vld [vmem:[%s1 + $0x59c] sm:$0xf]
  %v431 = vld [vmem:[%s1 + $0x5a0] sm:$0xf]
  %v432 = vld [vmem:[%s1 + $0x5a4] sm:$0xf]
  %v433 = vld [vmem:[%s1 + $0x5a8] sm:$0xf]
  %v434 = vld [vmem:[%s1 + $0x5ac] sm:$0xf]
  %v435 = vld [vmem:[%s1 + $0x5b0] sm:$0xf]
  %v436 = vld [vmem:[%s1 + $0x5b4] sm:$0xf]
  %v437 = vld [vmem:[%s1 + $0x5b8] sm:$0xf]
  %v438 = vld [vmem:[%s1 + $0x5bc] sm:$0xf]
  %v439 = vld [vmem:[%s1 + $0x5c0] sm:$0xf]
  %v440 = vld [vmem:[%s1 + $0x5c4] sm:$0xf]
  %v441 = vld [vmem:[%s1 + $0x5c8] sm:$0xf]
  %v442 = vld [vmem:[%s1 + $0x5cc] sm:$0xf]
  %v443 = vld [vmem:[%s1 + $0x5d0] sm:$0xf]
  %v444 = vld [vmem:[%s1 + $0x5d4] sm:$0xf]
  %v445 = vld [vmem:[%s1 + $0x5d8] sm:$0xf]
  %v446 = vld [vmem:[%s1 + $0x5dc] sm:$0xf]
  %v447 = vld [vmem:[%s1 + $0x5e0] sm:$0xf]
  %v448 = vld [vmem:[%s1 + $0x5e4] sm:$0xf]
  %v449 = vld [vmem:[%s1 + $0x5e8] sm:$0xf]
  %v450 = vld [vmem:[%s1 + $0x5ec] sm:$0xf]
  %v451 = vld [vmem:[%s1 + $0x5f0] sm:$0xf]
  %v452 = vld [vmem:[%s1 + $0x5f4] sm:$0xf]
  %v453 = vld [vmem:[%s1 + $0x5f8] sm:$0xf]
  %v454 = vld [vmem:[%s1 + $0x5fc] sm:$0xf]
  %v455 = vld [vmem:[%s1 + $0x600] sm:$0xf]
  %v456 = vld [vmem:[%s1 + $0x604] sm:$0xf]
  %v457 = vld [vmem:[%s1 + $0x608] sm:$0xf]
  %v458 = vld [vmem:[%s1 + $0x60c] sm:$0xf]
  %v459 = vld [vmem:[%s1 + $0x610] sm:$0xf]
  %v460 = vld [vmem:[%s1 + $0x614] sm:$0xf]
  %v461 = vld [vmem:[%s1 + $0x618] sm:$0xf]
  %v462 = vld [vmem:[%s1 + $0x61c] sm:$0xf]
  %v463 = vld [vmem:[%s2] sm:$0x1]
  %v465 = vlaneseq
  %v466 = vshrl.u32 %v465, 7
  %v467 = vsub.s32 0, %v466
  %v468 = vrot.slane %v463, %v467
  %v862 = vunpack.c.l.b16 %v71
  %v863 = vunpack.c.l.b16 %v72
  %v864 = vunpack.c.l.b16 %v73
  %v865 = vunpack.c.l.b16 %v74
  %v866 = vunpack.c.l.b16 %v75
  %v867 = vunpack.c.l.b16 %v76
  %v868 = vunpack.c.l.b16 %v77
  %v869 = vunpack.c.l.b16 %v78
  %v870 = vunpack.c.l.b16 %v79
  %v871 = vunpack.c.l.b16 %v80
  %v872 = vunpack.c.l.b16 %v81
  %v873 = vunpack.c.l.b16 %v82
  %v874 = vunpack.c.l.b16 %v83
  %v875 = vunpack.c.l.b16 %v84
  %v876 = vunpack.c.l.b16 %v85
  %v877 = vunpack.c.l.b16 %v86
  %v878 = vunpack.c.l.b16 %v87
  %v879 = vunpack.c.l.b16 %v88
  %v880 = vunpack.c.l.b16 %v89
  %v881 = vunpack.c.l.b16 %v90
  %v882 = vunpack.c.l.b16 %v91
  %v883 = vunpack.c.l.b16 %v92
  %v884 = vunpack.c.l.b16 %v93
  %v885 = vunpack.c.l.b16 %v94
  %v886 = vunpack.c.l.b16 %v95
  %v887 = vunpack.c.l.b16 %v96
  %v888 = vunpack.c.l.b16 %v97
  %v889 = vunpack.c.l.b16 %v98
  %v890 = vunpack.c.l.b16 %v99
  %v891 = vunpack.c.l.b16 %v100
  %v892 = vunpack.c.l.b16 %v101
  %v893 = vunpack.c.l.b16 %v102
  %v894 = vunpack.c.l.b16 %v103
  %v895 = vunpack.c.l.b16 %v104
  %v896 = vunpack.c.l.b16 %v105
  %v897 = vunpack.c.l.b16 %v106
  %v898 = vunpack.c.l.b16 %v107
  %v899 = vunpack.c.l.b16 %v108
  %v900 = vunpack.c.l.b16 %v109
  %v901 = vunpack.c.l.b16 %v110
  %v902 = vunpack.c.l.b16 %v111
  %v903 = vunpack.c.l.b16 %v112
  %v904 = vunpack.c.l.b16 %v113
  %v905 = vunpack.c.l.b16 %v114
  %v906 = vunpack.c.l.b16 %v115
  %v907 = vunpack.c.l.b16 %v116
  %v908 = vunpack.c.l.b16 %v117
  %v909 = vunpack.c.l.b16 %v118
  %v910 = vunpack.c.l.b16 %v119
  %v911 = vunpack.c.l.b16 %v120
  %v912 = vunpack.c.l.b16 %v121
  %v913 = vunpack.c.l.b16 %v122
  %v914 = vunpack.c.l.b16 %v123
  %v915 = vunpack.c.l.b16 %v124
  %v916 = vunpack.c.l.b16 %v125
  %v917 = vunpack.c.l.b16 %v126
  %v918 = vunpack.c.l.b16 %v127
  %v919 = vunpack.c.l.b16 %v128
  %v920 = vunpack.c.l.b16 %v129
  %v921 = vunpack.c.l.b16 %v130
  %v922 = vunpack.c.l.b16 %v131
  %v923 = vunpack.c.l.b16 %v132
  %v924 = vunpack.c.l.b16 %v133
  %v925 = vunpack.c.l.b16 %v134
  %v926 = vunpack.c.l.b16 %v135
  %v927 = vunpack.c.l.b16 %v136
  %v928 = vunpack.c.l.b16 %v137
  %v929 = vunpack.c.l.b16 %v138
  %v930 = vunpack.c.l.b16 %v139
  %v931 = vunpack.c.l.b16 %v140
  %v932 = vunpack.c.l.b16 %v141
  %v933 = vunpack.c.l.b16 %v142
  %v934 = vunpack.c.l.b16 %v143
  %v935 = vunpack.c.l.b16 %v144
  %v936 = vunpack.c.l.b16 %v145
  %v937 = vunpack.c.l.b16 %v146
  %v938 = vunpack.c.l.b16 %v147
  %v939 = vunpack.c.l.b16 %v148
  %v940 = vunpack.c.l.b16 %v149
  %v941 = vunpack.c.l.b16 %v150
  %v942 = vunpack.c.l.b16 %v151
  %v943 = vunpack.c.l.b16 %v152
  %v944 = vunpack.c.l.b16 %v153
  %v945 = vunpack.c.l.b16 %v154
  %v946 = vunpack.c.l.b16 %v155
  %v947 = vunpack.c.l.b16 %v156
  %v948 = vunpack.c.l.b16 %v157
  %v949 = vunpack.c.l.b16 %v158
  %v950 = vunpack.c.l.b16 %v159
  %v951 = vunpack.c.l.b16 %v160
  %v952 = vunpack.c.l.b16 %v161
  %v953 = vunpack.c.l.b16 %v162
  %v954 = vunpack.c.l.b16 %v163
  %v955 = vunpack.c.l.b16 %v164
  %v956 = vunpack.c.l.b16 %v165
  %v957 = vunpack.c.l.b16 %v166
  %v958 = vunpack.c.l.b16 %v167
  %v959 = vunpack.c.l.b16 %v168
  %v960 = vunpack.c.l.b16 %v169
  %v961 = vunpack.c.l.b16 %v170
  %v962 = vunpack.c.l.b16 %v171
  %v963 = vunpack.c.l.b16 %v172
  %v964 = vunpack.c.l.b16 %v173
  %v965 = vunpack.c.l.b16 %v174
  %v966 = vunpack.c.l.b16 %v175
  %v967 = vunpack.c.l.b16 %v176
  %v968 = vunpack.c.l.b16 %v177
  %v969 = vunpack.c.l.b16 %v178
  %v970 = vunpack.c.l.b16 %v179
  %v971 = vunpack.c.l.b16 %v180
  %v972 = vunpack.c.l.b16 %v181
  %v973 = vunpack.c.l.b16 %v182
  %v974 = vunpack.c.l.b16 %v183
  %v975 = vunpack.c.l.b16 %v184
  %v976 = vunpack.c.l.b16 %v185
  %v977 = vunpack.c.l.b16 %v186
  %v978 = vunpack.c.l.b16 %v187
  %v979 = vunpack.c.l.b16 %v188
  %v980 = vunpack.c.l.b16 %v189
  %v981 = vunpack.c.l.b16 %v190
  %v982 = vunpack.c.l.b16 %v191
  %v983 = vunpack.c.l.b16 %v192
  %v984 = vunpack.c.l.b16 %v193
  %v985 = vunpack.c.l.b16 %v194
  %v986 = vunpack.c.l.b16 %v195
  %v987 = vunpack.c.l.b16 %v196
  %v988 = vunpack.c.l.b16 %v197
  %v989 = vunpack.c.l.b16 %v198
  %v990 = vunpack.c.l.b16 %v199
  %v991 = vunpack.c.l.b16 %v200
  %v992 = vunpack.c.l.b16 %v201
  %v993 = vunpack.c.l.b16 %v202
  %v994 = vunpack.c.l.b16 %v203
  %v995 = vunpack.c.l.b16 %v204
  %v996 = vunpack.c.l.b16 %v205
  %v997 = vunpack.c.l.b16 %v206
  %v998 = vunpack.c.l.b16 %v207
  %v999 = vunpack.c.l.b16 %v208
  %v1000 = vunpack.c.l.b16 %v209
  %v1001 = vunpack.c.l.b16 %v210
  %v1002 = vunpack.c.l.b16 %v211
  %v1003 = vunpack.c.l.b16 %v212
  %v1004 = vunpack.c.l.b16 %v213
  %v1005 = vunpack.c.l.b16 %v214
  %v1006 = vunpack.c.l.b16 %v215
  %v1007 = vunpack.c.l.b16 %v216
  %v1008 = vunpack.c.l.b16 %v217
  %v1009 = vunpack.c.l.b16 %v218
  %v1010 = vunpack.c.l.b16 %v219
  %v1011 = vunpack.c.l.b16 %v220
  %v1012 = vunpack.c.l.b16 %v221
  %v1013 = vunpack.c.l.b16 %v222
  %v1014 = vunpack.c.l.b16 %v223
  %v1015 = vunpack.c.l.b16 %v224
  %v1016 = vunpack.c.l.b16 %v225
  %v1017 = vunpack.c.l.b16 %v226
  %v1018 = vunpack.c.l.b16 %v227
  %v1019 = vunpack.c.l.b16 %v228
  %v1020 = vunpack.c.l.b16 %v229
  %v1021 = vunpack.c.l.b16 %v230
  %v1022 = vunpack.c.l.b16 %v231
  %v1023 = vunpack.c.l.b16 %v232
  %v1024 = vunpack.c.l.b16 %v233
  %v1025 = vunpack.c.l.b16 %v234
  %v1026 = vunpack.c.l.b16 %v235
  %v1027 = vunpack.c.l.b16 %v236
  %v1028 = vunpack.c.l.b16 %v237
  %v1029 = vunpack.c.l.b16 %v238
  %v1030 = vunpack.c.l.b16 %v239
  %v1031 = vunpack.c.l.b16 %v240
  %v1032 = vunpack.c.l.b16 %v241
  %v1033 = vunpack.c.l.b16 %v242
  %v1034 = vunpack.c.l.b16 %v243
  %v1035 = vunpack.c.l.b16 %v244
  %v1036 = vunpack.c.l.b16 %v245
  %v1037 = vunpack.c.l.b16 %v246
  %v1038 = vunpack.c.l.b16 %v247
  %v1039 = vunpack.c.l.b16 %v248
  %v1040 = vunpack.c.l.b16 %v249
  %v1041 = vunpack.c.l.b16 %v250
  %v1042 = vunpack.c.l.b16 %v251
  %v1043 = vunpack.c.l.b16 %v252
  %v1044 = vunpack.c.l.b16 %v253
  %v1045 = vunpack.c.l.b16 %v254
  %v1046 = vunpack.c.l.b16 %v255
  %v1047 = vunpack.c.l.b16 %v256
  %v1048 = vunpack.c.l.b16 %v257
  %v1049 = vunpack.c.l.b16 %v258
  %v1050 = vunpack.c.l.b16 %v259
  %v1051 = vunpack.c.l.b16 %v260
  %v1052 = vunpack.c.l.b16 %v261
  %v1053 = vunpack.c.l.b16 %v262
  %v1054 = vunpack.c.l.b16 %v263
  %v1055 = vunpack.c.l.b16 %v264
  %v1056 = vunpack.c.l.b16 %v265
  %v1057 = vunpack.c.l.b16 %v266
  %v1058 = vunpack.c.l.b16 %v267
  %v1059 = vunpack.c.l.b16 %v268
  %v1060 = vunpack.c.l.b16 %v269
  %v1061 = vunpack.c.l.b16 %v270
  %v1062 = vunpack.c.l.b16 %v271
  %v1063 = vunpack.c.l.b16 %v272
  %v1064 = vunpack.c.l.b16 %v273
  %v1065 = vunpack.c.l.b16 %v274
  %v1066 = vunpack.c.l.b16 %v275
  %v1067 = vunpack.c.l.b16 %v276
  %v1068 = vunpack.c.l.b16 %v277
  %v1069 = vunpack.c.l.b16 %v278
  %v1070 = vunpack.c.l.b16 %v279
  %v1071 = vunpack.c.l.b16 %v280
  %v1072 = vunpack.c.l.b16 %v281
  %v1073 = vunpack.c.l.b16 %v282
  %v1074 = vunpack.c.l.b16 %v283
  %v1075 = vunpack.c.l.b16 %v284
  %v1076 = vunpack.c.l.b16 %v285
  %v1077 = vunpack.c.l.b16 %v286
  %v1078 = vunpack.c.l.b16 %v287
  %v1079 = vunpack.c.l.b16 %v288
  %v1080 = vunpack.c.l.b16 %v289
  %v1081 = vunpack.c.l.b16 %v290
  %v1082 = vunpack.c.l.b16 %v291
  %v1083 = vunpack.c.l.b16 %v292
  %v1084 = vunpack.c.l.b16 %v293
  %v1085 = vunpack.c.l.b16 %v294
  %v1086 = vunpack.c.l.b16 %v295
  %v1087 = vunpack.c.l.b16 %v296
  %v1088 = vunpack.c.l.b16 %v297
  %v1089 = vunpack.c.l.b16 %v298
  %v1090 = vunpack.c.l.b16 %v299
  %v1091 = vunpack.c.l.b16 %v300
  %v1092 = vunpack.c.l.b16 %v301
  %v1093 = vunpack.c.l.b16 %v302
  %v1094 = vunpack.c.l.b16 %v303
  %v1095 = vunpack.c.l.b16 %v304
  %v1096 = vunpack.c.l.b16 %v305
  %v1097 = vunpack.c.l.b16 %v306
  %v1098 = vunpack.c.l.b16 %v307
  %v1099 = vunpack.c.l.b16 %v308
  %v1100 = vunpack.c.l.b16 %v309
  %v1101 = vunpack.c.l.b16 %v310
  %v1102 = vunpack.c.l.b16 %v311
  %v1103 = vunpack.c.l.b16 %v312
  %v1104 = vunpack.c.l.b16 %v313
  %v1105 = vunpack.c.l.b16 %v314
  %v1106 = vunpack.c.l.b16 %v315
  %v1107 = vunpack.c.l.b16 %v316
  %v1108 = vunpack.c.l.b16 %v317
  %v1109 = vunpack.c.l.b16 %v318
  %v1110 = vunpack.c.l.b16 %v319
  %v1111 = vunpack.c.l.b16 %v320
  %v1112 = vunpack.c.l.b16 %v321
  %v1113 = vunpack.c.l.b16 %v322
  %v1114 = vunpack.c.l.b16 %v323
  %v1115 = vunpack.c.l.b16 %v324
  %v1116 = vunpack.c.l.b16 %v325
  %v1117 = vunpack.c.l.b16 %v326
  %v1118 = vunpack.c.l.b16 %v327
  %v1119 = vunpack.c.l.b16 %v328
  %v1120 = vunpack.c.l.b16 %v329
  %v1121 = vunpack.c.l.b16 %v330
  %v1122 = vunpack.c.l.b16 %v331
  %v1123 = vunpack.c.l.b16 %v332
  %v1124 = vunpack.c.l.b16 %v333
  %v1125 = vunpack.c.l.b16 %v334
  %v1126 = vunpack.c.l.b16 %v335
  %v1127 = vunpack.c.l.b16 %v336
  %v1128 = vunpack.c.l.b16 %v337
  %v1129 = vunpack.c.l.b16 %v338
  %v1130 = vunpack.c.l.b16 %v339
  %v1131 = vunpack.c.l.b16 %v340
  %v1132 = vunpack.c.l.b16 %v341
  %v1133 = vunpack.c.l.b16 %v342
  %v1134 = vunpack.c.l.b16 %v343
  %v1135 = vunpack.c.l.b16 %v344
  %v1136 = vunpack.c.l.b16 %v345
  %v1137 = vunpack.c.l.b16 %v346
  %v1138 = vunpack.c.l.b16 %v347
  %v1139 = vunpack.c.l.b16 %v348
  %v1140 = vunpack.c.l.b16 %v349
  %v1141 = vunpack.c.l.b16 %v350
  %v1142 = vunpack.c.l.b16 %v351
  %v1143 = vunpack.c.l.b16 %v352
  %v1144 = vunpack.c.l.b16 %v353
  %v1145 = vunpack.c.l.b16 %v354
  %v1146 = vunpack.c.l.b16 %v355
  %v1147 = vunpack.c.l.b16 %v356
  %v1148 = vunpack.c.l.b16 %v357
  %v1149 = vunpack.c.l.b16 %v358
  %v1150 = vunpack.c.l.b16 %v359
  %v1151 = vunpack.c.l.b16 %v360
  %v1152 = vunpack.c.l.b16 %v361
  %v1153 = vunpack.c.l.b16 %v362
  %v1154 = vunpack.c.l.b16 %v363
  %v1155 = vunpack.c.l.b16 %v364
  %v1156 = vunpack.c.l.b16 %v365
  %v1157 = vunpack.c.l.b16 %v366
  %v1158 = vunpack.c.l.b16 %v367
  %v1159 = vunpack.c.l.b16 %v368
  %v1160 = vunpack.c.l.b16 %v369
  %v1161 = vunpack.c.l.b16 %v370
  %v1162 = vunpack.c.l.b16 %v371
  %v1163 = vunpack.c.l.b16 %v372
  %v1164 = vunpack.c.l.b16 %v373
  %v1165 = vunpack.c.l.b16 %v374
  %v1166 = vunpack.c.l.b16 %v375
  %v1167 = vunpack.c.l.b16 %v376
  %v1168 = vunpack.c.l.b16 %v377
  %v1169 = vunpack.c.l.b16 %v378
  %v1170 = vunpack.c.l.b16 %v379
  %v1171 = vunpack.c.l.b16 %v380
  %v1172 = vunpack.c.l.b16 %v381
  %v1173 = vunpack.c.l.b16 %v382
  %v1174 = vunpack.c.l.b16 %v383
  %v1175 = vunpack.c.l.b16 %v384
  %v1176 = vunpack.c.l.b16 %v385
  %v1177 = vunpack.c.l.b16 %v386
  %v1178 = vunpack.c.l.b16 %v387
  %v1179 = vunpack.c.l.b16 %v388
  %v1180 = vunpack.c.l.b16 %v389
  %v1181 = vunpack.c.l.b16 %v390
  %v1182 = vunpack.c.l.b16 %v391
  %v1183 = vunpack.c.l.b16 %v392
  %v1184 = vunpack.c.l.b16 %v393
  %v1185 = vunpack.c.l.b16 %v394
  %v1186 = vunpack.c.l.b16 %v395
  %v1187 = vunpack.c.l.b16 %v396
  %v1188 = vunpack.c.l.b16 %v397
  %v1189 = vunpack.c.l.b16 %v398
  %v1190 = vunpack.c.l.b16 %v399
  %v1191 = vunpack.c.l.b16 %v400
  %v1192 = vunpack.c.l.b16 %v401
  %v1193 = vunpack.c.l.b16 %v402
  %v1194 = vunpack.c.l.b16 %v403
  %v1195 = vunpack.c.l.b16 %v404
  %v1196 = vunpack.c.l.b16 %v405
  %v1197 = vunpack.c.l.b16 %v406
  %v1198 = vunpack.c.l.b16 %v407
  %v1199 = vunpack.c.l.b16 %v408
  %v1200 = vunpack.c.l.b16 %v409
  %v1201 = vunpack.c.l.b16 %v410
  %v1202 = vunpack.c.l.b16 %v411
  %v1203 = vunpack.c.l.b16 %v412
  %v1204 = vunpack.c.l.b16 %v413
  %v1205 = vunpack.c.l.b16 %v414
  %v1206 = vunpack.c.l.b16 %v415
  %v1207 = vunpack.c.l.b16 %v416
  %v1208 = vunpack.c.l.b16 %v417
  %v1209 = vunpack.c.l.b16 %v418
  %v1210 = vunpack.c.l.b16 %v419
  %v1211 = vunpack.c.l.b16 %v420
  %v1212 = vunpack.c.l.b16 %v421
  %v1213 = vunpack.c.l.b16 %v422
  %v1214 = vunpack.c.l.b16 %v423
  %v1215 = vunpack.c.l.b16 %v424
  %v1216 = vunpack.c.l.b16 %v425
  %v1217 = vunpack.c.l.b16 %v426
  %v1218 = vunpack.c.l.b16 %v427
  %v1219 = vunpack.c.l.b16 %v428
  %v1220 = vunpack.c.l.b16 %v429
  %v1221 = vunpack.c.l.b16 %v430
  %v1222 = vunpack.c.l.b16 %v431
  %v1223 = vunpack.c.l.b16 %v432
  %v1224 = vunpack.c.l.b16 %v433
  %v1225 = vunpack.c.l.b16 %v434
  %v1226 = vunpack.c.l.b16 %v435
  %v1227 = vunpack.c.l.b16 %v436
  %v1228 = vunpack.c.l.b16 %v437
  %v1229 = vunpack.c.l.b16 %v438
  %v1230 = vunpack.c.l.b16 %v439
  %v1231 = vunpack.c.l.b16 %v440
  %v1232 = vunpack.c.l.b16 %v441
  %v1233 = vunpack.c.l.b16 %v442
  %v1234 = vunpack.c.l.b16 %v443
  %v1235 = vunpack.c.l.b16 %v444
  %v1236 = vunpack.c.l.b16 %v445
  %v1237 = vunpack.c.l.b16 %v446
  %v1238 = vunpack.c.l.b16 %v447
  %v1239 = vunpack.c.l.b16 %v448
  %v1240 = vunpack.c.l.b16 %v449
  %v1241 = vunpack.c.l.b16 %v450
  %v1242 = vunpack.c.l.b16 %v451
  %v1243 = vunpack.c.l.b16 %v452
  %v1244 = vunpack.c.l.b16 %v453
  %v1245 = vunpack.c.l.b16 %v454
  %v1246 = vunpack.c.l.b16 %v455
  %v1247 = vunpack.c.l.b16 %v456
  %v1248 = vunpack.c.l.b16 %v457
  %v1249 = vunpack.c.l.b16 %v458
  %v1250 = vunpack.c.l.b16 %v459
  %v1251 = vunpack.c.l.b16 %v460
  %v1252 = vunpack.c.l.b16 %v461
  %v1253 = vunpack.c.l.b16 %v462
  %v1254 = vpack.c.b16 %v863, %v862
  %v1255 = vpack.c.b16 %v865, %v864
  %v1256 = vpack.c.b16 %v867, %v866
  %v1257 = vpack.c.b16 %v869, %v868
  %v1258 = vpack.c.b16 %v871, %v870
  %v1259 = vpack.c.b16 %v873, %v872
  %v1260 = vpack.c.b16 %v875, %v874
  %v1261 = vpack.c.b16 %v877, %v876
  %v1262 = vpack.c.b16 %v879, %v878
  %v1263 = vpack.c.b16 %v881, %v880
  %v1264 = vpack.c.b16 %v883, %v882
  %v1265 = vpack.c.b16 %v885, %v884
  %v1266 = vpack.c.b16 %v887, %v886
  %v1267 = vpack.c.b16 %v889, %v888
  %v1268 = vpack.c.b16 %v891, %v890
  %v1269 = vpack.c.b16 %v893, %v892
  %v1270 = vpack.c.b16 %v895, %v894
  %v1271 = vpack.c.b16 %v897, %v896
  %v1272 = vpack.c.b16 %v899, %v898
  %v1273 = vpack.c.b16 %v901, %v900
  %v1274 = vpack.c.b16 %v903, %v902
  %v1275 = vpack.c.b16 %v905, %v904
  %v1276 = vpack.c.b16 %v907, %v906
  %v1277 = vpack.c.b16 %v909, %v908
  %v1278 = vpack.c.b16 %v911, %v910
  %v1279 = vpack.c.b16 %v913, %v912
  %v1280 = vpack.c.b16 %v915, %v914
  %v1281 = vpack.c.b16 %v917, %v916
  %v1282 = vpack.c.b16 %v919, %v918
  %v1283 = vpack.c.b16 %v921, %v920
  %v1284 = vpack.c.b16 %v923, %v922
  %v1285 = vpack.c.b16 %v925, %v924
  %v1286 = vpack.c.b16 %v927, %v926
  %v1287 = vpack.c.b16 %v929, %v928
  %v1288 = vpack.c.b16 %v931, %v930
  %v1289 = vpack.c.b16 %v933, %v932
  %v1290 = vpack.c.b16 %v935, %v934
  %v1291 = vpack.c.b16 %v937, %v936
  %v1292 = vpack.c.b16 %v939, %v938
  %v1293 = vpack.c.b16 %v941, %v940
  %v1294 = vpack.c.b16 %v943, %v942
  %v1295 = vpack.c.b16 %v945, %v944
  %v1296 = vpack.c.b16 %v947, %v946
  %v1297 = vpack.c.b16 %v949, %v948
  %v1298 = vpack.c.b16 %v951, %v950
  %v1299 = vpack.c.b16 %v953, %v952
  %v1300 = vpack.c.b16 %v955, %v954
  %v1301 = vpack.c.b16 %v957, %v956
  %v1302 = vpack.c.b16 %v959, %v958
  %v1303 = vpack.c.b16 %v961, %v960
  %v1304 = vpack.c.b16 %v963, %v962
  %v1305 = vpack.c.b16 %v965, %v964
  %v1306 = vpack.c.b16 %v967, %v966
  %v1307 = vpack.c.b16 %v969, %v968
  %v1308 = vpack.c.b16 %v971, %v970
  %v1309 = vpack.c.b16 %v973, %v972
  %v1310 = vpack.c.b16 %v975, %v974
  %v1311 = vpack.c.b16 %v977, %v976
  %v1312 = vpack.c.b16 %v979, %v978
  %v1313 = vpack.c.b16 %v981, %v980
  %v1314 = vpack.c.b16 %v983, %v982
  %v1315 = vpack.c.b16 %v985, %v984
  %v1316 = vpack.c.b16 %v987, %v986
  %v1317 = vpack.c.b16 %v989, %v988
  %v1318 = vpack.c.b16 %v991, %v990
  %v1319 = vpack.c.b16 %v993, %v992
  %v1320 = vpack.c.b16 %v995, %v994
  %v1321 = vpack.c.b16 %v997, %v996
  %v1322 = vpack.c.b16 %v999, %v998
  %v1323 = vpack.c.b16 %v1001, %v1000
  %v1324 = vpack.c.b16 %v1003, %v1002
  %v1325 = vpack.c.b16 %v1005, %v1004
  %v1326 = vpack.c.b16 %v1007, %v1006
  %v1327 = vpack.c.b16 %v1009, %v1008
  %v1328 = vpack.c.b16 %v1011, %v1010
  %v1329 = vpack.c.b16 %v1013, %v1012
  %v1330 = vpack.c.b16 %v1015, %v1014
  %v1331 = vpack.c.b16 %v1017, %v1016
  %v1332 = vpack.c.b16 %v1019, %v1018
  %v1333 = vpack.c.b16 %v1021, %v1020
  %v1334 = vpack.c.b16 %v1023, %v1022
  %v1335 = vpack.c.b16 %v1025, %v1024
  %v1336 = vpack.c.b16 %v1027, %v1026
  %v1337 = vpack.c.b16 %v1029, %v1028
  %v1338 = vpack.c.b16 %v1031, %v1030
  %v1339 = vpack.c.b16 %v1033, %v1032
  %v1340 = vpack.c.b16 %v1035, %v1034
  %v1341 = vpack.c.b16 %v1037, %v1036
  %v1342 = vpack.c.b16 %v1039, %v1038
  %v1343 = vpack.c.b16 %v1041, %v1040
  %v1344 = vpack.c.b16 %v1043, %v1042
  %v1345 = vpack.c.b16 %v1045, %v1044
  %v1346 = vpack.c.b16 %v1047, %v1046
  %v1347 = vpack.c.b16 %v1049, %v1048
  %v1348 = vpack.c.b16 %v1051, %v1050
  %v1349 = vpack.c.b16 %v1053, %v1052
  %v1350 = vpack.c.b16 %v1055, %v1054
  %v1351 = vpack.c.b16 %v1057, %v1056
  %v1352 = vpack.c.b16 %v1059, %v1058
  %v1353 = vpack.c.b16 %v1061, %v1060
  %v1354 = vpack.c.b16 %v1063, %v1062
  %v1355 = vpack.c.b16 %v1065, %v1064
  %v1356 = vpack.c.b16 %v1067, %v1066
  %v1357 = vpack.c.b16 %v1069, %v1068
  %v1358 = vpack.c.b16 %v1071, %v1070
  %v1359 = vpack.c.b16 %v1073, %v1072
  %v1360 = vpack.c.b16 %v1075, %v1074
  %v1361 = vpack.c.b16 %v1077, %v1076
  %v1362 = vpack.c.b16 %v1079, %v1078
  %v1363 = vpack.c.b16 %v1081, %v1080
  %v1364 = vpack.c.b16 %v1083, %v1082
  %v1365 = vpack.c.b16 %v1085, %v1084
  %v1366 = vpack.c.b16 %v1087, %v1086
  %v1367 = vpack.c.b16 %v1089, %v1088
  %v1368 = vpack.c.b16 %v1091, %v1090
  %v1369 = vpack.c.b16 %v1093, %v1092
  %v1370 = vpack.c.b16 %v1095, %v1094
  %v1371 = vpack.c.b16 %v1097, %v1096
  %v1372 = vpack.c.b16 %v1099, %v1098
  %v1373 = vpack.c.b16 %v1101, %v1100
  %v1374 = vpack.c.b16 %v1103, %v1102
  %v1375 = vpack.c.b16 %v1105, %v1104
  %v1376 = vpack.c.b16 %v1107, %v1106
  %v1377 = vpack.c.b16 %v1109, %v1108
  %v1378 = vpack.c.b16 %v1111, %v1110
  %v1379 = vpack.c.b16 %v1113, %v1112
  %v1380 = vpack.c.b16 %v1115, %v1114
  %v1381 = vpack.c.b16 %v1117, %v1116
  %v1382 = vpack.c.b16 %v1119, %v1118
  %v1383 = vpack.c.b16 %v1121, %v1120
  %v1384 = vpack.c.b16 %v1123, %v1122
  %v1385 = vpack.c.b16 %v1125, %v1124
  %v1386 = vpack.c.b16 %v1127, %v1126
  %v1387 = vpack.c.b16 %v1129, %v1128
  %v1388 = vpack.c.b16 %v1131, %v1130
  %v1389 = vpack.c.b16 %v1133, %v1132
  %v1390 = vpack.c.b16 %v1135, %v1134
  %v1391 = vpack.c.b16 %v1137, %v1136
  %v1392 = vpack.c.b16 %v1139, %v1138
  %v1393 = vpack.c.b16 %v1141, %v1140
  %v1394 = vpack.c.b16 %v1143, %v1142
  %v1395 = vpack.c.b16 %v1145, %v1144
  %v1396 = vpack.c.b16 %v1147, %v1146
  %v1397 = vpack.c.b16 %v1149, %v1148
  %v1398 = vpack.c.b16 %v1151, %v1150
  %v1399 = vpack.c.b16 %v1153, %v1152
  %v1400 = vpack.c.b16 %v1155, %v1154
  %v1401 = vpack.c.b16 %v1157, %v1156
  %v1402 = vpack.c.b16 %v1159, %v1158
  %v1403 = vpack.c.b16 %v1161, %v1160
  %v1404 = vpack.c.b16 %v1163, %v1162
  %v1405 = vpack.c.b16 %v1165, %v1164
  %v1406 = vpack.c.b16 %v1167, %v1166
  %v1407 = vpack.c.b16 %v1169, %v1168
  %v1408 = vpack.c.b16 %v1171, %v1170
  %v1409 = vpack.c.b16 %v1173, %v1172
  %v1410 = vpack.c.b16 %v1175, %v1174
  %v1411 = vpack.c.b16 %v1177, %v1176
  %v1412 = vpack.c.b16 %v1179, %v1178
  %v1413 = vpack.c.b16 %v1181, %v1180
  %v1414 = vpack.c.b16 %v1183, %v1182
  %v1415 = vpack.c.b16 %v1185, %v1184
  %v1416 = vpack.c.b16 %v1187, %v1186
  %v1417 = vpack.c.b16 %v1189, %v1188
  %v1418 = vpack.c.b16 %v1191, %v1190
  %v1419 = vpack.c.b16 %v1193, %v1192
  %v1420 = vpack.c.b16 %v1195, %v1194
  %v1421 = vpack.c.b16 %v1197, %v1196
  %v1422 = vpack.c.b16 %v1199, %v1198
  %v1423 = vpack.c.b16 %v1201, %v1200
  %v1424 = vpack.c.b16 %v1203, %v1202
  %v1425 = vpack.c.b16 %v1205, %v1204
  %v1426 = vpack.c.b16 %v1207, %v1206
  %v1427 = vpack.c.b16 %v1209, %v1208
  %v1428 = vpack.c.b16 %v1211, %v1210
  %v1429 = vpack.c.b16 %v1213, %v1212
  %v1430 = vpack.c.b16 %v1215, %v1214
  %v1431 = vpack.c.b16 %v1217, %v1216
  %v1432 = vpack.c.b16 %v1219, %v1218
  %v1433 = vpack.c.b16 %v1221, %v1220
  %v1434 = vpack.c.b16 %v1223, %v1222
  %v1435 = vpack.c.b16 %v1225, %v1224
  %v1436 = vpack.c.b16 %v1227, %v1226
  %v1437 = vpack.c.b16 %v1229, %v1228
  %v1438 = vpack.c.b16 %v1231, %v1230
  %v1439 = vpack.c.b16 %v1233, %v1232
  %v1440 = vpack.c.b16 %v1235, %v1234
  %v1441 = vpack.c.b16 %v1237, %v1236
  %v1442 = vpack.c.b16 %v1239, %v1238
  %v1443 = vpack.c.b16 %v1241, %v1240
  %v1444 = vpack.c.b16 %v1243, %v1242
  %v1445 = vpack.c.b16 %v1245, %v1244
  %v1446 = vpack.c.b16 %v1247, %v1246
  %v1447 = vpack.c.b16 %v1249, %v1248
  %v1448 = vpack.c.b16 %v1251, %v1250
  %v1449 = vpack.c.b16 %v1253, %v1252
  %vm1646 = vcmask 523264
  %v1648 = vsel %vm1646, %v70, 0
  %1650 = vmatprep.subr.bf16.mxu0 0
  %1651 = vmatpush1.bf16.msra.mxu0 %v1254
  %1652 = vmatprep.subr.bf16.mxu0 0
  %1653 = vmatpush1.bf16.msra.mxu0 %v1255
  %1654 = vmatprep.subr.bf16.mxu0 0
  %1655 = vmatpush1.bf16.msra.mxu0 %v1256
  %1656 = vmatprep.subr.bf16.mxu0 0
  %1657 = vmatpush1.bf16.msra.mxu0 %v1257
  %1658 = vmatprep.subr.bf16.mxu0 0
  %1659 = vmatpush1.bf16.msra.mxu0 %v1258
  %1660 = vmatprep.subr.bf16.mxu0 0
  %1661 = vmatpush1.bf16.msra.mxu0 %v1259
  %1662 = vmatprep.subr.bf16.mxu0 0
  %1663 = vmatpush1.bf16.msra.mxu0 %v1260
  %1664 = vmatprep.subr.bf16.mxu0 0
  %1665 = vmatpush1.bf16.msra.mxu0 %v1261
  %1666 = vmatprep.subr.bf16.mxu0 0
  %1667 = vmatpush1.bf16.msra.mxu0 %v1262
  %1668 = vmatprep.subr.bf16.mxu0 0
  %1669 = vmatpush1.bf16.msra.mxu0 %v1263
  %1670 = vmatprep.subr.bf16.mxu0 0
  %1671 = vmatpush1.bf16.msra.mxu0 %v1264
  %1672 = vmatprep.subr.bf16.mxu0 0
  %1673 = vmatpush1.bf16.msra.mxu0 %v1265
  %1674 = vmatprep.subr.bf16.mxu0 0
  %1675 = vmatpush1.bf16.msra.mxu0 %v1266
  %1676 = vmatprep.subr.bf16.mxu0 0
  %1677 = vmatpush1.bf16.msra.mxu0 %v1267
  %1678 = vmatprep.subr.bf16.mxu0 0
  %1679 = vmatpush1.bf16.msra.mxu0 %v1268
  %1680 = vmatprep.subr.bf16.mxu0 0
  %1681 = vmatpush1.bf16.msra.mxu0 %v1269
  %1682 = vmatprep.mubr.bf16.mxu0 %v47
  %1683 = vmatmul.mubr.bf16.gmra.mrb[0].mxu0 %v46
  %v1684 = vpop.f32.mrb[0].mxu0
  %v1685 = vadd.f32 %v468, %v1684
  %v1686 = vpop.f32.mrb[0].mxu0
  %v1687 = vpop.f32.mrb[0].mxu0
  %v1688 = vpop.f32.mrb[0].mxu0
  %1689 = vdwg.mxu0
  %1690 = vmatprep.subr.bf16.mxu0 0
  %1691 = vmatpush1.bf16.msra.mxu0 %v1270
  %1692 = vmatprep.subr.bf16.mxu0 0
  %1693 = vmatpush1.bf16.msra.mxu0 %v1271
  %1694 = vmatprep.subr.bf16.mxu0 0
  %1695 = vmatpush1.bf16.msra.mxu0 %v1272
  %1696 = vmatprep.subr.bf16.mxu0 0
  %1697 = vmatpush1.bf16.msra.mxu0 %v1273
  %1698 = vmatprep.subr.bf16.mxu0 0
  %1699 = vmatpush1.bf16.msra.mxu0 %v1274
  %1700 = vmatprep.subr.bf16.mxu0 0
  %1701 = vmatpush1.bf16.msra.mxu0 %v1275
  %1702 = vmatprep.subr.bf16.mxu0 0
  %1703 = vmatpush1.bf16.msra.mxu0 %v1276
  %1704 = vmatprep.subr.bf16.mxu0 0
  %1705 = vmatpush1.bf16.msra.mxu0 %v1277
  %1706 = vmatprep.subr.bf16.mxu0 0
  %1707 = vmatpush1.bf16.msra.mxu0 %v1278
  %1708 = vmatprep.subr.bf16.mxu0 0
  %1709 = vmatpush1.bf16.msra.mxu0 %v1279
  %1710 = vmatprep.subr.bf16.mxu0 0
  %1711 = vmatpush1.bf16.msra.mxu0 %v1280
  %1712 = vmatprep.subr.bf16.mxu0 0
  %1713 = vmatpush1.bf16.msra.mxu0 %v1281
  %1714 = vmatprep.subr.bf16.mxu0 0
  %1715 = vmatpush1.bf16.msra.mxu0 %v1282
  %1716 = vmatprep.subr.bf16.mxu0 0
  %1717 = vmatpush1.bf16.msra.mxu0 %v1283
  %1718 = vmatprep.subr.bf16.mxu0 0
  %1719 = vmatpush1.bf16.msra.mxu0 %v1284
  %1720 = vmatprep.subr.bf16.mxu0 0
  %1721 = vmatpush1.bf16.msra.mxu0 %v1285
  %1722 = vmatprep.mubr.bf16.mxu0 %v49
  %1723 = vmatmul.mubr.bf16.gmra.mrb[0].mxu0 %v48
  %v1724 = vpop.f32.mrb[0].mxu0
  %v1725 = vadd.f32 %v1685, %v1724
  %v1726 = vpop.f32.mrb[0].mxu0
  %v1727 = vpop.f32.mrb[0].mxu0
  %v1728 = vpop.f32.mrb[0].mxu0
  %1729 = vdwg.mxu0
  %1730 = vmatprep.subr.bf16.mxu0 0
  %1731 = vmatpush1.bf16.msra.mxu0 %v1286
  %1732 = vmatprep.subr.bf16.mxu0 0
  %1733 = vmatpush1.bf16.msra.mxu0 %v1287
  %1734 = vmatprep.subr.bf16.mxu0 0
  %1735 = vmatpush1.bf16.msra.mxu0 %v1288
  %1736 = vmatprep.subr.bf16.mxu0 0
  %1737 = vmatpush1.bf16.msra.mxu0 %v1289
  %1738 = vmatprep.subr.bf16.mxu0 0
  %1739 = vmatpush1.bf16.msra.mxu0 %v1290
  %1740 = vmatprep.subr.bf16.mxu0 0
  %1741 = vmatpush1.bf16.msra.mxu0 %v1291
  %1742 = vmatprep.subr.bf16.mxu0 0
  %1743 = vmatpush1.bf16.msra.mxu0 %v1292
  %1744 = vmatprep.subr.bf16.mxu0 0
  %1745 = vmatpush1.bf16.msra.mxu0 %v1293
  %1746 = vmatprep.subr.bf16.mxu0 0
  %1747 = vmatpush1.bf16.msra.mxu0 %v1294
  %1748 = vmatprep.subr.bf16.mxu0 0
  %1749 = vmatpush1.bf16.msra.mxu0 %v1295
  %1750 = vmatprep.subr.bf16.mxu0 0
  %1751 = vmatpush1.bf16.msra.mxu0 %v1296
  %1752 = vmatprep.subr.bf16.mxu0 0
  %1753 = vmatpush1.bf16.msra.mxu0 %v1297
  %1754 = vmatprep.subr.bf16.mxu0 0
  %1755 = vmatpush1.bf16.msra.mxu0 %v1298
  %1756 = vmatprep.subr.bf16.mxu0 0
  %1757 = vmatpush1.bf16.msra.mxu0 %v1299
  %1758 = vmatprep.subr.bf16.mxu0 0
  %1759 = vmatpush1.bf16.msra.mxu0 %v1300
  %1760 = vmatprep.subr.bf16.mxu0 0
  %1761 = vmatpush1.bf16.msra.mxu0 %v1301
  %1762 = vmatprep.mubr.bf16.mxu0 %v51
  %1763 = vmatmul.mubr.bf16.gmra.mrb[0].mxu0 %v50
  %v1764 = vpop.f32.mrb[0].mxu0
  %v1765 = vadd.f32 %v1725, %v1764
  %v1766 = vpop.f32.mrb[0].mxu0
  %v1767 = vpop.f32.mrb[0].mxu0
  %v1768 = vpop.f32.mrb[0].mxu0
  %1769 = vdwg.mxu0
  %1770 = vmatprep.subr.bf16.mxu0 0
  %1771 = vmatpush1.bf16.msra.mxu0 %v1302
  %1772 = vmatprep.subr.bf16.mxu0 0
  %1773 = vmatpush1.bf16.msra.mxu0 %v1303
  %1774 = vmatprep.subr.bf16.mxu0 0
  %1775 = vmatpush1.bf16.msra.mxu0 %v1304
  %1776 = vmatprep.subr.bf16.mxu0 0
  %1777 = vmatpush1.bf16.msra.mxu0 %v1305
  %1778 = vmatprep.subr.bf16.mxu0 0
  %1779 = vmatpush1.bf16.msra.mxu0 %v1306
  %1780 = vmatprep.subr.bf16.mxu0 0
  %1781 = vmatpush1.bf16.msra.mxu0 %v1307
  %1782 = vmatprep.subr.bf16.mxu0 0
  %1783 = vmatpush1.bf16.msra.mxu0 %v1308
  %1784 = vmatprep.subr.bf16.mxu0 0
  %1785 = vmatpush1.bf16.msra.mxu0 %v1309
  %1786 = vmatprep.subr.bf16.mxu0 0
  %1787 = vmatpush1.bf16.msra.mxu0 %v1310
  %1788 = vmatprep.subr.bf16.mxu0 0
  %1789 = vmatpush1.bf16.msra.mxu0 %v1311
  %1790 = vmatprep.subr.bf16.mxu0 0
  %1791 = vmatpush1.bf16.msra.mxu0 %v1312
  %1792 = vmatprep.subr.bf16.mxu0 0
  %1793 = vmatpush1.bf16.msra.mxu0 %v1313
  %1794 = vmatprep.subr.bf16.mxu0 0
  %1795 = vmatpush1.bf16.msra.mxu0 %v1314
  %1796 = vmatprep.subr.bf16.mxu0 0
  %1797 = vmatpush1.bf16.msra.mxu0 %v1315
  %1798 = vmatprep.subr.bf16.mxu0 0
  %1799 = vmatpush1.bf16.msra.mxu0 %v1316
  %1800 = vmatprep.subr.bf16.mxu0 0
  %1801 = vmatpush1.bf16.msra.mxu0 %v1317
  %1802 = vmatprep.mubr.bf16.mxu0 %v53
  %1803 = vmatmul.mubr.bf16.gmra.mrb[0].mxu0 %v52
  %v1804 = vpop.f32.mrb[0].mxu0
  %v1805 = vadd.f32 %v1765, %v1804
  %v1806 = vpop.f32.mrb[0].mxu0
  %v1807 = vpop.f32.mrb[0].mxu0
  %v1808 = vpop.f32.mrb[0].mxu0
  %1809 = vdwg.mxu0
  %1810 = vmatprep.subr.bf16.mxu0 0
  %1811 = vmatpush1.bf16.msra.mxu0 %v1318
  %1812 = vmatprep.subr.bf16.mxu0 0
  %1813 = vmatpush1.bf16.msra.mxu0 %v1319
  %1814 = vmatprep.subr.bf16.mxu0 0
  %1815 = vmatpush1.bf16.msra.mxu0 %v1320
  %1816 = vmatprep.subr.bf16.mxu0 0
  %1817 = vmatpush1.bf16.msra.mxu0 %v1321
  %1818 = vmatprep.subr.bf16.mxu0 0
  %1819 = vmatpush1.bf16.msra.mxu0 %v1322
  %1820 = vmatprep.subr.bf16.mxu0 0
  %1821 = vmatpush1.bf16.msra.mxu0 %v1323
  %1822 = vmatprep.subr.bf16.mxu0 0
  %1823 = vmatpush1.bf16.msra.mxu0 %v1324
  %1824 = vmatprep.subr.bf16.mxu0 0
  %1825 = vmatpush1.bf16.msra.mxu0 %v1325
  %1826 = vmatprep.subr.bf16.mxu0 0
  %1827 = vmatpush1.bf16.msra.mxu0 %v1326
  %1828 = vmatprep.subr.bf16.mxu0 0
  %1829 = vmatpush1.bf16.msra.mxu0 %v1327
  %1830 = vmatprep.subr.bf16.mxu0 0
  %1831 = vmatpush1.bf16.msra.mxu0 %v1328
  %1832 = vmatprep.subr.bf16.mxu0 0
  %1833 = vmatpush1.bf16.msra.mxu0 %v1329
  %1834 = vmatprep.subr.bf16.mxu0 0
  %1835 = vmatpush1.bf16.msra.mxu0 %v1330
  %1836 = vmatprep.subr.bf16.mxu0 0
  %1837 = vmatpush1.bf16.msra.mxu0 %v1331
  %1838 = vmatprep.subr.bf16.mxu0 0
  %1839 = vmatpush1.bf16.msra.mxu0 %v1332
  %1840 = vmatprep.subr.bf16.mxu0 0
  %1841 = vmatpush1.bf16.msra.mxu0 %v1333
  %1842 = vmatprep.mubr.bf16.mxu0 %v55
  %1843 = vmatmul.mubr.bf16.gmra.mrb[0].mxu0 %v54
  %v1844 = vpop.f32.mrb[0].mxu0
  %v1845 = vadd.f32 %v1805, %v1844
  %v1846 = vpop.f32.mrb[0].mxu0
  %v1847 = vpop.f32.mrb[0].mxu0
  %v1848 = vpop.f32.mrb[0].mxu0
  %1849 = vdwg.mxu0
  %1850 = vmatprep.subr.bf16.mxu0 0
  %1851 = vmatpush1.bf16.msra.mxu0 %v1334
  %1852 = vmatprep.subr.bf16.mxu0 0
  %1853 = vmatpush1.bf16.msra.mxu0 %v1335
  %1854 = vmatprep.subr.bf16.mxu0 0
  %1855 = vmatpush1.bf16.msra.mxu0 %v1336
  %1856 = vmatprep.subr.bf16.mxu0 0
  %1857 = vmatpush1.bf16.msra.mxu0 %v1337
  %1858 = vmatprep.subr.bf16.mxu0 0
  %1859 = vmatpush1.bf16.msra.mxu0 %v1338
  %1860 = vmatprep.subr.bf16.mxu0 0
  %1861 = vmatpush1.bf16.msra.mxu0 %v1339
  %1862 = vmatprep.subr.bf16.mxu0 0
  %1863 = vmatpush1.bf16.msra.mxu0 %v1340
  %1864 = vmatprep.subr.bf16.mxu0 0
  %1865 = vmatpush1.bf16.msra.mxu0 %v1341
  %1866 = vmatprep.subr.bf16.mxu0 0
  %1867 = vmatpush1.bf16.msra.mxu0 %v1342
  %1868 = vmatprep.subr.bf16.mxu0 0
  %1869 = vmatpush1.bf16.msra.mxu0 %v1343
  %1870 = vmatprep.subr.bf16.mxu0 0
  %1871 = vmatpush1.bf16.msra.mxu0 %v1344
  %1872 = vmatprep.subr.bf16.mxu0 0
  %1873 = vmatpush1.bf16.msra.mxu0 %v1345
  %1874 = vmatprep.subr.bf16.mxu0 0
  %1875 = vmatpush1.bf16.msra.mxu0 %v1346
  %1876 = vmatprep.subr.bf16.mxu0 0
  %1877 = vmatpush1.bf16.msra.mxu0 %v1347
  %1878 = vmatprep.subr.bf16.mxu0 0
  %1879 = vmatpush1.bf16.msra.mxu0 %v1348
  %1880 = vmatprep.subr.bf16.mxu0 0
  %1881 = vmatpush1.bf16.msra.mxu0 %v1349
  %1882 = vmatprep.mubr.bf16.mxu0 %v57
  %1883 = vmatmul.mubr.bf16.gmra.mrb[0].mxu0 %v56
  %v1884 = vpop.f32.mrb[0].mxu0
  %v1885 = vadd.f32 %v1845, %v1884
  %v1886 = vpop.f32.mrb[0].mxu0
  %v1887 = vpop.f32.mrb[0].mxu0
  %v1888 = vpop.f32.mrb[0].mxu0
  %1889 = vdwg.mxu0
  %1890 = vmatprep.subr.bf16.mxu0 0
  %1891 = vmatpush1.bf16.msra.mxu0 %v1350
  %1892 = vmatprep.subr.bf16.mxu0 0
  %1893 = vmatpush1.bf16.msra.mxu0 %v1351
  %1894 = vmatprep.subr.bf16.mxu0 0
  %1895 = vmatpush1.bf16.msra.mxu0 %v1352
  %1896 = vmatprep.subr.bf16.mxu0 0
  %1897 = vmatpush1.bf16.msra.mxu0 %v1353
  %1898 = vmatprep.subr.bf16.mxu0 0
  %1899 = vmatpush1.bf16.msra.mxu0 %v1354
  %1900 = vmatprep.subr.bf16.mxu0 0
  %1901 = vmatpush1.bf16.msra.mxu0 %v1355
  %1902 = vmatprep.subr.bf16.mxu0 0
  %1903 = vmatpush1.bf16.msra.mxu0 %v1356
  %1904 = vmatprep.subr.bf16.mxu0 0
  %1905 = vmatpush1.bf16.msra.mxu0 %v1357
  %1906 = vmatprep.subr.bf16.mxu0 0
  %1907 = vmatpush1.bf16.msra.mxu0 %v1358
  %1908 = vmatprep.subr.bf16.mxu0 0
  %1909 = vmatpush1.bf16.msra.mxu0 %v1359
  %1910 = vmatprep.subr.bf16.mxu0 0
  %1911 = vmatpush1.bf16.msra.mxu0 %v1360
  %1912 = vmatprep.subr.bf16.mxu0 0
  %1913 = vmatpush1.bf16.msra.mxu0 %v1361
  %1914 = vmatprep.subr.bf16.mxu0 0
  %1915 = vmatpush1.bf16.msra.mxu0 %v1362
  %1916 = vmatprep.subr.bf16.mxu0 0
  %1917 = vmatpush1.bf16.msra.mxu0 %v1363
  %1918 = vmatprep.subr.bf16.mxu0 0
  %1919 = vmatpush1.bf16.msra.mxu0 %v1364
  %1920 = vmatprep.subr.bf16.mxu0 0
  %1921 = vmatpush1.bf16.msra.mxu0 %v1365
  %1922 = vmatprep.mubr.bf16.mxu0 %v59
  %1923 = vmatmul.mubr.bf16.gmra.mrb[0].mxu0 %v58
  %v1924 = vpop.f32.mrb[0].mxu0
  %v1925 = vadd.f32 %v1885, %v1924
  %v1926 = vpop.f32.mrb[0].mxu0
  %v1927 = vpop.f32.mrb[0].mxu0
  %v1928 = vpop.f32.mrb[0].mxu0
  %1929 = vdwg.mxu0
  %1930 = vmatprep.subr.bf16.mxu0 0
  %1931 = vmatpush1.bf16.msra.mxu0 %v1366
  %1932 = vmatprep.subr.bf16.mxu0 0
  %1933 = vmatpush1.bf16.msra.mxu0 %v1367
  %1934 = vmatprep.subr.bf16.mxu0 0
  %1935 = vmatpush1.bf16.msra.mxu0 %v1368
  %1936 = vmatprep.subr.bf16.mxu0 0
  %1937 = vmatpush1.bf16.msra.mxu0 %v1369
  %1938 = vmatprep.subr.bf16.mxu0 0
  %1939 = vmatpush1.bf16.msra.mxu0 %v1370
  %1940 = vmatprep.subr.bf16.mxu0 0
  %1941 = vmatpush1.bf16.msra.mxu0 %v1371
  %1942 = vmatprep.subr.bf16.mxu0 0
  %1943 = vmatpush1.bf16.msra.mxu0 %v1372
  %1944 = vmatprep.subr.bf16.mxu0 0
  %1945 = vmatpush1.bf16.msra.mxu0 %v1373
  %1946 = vmatprep.subr.bf16.mxu0 0
  %1947 = vmatpush1.bf16.msra.mxu0 %v1374
  %1948 = vmatprep.subr.bf16.mxu0 0
  %1949 = vmatpush1.bf16.msra.mxu0 %v1375
  %1950 = vmatprep.subr.bf16.mxu0 0
  %1951 = vmatpush1.bf16.msra.mxu0 %v1376
  %1952 = vmatprep.subr.bf16.mxu0 0
  %1953 = vmatpush1.bf16.msra.mxu0 %v1377
  %1954 = vmatprep.subr.bf16.mxu0 0
  %1955 = vmatpush1.bf16.msra.mxu0 %v1378
  %1956 = vmatprep.subr.bf16.mxu0 0
  %1957 = vmatpush1.bf16.msra.mxu0 %v1379
  %1958 = vmatprep.subr.bf16.mxu0 0
  %1959 = vmatpush1.bf16.msra.mxu0 %v1380
  %1960 = vmatprep.subr.bf16.mxu0 0
  %1961 = vmatpush1.bf16.msra.mxu0 %v1381
  %1962 = vmatprep.mubr.bf16.mxu0 %v61
  %1963 = vmatmul.mubr.bf16.gmra.mrb[0].mxu0 %v60
  %v1964 = vpop.f32.mrb[0].mxu0
  %v1965 = vadd.f32 %v1925, %v1964
  %v1966 = vpop.f32.mrb[0].mxu0
  %v1967 = vpop.f32.mrb[0].mxu0
  %v1968 = vpop.f32.mrb[0].mxu0
  %1969 = vdwg.mxu0
  %1970 = vmatprep.subr.bf16.mxu0 0
  %1971 = vmatpush1.bf16.msra.mxu0 %v1382
  %1972 = vmatprep.subr.bf16.mxu0 0
  %1973 = vmatpush1.bf16.msra.mxu0 %v1383
  %1974 = vmatprep.subr.bf16.mxu0 0
  %1975 = vmatpush1.bf16.msra.mxu0 %v1384
  %1976 = vmatprep.subr.bf16.mxu0 0
  %1977 = vmatpush1.bf16.msra.mxu0 %v1385
  %1978 = vmatprep.subr.bf16.mxu0 0
  %1979 = vmatpush1.bf16.msra.mxu0 %v1386
  %1980 = vmatprep.subr.bf16.mxu0 0
  %1981 = vmatpush1.bf16.msra.mxu0 %v1387
  %1982 = vmatprep.subr.bf16.mxu0 0
  %1983 = vmatpush1.bf16.msra.mxu0 %v1388
  %1984 = vmatprep.subr.bf16.mxu0 0
  %1985 = vmatpush1.bf16.msra.mxu0 %v1389
  %1986 = vmatprep.subr.bf16.mxu0 0
  %1987 = vmatpush1.bf16.msra.mxu0 %v1390
  %1988 = vmatprep.subr.bf16.mxu0 0
  %1989 = vmatpush1.bf16.msra.mxu0 %v1391
  %1990 = vmatprep.subr.bf16.mxu0 0
  %1991 = vmatpush1.bf16.msra.mxu0 %v1392
  %1992 = vmatprep.subr.bf16.mxu0 0
  %1993 = vmatpush1.bf16.msra.mxu0 %v1393
  %1994 = vmatprep.subr.bf16.mxu0 0
  %1995 = vmatpush1.bf16.msra.mxu0 %v1394
  %1996 = vmatprep.subr.bf16.mxu0 0
  %1997 = vmatpush1.bf16.msra.mxu0 %v1395
  %1998 = vmatprep.subr.bf16.mxu0 0
  %1999 = vmatpush1.bf16.msra.mxu0 %v1396
  %2000 = vmatprep.subr.bf16.mxu0 0
  %2001 = vmatpush1.bf16.msra.mxu0 %v1397
  %2002 = vmatprep.mubr.bf16.mxu0 %v63
  %2003 = vmatmul.mubr.bf16.gmra.mrb[0].mxu0 %v62
  %v2004 = vpop.f32.mrb[0].mxu0
  %v2005 = vadd.f32 %v1965, %v2004
  %v2006 = vpop.f32.mrb[0].mxu0
  %v2007 = vpop.f32.mrb[0].mxu0
  %v2008 = vpop.f32.mrb[0].mxu0
  %2009 = vdwg.mxu0
  %2010 = vmatprep.subr.bf16.mxu0 0
  %2011 = vmatpush1.bf16.msra.mxu0 %v1398
  %2012 = vmatprep.subr.bf16.mxu0 0
  %2013 = vmatpush1.bf16.msra.mxu0 %v1399
  %2014 = vmatprep.subr.bf16.mxu0 0
  %2015 = vmatpush1.bf16.msra.mxu0 %v1400
  %2016 = vmatprep.subr.bf16.mxu0 0
  %2017 = vmatpush1.bf16.msra.mxu0 %v1401
  %2018 = vmatprep.subr.bf16.mxu0 0
  %2019 = vmatpush1.bf16.msra.mxu0 %v1402
  %2020 = vmatprep.subr.bf16.mxu0 0
  %2021 = vmatpush1.bf16.msra.mxu0 %v1403
  %2022 = vmatprep.subr.bf16.mxu0 0
  %2023 = vmatpush1.bf16.msra.mxu0 %v1404
  %2024 = vmatprep.subr.bf16.mxu0 0
  %2025 = vmatpush1.bf16.msra.mxu0 %v1405
  %2026 = vmatprep.subr.bf16.mxu0 0
  %2027 = vmatpush1.bf16.msra.mxu0 %v1406
  %2028 = vmatprep.subr.bf16.mxu0 0
  %2029 = vmatpush1.bf16.msra.mxu0 %v1407
  %2030 = vmatprep.subr.bf16.mxu0 0
  %2031 = vmatpush1.bf16.msra.mxu0 %v1408
  %2032 = vmatprep.subr.bf16.mxu0 0
  %2033 = vmatpush1.bf16.msra.mxu0 %v1409
  %2034 = vmatprep.subr.bf16.mxu0 0
  %2035 = vmatpush1.bf16.msra.mxu0 %v1410
  %2036 = vmatprep.subr.bf16.mxu0 0
  %2037 = vmatpush1.bf16.msra.mxu0 %v1411
  %2038 = vmatprep.subr.bf16.mxu0 0
  %2039 = vmatpush1.bf16.msra.mxu0 %v1412
  %2040 = vmatprep.subr.bf16.mxu0 0
  %2041 = vmatpush1.bf16.msra.mxu0 %v1413
  %2042 = vmatprep.mubr.bf16.mxu0 %v65
  %2043 = vmatmul.mubr.bf16.gmra.mrb[0].mxu0 %v64
  %v2044 = vpop.f32.mrb[0].mxu0
  %v2045 = vadd.f32 %v2005, %v2044
  %v2046 = vpop.f32.mrb[0].mxu0
  %v2047 = vpop.f32.mrb[0].mxu0
  %v2048 = vpop.f32.mrb[0].mxu0
  %2049 = vdwg.mxu0
  %2050 = vmatprep.subr.bf16.mxu0 0
  %2051 = vmatpush1.bf16.msra.mxu0 %v1414
  %2052 = vmatprep.subr.bf16.mxu0 0
  %2053 = vmatpush1.bf16.msra.mxu0 %v1415
  %2054 = vmatprep.subr.bf16.mxu0 0
  %2055 = vmatpush1.bf16.msra.mxu0 %v1416
  %2056 = vmatprep.subr.bf16.mxu0 0
  %2057 = vmatpush1.bf16.msra.mxu0 %v1417
  %2058 = vmatprep.subr.bf16.mxu0 0
  %2059 = vmatpush1.bf16.msra.mxu0 %v1418
  %2060 = vmatprep.subr.bf16.mxu0 0
  %2061 = vmatpush1.bf16.msra.mxu0 %v1419
  %2062 = vmatprep.subr.bf16.mxu0 0
  %2063 = vmatpush1.bf16.msra.mxu0 %v1420
  %2064 = vmatprep.subr.bf16.mxu0 0
  %2065 = vmatpush1.bf16.msra.mxu0 %v1421
  %2066 = vmatprep.subr.bf16.mxu0 0
  %2067 = vmatpush1.bf16.msra.mxu0 %v1422
  %2068 = vmatprep.subr.bf16.mxu0 0
  %2069 = vmatpush1.bf16.msra.mxu0 %v1423
  %2070 = vmatprep.subr.bf16.mxu0 0
  %2071 = vmatpush1.bf16.msra.mxu0 %v1424
  %2072 = vmatprep.subr.bf16.mxu0 0
  %2073 = vmatpush1.bf16.msra.mxu0 %v1425
  %2074 = vmatprep.subr.bf16.mxu0 0
  %2075 = vmatpush1.bf16.msra.mxu0 %v1426
  %2076 = vmatprep.subr.bf16.mxu0 0
  %2077 = vmatpush1.bf16.msra.mxu0 %v1427
  %2078 = vmatprep.subr.bf16.mxu0 0
  %2079 = vmatpush1.bf16.msra.mxu0 %v1428
  %2080 = vmatprep.subr.bf16.mxu0 0
  %2081 = vmatpush1.bf16.msra.mxu0 %v1429
  %2082 = vmatprep.mubr.bf16.mxu0 %v67
  %2083 = vmatmul.mubr.bf16.gmra.mrb[0].mxu0 %v66
  %v2084 = vpop.f32.mrb[0].mxu0
  %v2085 = vadd.f32 %v2045, %v2084
  %v2086 = vpop.f32.mrb[0].mxu0
  %v2087 = vpop.f32.mrb[0].mxu0
  %v2088 = vpop.f32.mrb[0].mxu0
  %2089 = vdwg.mxu0
  %2090 = vmatprep.subr.bf16.mxu0 0
  %2091 = vmatpush1.bf16.msra.mxu0 %v1430
  %2092 = vmatprep.subr.bf16.mxu0 0
  %2093 = vmatpush1.bf16.msra.mxu0 %v1431
  %2094 = vmatprep.subr.bf16.mxu0 0
  %2095 = vmatpush1.bf16.msra.mxu0 %v1432
  %2096 = vmatprep.subr.bf16.mxu0 0
  %2097 = vmatpush1.bf16.msra.mxu0 %v1433
  %2098 = vmatprep.subr.bf16.mxu0 0
  %2099 = vmatpush1.bf16.msra.mxu0 %v1434
  %2100 = vmatprep.subr.bf16.mxu0 0
  %2101 = vmatpush1.bf16.msra.mxu0 %v1435
  %2102 = vmatprep.subr.bf16.mxu0 0
  %2103 = vmatpush1.bf16.msra.mxu0 %v1436
  %2104 = vmatprep.subr.bf16.mxu0 0
  %2105 = vmatpush1.bf16.msra.mxu0 %v1437
  %2106 = vmatprep.subr.bf16.mxu0 0
  %2107 = vmatpush1.bf16.msra.mxu0 %v1438
  %2108 = vmatprep.subr.bf16.mxu0 0
  %2109 = vmatpush1.bf16.msra.mxu0 %v1439
  %2110 = vmatprep.subr.bf16.mxu0 0
  %2111 = vmatpush1.bf16.msra.mxu0 %v1440
  %2112 = vmatprep.subr.bf16.mxu0 0
  %2113 = vmatpush1.bf16.msra.mxu0 %v1441
  %2114 = vmatprep.subr.bf16.mxu0 0
  %2115 = vmatpush1.bf16.msra.mxu0 %v1442
  %2116 = vmatprep.subr.bf16.mxu0 0
  %2117 = vmatpush1.bf16.msra.mxu0 %v1443
  %2118 = vmatprep.subr.bf16.mxu0 0
  %2119 = vmatpush1.bf16.msra.mxu0 %v1444
  %2120 = vmatprep.subr.bf16.mxu0 0
  %2121 = vmatpush1.bf16.msra.mxu0 %v1445
  %2122 = vmatprep.mubr.bf16.mxu0 %v69
  %2123 = vmatmul.mubr.bf16.gmra.mrb[0].mxu0 %v68
  %v2124 = vpop.f32.mrb[0].mxu0
  %v2125 = vadd.f32 %v2085, %v2124
  %v2126 = vpop.f32.mrb[0].mxu0
  %v2127 = vpop.f32.mrb[0].mxu0
  %v2128 = vpop.f32.mrb[0].mxu0
  %2129 = vdwg.mxu0
  %2130 = vmatprep.subr.bf16.mxu0 0
  %2131 = vmatpush1.bf16.msra.mxu0 %v1446
  %2132 = vmatprep.subr.bf16.mxu0 0
  %2133 = vmatpush1.bf16.msra.mxu0 %v1447
  %2134 = vmatprep.subr.bf16.mxu0 0
  %2135 = vmatpush1.bf16.msra.mxu0 %v1448
  %2136 = vmatprep.subr.bf16.mxu0 0
  %2137 = vmatpush1.bf16.msra.mxu0 %v1449
  %2138 = vmatprep.subr.bf16.mxu0 0
  %2139 = vmatpush1.bf16.msra.mxu0 0
  %2140 = vmatprep.subr.bf16.mxu0 0
  %2141 = vmatpush1.bf16.msra.mxu0 0
  %2142 = vmatprep.subr.bf16.mxu0 0
  %2143 = vmatpush1.bf16.msra.mxu0 0
  %2144 = vmatprep.subr.bf16.mxu0 0
  %2145 = vmatpush1.bf16.msra.mxu0 0
  %2146 = vmatprep.subr.bf16.mxu0 0
  %2147 = vmatpush1.bf16.msra.mxu0 0
  %2148 = vmatprep.subr.bf16.mxu0 0
  %2149 = vmatpush1.bf16.msra.mxu0 0
  %2150 = vmatprep.subr.bf16.mxu0 0
  %2151 = vmatpush1.bf16.msra.mxu0 0
  %2152 = vmatprep.subr.bf16.mxu0 0
  %2153 = vmatpush1.bf16.msra.mxu0 0
  %2154 = vmatprep.subr.bf16.mxu0 0
  %2155 = vmatpush1.bf16.msra.mxu0 0
  %2156 = vmatprep.subr.bf16.mxu0 0
  %2157 = vmatpush1.bf16.msra.mxu0 0
  %2158 = vmatprep.subr.bf16.mxu0 0
  %2159 = vmatpush1.bf16.msra.mxu0 0
  %2160 = vmatprep.subr.bf16.mxu0 0
  %2161 = vmatpush1.bf16.msra.mxu0 0
  %2162 = vmatprep.mubr.bf16.mxu0 0
  %2163 = vmatmul.mubr.bf16.gmra.mrb[0].mxu0 %v1648
  %v2164 = vpop.f32.mrb[0].mxu0
  %v2165 = vadd.f32 %v2125, %v2164
  %v2166 = vpop.f32.mrb[0].mxu0
  %v2167 = vpop.f32.mrb[0].mxu0
  %v2168 = vpop.f32.mrb[0].mxu0
  %2169 = vdwg.mxu0
  %v2170 = vmax.f32 %v2165, 0.0
  %v2171 = vpack.c.bf16 %v2170, %v2170
  %v2172 = vld [vmem:[%s3] sm:$0xf]
  %v2173 = vld [vmem:[%s3 + $0x4] sm:$0xf]
  %v2174 = vld [vmem:[%s3 + $0x8] sm:$0xf]
  %v2175 = vld [vmem:[%s3 + $0xc] sm:$0xf]
  %v2176 = vld [vmem:[%s3 + $0x10] sm:$0xf]
  %v2177 = vld [vmem:[%s3 + $0x14] sm:$0xf]
  %v2178 = vld [vmem:[%s3 + $0x18] sm:$0xf]
  %v2179 = vld [vmem:[%s3 + $0x1c] sm:$0xf]
  %v2180 = vld [vmem:[%s3 + $0x20] sm:$0xf]
  %v2181 = vld [vmem:[%s3 + $0x24] sm:$0xf]
  %v2182 = vld [vmem:[%s3 + $0x28] sm:$0xf]
  %v2183 = vld [vmem:[%s3 + $0x2c] sm:$0xf]
  %v2184 = vld [vmem:[%s3 + $0x30] sm:$0xf]
  %v2185 = vld [vmem:[%s3 + $0x34] sm:$0xf]
  %v2186 = vld [vmem:[%s3 + $0x38] sm:$0xf]
  %v2187 = vld [vmem:[%s3 + $0x3c] sm:$0xf]
  %v2188 = vld [vmem:[%s4] sm:$0x1]
  %v2190 = vlaneseq
  %v2191 = vshrl.u32 %v2190, 7
  %v2192 = vsub.s32 0, %v2191
  %v2193 = vrot.slane %v2188, %v2192
  %v2211 = vunpack.c.l.b16 %v2172
  %v2212 = vunpack.c.l.b16 %v2173
  %v2213 = vunpack.c.l.b16 %v2174
  %v2214 = vunpack.c.l.b16 %v2175
  %v2215 = vunpack.c.l.b16 %v2176
  %v2216 = vunpack.c.l.b16 %v2177
  %v2217 = vunpack.c.l.b16 %v2178
  %v2218 = vunpack.c.l.b16 %v2179
  %v2219 = vunpack.c.l.b16 %v2180
  %v2220 = vunpack.c.l.b16 %v2181
  %v2221 = vunpack.c.l.b16 %v2182
  %v2222 = vunpack.c.l.b16 %v2183
  %v2223 = vunpack.c.l.b16 %v2184
  %v2224 = vunpack.c.l.b16 %v2185
  %v2225 = vunpack.c.l.b16 %v2186
  %v2226 = vunpack.c.l.b16 %v2187
  %v2227 = vpack.c.b16 %v2212, %v2211
  %v2228 = vpack.c.b16 %v2214, %v2213
  %v2229 = vpack.c.b16 %v2216, %v2215
  %v2230 = vpack.c.b16 %v2218, %v2217
  %v2231 = vpack.c.b16 %v2220, %v2219
  %v2232 = vpack.c.b16 %v2222, %v2221
  %v2233 = vpack.c.b16 %v2224, %v2223
  %v2234 = vpack.c.b16 %v2226, %v2225
  %2243 = vmatprep.subr.bf16.mxu0 0
  %2244 = vmatpush1.bf16.msra.mxu0 %v2227
  %2245 = vmatprep.subr.bf16.mxu0 0
  %2246 = vmatpush1.bf16.msra.mxu0 %v2228
  %2247 = vmatprep.subr.bf16.mxu0 0
  %2248 = vmatpush1.bf16.msra.mxu0 %v2229
  %2249 = vmatprep.subr.bf16.mxu0 0
  %2250 = vmatpush1.bf16.msra.mxu0 %v2230
  %2251 = vmatprep.subr.bf16.mxu0 0
  %2252 = vmatpush1.bf16.msra.mxu0 %v2231
  %2253 = vmatprep.subr.bf16.mxu0 0
  %2254 = vmatpush1.bf16.msra.mxu0 %v2232
  %2255 = vmatprep.subr.bf16.mxu0 0
  %2256 = vmatpush1.bf16.msra.mxu0 %v2233
  %2257 = vmatprep.subr.bf16.mxu0 0
  %2258 = vmatpush1.bf16.msra.mxu0 %v2234
  %2259 = vmatprep.subr.bf16.mxu0 0
  %2260 = vmatpush1.bf16.msra.mxu0 0
  %2261 = vmatprep.subr.bf16.mxu0 0
  %2262 = vmatpush1.bf16.msra.mxu0 0
  %2263 = vmatprep.subr.bf16.mxu0 0
  %2264 = vmatpush1.bf16.msra.mxu0 0
  %2265 = vmatprep.subr.bf16.mxu0 0
  %2266 = vmatpush1.bf16.msra.mxu0 0
  %2267 = vmatprep.subr.bf16.mxu0 0
  %2268 = vmatpush1.bf16.msra.mxu0 0
  %2269 = vmatprep.subr.bf16.mxu0 0
  %2270 = vmatpush1.bf16.msra.mxu0 0
  %2271 = vmatprep.subr.bf16.mxu0 0
  %2272 = vmatpush1.bf16.msra.mxu0 0
  %2273 = vmatprep.subr.bf16.mxu0 0
  %2274 = vmatpush1.bf16.msra.mxu0 0
  %2275 = vmatprep.mubr.bf16.mxu0 0
  %2276 = vmatmul.mubr.bf16.gmra.mrb[0].mxu0 %v2171
  %v2277 = vpop.f32.mrb[0].mxu0
  %v2278 = vadd.f32 %v2193, %v2277
  %v2279 = vpop.f32.mrb[0].mxu0
  %v2280 = vpop.f32.mrb[0].mxu0
  %v2281 = vpop.f32.mrb[0].mxu0
  %2282 = vdwg.mxu0
  %2283 = vst [vmem:[%s5] sm:$0xff] %v2278
  // Predicated region
  $region22: #{digit_classifier_forward.5} parent=0 // pred_check
    _
  $region23: #{digit_classifier_forward.5} parent=0 // pred_check_branch
    %2285 = sbr.rel (0) target = $region25
  $region24: #{digit_classifier_forward.5} parent=0 // pred_region
    _
  $region25: #{digit_classifier_forward.5} parent=0 // pred_fallthru
    _
  // Predicated region
  $region26: #{digit_classifier_forward.5} parent=0 // pred_check
    _
  $region27: #{digit_classifier_forward.5} parent=0 // pred_check_branch
    %2287 = sbr.rel (0) target = $region29
  $region28: #{digit_classifier_forward.5} parent=0 // pred_region
    _
  $region29: #{digit_classifier_forward.5} parent=0 // pred_fallthru
    _

// kernel: digit_classifier_forward.4
$region0: #{digit_classifier_forward.4}
  #allocation0 [shape = 'u32[]', space=smem, size = 0x4, offset = 0x4, fixed_abs, tag = 'smem constant byte address 0x4 - core index']
  #allocation1 [shape = 'u32[144,128]{1,0:T(1,128)}', space=vmem, size = 0x12000, scoped, tag = 'internal scratch']
  %s0 = inlined_call_operand.vmem [shape: f32[2,2,8,512], index: 0, kind: input, shape index: {}]
  %s1 = inlined_call_operand.vmem [shape: bf16[3,2,512,448], index: 1, kind: input, shape index: {}]
  %s2 = inlined_call_operand.vmem [shape: f32[1,448], index: 2, kind: input, shape index: {}]
  %s3 = inlined_call_operand.vmem [shape: f32[2,7,448], index: 3, kind: output, shape index: {}]
  %s4 = sld [smem:[#allocation0]]
  $region45: #{digit_classifier_forward.4} parent=0
    _
  %s6 = ssub.s32 1, %s4
  %s7 = scalar_select 0, %s6, %s4
  loop: start=0, step=1, limit=4
  $region2: #{digit_classifier_forward.4} parent=0 // loop_pre_header
    _
  $region3: #{digit_classifier_forward.4} parent=0 // loop_header
    %s9 = sphi 0, %s13
    %p10 = scmp.ge.s32.totalorder %s9, 4
    %s19 = sphi 0, %s21
    %s22 = sphi 0, %s19
    %s23 = sphi 0, %s22
    %s39 = sphi 0, %s23
    %s43 = sphi 0, %s43
    %s45 = sphi 0, %s43
    %s46 = sphi 0, %s45
    %s60 = sphi 0, %s46
    %s64 = sphi 0, %s64
    %s66 = sphi 0, %s64
    %s67 = sphi 0, %s66
    %s81 = sphi 0, %s67
    %s87 = sphi 0, %s89
    %s90 = sphi 0, %s87
    %s91 = sphi 0, %s90
    %s107 = sphi 0, %s91
  $region4: #{digit_classifier_forward.4} parent=0 // loop_header_branch
    %12 = sbr.rel (%p10) target = $region8
  $region5: #{digit_classifier_forward.4} parent=0 // loop_body
    %s14 = ssub.s32 %s9, 1
    %s15 = ssub.s32 %s9, 2
    %s16 = sadd.s32 %s9, 1
    %s17 = ssub.s32 %s9, %s16
    %p18 = scmp.eq.s32.totalorder %s17, 0
    %s20 = sadd.s32 %s19, 1
    %s21 = scalar_select %p18, %s19, %s20
    %p24 = pneg %p18
    %p25 = scmp.eq.s32.totalorder %s9, 1
    %p26 = por %p24, %p25
    %p27 = scmp.ne.s32.totalorder %s19, %s22
    %p28 = scmp.eq.s32.totalorder %s9, 0
    %p29 = por %p27, %p28
    %p30 = scmp.ne.s32.totalorder %s19, %s22
    %p31 = scmp.eq.s32.totalorder %s14, 1
    %p32 = por %p30, %p31
    %p33 = scmp.ne.s32.totalorder %s22, %s23
    %p34 = scmp.eq.s32.totalorder %s14, 0
    %p35 = por %p33, %p34
    %p36 = scmp.ne.s32.totalorder %s22, %s23
    %p37 = scmp.eq.s32.totalorder %s15, 1
    %p38 = por %p36, %p37
    %p40 = scmp.ne.s32.totalorder %s23, %s39
    %p41 = scmp.eq.s32.totalorder %s15, 0
    %p42 = por %p40, %p41
    %s44 = sadd.s32 %s43, 1
    %p47 = scmp.eq.s32.totalorder %s9, 1
    %p48 = scmp.ne.s32.totalorder %s43, %s45
    %p49 = scmp.eq.s32.totalorder %s9, 0
    %p50 = por %p48, %p49
    %p51 = scmp.ne.s32.totalorder %s43, %s45
    %p52 = scmp.eq.s32.totalorder %s14, 1
    %p53 = por %p51, %p52
    %p54 = scmp.ne.s32.totalorder %s45, %s46
    %p55 = scmp.eq.s32.totalorder %s14, 0
    %p56 = por %p54, %p55
    %p57 = scmp.ne.s32.totalorder %s45, %s46
    %p58 = scmp.eq.s32.totalorder %s15, 1
    %p59 = por %p57, %p58
    %p61 = scmp.ne.s32.totalorder %s46, %s60
    %p62 = scmp.eq.s32.totalorder %s15, 0
    %p63 = por %p61, %p62
    %s65 = sadd.s32 %s64, 1
    %p68 = scmp.eq.s32.totalorder %s9, 1
    %p69 = scmp.ne.s32.totalorder %s64, %s66
    %p70 = scmp.eq.s32.totalorder %s9, 0
    %p71 = por %p69, %p70
    %p72 = scmp.ne.s32.totalorder %s64, %s66
    %p73 = scmp.eq.s32.totalorder %s14, 1
    %p74 = por %p72, %p73
    %p75 = scmp.ne.s32.totalorder %s66, %s67
    %p76 = scmp.eq.s32.totalorder %s14, 0
    %p77 = por %p75, %p76
    %p78 = scmp.ne.s32.totalorder %s66, %s67
    %p79 = scmp.eq.s32.totalorder %s15, 1
    %p80 = por %p78, %p79
    %p82 = scmp.ne.s32.totalorder %s67, %s81
    %p83 = scmp.eq.s32.totalorder %s15, 0
    %p84 = por %p82, %p83
    %s85 = ssub.s32 %s9, %s16
    %p86 = scmp.eq.s32.totalorder %s85, 0
    %s88 = sadd.s32 %s87, 1
    %s89 = scalar_select %p86, %s87, %s88
    %p92 = pneg %p86
    %p93 = scmp.eq.s32.totalorder %s9, 1
    %p94 = por %p92, %p93
    %p95 = scmp.ne.s32.totalorder %s87, %s90
    %p96 = scmp.eq.s32.totalorder %s9, 0
    %p97 = por %p95, %p96
    %p98 = scmp.ne.s32.totalorder %s87, %s90
    %p99 = scmp.eq.s32.totalorder %s14, 1
    %p100 = por %p98, %p99
    %p101 = scmp.ne.s32.totalorder %s90, %s91
    %p102 = scmp.eq.s32.totalorder %s14, 0
    %p103 = por %p101, %p102
    %p104 = scmp.ne.s32.totalorder %s90, %s91
    %p105 = scmp.eq.s32.totalorder %s15, 1
    %p106 = por %p104, %p105
    %p108 = scmp.ne.s32.totalorder %s91, %s107
    %p109 = scmp.eq.s32.totalorder %s15, 0
    %p110 = por %p108, %p109
    %p111 = scmp.le.s32.totalorder 1, %s9
    %p112 = scmp.lt.s32.totalorder %s9, 3
    %p113 = pnand %p111, %p112
    %p114 = pneg %p113
    // Predicated region
    $region9: #{digit_classifier_forward.4} parent=5 // pred_check
      _
    $region10: #{digit_classifier_forward.4} parent=5 // pred_check_branch
      %116 = sbr.rel (%p113) target = $region12
    $region11: #{digit_classifier_forward.4} parent=5 // pred_region
      %s117 = ssub.s32 %s9, 1
      // Predicated region
      $region13: #{digit_classifier_forward.4} parent=11 // pred_check
        %p118 = pneg %p56
      $region14: #{digit_classifier_forward.4} parent=11 // pred_check_branch
        %120 = sbr.rel (%p118) target = $region16
      $region15: #{digit_classifier_forward.4} parent=11 // pred_region
        _
      $region16: #{digit_classifier_forward.4} parent=11 // pred_fallthru
        _
      // Predicated region
      $region17: #{digit_classifier_forward.4} parent=11 // pred_check
        %p121 = pneg %p77
      $region18: #{digit_classifier_forward.4} parent=11 // pred_check_branch
        %123 = sbr.rel (%p121) target = $region20
      $region19: #{digit_classifier_forward.4} parent=11 // pred_region
        _
      $region20: #{digit_classifier_forward.4} parent=11 // pred_fallthru
        _
    $region12: #{digit_classifier_forward.4} parent=5 // pred_fallthru
      _
    %p124 = scmp.lt.s32.totalorder %s9, 2
    // Predicated region
    $region21: #{digit_classifier_forward.4} parent=5 // pred_check
      %p125 = pneg %p124
    $region22: #{digit_classifier_forward.4} parent=5 // pred_check_branch
      %127 = sbr.rel (%p125) target = $region24
    $region23: #{digit_classifier_forward.4} parent=5 // pred_region
      // Predicated region
      $region25: #{digit_classifier_forward.4} parent=23 // pred_check
        %p128 = pneg %p29
      $region26: #{digit_classifier_forward.4} parent=23 // pred_check_branch
        %130 = sbr.rel (%p128) target = $region28
      $region27: #{digit_classifier_forward.4} parent=23 // pred_region
        %p131 = scmp.lt.s32.totalorder %s9, 1
        %s132 = scalar_select %p131, %s9, 1
        %s133 = smul.addr %s132, 8
        %s134 = smul.addr %s133, 8
        %s135 = scalar_lea.vmem %s0, %s134
      $region28: #{digit_classifier_forward.4} parent=23 // pred_fallthru
        _
    $region24: #{digit_classifier_forward.4} parent=5 // pred_fallthru
      _
    %p136 = scmp.le.s32.totalorder 1, %s9
    %p137 = scmp.lt.s32.totalorder %s9, 3
    %p138 = pnand %p136, %p137
    %p139 = pneg %p138
    // Predicated region
    $region29: #{digit_classifier_forward.4} parent=5 // pred_check
      _
    $region30: #{digit_classifier_forward.4} parent=5 // pred_check_branch
      %141 = sbr.rel (%p138) target = $region32
    $region31: #{digit_classifier_forward.4} parent=5 // pred_region
      %s142 = ssub.s32 %s9, 1
      %p143 = scmp.lt.s32.totalorder %s14, 1
      %s144 = scalar_select %p143, %s14, 1
      %s145 = smul.addr %s144, 8
      %s146 = smul.addr %s145, 8
      %s147 = scalar_lea.vmem %s0, %s146
      %p148 = pneg %p35
      %p149 = pneg %p32
      %p150 = pneg %p56
      %p151 = pneg %p53
      %p152 = pneg %p77
      %p153 = pneg %p74
      %p154 = pneg %p103
      %p155 = pneg %p100
      %p156 = scmp.lt.s32.totalorder %s14, 1
      %s157 = scalar_select %p156, %s14, 1
      %s158 = smul.addr %s157, 4
      %s159 = smul.addr %s158, 8
      %s160 = scalar_lea.vmem %s3, %s159
      %p161 = scmp.lt.s32.totalorder %s14, 1
      %s162 = scalar_select %p161, %s14, 1
      %s163 = smul.addr %s162, 8
      %s164 = smul.addr %s163, 8
      %s165 = scalar_lea.vmem %s0, %s164
      %p166 = scmp.lt.s32.totalorder %s14, 1
      %s167 = scalar_select %p166, %s14, 1
      %s168 = smul.addr %s167, 4
      %s169 = smul.addr %s168, 8
      %s170 = scalar_lea.vmem %s3, %s169
      %v171 = vld [vmem:[%s165] sm:$0xff]
      %v172 = vld [vmem:[%s165 + $0x8] sm:$0xff]
      %v173 = vld [vmem:[%s165 + $0x10] sm:$0xff]
      %v174 = vld [vmem:[%s165 + $0x18] sm:$0xff]
      %v175 = vpack.c.bf16 %v171, %v171
      %v176 = vpack.c.bf16 %v172, %v172
      %v177 = vpack.c.bf16 %v173, %v173
      %v178 = vpack.c.bf16 %v174, %v174
      %s179 = scalar_lea.vmem %s165, 32
      %v180 = vld [vmem:[%s179] sm:$0xff]
      %v181 = vld [vmem:[%s179 + $0x8] sm:$0xff]
      %v182 = vld [vmem:[%s179 + $0x10] sm:$0xff]
      %v183 = vld [vmem:[%s179 + $0x18] sm:$0xff]
      %v184 = vpack.c.bf16 %v180, %v180
      %v185 = vpack.c.bf16 %v181, %v181
      %v186 = vpack.c.bf16 %v182, %v182
      %v187 = vpack.c.bf16 %v183, %v183
      %v188 = vld [vmem:[%s1] sm:$0xff]
      %v189 = vld [vmem:[%s1 + $0x8] sm:$0xff]
      %v190 = vld [vmem:[%s1 + $0x10] sm:$0xff]
      %v191 = vld [vmem:[%s1 + $0x18] sm:$0xff]
      %v192 = vld [vmem:[%s1 + $0x20] sm:$0xff]
      %v193 = vld [vmem:[%s1 + $0x28] sm:$0xff]
      %v194 = vld [vmem:[%s1 + $0x30] sm:$0xff]
      %v195 = vld [vmem:[%s1 + $0x38] sm:$0xff]
      %v196 = vld [vmem:[%s1 + $0x40] sm:$0xff]
      %v197 = vld [vmem:[%s1 + $0x48] sm:$0xff]
      %v198 = vld [vmem:[%s1 + $0x50] sm:$0xff]
      %v199 = vld [vmem:[%s1 + $0x58] sm:$0xff]
      %v200 = vld [vmem:[%s1 + $0x60] sm:$0xff]
      %v201 = vld [vmem:[%s1 + $0x68] sm:$0xff]
      %v202 = vld [vmem:[%s1 + $0x70] sm:$0xff]
      %v203 = vld [vmem:[%s1 + $0x78] sm:$0xff]
      %v204 = vld [vmem:[%s1 + $0x80] sm:$0xff]
      %v205 = vld [vmem:[%s1 + $0x88] sm:$0xff]
      %v206 = vld [vmem:[%s1 + $0x90] sm:$0xff]
      %v207 = vld [vmem:[%s1 + $0x98] sm:$0xff]
      %v208 = vld [vmem:[%s1 + $0xa0] sm:$0xff]
      %v209 = vld [vmem:[%s1 + $0xa8] sm:$0xff]
      %v210 = vld [vmem:[%s1 + $0xb0] sm:$0xff]
      %v211 = vld [vmem:[%s1 + $0xb8] sm:$0xff]
      %v212 = vld [vmem:[%s1 + $0xc0] sm:$0xff]
      %v213 = vld [vmem:[%s1 + $0xc8] sm:$0xff]
      %v214 = vld [vmem:[%s1 + $0xd0] sm:$0xff]
      %v215 = vld [vmem:[%s1 + $0xd8] sm:$0xff]
      %v216 = vld [vmem:[%s1 + $0xe0] sm:$0xff]
      %v217 = vld [vmem:[%s1 + $0xe8] sm:$0xff]
      %v218 = vld [vmem:[%s1 + $0xf0] sm:$0xff]
      %v219 = vld [vmem:[%s1 + $0xf8] sm:$0xff]
      %v220 = vld [vmem:[%s1 + $0x100] sm:$0xff]
      %v221 = vld [vmem:[%s1 + $0x108] sm:$0xff]
      %v222 = vld [vmem:[%s1 + $0x110] sm:$0xff]
      %v223 = vld [vmem:[%s1 + $0x118] sm:$0xff]
      %v224 = vld [vmem:[%s1 + $0x120] sm:$0xff]
      %v225 = vld [vmem:[%s1 + $0x128] sm:$0xff]
      %v226 = vld [vmem:[%s1 + $0x130] sm:$0xff]
      %v227 = vld [vmem:[%s1 + $0x138] sm:$0xff]
      %v228 = vld [vmem:[%s1 + $0x140] sm:$0xff]
      %v229 = vld [vmem:[%s1 + $0x148] sm:$0xff]
      %v230 = vld [vmem:[%s1 + $0x150] sm:$0xff]
      %v231 = vld [vmem:[%s1 + $0x158] sm:$0xff]
      %v232 = vld [vmem:[%s1 + $0x160] sm:$0xff]
      %v233 = vld [vmem:[%s1 + $0x168] sm:$0xff]
      %v234 = vld [vmem:[%s1 + $0x170] sm:$0xff]
      %v235 = vld [vmem:[%s1 + $0x178] sm:$0xff]
      %v236 = vld [vmem:[%s1 + $0x180] sm:$0xff]
      %v237 = vld [vmem:[%s1 + $0x188] sm:$0xff]
      %v238 = vld [vmem:[%s1 + $0x190] sm:$0xff]
      %v239 = vld [vmem:[%s1 + $0x198] sm:$0xff]
      %v240 = vld [vmem:[%s1 + $0x1a0] sm:$0xff]
      %v241 = vld [vmem:[%s1 + $0x1a8] sm:$0xff]
      %v242 = vld [vmem:[%s1 + $0x1b0] sm:$0xff]
      %v243 = vld [vmem:[%s1 + $0x1b8] sm:$0xff]
      %v244 = vld [vmem:[%s1 + $0x1c0] sm:$0xff]
      %v245 = vld [vmem:[%s1 + $0x1c8] sm:$0xff]
      %v246 = vld [vmem:[%s1 + $0x1d0] sm:$0xff]
      %v247 = vld [vmem:[%s1 + $0x1d8] sm:$0xff]
      %v248 = vld [vmem:[%s1 + $0x1e0] sm:$0xff]
      %v249 = vld [vmem:[%s1 + $0x1e8] sm:$0xff]
      %v250 = vld [vmem:[%s1 + $0x1f0] sm:$0xff]
      %v251 = vld [vmem:[%s1 + $0x1f8] sm:$0xff]
      %v252 = vld [vmem:[%s1 + $0x200] sm:$0xff]
      %v253 = vld [vmem:[%s1 + $0x208] sm:$0xff]
      %v254 = vld [vmem:[%s1 + $0x210] sm:$0xff]
      %v255 = vld [vmem:[%s1 + $0x218] sm:$0xff]
      %v256 = vld [vmem:[%s1 + $0x220] sm:$0xff]
      %v257 = vld [vmem:[%s1 + $0x228] sm:$0xff]
      %v258 = vld [vmem:[%s1 + $0x230] sm:$0xff]
      %v259 = vld [vmem:[%s1 + $0x238] sm:$0xff]
      %v260 = vld [vmem:[%s1 + $0x240] sm:$0xff]
      %v261 = vld [vmem:[%s1 + $0x248] sm:$0xff]
      %v262 = vld [vmem:[%s1 + $0x250] sm:$0xff]
      %v263 = vld [vmem:[%s1 + $0x258] sm:$0xff]
      %v264 = vld [vmem:[%s1 + $0x260] sm:$0xff]
      %v265 = vld [vmem:[%s1 + $0x268] sm:$0xff]
      %v266 = vld [vmem:[%s1 + $0x270] sm:$0xff]
      %v267 = vld [vmem:[%s1 + $0x278] sm:$0xff]
      %v268 = vld [vmem:[%s1 + $0x280] sm:$0xff]
      %v269 = vld [vmem:[%s1 + $0x288] sm:$0xff]
      %v270 = vld [vmem:[%s1 + $0x290] sm:$0xff]
      %v271 = vld [vmem:[%s1 + $0x298] sm:$0xff]
      %v272 = vld [vmem:[%s1 + $0x2a0] sm:$0xff]
      %v273 = vld [vmem:[%s1 + $0x2a8] sm:$0xff]
      %v274 = vld [vmem:[%s1 + $0x2b0] sm:$0xff]
      %v275 = vld [vmem:[%s1 + $0x2b8] sm:$0xff]
      %v276 = vld [vmem:[%s1 + $0x2c0] sm:$0xff]
      %v277 = vld [vmem:[%s1 + $0x2c8] sm:$0xff]
      %v278 = vld [vmem:[%s1 + $0x2d0] sm:$0xff]
      %v279 = vld [vmem:[%s1 + $0x2d8] sm:$0xff]
      %v280 = vld [vmem:[%s1 + $0x2e0] sm:$0xff]
      %v281 = vld [vmem:[%s1 + $0x2e8] sm:$0xff]
      %v282 = vld [vmem:[%s1 + $0x2f0] sm:$0xff]
      %v283 = vld [vmem:[%s1 + $0x2f8] sm:$0xff]
      %v284 = vld [vmem:[%s1 + $0x300] sm:$0xff]
      %v285 = vld [vmem:[%s1 + $0x308] sm:$0xff]
      %v286 = vld [vmem:[%s1 + $0x310] sm:$0xff]
      %v287 = vld [vmem:[%s1 + $0x318] sm:$0xff]
      %v288 = vld [vmem:[%s1 + $0x320] sm:$0xff]
      %v289 = vld [vmem:[%s1 + $0x328] sm:$0xff]
      %v290 = vld [vmem:[%s1 + $0x330] sm:$0xff]
      %v291 = vld [vmem:[%s1 + $0x338] sm:$0xff]
      %v292 = vld [vmem:[%s1 + $0x340] sm:$0xff]
      %v293 = vld [vmem:[%s1 + $0x348] sm:$0xff]
      %v294 = vld [vmem:[%s1 + $0x350] sm:$0xff]
      %v295 = vld [vmem:[%s1 + $0x358] sm:$0xff]
      %v296 = vld [vmem:[%s1 + $0x360] sm:$0xff]
      %v297 = vld [vmem:[%s1 + $0x368] sm:$0xff]
      %v298 = vld [vmem:[%s1 + $0x370] sm:$0xff]
      %v299 = vld [vmem:[%s1 + $0x378] sm:$0xff]
      %v300 = vld [vmem:[%s1 + $0x380] sm:$0xff]
      %v301 = vld [vmem:[%s1 + $0x388] sm:$0xff]
      %v302 = vld [vmem:[%s1 + $0x390] sm:$0xff]
      %v303 = vld [vmem:[%s1 + $0x398] sm:$0xff]
      %v304 = vld [vmem:[%s1 + $0x3a0] sm:$0xff]
      %v305 = vld [vmem:[%s1 + $0x3a8] sm:$0xff]
      %v306 = vld [vmem:[%s1 + $0x3b0] sm:$0xff]
      %v307 = vld [vmem:[%s1 + $0x3b8] sm:$0xff]
      %v308 = vld [vmem:[%s1 + $0x3c0] sm:$0xff]
      %v309 = vld [vmem:[%s1 + $0x3c8] sm:$0xff]
      %v310 = vld [vmem:[%s1 + $0x3d0] sm:$0xff]
      %v311 = vld [vmem:[%s1 + $0x3d8] sm:$0xff]
      %v312 = vld [vmem:[%s1 + $0x3e0] sm:$0xff]
      %v313 = vld [vmem:[%s1 + $0x3e8] sm:$0xff]
      %v314 = vld [vmem:[%s1 + $0x3f0] sm:$0xff]
      %v315 = vld [vmem:[%s1 + $0x3f8] sm:$0xff]
      %s316 = scalar_lea.vmem %s1, 2048
      %v317 = vld [vmem:[%s316] sm:$0xff]
      %v318 = vld [vmem:[%s316 + $0x8] sm:$0xff]
      %v319 = vld [vmem:[%s316 + $0x10] sm:$0xff]
      %v320 = vld [vmem:[%s316 + $0x18] sm:$0xff]
      %v321 = vld [vmem:[%s316 + $0x20] sm:$0xff]
      %v322 = vld [vmem:[%s316 + $0x28] sm:$0xff]
      %v323 = vld [vmem:[%s316 + $0x30] sm:$0xff]
      %v324 = vld [vmem:[%s316 + $0x38] sm:$0xff]
      %v325 = vld [vmem:[%s316 + $0x40] sm:$0xff]
      %v326 = vld [vmem:[%s316 + $0x48] sm:$0xff]
      %v327 = vld [vmem:[%s316 + $0x50] sm:$0xff]
      %v328 = vld [vmem:[%s316 + $0x58] sm:$0xff]
      %v329 = vld [vmem:[%s316 + $0x60] sm:$0xff]
      %v330 = vld [vmem:[%s316 + $0x68] sm:$0xff]
      %v331 = vld [vmem:[%s316 + $0x70] sm:$0xff]
      %v332 = vld [vmem:[%s316 + $0x78] sm:$0xff]
      %v333 = vld [vmem:[%s316 + $0x80] sm:$0xff]
      %v334 = vld [vmem:[%s316 + $0x88] sm:$0xff]
      %v335 = vld [vmem:[%s316 + $0x90] sm:$0xff]
      %v336 = vld [vmem:[%s316 + $0x98] sm:$0xff]
      %v337 = vld [vmem:[%s316 + $0xa0] sm:$0xff]
      %v338 = vld [vmem:[%s316 + $0xa8] sm:$0xff]
      %v339 = vld [vmem:[%s316 + $0xb0] sm:$0xff]
      %v340 = vld [vmem:[%s316 + $0xb8] sm:$0xff]
      %v341 = vld [vmem:[%s316 + $0xc0] sm:$0xff]
      %v342 = vld [vmem:[%s316 + $0xc8] sm:$0xff]
      %v343 = vld [vmem:[%s316 + $0xd0] sm:$0xff]
      %v344 = vld [vmem:[%s316 + $0xd8] sm:$0xff]
      %v345 = vld [vmem:[%s316 + $0xe0] sm:$0xff]
      %v346 = vld [vmem:[%s316 + $0xe8] sm:$0xff]
      %v347 = vld [vmem:[%s316 + $0xf0] sm:$0xff]
      %v348 = vld [vmem:[%s316 + $0xf8] sm:$0xff]
      %v349 = vld [vmem:[%s316 + $0x100] sm:$0xff]
      %v350 = vld [vmem:[%s316 + $0x108] sm:$0xff]
      %v351 = vld [vmem:[%s316 + $0x110] sm:$0xff]
      %v352 = vld [vmem:[%s316 + $0x118] sm:$0xff]
      %v353 = vld [vmem:[%s316 + $0x120] sm:$0xff]
      %v354 = vld [vmem:[%s316 + $0x128] sm:$0xff]
      %v355 = vld [vmem:[%s316 + $0x130] sm:$0xff]
      %v356 = vld [vmem:[%s316 + $0x138] sm:$0xff]
      %v357 = vld [vmem:[%s316 + $0x140] sm:$0xff]
      %v358 = vld [vmem:[%s316 + $0x148] sm:$0xff]
      %v359 = vld [vmem:[%s316 + $0x150] sm:$0xff]
      %v360 = vld [vmem:[%s316 + $0x158] sm:$0xff]
      %v361 = vld [vmem:[%s316 + $0x160] sm:$0xff]
      %v362 = vld [vmem:[%s316 + $0x168] sm:$0xff]
      %v363 = vld [vmem:[%s316 + $0x170] sm:$0xff]
      %v364 = vld [vmem:[%s316 + $0x178] sm:$0xff]
      %v365 = vld [vmem:[%s316 + $0x180] sm:$0xff]
      %v366 = vld [vmem:[%s316 + $0x188] sm:$0xff]
      %v367 = vld [vmem:[%s316 + $0x190] sm:$0xff]
      %v368 = vld [vmem:[%s316 + $0x198] sm:$0xff]
      %v369 = vld [vmem:[%s316 + $0x1a0] sm:$0xff]
      %v370 = vld [vmem:[%s316 + $0x1a8] sm:$0xff]
      %v371 = vld [vmem:[%s316 + $0x1b0] sm:$0xff]
      %v372 = vld [vmem:[%s316 + $0x1b8] sm:$0xff]
      %v373 = vld [vmem:[%s316 + $0x1c0] sm:$0xff]
      %v374 = vld [vmem:[%s316 + $0x1c8] sm:$0xff]
      %v375 = vld [vmem:[%s316 + $0x1d0] sm:$0xff]
      %v376 = vld [vmem:[%s316 + $0x1d8] sm:$0xff]
      %v377 = vld [vmem:[%s316 + $0x1e0] sm:$0xff]
      %v378 = vld [vmem:[%s316 + $0x1e8] sm:$0xff]
      %v379 = vld [vmem:[%s316 + $0x1f0] sm:$0xff]
      %v380 = vld [vmem:[%s316 + $0x1f8] sm:$0xff]
      %v381 = vld [vmem:[%s316 + $0x200] sm:$0xff]
      %v382 = vld [vmem:[%s316 + $0x208] sm:$0xff]
      %v383 = vld [vmem:[%s316 + $0x210] sm:$0xff]
      %v384 = vld [vmem:[%s316 + $0x218] sm:$0xff]
      %v385 = vld [vmem:[%s316 + $0x220] sm:$0xff]
      %v386 = vld [vmem:[%s316 + $0x228] sm:$0xff]
      %v387 = vld [vmem:[%s316 + $0x230] sm:$0xff]
      %v388 = vld [vmem:[%s316 + $0x238] sm:$0xff]
      %v389 = vld [vmem:[%s316 + $0x240] sm:$0xff]
      %v390 = vld [vmem:[%s316 + $0x248] sm:$0xff]
      %v391 = vld [vmem:[%s316 + $0x250] sm:$0xff]
      %v392 = vld [vmem:[%s316 + $0x258] sm:$0xff]
      %v393 = vld [vmem:[%s316 + $0x260] sm:$0xff]
      %v394 = vld [vmem:[%s316 + $0x268] sm:$0xff]
      %v395 = vld [vmem:[%s316 + $0x270] sm:$0xff]
      %v396 = vld [vmem:[%s316 + $0x278] sm:$0xff]
      %v397 = vld [vmem:[%s316 + $0x280] sm:$0xff]
      %v398 = vld [vmem:[%s316 + $0x288] sm:$0xff]
      %v399 = vld [vmem:[%s316 + $0x290] sm:$0xff]
      %v400 = vld [vmem:[%s316 + $0x298] sm:$0xff]
      %v401 = vld [vmem:[%s316 + $0x2a0] sm:$0xff]
      %v402 = vld [vmem:[%s316 + $0x2a8] sm:$0xff]
      %v403 = vld [vmem:[%s316 + $0x2b0] sm:$0xff]
      %v404 = vld [vmem:[%s316 + $0x2b8] sm:$0xff]
      %v405 = vld [vmem:[%s316 + $0x2c0] sm:$0xff]
      %v406 = vld [vmem:[%s316 + $0x2c8] sm:$0xff]
      %v407 = vld [vmem:[%s316 + $0x2d0] sm:$0xff]
      %v408 = vld [vmem:[%s316 + $0x2d8] sm:$0xff]
      %v409 = vld [vmem:[%s316 + $0x2e0] sm:$0xff]
      %v410 = vld [vmem:[%s316 + $0x2e8] sm:$0xff]
      %v411 = vld [vmem:[%s316 + $0x2f0] sm:$0xff]
      %v412 = vld [vmem:[%s316 + $0x2f8] sm:$0xff]
      %v413 = vld [vmem:[%s316 + $0x300] sm:$0xff]
      %v414 = vld [vmem:[%s316 + $0x308] sm:$0xff]
      %v415 = vld [vmem:[%s316 + $0x310] sm:$0xff]
      %v416 = vld [vmem:[%s316 + $0x318] sm:$0xff]
      %v417 = vld [vmem:[%s316 + $0x320] sm:$0xff]
      %v418 = vld [vmem:[%s316 + $0x328] sm:$0xff]
      %v419 = vld [vmem:[%s316 + $0x330] sm:$0xff]
      %v420 = vld [vmem:[%s316 + $0x338] sm:$0xff]
      %v421 = vld [vmem:[%s316 + $0x340] sm:$0xff]
      %v422 = vld [vmem:[%s316 + $0x348] sm:$0xff]
      %v423 = vld [vmem:[%s316 + $0x350] sm:$0xff]
      %v424 = vld [vmem:[%s316 + $0x358] sm:$0xff]
      %v425 = vld [vmem:[%s316 + $0x360] sm:$0xff]
      %v426 = vld [vmem:[%s316 + $0x368] sm:$0xff]
      %v427 = vld [vmem:[%s316 + $0x370] sm:$0xff]
      %v428 = vld [vmem:[%s316 + $0x378] sm:$0xff]
      %v429 = vld [vmem:[%s316 + $0x380] sm:$0xff]
      %v430 = vld [vmem:[%s316 + $0x388] sm:$0xff]
      %v431 = vld [vmem:[%s316 + $0x390] sm:$0xff]
      %v432 = vld [vmem:[%s316 + $0x398] sm:$0xff]
      %v433 = vld [vmem:[%s316 + $0x3a0] sm:$0xff]
      %v434 = vld [vmem:[%s316 + $0x3a8] sm:$0xff]
      %v435 = vld [vmem:[%s316 + $0x3b0] sm:$0xff]
      %v436 = vld [vmem:[%s316 + $0x3b8] sm:$0xff]
      %v437 = vld [vmem:[%s316 + $0x3c0] sm:$0xff]
      %v438 = vld [vmem:[%s316 + $0x3c8] sm:$0xff]
      %v439 = vld [vmem:[%s316 + $0x3d0] sm:$0xff]
      %v440 = vld [vmem:[%s316 + $0x3d8] sm:$0xff]
      %v441 = vld [vmem:[%s316 + $0x3e0] sm:$0xff]
      %v442 = vld [vmem:[%s316 + $0x3e8] sm:$0xff]
      %v443 = vld [vmem:[%s316 + $0x3f0] sm:$0xff]
      %v444 = vld [vmem:[%s316 + $0x3f8] sm:$0xff]
      %v573 = vunpack.c.l.b16 %v317
      %v574 = vunpack.c.h.b16 %v317
      %v575 = vunpack.c.l.b16 %v318
      %v576 = vunpack.c.h.b16 %v318
      %v577 = vunpack.c.l.b16 %v319
      %v578 = vunpack.c.h.b16 %v319
      %v579 = vunpack.c.l.b16 %v320
      %v580 = vunpack.c.h.b16 %v320
      %v581 = vunpack.c.l.b16 %v321
      %v582 = vunpack.c.h.b16 %v321
      %v583 = vunpack.c.l.b16 %v322
      %v584 = vunpack.c.h.b16 %v322
      %v585 = vunpack.c.l.b16 %v323
      %v586 = vunpack.c.h.b16 %v323
      %v587 = vunpack.c.l.b16 %v324
      %v588 = vunpack.c.h.b16 %v324
      %v589 = vunpack.c.l.b16 %v325
      %v590 = vunpack.c.h.b16 %v325
      %v591 = vunpack.c.l.b16 %v326
      %v592 = vunpack.c.h.b16 %v326
      %v593 = vunpack.c.l.b16 %v327
      %v594 = vunpack.c.h.b16 %v327
      %v595 = vunpack.c.l.b16 %v328
      %v596 = vunpack.c.h.b16 %v328
      %v597 = vunpack.c.l.b16 %v329
      %v598 = vunpack.c.h.b16 %v329
      %v599 = vunpack.c.l.b16 %v330
      %v600 = vunpack.c.h.b16 %v330
      %v601 = vunpack.c.l.b16 %v331
      %v602 = vunpack.c.h.b16 %v331
      %v603 = vunpack.c.l.b16 %v332
      %v604 = vunpack.c.h.b16 %v332
      %v605 = vunpack.c.l.b16 %v333
      %v606 = vunpack.c.h.b16 %v333
      %v607 = vunpack.c.l.b16 %v334
      %v608 = vunpack.c.h.b16 %v334
      %v609 = vunpack.c.l.b16 %v335
      %v610 = vunpack.c.h.b16 %v335
      %v611 = vunpack.c.l.b16 %v336
      %v612 = vunpack.c.h.b16 %v336
      %v613 = vunpack.c.l.b16 %v337
      %v614 = vunpack.c.h.b16 %v337
      %v615 = vunpack.c.l.b16 %v338
      %v616 = vunpack.c.h.b16 %v338
      %v617 = vunpack.c.l.b16 %v339
      %v618 = vunpack.c.h.b16 %v339
      %v619 = vunpack.c.l.b16 %v340
      %v620 = vunpack.c.h.b16 %v340
      %v621 = vunpack.c.l.b16 %v341
      %v622 = vunpack.c.h.b16 %v341
      %v623 = vunpack.c.l.b16 %v342
      %v624 = vunpack.c.h.b16 %v342
      %v625 = vunpack.c.l.b16 %v343
      %v626 = vunpack.c.h.b16 %v343
      %v627 = vunpack.c.l.b16 %v344
      %v628 = vunpack.c.h.b16 %v344
      %v629 = vunpack.c.l.b16 %v345
      %v630 = vunpack.c.h.b16 %v345
      %v631 = vunpack.c.l.b16 %v346
      %v632 = vunpack.c.h.b16 %v346
      %v633 = vunpack.c.l.b16 %v347
      %v634 = vunpack.c.h.b16 %v347
      %v635 = vunpack.c.l.b16 %v348
      %v636 = vunpack.c.h.b16 %v348
      %v637 = vunpack.c.l.b16 %v349
      %v638 = vunpack.c.h.b16 %v349
      %v639 = vunpack.c.l.b16 %v350
      %v640 = vunpack.c.h.b16 %v350
      %v641 = vunpack.c.l.b16 %v351
      %v642 = vunpack.c.h.b16 %v351
      %v643 = vunpack.c.l.b16 %v352
      %v644 = vunpack.c.h.b16 %v352
      %v645 = vunpack.c.l.b16 %v353
      %v646 = vunpack.c.h.b16 %v353
      %v647 = vunpack.c.l.b16 %v354
      %v648 = vunpack.c.h.b16 %v354
      %v649 = vunpack.c.l.b16 %v355
      %v650 = vunpack.c.h.b16 %v355
      %v651 = vunpack.c.l.b16 %v356
      %v652 = vunpack.c.h.b16 %v356
      %v653 = vunpack.c.l.b16 %v357
      %v654 = vunpack.c.h.b16 %v357
      %v655 = vunpack.c.l.b16 %v358
      %v656 = vunpack.c.h.b16 %v358
      %v657 = vunpack.c.l.b16 %v359
      %v658 = vunpack.c.h.b16 %v359
      %v659 = vunpack.c.l.b16 %v360
      %v660 = vunpack.c.h.b16 %v360
      %v661 = vunpack.c.l.b16 %v361
      %v662 = vunpack.c.h.b16 %v361
      %v663 = vunpack.c.l.b16 %v362
      %v664 = vunpack.c.h.b16 %v362
      %v665 = vunpack.c.l.b16 %v363
      %v666 = vunpack.c.h.b16 %v363
      %v667 = vunpack.c.l.b16 %v364
      %v668 = vunpack.c.h.b16 %v364
      %v669 = vunpack.c.l.b16 %v365
      %v670 = vunpack.c.h.b16 %v365
      %v671 = vunpack.c.l.b16 %v366
      %v672 = vunpack.c.h.b16 %v366
      %v673 = vunpack.c.l.b16 %v367
      %v674 = vunpack.c.h.b16 %v367
      %v675 = vunpack.c.l.b16 %v368
      %v676 = vunpack.c.h.b16 %v368
      %v677 = vunpack.c.l.b16 %v369
      %v678 = vunpack.c.h.b16 %v369
      %v679 = vunpack.c.l.b16 %v370
      %v680 = vunpack.c.h.b16 %v370
      %v681 = vunpack.c.l.b16 %v371
      %v682 = vunpack.c.h.b16 %v371
      %v683 = vunpack.c.l.b16 %v372
      %v684 = vunpack.c.h.b16 %v372
      %v685 = vunpack.c.l.b16 %v373
      %v686 = vunpack.c.h.b16 %v373
      %v687 = vunpack.c.l.b16 %v374
      %v688 = vunpack.c.h.b16 %v374
      %v689 = vunpack.c.l.b16 %v375
      %v690 = vunpack.c.h.b16 %v375
      %v691 = vunpack.c.l.b16 %v376
      %v692 = vunpack.c.h.b16 %v376
      %v693 = vunpack.c.l.b16 %v377
      %v694 = vunpack.c.h.b16 %v377
      %v695 = vunpack.c.l.b16 %v378
      %v696 = vunpack.c.h.b16 %v378
      %v697 = vunpack.c.l.b16 %v379
      %v698 = vunpack.c.h.b16 %v379
      %v699 = vunpack.c.l.b16 %v380
      %v700 = vunpack.c.h.b16 %v380
      %v701 = vunpack.c.l.b16 %v381
      %v702 = vunpack.c.h.b16 %v381
      %v703 = vunpack.c.l.b16 %v382
      %v704 = vunpack.c.h.b16 %v382
      %v705 = vunpack.c.l.b16 %v383
      %v706 = vunpack.c.h.b16 %v383
      %v707 = vunpack.c.l.b16 %v384
      %v708 = vunpack.c.h.b16 %v384
      %v709 = vunpack.c.l.b16 %v385
      %v710 = vunpack.c.h.b16 %v385
      %v711 = vunpack.c.l.b16 %v386
      %v712 = vunpack.c.h.b16 %v386
      %v713 = vunpack.c.l.b16 %v387
      %v714 = vunpack.c.h.b16 %v387
      %v715 = vunpack.c.l.b16 %v388
      %v716 = vunpack.c.h.b16 %v388
      %v717 = vunpack.c.l.b16 %v389
      %v718 = vunpack.c.h.b16 %v389
      %v719 = vunpack.c.l.b16 %v390
      %v720 = vunpack.c.h.b16 %v390
      %v721 = vunpack.c.l.b16 %v391
      %v722 = vunpack.c.h.b16 %v391
      %v723 = vunpack.c.l.b16 %v392
      %v724 = vunpack.c.h.b16 %v392
      %v725 = vunpack.c.l.b16 %v393
      %v726 = vunpack.c.h.b16 %v393
      %v727 = vunpack.c.l.b16 %v394
      %v728 = vunpack.c.h.b16 %v394
      %v729 = vunpack.c.l.b16 %v395
      %v730 = vunpack.c.h.b16 %v395
      %v731 = vunpack.c.l.b16 %v396
      %v732 = vunpack.c.h.b16 %v396
      %v733 = vunpack.c.l.b16 %v397
      %v734 = vunpack.c.h.b16 %v397
      %v735 = vunpack.c.l.b16 %v398
      %v736 = vunpack.c.h.b16 %v398
      %v737 = vunpack.c.l.b16 %v399
      %v738 = vunpack.c.h.b16 %v399
      %v739 = vunpack.c.l.b16 %v400
      %v740 = vunpack.c.h.b16 %v400
      %v741 = vunpack.c.l.b16 %v401
      %v742 = vunpack.c.h.b16 %v401
      %v743 = vunpack.c.l.b16 %v402
      %v744 = vunpack.c.h.b16 %v402
      %v745 = vunpack.c.l.b16 %v403
      %v746 = vunpack.c.h.b16 %v403
      %v747 = vunpack.c.l.b16 %v404
      %v748 = vunpack.c.h.b16 %v404
      %v749 = vunpack.c.l.b16 %v405
      %v750 = vunpack.c.h.b16 %v405
      %v751 = vunpack.c.l.b16 %v406
      %v752 = vunpack.c.h.b16 %v406
      %v753 = vunpack.c.l.b16 %v407
      %v754 = vunpack.c.h.b16 %v407
      %v755 = vunpack.c.l.b16 %v408
      %v756 = vunpack.c.h.b16 %v408
      %v757 = vunpack.c.l.b16 %v409
      %v758 = vunpack.c.h.b16 %v409
      %v759 = vunpack.c.l.b16 %v410
      %v760 = vunpack.c.h.b16 %v410
      %v761 = vunpack.c.l.b16 %v411
      %v762 = vunpack.c.h.b16 %v411
      %v763 = vunpack.c.l.b16 %v412
      %v764 = vunpack.c.h.b16 %v412
      %v765 = vunpack.c.l.b16 %v413
      %v766 = vunpack.c.h.b16 %v413
      %v767 = vunpack.c.l.b16 %v414
      %v768 = vunpack.c.h.b16 %v414
      %v769 = vunpack.c.l.b16 %v415
      %v770 = vunpack.c.h.b16 %v415
      %v771 = vunpack.c.l.b16 %v416
      %v772 = vunpack.c.h.b16 %v416
      %v773 = vunpack.c.l.b16 %v417
      %v774 = vunpack.c.h.b16 %v417
      %v775 = vunpack.c.l.b16 %v418
      %v776 = vunpack.c.h.b16 %v418
      %v777 = vunpack.c.l.b16 %v419
      %v778 = vunpack.c.h.b16 %v419
      %v779 = vunpack.c.l.b16 %v420
      %v780 = vunpack.c.h.b16 %v420
      %v781 = vunpack.c.l.b16 %v421
      %v782 = vunpack.c.h.b16 %v421
      %v783 = vunpack.c.l.b16 %v422
      %v784 = vunpack.c.h.b16 %v422
      %v785 = vunpack.c.l.b16 %v423
      %v786 = vunpack.c.h.b16 %v423
      %v787 = vunpack.c.l.b16 %v424
      %v788 = vunpack.c.h.b16 %v424
      %v789 = vunpack.c.l.b16 %v425
      %v790 = vunpack.c.h.b16 %v425
      %v791 = vunpack.c.l.b16 %v426
      %v792 = vunpack.c.h.b16 %v426
      %v793 = vunpack.c.l.b16 %v427
      %v794 = vunpack.c.h.b16 %v427
      %v795 = vunpack.c.l.b16 %v428
      %v796 = vunpack.c.h.b16 %v428
      %v797 = vunpack.c.l.b16 %v429
      %v798 = vunpack.c.h.b16 %v429
      %v799 = vunpack.c.l.b16 %v430
      %v800 = vunpack.c.h.b16 %v430
      %v801 = vunpack.c.l.b16 %v431
      %v802 = vunpack.c.h.b16 %v431
      %v803 = vunpack.c.l.b16 %v432
      %v804 = vunpack.c.h.b16 %v432
      %v805 = vunpack.c.l.b16 %v433
      %v806 = vunpack.c.h.b16 %v433
      %v807 = vunpack.c.l.b16 %v434
      %v808 = vunpack.c.h.b16 %v434
      %v809 = vunpack.c.l.b16 %v435
      %v810 = vunpack.c.h.b16 %v435
      %v811 = vunpack.c.l.b16 %v436
      %v812 = vunpack.c.h.b16 %v436
      %v813 = vunpack.c.l.b16 %v437
      %v814 = vunpack.c.h.b16 %v437
      %v815 = vunpack.c.l.b16 %v438
      %v816 = vunpack.c.h.b16 %v438
      %v817 = vunpack.c.l.b16 %v439
      %v818 = vunpack.c.h.b16 %v439
      %v819 = vunpack.c.l.b16 %v440
      %v820 = vunpack.c.h.b16 %v440
      %v821 = vunpack.c.l.b16 %v441
      %v822 = vunpack.c.h.b16 %v441
      %v823 = vunpack.c.l.b16 %v442
      %v824 = vunpack.c.h.b16 %v442
      %v825 = vunpack.c.l.b16 %v443
      %v826 = vunpack.c.h.b16 %v443
      %v827 = vunpack.c.l.b16 %v444
      %v828 = vunpack.c.h.b16 %v444
      %v829 = vpack.c.b16 %v577, %v573
      %v830 = vpack.c.b16 %v578, %v574
      %v831 = vpack.c.b16 %v579, %v575
      %v832 = vpack.c.b16 %v580, %v576
      %v833 = vpack.c.b16 %v585, %v581
      %v834 = vpack.c.b16 %v586, %v582
      %v835 = vpack.c.b16 %v587, %v583
      %v836 = vpack.c.b16 %v588, %v584
      %v837 = vpack.c.b16 %v593, %v589
      %v838 = vpack.c.b16 %v594, %v590
      %v839 = vpack.c.b16 %v595, %v591
      %v840 = vpack.c.b16 %v596, %v592
      %v841 = vpack.c.b16 %v601, %v597
      %v842 = vpack.c.b16 %v602, %v598
      %v843 = vpack.c.b16 %v603, %v599
      %v844 = vpack.c.b16 %v604, %v600
      %v845 = vpack.c.b16 %v609, %v605
      %v846 = vpack.c.b16 %v610, %v606
      %v847 = vpack.c.b16 %v611, %v607
      %v848 = vpack.c.b16 %v612, %v608
      %v849 = vpack.c.b16 %v617, %v613
      %v850 = vpack.c.b16 %v618, %v614
      %v851 = vpack.c.b16 %v619, %v615
      %v852 = vpack.c.b16 %v620, %v616
      %v853 = vpack.c.b16 %v625, %v621
      %v854 = vpack.c.b16 %v626, %v622
      %v855 = vpack.c.b16 %v627, %v623
      %v856 = vpack.c.b16 %v628, %v624
      %v857 = vpack.c.b16 %v633, %v629
      %v858 = vpack.c.b16 %v634, %v630
      %v859 = vpack.c.b16 %v635, %v631
      %v860 = vpack.c.b16 %v636, %v632
      %v861 = vpack.c.b16 %v641, %v637
      %v862 = vpack.c.b16 %v642, %v638
      %v863 = vpack.c.b16 %v643, %v639
      %v864 = vpack.c.b16 %v644, %v640
      %v865 = vpack.c.b16 %v649, %v645
      %v866 = vpack.c.b16 %v650, %v646
      %v867 = vpack.c.b16 %v651, %v647
      %v868 = vpack.c.b16 %v652, %v648
      %v869 = vpack.c.b16 %v657, %v653
      %v870 = vpack.c.b16 %v658, %v654
      %v871 = vpack.c.b16 %v659, %v655
      %v872 = vpack.c.b16 %v660, %v656
      %v873 = vpack.c.b16 %v665, %v661
      %v874 = vpack.c.b16 %v666, %v662
      %v875 = vpack.c.b16 %v667, %v663
      %v876 = vpack.c.b16 %v668, %v664
      %v877 = vpack.c.b16 %v673, %v669
      %v878 = vpack.c.b16 %v674, %v670
      %v879 = vpack.c.b16 %v675, %v671
      %v880 = vpack.c.b16 %v676, %v672
      %v881 = vpack.c.b16 %v681, %v677
      %v882 = vpack.c.b16 %v682, %v678
      %v883 = vpack.c.b16 %v683, %v679
      %v884 = vpack.c.b16 %v684, %v680
      %v885 = vpack.c.b16 %v689, %v685
      %v886 = vpack.c.b16 %v690, %v686
      %v887 = vpack.c.b16 %v691, %v687
      %v888 = vpack.c.b16 %v692, %v688
      %v889 = vpack.c.b16 %v697, %v693
      %v890 = vpack.c.b16 %v698, %v694
      %v891 = vpack.c.b16 %v699, %v695
      %v892 = vpack.c.b16 %v700, %v696
      %v893 = vpack.c.b16 %v705, %v701
      %v894 = vpack.c.b16 %v706, %v702
      %v895 = vpack.c.b16 %v707, %v703
      %v896 = vpack.c.b16 %v708, %v704
      %v897 = vpack.c.b16 %v713, %v709
      %v898 = vpack.c.b16 %v714, %v710
      %v899 = vpack.c.b16 %v715, %v711
      %v900 = vpack.c.b16 %v716, %v712
      %v901 = vpack.c.b16 %v721, %v717
      %v902 = vpack.c.b16 %v722, %v718
      %v903 = vpack.c.b16 %v723, %v719
      %v904 = vpack.c.b16 %v724, %v720
      %v905 = vpack.c.b16 %v729, %v725
      %v906 = vpack.c.b16 %v730, %v726
      %v907 = vpack.c.b16 %v731, %v727
      %v908 = vpack.c.b16 %v732, %v728
      %v909 = vpack.c.b16 %v737, %v733
      %v910 = vpack.c.b16 %v738, %v734
      %v911 = vpack.c.b16 %v739, %v735
      %v912 = vpack.c.b16 %v740, %v736
      %v913 = vpack.c.b16 %v745, %v741
      %v914 = vpack.c.b16 %v746, %v742
      %v915 = vpack.c.b16 %v747, %v743
      %v916 = vpack.c.b16 %v748, %v744
      %v917 = vpack.c.b16 %v753, %v749
      %v918 = vpack.c.b16 %v754, %v750
      %v919 = vpack.c.b16 %v755, %v751
      %v920 = vpack.c.b16 %v756, %v752
      %v921 = vpack.c.b16 %v761, %v757
      %v922 = vpack.c.b16 %v762, %v758
      %v923 = vpack.c.b16 %v763, %v759
      %v924 = vpack.c.b16 %v764, %v760
      %v925 = vpack.c.b16 %v769, %v765
      %v926 = vpack.c.b16 %v770, %v766
      %v927 = vpack.c.b16 %v771, %v767
      %v928 = vpack.c.b16 %v772, %v768
      %v929 = vpack.c.b16 %v777, %v773
      %v930 = vpack.c.b16 %v778, %v774
      %v931 = vpack.c.b16 %v779, %v775
      %v932 = vpack.c.b16 %v780, %v776
      %v933 = vpack.c.b16 %v785, %v781
      %v934 = vpack.c.b16 %v786, %v782
      %v935 = vpack.c.b16 %v787, %v783
      %v936 = vpack.c.b16 %v788, %v784
      %v937 = vpack.c.b16 %v793, %v789
      %v938 = vpack.c.b16 %v794, %v790
      %v939 = vpack.c.b16 %v795, %v791
      %v940 = vpack.c.b16 %v796, %v792
      %v941 = vpack.c.b16 %v801, %v797
      %v942 = vpack.c.b16 %v802, %v798
      %v943 = vpack.c.b16 %v803, %v799
      %v944 = vpack.c.b16 %v804, %v800
      %v945 = vpack.c.b16 %v809, %v805
      %v946 = vpack.c.b16 %v810, %v806
      %v947 = vpack.c.b16 %v811, %v807
      %v948 = vpack.c.b16 %v812, %v808
      %v949 = vpack.c.b16 %v817, %v813
      %v950 = vpack.c.b16 %v818, %v814
      %v951 = vpack.c.b16 %v819, %v815
      %v952 = vpack.c.b16 %v820, %v816
      %v953 = vpack.c.b16 %v825, %v821
      %v954 = vpack.c.b16 %v826, %v822
      %v955 = vpack.c.b16 %v827, %v823
      %v956 = vpack.c.b16 %v828, %v824
      %1085 = vmatprep.subr.bf16.mxu0 %v830
      %1086 = vmatpush1.bf16.msra.mxu0 %v829
      %1087 = vmatprep.subr.bf16.mxu0 %v834
      %1088 = vmatpush1.bf16.msra.mxu0 %v833
      %1089 = vmatprep.subr.bf16.mxu0 %v838
      %1090 = vmatpush1.bf16.msra.mxu0 %v837
      %1091 = vmatprep.subr.bf16.mxu0 %v842
      %1092 = vmatpush1.bf16.msra.mxu0 %v841
      %1093 = vmatprep.subr.bf16.mxu0 %v846
      %1094 = vmatpush1.bf16.msra.mxu0 %v845
      %1095 = vmatprep.subr.bf16.mxu0 %v850
      %1096 = vmatpush1.bf16.msra.mxu0 %v849
      %1097 = vmatprep.subr.bf16.mxu0 %v854
      %1098 = vmatpush1.bf16.msra.mxu0 %v853
      %1099 = vmatprep.subr.bf16.mxu0 %v858
      %1100 = vmatpush1.bf16.msra.mxu0 %v857
      %1101 = vmatprep.subr.bf16.mxu0 %v862
      %1102 = vmatpush1.bf16.msra.mxu0 %v861
      %1103 = vmatprep.subr.bf16.mxu0 %v866
      %1104 = vmatpush1.bf16.msra.mxu0 %v865
      %1105 = vmatprep.subr.bf16.mxu0 %v870
      %1106 = vmatpush1.bf16.msra.mxu0 %v869
      %1107 = vmatprep.subr.bf16.mxu0 %v874
      %1108 = vmatpush1.bf16.msra.mxu0 %v873
      %1109 = vmatprep.subr.bf16.mxu0 %v878
      %1110 = vmatpush1.bf16.msra.mxu0 %v877
      %1111 = vmatprep.subr.bf16.mxu0 %v882
      %1112 = vmatpush1.bf16.msra.mxu0 %v881
      %1113 = vmatprep.subr.bf16.mxu0 %v886
      %1114 = vmatpush1.bf16.msra.mxu0 %v885
      %1115 = vmatprep.subr.bf16.mxu0 %v890
      %1116 = vmatpush1.bf16.msra.mxu0 %v889
      %1117 = vmatprep.mubr.bf16.mxu0 %v185
      %1118 = vmatmul.mubr.bf16.gmra.mrb[0].mxu0 %v184
      %v1119 = vpop.f32.mrb[0].mxu0
      %v1120 = vadd.f32 0.0, %v1119
      %v1121 = vpop.f32.mrb[0].mxu0
      %v1122 = vadd.f32 0.0, %v1121
      %v1123 = vpop.f32.mrb[0].mxu0
      %v1124 = vpop.f32.mrb[0].mxu0
      %1125 = vdwg.mxu0
      %1126 = vmatprep.subr.bf16.mxu0 %v894
      %1127 = vmatpush1.bf16.msra.mxu0 %v893
      %1128 = vmatprep.subr.bf16.mxu0 %v898
      %1129 = vmatpush1.bf16.msra.mxu0 %v897
      %1130 = vmatprep.subr.bf16.mxu0 %v902
      %1131 = vmatpush1.bf16.msra.mxu0 %v901
      %1132 = vmatprep.subr.bf16.mxu0 %v906
      %1133 = vmatpush1.bf16.msra.mxu0 %v905
      %1134 = vmatprep.subr.bf16.mxu0 %v910
      %1135 = vmatpush1.bf16.msra.mxu0 %v909
      %1136 = vmatprep.subr.bf16.mxu0 %v914
      %1137 = vmatpush1.bf16.msra.mxu0 %v913
      %1138 = vmatprep.subr.bf16.mxu0 %v918
      %1139 = vmatpush1.bf16.msra.mxu0 %v917
      %1140 = vmatprep.subr.bf16.mxu0 %v922
      %1141 = vmatpush1.bf16.msra.mxu0 %v921
      %1142 = vmatprep.subr.bf16.mxu0 %v926
      %1143 = vmatpush1.bf16.msra.mxu0 %v925
      %1144 = vmatprep.subr.bf16.mxu0 %v930
      %1145 = vmatpush1.bf16.msra.mxu0 %v929
      %1146 = vmatprep.subr.bf16.mxu0 %v934
      %1147 = vmatpush1.bf16.msra.mxu0 %v933
      %1148 = vmatprep.subr.bf16.mxu0 %v938
      %1149 = vmatpush1.bf16.msra.mxu0 %v937
      %1150 = vmatprep.subr.bf16.mxu0 %v942
      %1151 = vmatpush1.bf16.msra.mxu0 %v941
      %1152 = vmatprep.subr.bf16.mxu0 %v946
      %1153 = vmatpush1.bf16.msra.mxu0 %v945
      %1154 = vmatprep.subr.bf16.mxu0 %v950
      %1155 = vmatpush1.bf16.msra.mxu0 %v949
      %1156 = vmatprep.subr.bf16.mxu0 %v954
      %1157 = vmatpush1.bf16.msra.mxu0 %v953
      %1158 = vmatprep.mubr.bf16.mxu0 %v187
      %1159 = vmatmul.mubr.bf16.gmra.mrb[0].mxu0 %v186
      %v1160 = vpop.f32.mrb[0].mxu0
      %v1161 = vadd.f32 %v1120, %v1160
      %v1162 = vpop.f32.mrb[0].mxu0
      %v1163 = vadd.f32 %v1122, %v1162
      %v1164 = vpop.f32.mrb[0].mxu0
      %v1165 = vpop.f32.mrb[0].mxu0
      %1166 = vdwg.mxu0
      %1167 = vmatprep.subr.bf16.mxu0 %v832
      %1168 = vmatpush1.bf16.msra.mxu0 %v831
      %1169 = vmatprep.subr.bf16.mxu0 %v836
      %1170 = vmatpush1.bf16.msra.mxu0 %v835
      %1171 = vmatprep.subr.bf16.mxu0 %v840
      %1172 = vmatpush1.bf16.msra.mxu0 %v839
      %1173 = vmatprep.subr.bf16.mxu0 %v844
      %1174 = vmatpush1.bf16.msra.mxu0 %v843
      %1175 = vmatprep.subr.bf16.mxu0 %v848
      %1176 = vmatpush1.bf16.msra.mxu0 %v847
      %1177 = vmatprep.subr.bf16.mxu0 %v852
      %1178 = vmatpush1.bf16.msra.mxu0 %v851
      %1179 = vmatprep.subr.bf16.mxu0 %v856
      %1180 = vmatpush1.bf16.msra.mxu0 %v855
      %1181 = vmatprep.subr.bf16.mxu0 %v860
      %1182 = vmatpush1.bf16.msra.mxu0 %v859
      %1183 = vmatprep.subr.bf16.mxu0 %v864
      %1184 = vmatpush1.bf16.msra.mxu0 %v863
      %1185 = vmatprep.subr.bf16.mxu0 %v868
      %1186 = vmatpush1.bf16.msra.mxu0 %v867
      %1187 = vmatprep.subr.bf16.mxu0 %v872
      %1188 = vmatpush1.bf16.msra.mxu0 %v871
      %1189 = vmatprep.subr.bf16.mxu0 %v876
      %1190 = vmatpush1.bf16.msra.mxu0 %v875
      %1191 = vmatprep.subr.bf16.mxu0 %v880
      %1192 = vmatpush1.bf16.msra.mxu0 %v879
      %1193 = vmatprep.subr.bf16.mxu0 %v884
      %1194 = vmatpush1.bf16.msra.mxu0 %v883
      %1195 = vmatprep.subr.bf16.mxu0 %v888
      %1196 = vmatpush1.bf16.msra.mxu0 %v887
      %1197 = vmatprep.subr.bf16.mxu0 %v892
      %1198 = vmatpush1.bf16.msra.mxu0 %v891
      %1199 = vmatprep.mubr.bf16.mxu0 %v185
      %1200 = vmatmul.mubr.bf16.gmra.mrb[0].mxu0 %v184
      %v1201 = vpop.f32.mrb[0].mxu0
      %v1202 = vadd.f32 0.0, %v1201
      %v1203 = vpop.f32.mrb[0].mxu0
      %v1204 = vadd.f32 0.0, %v1203
      %v1205 = vpop.f32.mrb[0].mxu0
      %v1206 = vpop.f32.mrb[0].mxu0
      %1207 = vdwg.mxu0
      %1208 = vmatprep.subr.bf16.mxu0 %v896
      %1209 = vmatpush1.bf16.msra.mxu0 %v895
      %1210 = vmatprep.subr.bf16.mxu0 %v900
      %1211 = vmatpush1.bf16.msra.mxu0 %v899
      %1212 = vmatprep.subr.bf16.mxu0 %v904
      %1213 = vmatpush1.bf16.msra.mxu0 %v903
      %1214 = vmatprep.subr.bf16.mxu0 %v908
      %1215 = vmatpush1.bf16.msra.mxu0 %v907
      %1216 = vmatprep.subr.bf16.mxu0 %v912
      %1217 = vmatpush1.bf16.msra.mxu0 %v911
      %1218 = vmatprep.subr.bf16.mxu0 %v916
      %1219 = vmatpush1.bf16.msra.mxu0 %v915
      %1220 = vmatprep.subr.bf16.mxu0 %v920
      %1221 = vmatpush1.bf16.msra.mxu0 %v919
      %1222 = vmatprep.subr.bf16.mxu0 %v924
      %1223 = vmatpush1.bf16.msra.mxu0 %v923
      %1224 = vmatprep.subr.bf16.mxu0 %v928
      %1225 = vmatpush1.bf16.msra.mxu0 %v927
      %1226 = vmatprep.subr.bf16.mxu0 %v932
      %1227 = vmatpush1.bf16.msra.mxu0 %v931
      %1228 = vmatprep.subr.bf16.mxu0 %v936
      %1229 = vmatpush1.bf16.msra.mxu0 %v935
      %1230 = vmatprep.subr.bf16.mxu0 %v940
      %1231 = vmatpush1.bf16.msra.mxu0 %v939
      %1232 = vmatprep.subr.bf16.mxu0 %v944
      %1233 = vmatpush1.bf16.msra.mxu0 %v943
      %1234 = vmatprep.subr.bf16.mxu0 %v948
      %1235 = vmatpush1.bf16.msra.mxu0 %v947
      %1236 = vmatprep.subr.bf16.mxu0 %v952
      %1237 = vmatpush1.bf16.msra.mxu0 %v951
      %1238 = vmatprep.subr.bf16.mxu0 %v956
      %1239 = vmatpush1.bf16.msra.mxu0 %v955
      %1240 = vmatprep.mubr.bf16.mxu0 %v187
      %1241 = vmatmul.mubr.bf16.gmra.mrb[0].mxu0 %v186
      %v1242 = vpop.f32.mrb[0].mxu0
      %v1243 = vadd.f32 %v1202, %v1242
      %v1244 = vpop.f32.mrb[0].mxu0
      %v1245 = vadd.f32 %v1204, %v1244
      %v1246 = vpop.f32.mrb[0].mxu0
      %v1247 = vpop.f32.mrb[0].mxu0
      %1248 = vdwg.mxu0
      %v1377 = vunpack.c.l.b16 %v188
      %v1378 = vunpack.c.h.b16 %v188
      %v1379 = vunpack.c.l.b16 %v189
      %v1380 = vunpack.c.h.b16 %v189
      %v1381 = vunpack.c.l.b16 %v190
      %v1382 = vunpack.c.h.b16 %v190
      %v1383 = vunpack.c.l.b16 %v191
      %v1384 = vunpack.c.h.b16 %v191
      %v1385 = vunpack.c.l.b16 %v192
      %v1386 = vunpack.c.h.b16 %v192
      %v1387 = vunpack.c.l.b16 %v193
      %v1388 = vunpack.c.h.b16 %v193
      %v1389 = vunpack.c.l.b16 %v194
      %v1390 = vunpack.c.h.b16 %v194
      %v1391 = vunpack.c.l.b16 %v195
      %v1392 = vunpack.c.h.b16 %v195
      %v1393 = vunpack.c.l.b16 %v196
      %v1394 = vunpack.c.h.b16 %v196
      %v1395 = vunpack.c.l.b16 %v197
      %v1396 = vunpack.c.h.b16 %v197
      %v1397 = vunpack.c.l.b16 %v198
      %v1398 = vunpack.c.h.b16 %v198
      %v1399 = vunpack.c.l.b16 %v199
      %v1400 = vunpack.c.h.b16 %v199
      %v1401 = vunpack.c.l.b16 %v200
      %v1402 = vunpack.c.h.b16 %v200
      %v1403 = vunpack.c.l.b16 %v201
      %v1404 = vunpack.c.h.b16 %v201
      %v1405 = vunpack.c.l.b16 %v202
      %v1406 = vunpack.c.h.b16 %v202
      %v1407 = vunpack.c.l.b16 %v203
      %v1408 = vunpack.c.h.b16 %v203
      %v1409 = vunpack.c.l.b16 %v204
      %v1410 = vunpack.c.h.b16 %v204
      %v1411 = vunpack.c.l.b16 %v205
      %v1412 = vunpack.c.h.b16 %v205
      %v1413 = vunpack.c.l.b16 %v206
      %v1414 = vunpack.c.h.b16 %v206
      %v1415 = vunpack.c.l.b16 %v207
      %v1416 = vunpack.c.h.b16 %v207
      %v1417 = vunpack.c.l.b16 %v208
      %v1418 = vunpack.c.h.b16 %v208
      %v1419 = vunpack.c.l.b16 %v209
      %v1420 = vunpack.c.h.b16 %v209
      %v1421 = vunpack.c.l.b16 %v210
      %v1422 = vunpack.c.h.b16 %v210
      %v1423 = vunpack.c.l.b16 %v211
      %v1424 = vunpack.c.h.b16 %v211
      %v1425 = vunpack.c.l.b16 %v212
      %v1426 = vunpack.c.h.b16 %v212
      %v1427 = vunpack.c.l.b16 %v213
      %v1428 = vunpack.c.h.b16 %v213
      %v1429 = vunpack.c.l.b16 %v214
      %v1430 = vunpack.c.h.b16 %v214
      %v1431 = vunpack.c.l.b16 %v215
      %v1432 = vunpack.c.h.b16 %v215
      %v1433 = vunpack.c.l.b16 %v216
      %v1434 = vunpack.c.h.b16 %v216
      %v1435 = vunpack.c.l.b16 %v217
      %v1436 = vunpack.c.h.b16 %v217
      %v1437 = vunpack.c.l.b16 %v218
      %v1438 = vunpack.c.h.b16 %v218
      %v1439 = vunpack.c.l.b16 %v219
      %v1440 = vunpack.c.h.b16 %v219
      %v1441 = vunpack.c.l.b16 %v220
      %v1442 = vunpack.c.h.b16 %v220
      %v1443 = vunpack.c.l.b16 %v221
      %v1444 = vunpack.c.h.b16 %v221
      %v1445 = vunpack.c.l.b16 %v222
      %v1446 = vunpack.c.h.b16 %v222
      %v1447 = vunpack.c.l.b16 %v223
      %v1448 = vunpack.c.h.b16 %v223
      %v1449 = vunpack.c.l.b16 %v224
      %v1450 = vunpack.c.h.b16 %v224
      %v1451 = vunpack.c.l.b16 %v225
      %v1452 = vunpack.c.h.b16 %v225
      %v1453 = vunpack.c.l.b16 %v226
      %v1454 = vunpack.c.h.b16 %v226
      %v1455 = vunpack.c.l.b16 %v227
      %v1456 = vunpack.c.h.b16 %v227
      %v1457 = vunpack.c.l.b16 %v228
      %v1458 = vunpack.c.h.b16 %v228
      %v1459 = vunpack.c.l.b16 %v229
      %v1460 = vunpack.c.h.b16 %v229
      %v1461 = vunpack.c.l.b16 %v230
      %v1462 = vunpack.c.h.b16 %v230
      %v1463 = vunpack.c.l.b16 %v231
      %v1464 = vunpack.c.h.b16 %v231
      %v1465 = vunpack.c.l.b16 %v232
      %v1466 = vunpack.c.h.b16 %v232
      %v1467 = vunpack.c.l.b16 %v233
      %v1468 = vunpack.c.h.b16 %v233
      %v1469 = vunpack.c.l.b16 %v234
      %v1470 = vunpack.c.h.b16 %v234
      %v1471 = vunpack.c.l.b16 %v235
      %v1472 = vunpack.c.h.b16 %v235
      %v1473 = vunpack.c.l.b16 %v236
      %v1474 = vunpack.c.h.b16 %v236
      %v1475 = vunpack.c.l.b16 %v237
      %v1476 = vunpack.c.h.b16 %v237
      %v1477 = vunpack.c.l.b16 %v238
      %v1478 = vunpack.c.h.b16 %v238
      %v1479 = vunpack.c.l.b16 %v239
      %v1480 = vunpack.c.h.b16 %v239
      %v1481 = vunpack.c.l.b16 %v240
      %v1482 = vunpack.c.h.b16 %v240
      %v1483 = vunpack.c.l.b16 %v241
      %v1484 = vunpack.c.h.b16 %v241
      %v1485 = vunpack.c.l.b16 %v242
      %v1486 = vunpack.c.h.b16 %v242
      %v1487 = vunpack.c.l.b16 %v243
      %v1488 = vunpack.c.h.b16 %v243
      %v1489 = vunpack.c.l.b16 %v244
      %v1490 = vunpack.c.h.b16 %v244
      %v1491 = vunpack.c.l.b16 %v245
      %v1492 = vunpack.c.h.b16 %v245
      %v1493 = vunpack.c.l.b16 %v246
      %v1494 = vunpack.c.h.b16 %v246
      %v1495 = vunpack.c.l.b16 %v247
      %v1496 = vunpack.c.h.b16 %v247
      %v1497 = vunpack.c.l.b16 %v248
      %v1498 = vunpack.c.h.b16 %v248
      %v1499 = vunpack.c.l.b16 %v249
      %v1500 = vunpack.c.h.b16 %v249
      %v1501 = vunpack.c.l.b16 %v250
      %v1502 = vunpack.c.h.b16 %v250
      %v1503 = vunpack.c.l.b16 %v251
      %v1504 = vunpack.c.h.b16 %v251
      %v1505 = vunpack.c.l.b16 %v252
      %v1506 = vunpack.c.h.b16 %v252
      %v1507 = vunpack.c.l.b16 %v253
      %v1508 = vunpack.c.h.b16 %v253
      %v1509 = vunpack.c.l.b16 %v254
      %v1510 = vunpack.c.h.b16 %v254
      %v1511 = vunpack.c.l.b16 %v255
      %v1512 = vunpack.c.h.b16 %v255
      %v1513 = vunpack.c.l.b16 %v256
      %v1514 = vunpack.c.h.b16 %v256
      %v1515 = vunpack.c.l.b16 %v257
      %v1516 = vunpack.c.h.b16 %v257
      %v1517 = vunpack.c.l.b16 %v258
      %v1518 = vunpack.c.h.b16 %v258
      %v1519 = vunpack.c.l.b16 %v259
      %v1520 = vunpack.c.h.b16 %v259
      %v1521 = vunpack.c.l.b16 %v260
      %v1522 = vunpack.c.h.b16 %v260
      %v1523 = vunpack.c.l.b16 %v261
      %v1524 = vunpack.c.h.b16 %v261
      %v1525 = vunpack.c.l.b16 %v262
      %v1526 = vunpack.c.h.b16 %v262
      %v1527 = vunpack.c.l.b16 %v263
      %v1528 = vunpack.c.h.b16 %v263
      %v1529 = vunpack.c.l.b16 %v264
      %v1530 = vunpack.c.h.b16 %v264
      %v1531 = vunpack.c.l.b16 %v265
      %v1532 = vunpack.c.h.b16 %v265
      %v1533 = vunpack.c.l.b16 %v266
      %v1534 = vunpack.c.h.b16 %v266
      %v1535 = vunpack.c.l.b16 %v267
      %v1536 = vunpack.c.h.b16 %v267
      %v1537 = vunpack.c.l.b16 %v268
      %v1538 = vunpack.c.h.b16 %v268
      %v1539 = vunpack.c.l.b16 %v269
      %v1540 = vunpack.c.h.b16 %v269
      %v1541 = vunpack.c.l.b16 %v270
      %v1542 = vunpack.c.h.b16 %v270
      %v1543 = vunpack.c.l.b16 %v271
      %v1544 = vunpack.c.h.b16 %v271
      %v1545 = vunpack.c.l.b16 %v272
      %v1546 = vunpack.c.h.b16 %v272
      %v1547 = vunpack.c.l.b16 %v273
      %v1548 = vunpack.c.h.b16 %v273
      %v1549 = vunpack.c.l.b16 %v274
      %v1550 = vunpack.c.h.b16 %v274
      %v1551 = vunpack.c.l.b16 %v275
      %v1552 = vunpack.c.h.b16 %v275
      %v1553 = vunpack.c.l.b16 %v276
      %v1554 = vunpack.c.h.b16 %v276
      %v1555 = vunpack.c.l.b16 %v277
      %v1556 = vunpack.c.h.b16 %v277
      %v1557 = vunpack.c.l.b16 %v278
      %v1558 = vunpack.c.h.b16 %v278
      %v1559 = vunpack.c.l.b16 %v279
      %v1560 = vunpack.c.h.b16 %v279
      %v1561 = vunpack.c.l.b16 %v280
      %v1562 = vunpack.c.h.b16 %v280
      %v1563 = vunpack.c.l.b16 %v281
      %v1564 = vunpack.c.h.b16 %v281
      %v1565 = vunpack.c.l.b16 %v282
      %v1566 = vunpack.c.h.b16 %v282
      %v1567 = vunpack.c.l.b16 %v283
      %v1568 = vunpack.c.h.b16 %v283
      %v1569 = vunpack.c.l.b16 %v284
      %v1570 = vunpack.c.h.b16 %v284
      %v1571 = vunpack.c.l.b16 %v285
      %v1572 = vunpack.c.h.b16 %v285
      %v1573 = vunpack.c.l.b16 %v286
      %v1574 = vunpack.c.h.b16 %v286
      %v1575 = vunpack.c.l.b16 %v287
      %v1576 = vunpack.c.h.b16 %v287
      %v1577 = vunpack.c.l.b16 %v288
      %v1578 = vunpack.c.h.b16 %v288
      %v1579 = vunpack.c.l.b16 %v289
      %v1580 = vunpack.c.h.b16 %v289
      %v1581 = vunpack.c.l.b16 %v290
      %v1582 = vunpack.c.h.b16 %v290
      %v1583 = vunpack.c.l.b16 %v291
      %v1584 = vunpack.c.h.b16 %v291
      %v1585 = vunpack.c.l.b16 %v292
      %v1586 = vunpack.c.h.b16 %v292
      %v1587 = vunpack.c.l.b16 %v293
      %v1588 = vunpack.c.h.b16 %v293
      %v1589 = vunpack.c.l.b16 %v294
      %v1590 = vunpack.c.h.b16 %v294
      %v1591 = vunpack.c.l.b16 %v295
      %v1592 = vunpack.c.h.b16 %v295
      %v1593 = vunpack.c.l.b16 %v296
      %v1594 = vunpack.c.h.b16 %v296
      %v1595 = vunpack.c.l.b16 %v297
      %v1596 = vunpack.c.h.b16 %v297
      %v1597 = vunpack.c.l.b16 %v298
      %v1598 = vunpack.c.h.b16 %v298
      %v1599 = vunpack.c.l.b16 %v299
      %v1600 = vunpack.c.h.b16 %v299
      %v1601 = vunpack.c.l.b16 %v300
      %v1602 = vunpack.c.h.b16 %v300
      %v1603 = vunpack.c.l.b16 %v301
      %v1604 = vunpack.c.h.b16 %v301
      %v1605 = vunpack.c.l.b16 %v302
      %v1606 = vunpack.c.h.b16 %v302
      %v1607 = vunpack.c.l.b16 %v303
      %v1608 = vunpack.c.h.b16 %v303
      %v1609 = vunpack.c.l.b16 %v304
      %v1610 = vunpack.c.h.b16 %v304
      %v1611 = vunpack.c.l.b16 %v305
      %v1612 = vunpack.c.h.b16 %v305
      %v1613 = vunpack.c.l.b16 %v306
      %v1614 = vunpack.c.h.b16 %v306
      %v1615 = vunpack.c.l.b16 %v307
      %v1616 = vunpack.c.h.b16 %v307
      %v1617 = vunpack.c.l.b16 %v308
      %v1618 = vunpack.c.h.b16 %v308
      %v1619 = vunpack.c.l.b16 %v309
      %v1620 = vunpack.c.h.b16 %v309
      %v1621 = vunpack.c.l.b16 %v310
      %v1622 = vunpack.c.h.b16 %v310
      %v1623 = vunpack.c.l.b16 %v311
      %v1624 = vunpack.c.h.b16 %v311
      %v1625 = vunpack.c.l.b16 %v312
      %v1626 = vunpack.c.h.b16 %v312
      %v1627 = vunpack.c.l.b16 %v313
      %v1628 = vunpack.c.h.b16 %v313
      %v1629 = vunpack.c.l.b16 %v314
      %v1630 = vunpack.c.h.b16 %v314
      %v1631 = vunpack.c.l.b16 %v315
      %v1632 = vunpack.c.h.b16 %v315
      %v1633 = vpack.c.b16 %v1381, %v1377
      %v1634 = vpack.c.b16 %v1382, %v1378
      %v1635 = vpack.c.b16 %v1383, %v1379
      %v1636 = vpack.c.b16 %v1384, %v1380
      %v1637 = vpack.c.b16 %v1389, %v1385
      %v1638 = vpack.c.b16 %v1390, %v1386
      %v1639 = vpack.c.b16 %v1391, %v1387
      %v1640 = vpack.c.b16 %v1392, %v1388
      %v1641 = vpack.c.b16 %v1397, %v1393
      %v1642 = vpack.c.b16 %v1398, %v1394
      %v1643 = vpack.c.b16 %v1399, %v1395
      %v1644 = vpack.c.b16 %v1400, %v1396
      %v1645 = vpack.c.b16 %v1405, %v1401
      %v1646 = vpack.c.b16 %v1406, %v1402
      %v1647 = vpack.c.b16 %v1407, %v1403
      %v1648 = vpack.c.b16 %v1408, %v1404
      %v1649 = vpack.c.b16 %v1413, %v1409
      %v1650 = vpack.c.b16 %v1414, %v1410
      %v1651 = vpack.c.b16 %v1415, %v1411
      %v1652 = vpack.c.b16 %v1416, %v1412
      %v1653 = vpack.c.b16 %v1421, %v1417
      %v1654 = vpack.c.b16 %v1422, %v1418
      %v1655 = vpack.c.b16 %v1423, %v1419
      %v1656 = vpack.c.b16 %v1424, %v1420
      %v1657 = vpack.c.b16 %v1429, %v1425
      %v1658 = vpack.c.b16 %v1430, %v1426
      %v1659 = vpack.c.b16 %v1431, %v1427
      %v1660 = vpack.c.b16 %v1432, %v1428
      %v1661 = vpack.c.b16 %v1437, %v1433
      %v1662 = vpack.c.b16 %v1438, %v1434
      %v1663 = vpack.c.b16 %v1439, %v1435
      %v1664 = vpack.c.b16 %v1440, %v1436
      %v1665 = vpack.c.b16 %v1445, %v1441
      %v1666 = vpack.c.b16 %v1446, %v1442
      %v1667 = vpack.c.b16 %v1447, %v1443
      %v1668 = vpack.c.b16 %v1448, %v1444
      %v1669 = vpack.c.b16 %v1453, %v1449
      %v1670 = vpack.c.b16 %v1454, %v1450
      %v1671 = vpack.c.b16 %v1455, %v1451
      %v1672 = vpack.c.b16 %v1456, %v1452
      %v1673 = vpack.c.b16 %v1461, %v1457
      %v1674 = vpack.c.b16 %v1462, %v1458
      %v1675 = vpack.c.b16 %v1463, %v1459
      %v1676 = vpack.c.b16 %v1464, %v1460
      %v1677 = vpack.c.b16 %v1469, %v1465
      %v1678 = vpack.c.b16 %v1470, %v1466
      %v1679 = vpack.c.b16 %v1471, %v1467
      %v1680 = vpack.c.b16 %v1472, %v1468
      %v1681 = vpack.c.b16 %v1477, %v1473
      %v1682 = vpack.c.b16 %v1478, %v1474
      %v1683 = vpack.c.b16 %v1479, %v1475
      %v1684 = vpack.c.b16 %v1480, %v1476
      %v1685 = vpack.c.b16 %v1485, %v1481
      %v1686 = vpack.c.b16 %v1486, %v1482
      %v1687 = vpack.c.b16 %v1487, %v1483
      %v1688 = vpack.c.b16 %v1488, %v1484
      %v1689 = vpack.c.b16 %v1493, %v1489
      %v1690 = vpack.c.b16 %v1494, %v1490
      %v1691 = vpack.c.b16 %v1495, %v1491
      %v1692 = vpack.c.b16 %v1496, %v1492
      %v1693 = vpack.c.b16 %v1501, %v1497
      %v1694 = vpack.c.b16 %v1502, %v1498
      %v1695 = vpack.c.b16 %v1503, %v1499
      %v1696 = vpack.c.b16 %v1504, %v1500
      %v1697 = vpack.c.b16 %v1509, %v1505
      %v1698 = vpack.c.b16 %v1510, %v1506
      %v1699 = vpack.c.b16 %v1511, %v1507
      %v1700 = vpack.c.b16 %v1512, %v1508
      %v1701 = vpack.c.b16 %v1517, %v1513
      %v1702 = vpack.c.b16 %v1518, %v1514
      %v1703 = vpack.c.b16 %v1519, %v1515
      %v1704 = vpack.c.b16 %v1520, %v1516
      %v1705 = vpack.c.b16 %v1525, %v1521
      %v1706 = vpack.c.b16 %v1526, %v1522
      %v1707 = vpack.c.b16 %v1527, %v1523
      %v1708 = vpack.c.b16 %v1528, %v1524
      %v1709 = vpack.c.b16 %v1533, %v1529
      %v1710 = vpack.c.b16 %v1534, %v1530
      %v1711 = vpack.c.b16 %v1535, %v1531
      %v1712 = vpack.c.b16 %v1536, %v1532
      %v1713 = vpack.c.b16 %v1541, %v1537
      %v1714 = vpack.c.b16 %v1542, %v1538
      %v1715 = vpack.c.b16 %v1543, %v1539
      %v1716 = vpack.c.b16 %v1544, %v1540
      %v1717 = vpack.c.b16 %v1549, %v1545
      %v1718 = vpack.c.b16 %v1550, %v1546
      %v1719 = vpack.c.b16 %v1551, %v1547
      %v1720 = vpack.c.b16 %v1552, %v1548
      %v1721 = vpack.c.b16 %v1557, %v1553
      %v1722 = vpack.c.b16 %v1558, %v1554
      %v1723 = vpack.c.b16 %v1559, %v1555
      %v1724 = vpack.c.b16 %v1560, %v1556
      %v1725 = vpack.c.b16 %v1565, %v1561
      %v1726 = vpack.c.b16 %v1566, %v1562
      %v1727 = vpack.c.b16 %v1567, %v1563
      %v1728 = vpack.c.b16 %v1568, %v1564
      %v1729 = vpack.c.b16 %v1573, %v1569
      %v1730 = vpack.c.b16 %v1574, %v1570
      %v1731 = vpack.c.b16 %v1575, %v1571
      %v1732 = vpack.c.b16 %v1576, %v1572
      %v1733 = vpack.c.b16 %v1581, %v1577
      %v1734 = vpack.c.b16 %v1582, %v1578
      %v1735 = vpack.c.b16 %v1583, %v1579
      %v1736 = vpack.c.b16 %v1584, %v1580
      %v1737 = vpack.c.b16 %v1589, %v1585
      %v1738 = vpack.c.b16 %v1590, %v1586
      %v1739 = vpack.c.b16 %v1591, %v1587
      %v1740 = vpack.c.b16 %v1592, %v1588
      %v1741 = vpack.c.b16 %v1597, %v1593
      %v1742 = vpack.c.b16 %v1598, %v1594
      %v1743 = vpack.c.b16 %v1599, %v1595
      %v1744 = vpack.c.b16 %v1600, %v1596
      %v1745 = vpack.c.b16 %v1605, %v1601
      %v1746 = vpack.c.b16 %v1606, %v1602
      %v1747 = vpack.c.b16 %v1607, %v1603
      %v1748 = vpack.c.b16 %v1608, %v1604
      %v1749 = vpack.c.b16 %v1613, %v1609
      %v1750 = vpack.c.b16 %v1614, %v1610
      %v1751 = vpack.c.b16 %v1615, %v1611
      %v1752 = vpack.c.b16 %v1616, %v1612
      %v1753 = vpack.c.b16 %v1621, %v1617
      %v1754 = vpack.c.b16 %v1622, %v1618
      %v1755 = vpack.c.b16 %v1623, %v1619
      %v1756 = vpack.c.b16 %v1624, %v1620
      %v1757 = vpack.c.b16 %v1629, %v1625
      %v1758 = vpack.c.b16 %v1630, %v1626
      %v1759 = vpack.c.b16 %v1631, %v1627
      %v1760 = vpack.c.b16 %v1632, %v1628
      %1889 = vmatprep.subr.bf16.mxu0 %v1634
      %1890 = vmatpush1.bf16.msra.mxu0 %v1633
      %1891 = vmatprep.subr.bf16.mxu0 %v1638
      %1892 = vmatpush1.bf16.msra.mxu0 %v1637
      %1893 = vmatprep.subr.bf16.mxu0 %v1642
      %1894 = vmatpush1.bf16.msra.mxu0 %v1641
      %1895 = vmatprep.subr.bf16.mxu0 %v1646
      %1896 = vmatpush1.bf16.msra.mxu0 %v1645
      %1897 = vmatprep.subr.bf16.mxu0 %v1650
      %1898 = vmatpush1.bf16.msra.mxu0 %v1649
      %1899 = vmatprep.subr.bf16.mxu0 %v1654
      %1900 = vmatpush1.bf16.msra.mxu0 %v1653
      %1901 = vmatprep.subr.bf16.mxu0 %v1658
      %1902 = vmatpush1.bf16.msra.mxu0 %v1657
      %1903 = vmatprep.subr.bf16.mxu0 %v1662
      %1904 = vmatpush1.bf16.msra.mxu0 %v1661
      %1905 = vmatprep.subr.bf16.mxu0 %v1666
      %1906 = vmatpush1.bf16.msra.mxu0 %v1665
      %1907 = vmatprep.subr.bf16.mxu0 %v1670
      %1908 = vmatpush1.bf16.msra.mxu0 %v1669
      %1909 = vmatprep.subr.bf16.mxu0 %v1674
      %1910 = vmatpush1.bf16.msra.mxu0 %v1673
      %1911 = vmatprep.subr.bf16.mxu0 %v1678
      %1912 = vmatpush1.bf16.msra.mxu0 %v1677
      %1913 = vmatprep.subr.bf16.mxu0 %v1682
      %1914 = vmatpush1.bf16.msra.mxu0 %v1681
      %1915 = vmatprep.subr.bf16.mxu0 %v1686
      %1916 = vmatpush1.bf16.msra.mxu0 %v1685
      %1917 = vmatprep.subr.bf16.mxu0 %v1690
      %1918 = vmatpush1.bf16.msra.mxu0 %v1689
      %1919 = vmatprep.subr.bf16.mxu0 %v1694
      %1920 = vmatpush1.bf16.msra.mxu0 %v1693
      %1921 = vmatprep.mubr.bf16.mxu0 %v176
      %1922 = vmatmul.mubr.bf16.gmra.mrb[0].mxu0 %v175
      %v1923 = vpop.f32.mrb[0].mxu0
      %v1924 = vadd.f32 %v1161, %v1923
      %v1925 = vpop.f32.mrb[0].mxu0
      %v1926 = vadd.f32 %v1163, %v1925
      %v1927 = vpop.f32.mrb[0].mxu0
      %v1928 = vpop.f32.mrb[0].mxu0
      %1929 = vdwg.mxu0
      %1930 = vmatprep.subr.bf16.mxu0 %v1698
      %1931 = vmatpush1.bf16.msra.mxu0 %v1697
      %1932 = vmatprep.subr.bf16.mxu0 %v1702
      %1933 = vmatpush1.bf16.msra.mxu0 %v1701
      %1934 = vmatprep.subr.bf16.mxu0 %v1706
      %1935 = vmatpush1.bf16.msra.mxu0 %v1705
      %1936 = vmatprep.subr.bf16.mxu0 %v1710
      %1937 = vmatpush1.bf16.msra.mxu0 %v1709
      %1938 = vmatprep.subr.bf16.mxu0 %v1714
      %1939 = vmatpush1.bf16.msra.mxu0 %v1713
      %1940 = vmatprep.subr.bf16.mxu0 %v1718
      %1941 = vmatpush1.bf16.msra.mxu0 %v1717
      %1942 = vmatprep.subr.bf16.mxu0 %v1722
      %1943 = vmatpush1.bf16.msra.mxu0 %v1721
      %1944 = vmatprep.subr.bf16.mxu0 %v1726
      %1945 = vmatpush1.bf16.msra.mxu0 %v1725
      %1946 = vmatprep.subr.bf16.mxu0 %v1730
      %1947 = vmatpush1.bf16.msra.mxu0 %v1729
      %1948 = vmatprep.subr.bf16.mxu0 %v1734
      %1949 = vmatpush1.bf16.msra.mxu0 %v1733
      %1950 = vmatprep.subr.bf16.mxu0 %v1738
      %1951 = vmatpush1.bf16.msra.mxu0 %v1737
      %1952 = vmatprep.subr.bf16.mxu0 %v1742
      %1953 = vmatpush1.bf16.msra.mxu0 %v1741
      %1954 = vmatprep.subr.bf16.mxu0 %v1746
      %1955 = vmatpush1.bf16.msra.mxu0 %v1745
      %1956 = vmatprep.subr.bf16.mxu0 %v1750
      %1957 = vmatpush1.bf16.msra.mxu0 %v1749
      %1958 = vmatprep.subr.bf16.mxu0 %v1754
      %1959 = vmatpush1.bf16.msra.mxu0 %v1753
      %1960 = vmatprep.subr.bf16.mxu0 %v1758
      %1961 = vmatpush1.bf16.msra.mxu0 %v1757
      %1962 = vmatprep.mubr.bf16.mxu0 %v178
      %1963 = vmatmul.mubr.bf16.gmra.mrb[0].mxu0 %v177
      %v1964 = vpop.f32.mrb[0].mxu0
      %v1965 = vadd.f32 %v1924, %v1964
      %v1966 = vpop.f32.mrb[0].mxu0
      %v1967 = vadd.f32 %v1926, %v1966
      %v1968 = vpop.f32.mrb[0].mxu0
      %v1969 = vpop.f32.mrb[0].mxu0
      %1970 = vdwg.mxu0
      %1971 = vmatprep.subr.bf16.mxu0 %v1636
      %1972 = vmatpush1.bf16.msra.mxu0 %v1635
      %1973 = vmatprep.subr.bf16.mxu0 %v1640
      %1974 = vmatpush1.bf16.msra.mxu0 %v1639
      %1975 = vmatprep.subr.bf16.mxu0 %v1644
      %1976 = vmatpush1.bf16.msra.mxu0 %v1643
      %1977 = vmatprep.subr.bf16.mxu0 %v1648
      %1978 = vmatpush1.bf16.msra.mxu0 %v1647
      %1979 = vmatprep.subr.bf16.mxu0 %v1652
      %1980 = vmatpush1.bf16.msra.mxu0 %v1651
      %1981 = vmatprep.subr.bf16.mxu0 %v1656
      %1982 = vmatpush1.bf16.msra.mxu0 %v1655
      %1983 = vmatprep.subr.bf16.mxu0 %v1660
      %1984 = vmatpush1.bf16.msra.mxu0 %v1659
      %1985 = vmatprep.subr.bf16.mxu0 %v1664
      %1986 = vmatpush1.bf16.msra.mxu0 %v1663
      %1987 = vmatprep.subr.bf16.mxu0 %v1668
      %1988 = vmatpush1.bf16.msra.mxu0 %v1667
      %1989 = vmatprep.subr.bf16.mxu0 %v1672
      %1990 = vmatpush1.bf16.msra.mxu0 %v1671
      %1991 = vmatprep.subr.bf16.mxu0 %v1676
      %1992 = vmatpush1.bf16.msra.mxu0 %v1675
      %1993 = vmatprep.subr.bf16.mxu0 %v1680
      %1994 = vmatpush1.bf16.msra.mxu0 %v1679
      %1995 = vmatprep.subr.bf16.mxu0 %v1684
      %1996 = vmatpush1.bf16.msra.mxu0 %v1683
      %1997 = vmatprep.subr.bf16.mxu0 %v1688
      %1998 = vmatpush1.bf16.msra.mxu0 %v1687
      %1999 = vmatprep.subr.bf16.mxu0 %v1692
      %2000 = vmatpush1.bf16.msra.mxu0 %v1691
      %2001 = vmatprep.subr.bf16.mxu0 %v1696
      %2002 = vmatpush1.bf16.msra.mxu0 %v1695
      %2003 = vmatprep.mubr.bf16.mxu0 %v176
      %2004 = vmatmul.mubr.bf16.gmra.mrb[0].mxu0 %v175
      %v2005 = vpop.f32.mrb[0].mxu0
      %v2006 = vadd.f32 %v1243, %v2005
      %v2007 = vpop.f32.mrb[0].mxu0
      %v2008 = vadd.f32 %v1245, %v2007
      %v2009 = vpop.f32.mrb[0].mxu0
      %v2010 = vpop.f32.mrb[0].mxu0
      %2011 = vdwg.mxu0
      %2012 = vmatprep.subr.bf16.mxu0 %v1700
      %2013 = vmatpush1.bf16.msra.mxu0 %v1699
      %2014 = vmatprep.subr.bf16.mxu0 %v1704
      %2015 = vmatpush1.bf16.msra.mxu0 %v1703
      %2016 = vmatprep.subr.bf16.mxu0 %v1708
      %2017 = vmatpush1.bf16.msra.mxu0 %v1707
      %2018 = vmatprep.subr.bf16.mxu0 %v1712
      %2019 = vmatpush1.bf16.msra.mxu0 %v1711
      %2020 = vmatprep.subr.bf16.mxu0 %v1716
      %2021 = vmatpush1.bf16.msra.mxu0 %v1715
      %2022 = vmatprep.subr.bf16.mxu0 %v1720
      %2023 = vmatpush1.bf16.msra.mxu0 %v1719
      %2024 = vmatprep.subr.bf16.mxu0 %v1724
      %2025 = vmatpush1.bf16.msra.mxu0 %v1723
      %2026 = vmatprep.subr.bf16.mxu0 %v1728
      %2027 = vmatpush1.bf16.msra.mxu0 %v1727
      %2028 = vmatprep.subr.bf16.mxu0 %v1732
      %2029 = vmatpush1.bf16.msra.mxu0 %v1731
      %2030 = vmatprep.subr.bf16.mxu0 %v1736
      %2031 = vmatpush1.bf16.msra.mxu0 %v1735
      %2032 = vmatprep.subr.bf16.mxu0 %v1740
      %2033 = vmatpush1.bf16.msra.mxu0 %v1739
      %2034 = vmatprep.subr.bf16.mxu0 %v1744
      %2035 = vmatpush1.bf16.msra.mxu0 %v1743
      %2036 = vmatprep.subr.bf16.mxu0 %v1748
      %2037 = vmatpush1.bf16.msra.mxu0 %v1747
      %2038 = vmatprep.subr.bf16.mxu0 %v1752
      %2039 = vmatpush1.bf16.msra.mxu0 %v1751
      %2040 = vmatprep.subr.bf16.mxu0 %v1756
      %2041 = vmatpush1.bf16.msra.mxu0 %v1755
      %2042 = vmatprep.subr.bf16.mxu0 %v1760
      %2043 = vmatpush1.bf16.msra.mxu0 %v1759
      %2044 = vmatprep.mubr.bf16.mxu0 %v178
      %2045 = vmatmul.mubr.bf16.gmra.mrb[0].mxu0 %v177
      %v2046 = vpop.f32.mrb[0].mxu0
      %v2047 = vadd.f32 %v2006, %v2046
      %v2048 = vpop.f32.mrb[0].mxu0
      %v2049 = vadd.f32 %v2008, %v2048
      %v2050 = vpop.f32.mrb[0].mxu0
      %v2051 = vpop.f32.mrb[0].mxu0
      %2052 = vdwg.mxu0
      %s2053 = scalar_lea.vmem %s1, 4096
      %v2054 = vld [vmem:[%s2053] sm:$0xff]
      %v2055 = vld [vmem:[%s2053 + $0x8] sm:$0xff]
      %v2056 = vld [vmem:[%s2053 + $0x10] sm:$0xff]
      %v2057 = vld [vmem:[%s2053 + $0x18] sm:$0xff]
      %v2058 = vld [vmem:[%s2053 + $0x20] sm:$0xff]
      %v2059 = vld [vmem:[%s2053 + $0x28] sm:$0xff]
      %v2060 = vld [vmem:[%s2053 + $0x30] sm:$0xff]
      %v2061 = vld [vmem:[%s2053 + $0x38] sm:$0xff]
      %v2062 = vld [vmem:[%s2053 + $0x40] sm:$0xff]
      %v2063 = vld [vmem:[%s2053 + $0x48] sm:$0xff]
      %v2064 = vld [vmem:[%s2053 + $0x50] sm:$0xff]
      %v2065 = vld [vmem:[%s2053 + $0x58] sm:$0xff]
      %v2066 = vld [vmem:[%s2053 + $0x60] sm:$0xff]
      %v2067 = vld [vmem:[%s2053 + $0x68] sm:$0xff]
      %v2068 = vld [vmem:[%s2053 + $0x70] sm:$0xff]
      %v2069 = vld [vmem:[%s2053 + $0x78] sm:$0xff]
      %v2070 = vld [vmem:[%s2053 + $0x80] sm:$0xff]
      %v2071 = vld [vmem:[%s2053 + $0x88] sm:$0xff]
      %v2072 = vld [vmem:[%s2053 + $0x90] sm:$0xff]
      %v2073 = vld [vmem:[%s2053 + $0x98] sm:$0xff]
      %v2074 = vld [vmem:[%s2053 + $0xa0] sm:$0xff]
      %v2075 = vld [vmem:[%s2053 + $0xa8] sm:$0xff]
      %v2076 = vld [vmem:[%s2053 + $0xb0] sm:$0xff]
      %v2077 = vld [vmem:[%s2053 + $0xb8] sm:$0xff]
      %v2078 = vld [vmem:[%s2053 + $0xc0] sm:$0xff]
      %v2079 = vld [vmem:[%s2053 + $0xc8] sm:$0xff]
      %v2080 = vld [vmem:[%s2053 + $0xd0] sm:$0xff]
      %v2081 = vld [vmem:[%s2053 + $0xd8] sm:$0xff]
      %v2082 = vld [vmem:[%s2053 + $0xe0] sm:$0xff]
      %v2083 = vld [vmem:[%s2053 + $0xe8] sm:$0xff]
      %v2084 = vld [vmem:[%s2053 + $0xf0] sm:$0xff]
      %v2085 = vld [vmem:[%s2053 + $0xf8] sm:$0xff]
      %v2086 = vld [vmem:[%s2053 + $0x100] sm:$0xff]
      %v2087 = vld [vmem:[%s2053 + $0x108] sm:$0xff]
      %v2088 = vld [vmem:[%s2053 + $0x110] sm:$0xff]
      %v2089 = vld [vmem:[%s2053 + $0x118] sm:$0xff]
      %v2090 = vld [vmem:[%s2053 + $0x120] sm:$0xff]
      %v2091 = vld [vmem:[%s2053 + $0x128] sm:$0xff]
      %v2092 = vld [vmem:[%s2053 + $0x130] sm:$0xff]
      %v2093 = vld [vmem:[%s2053 + $0x138] sm:$0xff]
      %v2094 = vld [vmem:[%s2053 + $0x140] sm:$0xff]
      %v2095 = vld [vmem:[%s2053 + $0x148] sm:$0xff]
      %v2096 = vld [vmem:[%s2053 + $0x150] sm:$0xff]
      %v2097 = vld [vmem:[%s2053 + $0x158] sm:$0xff]
      %v2098 = vld [vmem:[%s2053 + $0x160] sm:$0xff]
      %v2099 = vld [vmem:[%s2053 + $0x168] sm:$0xff]
      %v2100 = vld [vmem:[%s2053 + $0x170] sm:$0xff]
      %v2101 = vld [vmem:[%s2053 + $0x178] sm:$0xff]
      %v2102 = vld [vmem:[%s2053 + $0x180] sm:$0xff]
      %v2103 = vld [vmem:[%s2053 + $0x188] sm:$0xff]
      %v2104 = vld [vmem:[%s2053 + $0x190] sm:$0xff]
      %v2105 = vld [vmem:[%s2053 + $0x198] sm:$0xff]
      %v2106 = vld [vmem:[%s2053 + $0x1a0] sm:$0xff]
      %v2107 = vld [vmem:[%s2053 + $0x1a8] sm:$0xff]
      %v2108 = vld [vmem:[%s2053 + $0x1b0] sm:$0xff]
      %v2109 = vld [vmem:[%s2053 + $0x1b8] sm:$0xff]
      %v2110 = vld [vmem:[%s2053 + $0x1c0] sm:$0xff]
      %v2111 = vld [vmem:[%s2053 + $0x1c8] sm:$0xff]
      %v2112 = vld [vmem:[%s2053 + $0x1d0] sm:$0xff]
      %v2113 = vld [vmem:[%s2053 + $0x1d8] sm:$0xff]
      %v2114 = vld [vmem:[%s2053 + $0x1e0] sm:$0xff]
      %v2115 = vld [vmem:[%s2053 + $0x1e8] sm:$0xff]
      %v2116 = vld [vmem:[%s2053 + $0x1f0] sm:$0xff]
      %v2117 = vld [vmem:[%s2053 + $0x1f8] sm:$0xff]
      %v2118 = vld [vmem:[%s2053 + $0x200] sm:$0xff]
      %v2119 = vld [vmem:[%s2053 + $0x208] sm:$0xff]
      %v2120 = vld [vmem:[%s2053 + $0x210] sm:$0xff]
      %v2121 = vld [vmem:[%s2053 + $0x218] sm:$0xff]
      %v2122 = vld [vmem:[%s2053 + $0x220] sm:$0xff]
      %v2123 = vld [vmem:[%s2053 + $0x228] sm:$0xff]
      %v2124 = vld [vmem:[%s2053 + $0x230] sm:$0xff]
      %v2125 = vld [vmem:[%s2053 + $0x238] sm:$0xff]
      %v2126 = vld [vmem:[%s2053 + $0x240] sm:$0xff]
      %v2127 = vld [vmem:[%s2053 + $0x248] sm:$0xff]
      %v2128 = vld [vmem:[%s2053 + $0x250] sm:$0xff]
      %v2129 = vld [vmem:[%s2053 + $0x258] sm:$0xff]
      %v2130 = vld [vmem:[%s2053 + $0x260] sm:$0xff]
      %v2131 = vld [vmem:[%s2053 + $0x268] sm:$0xff]
      %v2132 = vld [vmem:[%s2053 + $0x270] sm:$0xff]
      %v2133 = vld [vmem:[%s2053 + $0x278] sm:$0xff]
      %v2134 = vld [vmem:[%s2053 + $0x280] sm:$0xff]
      %v2135 = vld [vmem:[%s2053 + $0x288] sm:$0xff]
      %v2136 = vld [vmem:[%s2053 + $0x290] sm:$0xff]
      %v2137 = vld [vmem:[%s2053 + $0x298] sm:$0xff]
      %v2138 = vld [vmem:[%s2053 + $0x2a0] sm:$0xff]
      %v2139 = vld [vmem:[%s2053 + $0x2a8] sm:$0xff]
      %v2140 = vld [vmem:[%s2053 + $0x2b0] sm:$0xff]
      %v2141 = vld [vmem:[%s2053 + $0x2b8] sm:$0xff]
      %v2142 = vld [vmem:[%s2053 + $0x2c0] sm:$0xff]
      %v2143 = vld [vmem:[%s2053 + $0x2c8] sm:$0xff]
      %v2144 = vld [vmem:[%s2053 + $0x2d0] sm:$0xff]
      %v2145 = vld [vmem:[%s2053 + $0x2d8] sm:$0xff]
      %v2146 = vld [vmem:[%s2053 + $0x2e0] sm:$0xff]
      %v2147 = vld [vmem:[%s2053 + $0x2e8] sm:$0xff]
      %v2148 = vld [vmem:[%s2053 + $0x2f0] sm:$0xff]
      %v2149 = vld [vmem:[%s2053 + $0x2f8] sm:$0xff]
      %v2150 = vld [vmem:[%s2053 + $0x300] sm:$0xff]
      %v2151 = vld [vmem:[%s2053 + $0x308] sm:$0xff]
      %v2152 = vld [vmem:[%s2053 + $0x310] sm:$0xff]
      %v2153 = vld [vmem:[%s2053 + $0x318] sm:$0xff]
      %v2154 = vld [vmem:[%s2053 + $0x320] sm:$0xff]
      %v2155 = vld [vmem:[%s2053 + $0x328] sm:$0xff]
      %v2156 = vld [vmem:[%s2053 + $0x330] sm:$0xff]
      %v2157 = vld [vmem:[%s2053 + $0x338] sm:$0xff]
      %v2158 = vld [vmem:[%s2053 + $0x340] sm:$0xff]
      %v2159 = vld [vmem:[%s2053 + $0x348] sm:$0xff]
      %v2160 = vld [vmem:[%s2053 + $0x350] sm:$0xff]
      %v2161 = vld [vmem:[%s2053 + $0x358] sm:$0xff]
      %v2162 = vld [vmem:[%s2053 + $0x360] sm:$0xff]
      %v2163 = vld [vmem:[%s2053 + $0x368] sm:$0xff]
      %v2164 = vld [vmem:[%s2053 + $0x370] sm:$0xff]
      %v2165 = vld [vmem:[%s2053 + $0x378] sm:$0xff]
      %v2166 = vld [vmem:[%s2053 + $0x380] sm:$0xff]
      %v2167 = vld [vmem:[%s2053 + $0x388] sm:$0xff]
      %v2168 = vld [vmem:[%s2053 + $0x390] sm:$0xff]
      %v2169 = vld [vmem:[%s2053 + $0x398] sm:$0xff]
      %v2170 = vld [vmem:[%s2053 + $0x3a0] sm:$0xff]
      %v2171 = vld [vmem:[%s2053 + $0x3a8] sm:$0xff]
      %v2172 = vld [vmem:[%s2053 + $0x3b0] sm:$0xff]
      %v2173 = vld [vmem:[%s2053 + $0x3b8] sm:$0xff]
      %v2174 = vld [vmem:[%s2053 + $0x3c0] sm:$0xff]
      %v2175 = vld [vmem:[%s2053 + $0x3c8] sm:$0xff]
      %v2176 = vld [vmem:[%s2053 + $0x3d0] sm:$0xff]
      %v2177 = vld [vmem:[%s2053 + $0x3d8] sm:$0xff]
      %v2178 = vld [vmem:[%s2053 + $0x3e0] sm:$0xff]
      %v2179 = vld [vmem:[%s2053 + $0x3e8] sm:$0xff]
      %v2180 = vld [vmem:[%s2053 + $0x3f0] sm:$0xff]
      %v2181 = vld [vmem:[%s2053 + $0x3f8] sm:$0xff]
      %v2183 = vshrl.u32 %v175, 16
      %v2185 = vshll.u32 %v175, 16
      %v2187 = vrot.slane %v2185, 1
      %v2188 = vor.u32 %v2183, %v2187
      %v2190 = vshrl.u32 %v176, 16
      %v2192 = vshll.u32 %v176, 16
      %v2194 = vrot.slane %v2192, 1
      %v2195 = vor.u32 %v2190, %v2194
      %v2197 = vshrl.u32 %v177, 16
      %v2199 = vshll.u32 %v177, 16
      %v2201 = vrot.slane %v2199, 1
      %v2202 = vor.u32 %v2197, %v2201
      %v2204 = vshrl.u32 %v178, 16
      %v2206 = vshll.u32 %v178, 16
      %v2208 = vrot.slane %v2206, 1
      %v2209 = vor.u32 %v2204, %v2208
      %v2342 = vunpack.c.l.b16 %v2054
      %v2343 = vunpack.c.h.b16 %v2054
      %v2344 = vunpack.c.l.b16 %v2055
      %v2345 = vunpack.c.h.b16 %v2055
      %v2346 = vunpack.c.l.b16 %v2056
      %v2347 = vunpack.c.h.b16 %v2056
      %v2348 = vunpack.c.l.b16 %v2057
      %v2349 = vunpack.c.h.b16 %v2057
      %v2350 = vunpack.c.l.b16 %v2058
      %v2351 = vunpack.c.h.b16 %v2058
      %v2352 = vunpack.c.l.b16 %v2059
      %v2353 = vunpack.c.h.b16 %v2059
      %v2354 = vunpack.c.l.b16 %v2060
      %v2355 = vunpack.c.h.b16 %v2060
      %v2356 = vunpack.c.l.b16 %v2061
      %v2357 = vunpack.c.h.b16 %v2061
      %v2358 = vunpack.c.l.b16 %v2062
      %v2359 = vunpack.c.h.b16 %v2062
      %v2360 = vunpack.c.l.b16 %v2063
      %v2361 = vunpack.c.h.b16 %v2063
      %v2362 = vunpack.c.l.b16 %v2064
      %v2363 = vunpack.c.h.b16 %v2064
      %v2364 = vunpack.c.l.b16 %v2065
      %v2365 = vunpack.c.h.b16 %v2065
      %v2366 = vunpack.c.l.b16 %v2066
      %v2367 = vunpack.c.h.b16 %v2066
      %v2368 = vunpack.c.l.b16 %v2067
      %v2369 = vunpack.c.h.b16 %v2067
      %v2370 = vunpack.c.l.b16 %v2068
      %v2371 = vunpack.c.h.b16 %v2068
      %v2372 = vunpack.c.l.b16 %v2069
      %v2373 = vunpack.c.h.b16 %v2069
      %v2374 = vunpack.c.l.b16 %v2070
      %v2375 = vunpack.c.h.b16 %v2070
      %v2376 = vunpack.c.l.b16 %v2071
      %v2377 = vunpack.c.h.b16 %v2071
      %v2378 = vunpack.c.l.b16 %v2072
      %v2379 = vunpack.c.h.b16 %v2072
      %v2380 = vunpack.c.l.b16 %v2073
      %v2381 = vunpack.c.h.b16 %v2073
      %v2382 = vunpack.c.l.b16 %v2074
      %v2383 = vunpack.c.h.b16 %v2074
      %v2384 = vunpack.c.l.b16 %v2075
      %v2385 = vunpack.c.h.b16 %v2075
      %v2386 = vunpack.c.l.b16 %v2076
      %v2387 = vunpack.c.h.b16 %v2076
      %v2388 = vunpack.c.l.b16 %v2077
      %v2389 = vunpack.c.h.b16 %v2077
      %v2390 = vunpack.c.l.b16 %v2078
      %v2391 = vunpack.c.h.b16 %v2078
      %v2392 = vunpack.c.l.b16 %v2079
      %v2393 = vunpack.c.h.b16 %v2079
      %v2394 = vunpack.c.l.b16 %v2080
      %v2395 = vunpack.c.h.b16 %v2080
      %v2396 = vunpack.c.l.b16 %v2081
      %v2397 = vunpack.c.h.b16 %v2081
      %v2398 = vunpack.c.l.b16 %v2082
      %v2399 = vunpack.c.h.b16 %v2082
      %v2400 = vunpack.c.l.b16 %v2083
      %v2401 = vunpack.c.h.b16 %v2083
      %v2402 = vunpack.c.l.b16 %v2084
      %v2403 = vunpack.c.h.b16 %v2084
      %v2404 = vunpack.c.l.b16 %v2085
      %v2405 = vunpack.c.h.b16 %v2085
      %v2406 = vunpack.c.l.b16 %v2086
      %v2407 = vunpack.c.h.b16 %v2086
      %v2408 = vunpack.c.l.b16 %v2087
      %v2409 = vunpack.c.h.b16 %v2087
      %v2410 = vunpack.c.l.b16 %v2088
      %v2411 = vunpack.c.h.b16 %v2088
      %v2412 = vunpack.c.l.b16 %v2089
      %v2413 = vunpack.c.h.b16 %v2089
      %v2414 = vunpack.c.l.b16 %v2090
      %v2415 = vunpack.c.h.b16 %v2090
      %v2416 = vunpack.c.l.b16 %v2091
      %v2417 = vunpack.c.h.b16 %v2091
      %v2418 = vunpack.c.l.b16 %v2092
      %v2419 = vunpack.c.h.b16 %v2092
      %v2420 = vunpack.c.l.b16 %v2093
      %v2421 = vunpack.c.h.b16 %v2093
      %v2422 = vunpack.c.l.b16 %v2094
      %v2423 = vunpack.c.h.b16 %v2094
      %v2424 = vunpack.c.l.b16 %v2095
      %v2425 = vunpack.c.h.b16 %v2095
      %v2426 = vunpack.c.l.b16 %v2096
      %v2427 = vunpack.c.h.b16 %v2096
      %v2428 = vunpack.c.l.b16 %v2097
      %v2429 = vunpack.c.h.b16 %v2097
      %v2430 = vunpack.c.l.b16 %v2098
      %v2431 = vunpack.c.h.b16 %v2098
      %v2432 = vunpack.c.l.b16 %v2099
      %v2433 = vunpack.c.h.b16 %v2099
      %v2434 = vunpack.c.l.b16 %v2100
      %v2435 = vunpack.c.h.b16 %v2100
      %v2436 = vunpack.c.l.b16 %v2101
      %v2437 = vunpack.c.h.b16 %v2101
      %v2438 = vunpack.c.l.b16 %v2102
      %v2439 = vunpack.c.h.b16 %v2102
      %v2440 = vunpack.c.l.b16 %v2103
      %v2441 = vunpack.c.h.b16 %v2103
      %v2442 = vunpack.c.l.b16 %v2104
      %v2443 = vunpack.c.h.b16 %v2104
      %v2444 = vunpack.c.l.b16 %v2105
      %v2445 = vunpack.c.h.b16 %v2105
      %v2446 = vunpack.c.l.b16 %v2106
      %v2447 = vunpack.c.h.b16 %v2106
      %v2448 = vunpack.c.l.b16 %v2107
      %v2449 = vunpack.c.h.b16 %v2107
      %v2450 = vunpack.c.l.b16 %v2108
      %v2451 = vunpack.c.h.b16 %v2108
      %v2452 = vunpack.c.l.b16 %v2109
      %v2453 = vunpack.c.h.b16 %v2109
      %v2454 = vunpack.c.l.b16 %v2110
      %v2455 = vunpack.c.h.b16 %v2110
      %v2456 = vunpack.c.l.b16 %v2111
      %v2457 = vunpack.c.h.b16 %v2111
      %v2458 = vunpack.c.l.b16 %v2112
      %v2459 = vunpack.c.h.b16 %v2112
      %v2460 = vunpack.c.l.b16 %v2113
      %v2461 = vunpack.c.h.b16 %v2113
      %v2462 = vunpack.c.l.b16 %v2114
      %v2463 = vunpack.c.h.b16 %v2114
      %v2464 = vunpack.c.l.b16 %v2115
      %v2465 = vunpack.c.h.b16 %v2115
      %v2466 = vunpack.c.l.b16 %v2116
      %v2467 = vunpack.c.h.b16 %v2116
      %v2468 = vunpack.c.l.b16 %v2117
      %v2469 = vunpack.c.h.b16 %v2117
      %v2470 = vunpack.c.l.b16 %v2118
      %v2471 = vunpack.c.h.b16 %v2118
      %v2472 = vunpack.c.l.b16 %v2119
      %v2473 = vunpack.c.h.b16 %v2119
      %v2474 = vunpack.c.l.b16 %v2120
      %v2475 = vunpack.c.h.b16 %v2120
      %v2476 = vunpack.c.l.b16 %v2121
      %v2477 = vunpack.c.h.b16 %v2121
      %v2478 = vunpack.c.l.b16 %v2122
      %v2479 = vunpack.c.h.b16 %v2122
      %v2480 = vunpack.c.l.b16 %v2123
      %v2481 = vunpack.c.h.b16 %v2123
      %v2482 = vunpack.c.l.b16 %v2124
      %v2483 = vunpack.c.h.b16 %v2124
      %v2484 = vunpack.c.l.b16 %v2125
      %v2485 = vunpack.c.h.b16 %v2125
      %v2486 = vunpack.c.l.b16 %v2126
      %v2487 = vunpack.c.h.b16 %v2126
      %v2488 = vunpack.c.l.b16 %v2127
      %v2489 = vunpack.c.h.b16 %v2127
      %v2490 = vunpack.c.l.b16 %v2128
      %v2491 = vunpack.c.h.b16 %v2128
      %v2492 = vunpack.c.l.b16 %v2129
      %v2493 = vunpack.c.h.b16 %v2129
      %v2494 = vunpack.c.l.b16 %v2130
      %v2495 = vunpack.c.h.b16 %v2130
      %v2496 = vunpack.c.l.b16 %v2131
      %v2497 = vunpack.c.h.b16 %v2131
      %v2498 = vunpack.c.l.b16 %v2132
      %v2499 = vunpack.c.h.b16 %v2132
      %v2500 = vunpack.c.l.b16 %v2133
      %v2501 = vunpack.c.h.b16 %v2133
      %v2502 = vunpack.c.l.b16 %v2134
      %v2503 = vunpack.c.h.b16 %v2134
      %v2504 = vunpack.c.l.b16 %v2135
      %v2505 = vunpack.c.h.b16 %v2135
      %v2506 = vunpack.c.l.b16 %v2136
      %v2507 = vunpack.c.h.b16 %v2136
      %v2508 = vunpack.c.l.b16 %v2137
      %v2509 = vunpack.c.h.b16 %v2137
      %v2510 = vunpack.c.l.b16 %v2138
      %v2511 = vunpack.c.h.b16 %v2138
      %v2512 = vunpack.c.l.b16 %v2139
      %v2513 = vunpack.c.h.b16 %v2139
      %v2514 = vunpack.c.l.b16 %v2140
      %v2515 = vunpack.c.h.b16 %v2140
      %v2516 = vunpack.c.l.b16 %v2141
      %v2517 = vunpack.c.h.b16 %v2141
      %v2518 = vunpack.c.l.b16 %v2142
      %v2519 = vunpack.c.h.b16 %v2142
      %v2520 = vunpack.c.l.b16 %v2143
      %v2521 = vunpack.c.h.b16 %v2143
      %v2522 = vunpack.c.l.b16 %v2144
      %v2523 = vunpack.c.h.b16 %v2144
      %v2524 = vunpack.c.l.b16 %v2145
      %v2525 = vunpack.c.h.b16 %v2145
      %v2526 = vunpack.c.l.b16 %v2146
      %v2527 = vunpack.c.h.b16 %v2146
      %v2528 = vunpack.c.l.b16 %v2147
      %v2529 = vunpack.c.h.b16 %v2147
      %v2530 = vunpack.c.l.b16 %v2148
      %v2531 = vunpack.c.h.b16 %v2148
      %v2532 = vunpack.c.l.b16 %v2149
      %v2533 = vunpack.c.h.b16 %v2149
      %v2534 = vunpack.c.l.b16 %v2150
      %v2535 = vunpack.c.h.b16 %v2150
      %v2536 = vunpack.c.l.b16 %v2151
      %v2537 = vunpack.c.h.b16 %v2151
      %v2538 = vunpack.c.l.b16 %v2152
      %v2539 = vunpack.c.h.b16 %v2152
      %v2540 = vunpack.c.l.b16 %v2153
      %v2541 = vunpack.c.h.b16 %v2153
      %v2542 = vunpack.c.l.b16 %v2154
      %v2543 = vunpack.c.h.b16 %v2154
      %v2544 = vunpack.c.l.b16 %v2155
      %v2545 = vunpack.c.h.b16 %v2155
      %v2546 = vunpack.c.l.b16 %v2156
      %v2547 = vunpack.c.h.b16 %v2156
      %v2548 = vunpack.c.l.b16 %v2157
      %v2549 = vunpack.c.h.b16 %v2157
      %v2550 = vunpack.c.l.b16 %v2158
      %v2551 = vunpack.c.h.b16 %v2158
      %v2552 = vunpack.c.l.b16 %v2159
      %v2553 = vunpack.c.h.b16 %v2159
      %v2554 = vunpack.c.l.b16 %v2160
      %v2555 = vunpack.c.h.b16 %v2160
      %v2556 = vunpack.c.l.b16 %v2161
      %v2557 = vunpack.c.h.b16 %v2161
      %v2558 = vunpack.c.l.b16 %v2162
      %v2559 = vunpack.c.h.b16 %v2162
      %v2560 = vunpack.c.l.b16 %v2163
      %v2561 = vunpack.c.h.b16 %v2163
      %v2562 = vunpack.c.l.b16 %v2164
      %v2563 = vunpack.c.h.b16 %v2164
      %v2564 = vunpack.c.l.b16 %v2165
      %v2565 = vunpack.c.h.b16 %v2165
      %v2566 = vunpack.c.l.b16 %v2166
      %v2567 = vunpack.c.h.b16 %v2166
      %v2568 = vunpack.c.l.b16 %v2167
      %v2569 = vunpack.c.h.b16 %v2167
      %v2570 = vunpack.c.l.b16 %v2168
      %v2571 = vunpack.c.h.b16 %v2168
      %v2572 = vunpack.c.l.b16 %v2169
      %v2573 = vunpack.c.h.b16 %v2169
      %v2574 = vunpack.c.l.b16 %v2170
      %v2575 = vunpack.c.h.b16 %v2170
      %v2576 = vunpack.c.l.b16 %v2171
      %v2577 = vunpack.c.h.b16 %v2171
      %v2578 = vunpack.c.l.b16 %v2172
      %v2579 = vunpack.c.h.b16 %v2172
      %v2580 = vunpack.c.l.b16 %v2173
      %v2581 = vunpack.c.h.b16 %v2173
      %v2582 = vunpack.c.l.b16 %v2174
      %v2583 = vunpack.c.h.b16 %v2174
      %v2584 = vunpack.c.l.b16 %v2175
      %v2585 = vunpack.c.h.b16 %v2175
      %v2586 = vunpack.c.l.b16 %v2176
      %v2587 = vunpack.c.h.b16 %v2176
      %v2588 = vunpack.c.l.b16 %v2177
      %v2589 = vunpack.c.h.b16 %v2177
      %v2590 = vunpack.c.l.b16 %v2178
      %v2591 = vunpack.c.h.b16 %v2178
      %v2592 = vunpack.c.l.b16 %v2179
      %v2593 = vunpack.c.h.b16 %v2179
      %v2594 = vunpack.c.l.b16 %v2180
      %v2595 = vunpack.c.h.b16 %v2180
      %v2596 = vunpack.c.l.b16 %v2181
      %v2597 = vunpack.c.h.b16 %v2181
      %v2598 = vpack.c.b16 %v2346, %v2342
      %v2599 = vpack.c.b16 %v2347, %v2343
      %v2600 = vpack.c.b16 %v2348, %v2344
      %v2601 = vpack.c.b16 %v2349, %v2345
      %v2602 = vpack.c.b16 %v2354, %v2350
      %v2603 = vpack.c.b16 %v2355, %v2351
      %v2604 = vpack.c.b16 %v2356, %v2352
      %v2605 = vpack.c.b16 %v2357, %v2353
      %v2606 = vpack.c.b16 %v2362, %v2358
      %v2607 = vpack.c.b16 %v2363, %v2359
      %v2608 = vpack.c.b16 %v2364, %v2360
      %v2609 = vpack.c.b16 %v2365, %v2361
      %v2610 = vpack.c.b16 %v2370, %v2366
      %v2611 = vpack.c.b16 %v2371, %v2367
      %v2612 = vpack.c.b16 %v2372, %v2368
      %v2613 = vpack.c.b16 %v2373, %v2369
      %v2614 = vpack.c.b16 %v2378, %v2374
      %v2615 = vpack.c.b16 %v2379, %v2375
      %v2616 = vpack.c.b16 %v2380, %v2376
      %v2617 = vpack.c.b16 %v2381, %v2377
      %v2618 = vpack.c.b16 %v2386, %v2382
      %v2619 = vpack.c.b16 %v2387, %v2383
      %v2620 = vpack.c.b16 %v2388, %v2384
      %v2621 = vpack.c.b16 %v2389, %v2385
      %v2622 = vpack.c.b16 %v2394, %v2390
      %v2623 = vpack.c.b16 %v2395, %v2391
      %v2624 = vpack.c.b16 %v2396, %v2392
      %v2625 = vpack.c.b16 %v2397, %v2393
      %v2626 = vpack.c.b16 %v2402, %v2398
      %v2627 = vpack.c.b16 %v2403, %v2399
      %v2628 = vpack.c.b16 %v2404, %v2400
      %v2629 = vpack.c.b16 %v2405, %v2401
      %v2630 = vpack.c.b16 %v2410, %v2406
      %v2631 = vpack.c.b16 %v2411, %v2407
      %v2632 = vpack.c.b16 %v2412, %v2408
      %v2633 = vpack.c.b16 %v2413, %v2409
      %v2634 = vpack.c.b16 %v2418, %v2414
      %v2635 = vpack.c.b16 %v2419, %v2415
      %v2636 = vpack.c.b16 %v2420, %v2416
      %v2637 = vpack.c.b16 %v2421, %v2417
      %v2638 = vpack.c.b16 %v2426, %v2422
      %v2639 = vpack.c.b16 %v2427, %v2423
      %v2640 = vpack.c.b16 %v2428, %v2424
      %v2641 = vpack.c.b16 %v2429, %v2425
      %v2642 = vpack.c.b16 %v2434, %v2430
      %v2643 = vpack.c.b16 %v2435, %v2431
      %v2644 = vpack.c.b16 %v2436, %v2432
      %v2645 = vpack.c.b16 %v2437, %v2433
      %v2646 = vpack.c.b16 %v2442, %v2438
      %v2647 = vpack.c.b16 %v2443, %v2439
      %v2648 = vpack.c.b16 %v2444, %v2440
      %v2649 = vpack.c.b16 %v2445, %v2441
      %v2650 = vpack.c.b16 %v2450, %v2446
      %v2651 = vpack.c.b16 %v2451, %v2447
      %v2652 = vpack.c.b16 %v2452, %v2448
      %v2653 = vpack.c.b16 %v2453, %v2449
      %v2654 = vpack.c.b16 %v2458, %v2454
      %v2655 = vpack.c.b16 %v2459, %v2455
      %v2656 = vpack.c.b16 %v2460, %v2456
      %v2657 = vpack.c.b16 %v2461, %v2457
      %v2658 = vpack.c.b16 %v2466, %v2462
      %v2659 = vpack.c.b16 %v2467, %v2463
      %v2660 = vpack.c.b16 %v2468, %v2464
      %v2661 = vpack.c.b16 %v2469, %v2465
      %v2662 = vpack.c.b16 %v2474, %v2470
      %v2663 = vpack.c.b16 %v2475, %v2471
      %v2664 = vpack.c.b16 %v2476, %v2472
      %v2665 = vpack.c.b16 %v2477, %v2473
      %v2666 = vpack.c.b16 %v2482, %v2478
      %v2667 = vpack.c.b16 %v2483, %v2479
      %v2668 = vpack.c.b16 %v2484, %v2480
      %v2669 = vpack.c.b16 %v2485, %v2481
      %v2670 = vpack.c.b16 %v2490, %v2486
      %v2671 = vpack.c.b16 %v2491, %v2487
      %v2672 = vpack.c.b16 %v2492, %v2488
      %v2673 = vpack.c.b16 %v2493, %v2489
      %v2674 = vpack.c.b16 %v2498, %v2494
      %v2675 = vpack.c.b16 %v2499, %v2495
      %v2676 = vpack.c.b16 %v2500, %v2496
      %v2677 = vpack.c.b16 %v2501, %v2497
      %v2678 = vpack.c.b16 %v2506, %v2502
      %v2679 = vpack.c.b16 %v2507, %v2503
      %v2680 = vpack.c.b16 %v2508, %v2504
      %v2681 = vpack.c.b16 %v2509, %v2505
      %v2682 = vpack.c.b16 %v2514, %v2510
      %v2683 = vpack.c.b16 %v2515, %v2511
      %v2684 = vpack.c.b16 %v2516, %v2512
      %v2685 = vpack.c.b16 %v2517, %v2513
      %v2686 = vpack.c.b16 %v2522, %v2518
      %v2687 = vpack.c.b16 %v2523, %v2519
      %v2688 = vpack.c.b16 %v2524, %v2520
      %v2689 = vpack.c.b16 %v2525, %v2521
      %v2690 = vpack.c.b16 %v2530, %v2526
      %v2691 = vpack.c.b16 %v2531, %v2527
      %v2692 = vpack.c.b16 %v2532, %v2528
      %v2693 = vpack.c.b16 %v2533, %v2529
      %v2694 = vpack.c.b16 %v2538, %v2534
      %v2695 = vpack.c.b16 %v2539, %v2535
      %v2696 = vpack.c.b16 %v2540, %v2536
      %v2697 = vpack.c.b16 %v2541, %v2537
      %v2698 = vpack.c.b16 %v2546, %v2542
      %v2699 = vpack.c.b16 %v2547, %v2543
      %v2700 = vpack.c.b16 %v2548, %v2544
      %v2701 = vpack.c.b16 %v2549, %v2545
      %v2702 = vpack.c.b16 %v2554, %v2550
      %v2703 = vpack.c.b16 %v2555, %v2551
      %v2704 = vpack.c.b16 %v2556, %v2552
      %v2705 = vpack.c.b16 %v2557, %v2553
      %v2706 = vpack.c.b16 %v2562, %v2558
      %v2707 = vpack.c.b16 %v2563, %v2559
      %v2708 = vpack.c.b16 %v2564, %v2560
      %v2709 = vpack.c.b16 %v2565, %v2561
      %v2710 = vpack.c.b16 %v2570, %v2566
      %v2711 = vpack.c.b16 %v2571, %v2567
      %v2712 = vpack.c.b16 %v2572, %v2568
      %v2713 = vpack.c.b16 %v2573, %v2569
      %v2714 = vpack.c.b16 %v2578, %v2574
      %v2715 = vpack.c.b16 %v2579, %v2575
      %v2716 = vpack.c.b16 %v2580, %v2576
      %v2717 = vpack.c.b16 %v2581, %v2577
      %v2718 = vpack.c.b16 %v2586, %v2582
      %v2719 = vpack.c.b16 %v2587, %v2583
      %v2720 = vpack.c.b16 %v2588, %v2584
      %v2721 = vpack.c.b16 %v2589, %v2585
      %v2722 = vpack.c.b16 %v2594, %v2590
      %v2723 = vpack.c.b16 %v2595, %v2591
      %v2724 = vpack.c.b16 %v2596, %v2592
      %v2725 = vpack.c.b16 %v2597, %v2593
      %2854 = vmatprep.subr.bf16.mxu0 %v2599
      %2855 = vmatpush1.bf16.msra.mxu0 %v2598
      %2856 = vmatprep.subr.bf16.mxu0 %v2603
      %2857 = vmatpush1.bf16.msra.mxu0 %v2602
      %2858 = vmatprep.subr.bf16.mxu0 %v2607
      %2859 = vmatpush1.bf16.msra.mxu0 %v2606
      %2860 = vmatprep.subr.bf16.mxu0 %v2611
      %2861 = vmatpush1.bf16.msra.mxu0 %v2610
      %2862 = vmatprep.subr.bf16.mxu0 %v2615
      %2863 = vmatpush1.bf16.msra.mxu0 %v2614
      %2864 = vmatprep.subr.bf16.mxu0 %v2619
      %2865 = vmatpush1.bf16.msra.mxu0 %v2618
      %2866 = vmatprep.subr.bf16.mxu0 %v2623
      %2867 = vmatpush1.bf16.msra.mxu0 %v2622
      %2868 = vmatprep.subr.bf16.mxu0 %v2627
      %2869 = vmatpush1.bf16.msra.mxu0 %v2626
      %2870 = vmatprep.subr.bf16.mxu0 %v2631
      %2871 = vmatpush1.bf16.msra.mxu0 %v2630
      %2872 = vmatprep.subr.bf16.mxu0 %v2635
      %2873 = vmatpush1.bf16.msra.mxu0 %v2634
      %2874 = vmatprep.subr.bf16.mxu0 %v2639
      %2875 = vmatpush1.bf16.msra.mxu0 %v2638
      %2876 = vmatprep.subr.bf16.mxu0 %v2643
      %2877 = vmatpush1.bf16.msra.mxu0 %v2642
      %2878 = vmatprep.subr.bf16.mxu0 %v2647
      %2879 = vmatpush1.bf16.msra.mxu0 %v2646
      %2880 = vmatprep.subr.bf16.mxu0 %v2651
      %2881 = vmatpush1.bf16.msra.mxu0 %v2650
      %2882 = vmatprep.subr.bf16.mxu0 %v2655
      %2883 = vmatpush1.bf16.msra.mxu0 %v2654
      %2884 = vmatprep.subr.bf16.mxu0 %v2659
      %2885 = vmatpush1.bf16.msra.mxu0 %v2658
      %2886 = vmatprep.mubr.bf16.mxu0 %v2195
      %2887 = vmatmul.mubr.bf16.gmra.mrb[0].mxu0 %v2188
      %v2888 = vpop.f32.mrb[0].mxu0
      %v2889 = vadd.f32 0.0, %v2888
      %v2890 = vpop.f32.mrb[0].mxu0
      %v2891 = vadd.f32 0.0, %v2890
      %v2892 = vpop.f32.mrb[0].mxu0
      %v2893 = vpop.f32.mrb[0].mxu0
      %2894 = vdwg.mxu0
      %2895 = vmatprep.subr.bf16.mxu0 %v2663
      %2896 = vmatpush1.bf16.msra.mxu0 %v2662
      %2897 = vmatprep.subr.bf16.mxu0 %v2667
      %2898 = vmatpush1.bf16.msra.mxu0 %v2666
      %2899 = vmatprep.subr.bf16.mxu0 %v2671
      %2900 = vmatpush1.bf16.msra.mxu0 %v2670
      %2901 = vmatprep.subr.bf16.mxu0 %v2675
      %2902 = vmatpush1.bf16.msra.mxu0 %v2674
      %2903 = vmatprep.subr.bf16.mxu0 %v2679
      %2904 = vmatpush1.bf16.msra.mxu0 %v2678
      %2905 = vmatprep.subr.bf16.mxu0 %v2683
      %2906 = vmatpush1.bf16.msra.mxu0 %v2682
      %2907 = vmatprep.subr.bf16.mxu0 %v2687
      %2908 = vmatpush1.bf16.msra.mxu0 %v2686
      %2909 = vmatprep.subr.bf16.mxu0 %v2691
      %2910 = vmatpush1.bf16.msra.mxu0 %v2690
      %2911 = vmatprep.subr.bf16.mxu0 %v2695
      %2912 = vmatpush1.bf16.msra.mxu0 %v2694
      %2913 = vmatprep.subr.bf16.mxu0 %v2699
      %2914 = vmatpush1.bf16.msra.mxu0 %v2698
      %2915 = vmatprep.subr.bf16.mxu0 %v2703
      %2916 = vmatpush1.bf16.msra.mxu0 %v2702
      %2917 = vmatprep.subr.bf16.mxu0 %v2707
      %2918 = vmatpush1.bf16.msra.mxu0 %v2706
      %2919 = vmatprep.subr.bf16.mxu0 %v2711
      %2920 = vmatpush1.bf16.msra.mxu0 %v2710
      %2921 = vmatprep.subr.bf16.mxu0 %v2715
      %2922 = vmatpush1.bf16.msra.mxu0 %v2714
      %2923 = vmatprep.subr.bf16.mxu0 %v2719
      %2924 = vmatpush1.bf16.msra.mxu0 %v2718
      %2925 = vmatprep.subr.bf16.mxu0 %v2723
      %2926 = vmatpush1.bf16.msra.mxu0 %v2722
      %2927 = vmatprep.mubr.bf16.mxu0 %v2209
      %2928 = vmatmul.mubr.bf16.gmra.mrb[0].mxu0 %v2202
      %v2929 = vpop.f32.mrb[0].mxu0
      %v2930 = vadd.f32 %v2889, %v2929
      %v2931 = vpop.f32.mrb[0].mxu0
      %v2932 = vadd.f32 %v2891, %v2931
      %v2933 = vpop.f32.mrb[0].mxu0
      %v2934 = vpop.f32.mrb[0].mxu0
      %2935 = vdwg.mxu0
      %2936 = vmatprep.subr.bf16.mxu0 %v2601
      %2937 = vmatpush1.bf16.msra.mxu0 %v2600
      %2938 = vmatprep.subr.bf16.mxu0 %v2605
      %2939 = vmatpush1.bf16.msra.mxu0 %v2604
      %2940 = vmatprep.subr.bf16.mxu0 %v2609
      %2941 = vmatpush1.bf16.msra.mxu0 %v2608
      %2942 = vmatprep.subr.bf16.mxu0 %v2613
      %2943 = vmatpush1.bf16.msra.mxu0 %v2612
      %2944 = vmatprep.subr.bf16.mxu0 %v2617
      %2945 = vmatpush1.bf16.msra.mxu0 %v2616
      %2946 = vmatprep.subr.bf16.mxu0 %v2621
      %2947 = vmatpush1.bf16.msra.mxu0 %v2620
      %2948 = vmatprep.subr.bf16.mxu0 %v2625
      %2949 = vmatpush1.bf16.msra.mxu0 %v2624
      %2950 = vmatprep.subr.bf16.mxu0 %v2629
      %2951 = vmatpush1.bf16.msra.mxu0 %v2628
      %2952 = vmatprep.subr.bf16.mxu0 %v2633
      %2953 = vmatpush1.bf16.msra.mxu0 %v2632
      %2954 = vmatprep.subr.bf16.mxu0 %v2637
      %2955 = vmatpush1.bf16.msra.mxu0 %v2636
      %2956 = vmatprep.subr.bf16.mxu0 %v2641
      %2957 = vmatpush1.bf16.msra.mxu0 %v2640
      %2958 = vmatprep.subr.bf16.mxu0 %v2645
      %2959 = vmatpush1.bf16.msra.mxu0 %v2644
      %2960 = vmatprep.subr.bf16.mxu0 %v2649
      %2961 = vmatpush1.bf16.msra.mxu0 %v2648
      %2962 = vmatprep.subr.bf16.mxu0 %v2653
      %2963 = vmatpush1.bf16.msra.mxu0 %v2652
      %2964 = vmatprep.subr.bf16.mxu0 %v2657
      %2965 = vmatpush1.bf16.msra.mxu0 %v2656
      %2966 = vmatprep.subr.bf16.mxu0 %v2661
      %2967 = vmatpush1.bf16.msra.mxu0 %v2660
      %2968 = vmatprep.mubr.bf16.mxu0 %v2195
      %2969 = vmatmul.mubr.bf16.gmra.mrb[0].mxu0 %v2188
      %v2970 = vpop.f32.mrb[0].mxu0
      %v2971 = vadd.f32 0.0, %v2970
      %v2972 = vpop.f32.mrb[0].mxu0
      %v2973 = vadd.f32 0.0, %v2972
      %v2974 = vpop.f32.mrb[0].mxu0
      %v2975 = vpop.f32.mrb[0].mxu0
      %2976 = vdwg.mxu0
      %2977 = vmatprep.subr.bf16.mxu0 %v2665
      %2978 = vmatpush1.bf16.msra.mxu0 %v2664
      %2979 = vmatprep.subr.bf16.mxu0 %v2669
      %2980 = vmatpush1.bf16.msra.mxu0 %v2668
      %2981 = vmatprep.subr.bf16.mxu0 %v2673
      %2982 = vmatpush1.bf16.msra.mxu0 %v2672
      %2983 = vmatprep.subr.bf16.mxu0 %v2677
      %2984 = vmatpush1.bf16.msra.mxu0 %v2676
      %2985 = vmatprep.subr.bf16.mxu0 %v2681
      %2986 = vmatpush1.bf16.msra.mxu0 %v2680
      %2987 = vmatprep.subr.bf16.mxu0 %v2685
      %2988 = vmatpush1.bf16.msra.mxu0 %v2684
      %2989 = vmatprep.subr.bf16.mxu0 %v2689
      %2990 = vmatpush1.bf16.msra.mxu0 %v2688
      %2991 = vmatprep.subr.bf16.mxu0 %v2693
      %2992 = vmatpush1.bf16.msra.mxu0 %v2692
      %2993 = vmatprep.subr.bf16.mxu0 %v2697
      %2994 = vmatpush1.bf16.msra.mxu0 %v2696
      %2995 = vmatprep.subr.bf16.mxu0 %v2701
      %2996 = vmatpush1.bf16.msra.mxu0 %v2700
      %2997 = vmatprep.subr.bf16.mxu0 %v2705
      %2998 = vmatpush1.bf16.msra.mxu0 %v2704
      %2999 = vmatprep.subr.bf16.mxu0 %v2709
      %3000 = vmatpush1.bf16.msra.mxu0 %v2708
      %3001 = vmatprep.subr.bf16.mxu0 %v2713
      %3002 = vmatpush1.bf16.msra.mxu0 %v2712
      %3003 = vmatprep.subr.bf16.mxu0 %v2717
      %3004 = vmatpush1.bf16.msra.mxu0 %v2716
      %3005 = vmatprep.subr.bf16.mxu0 %v2721
      %3006 = vmatpush1.bf16.msra.mxu0 %v2720
      %3007 = vmatprep.subr.bf16.mxu0 %v2725
      %3008 = vmatpush1.bf16.msra.mxu0 %v2724
      %3009 = vmatprep.mubr.bf16.mxu0 %v2209
      %3010 = vmatmul.mubr.bf16.gmra.mrb[0].mxu0 %v2202
      %v3011 = vpop.f32.mrb[0].mxu0
      %v3012 = vadd.f32 %v2971, %v3011
      %v3013 = vpop.f32.mrb[0].mxu0
      %v3014 = vadd.f32 %v2973, %v3013
      %v3015 = vpop.f32.mrb[0].mxu0
      %v3016 = vpop.f32.mrb[0].mxu0
      %3017 = vdwg.mxu0
      %v3018 = vadd.f32 %v1965, %v2930
      %v3019 = vadd.f32 %v1967, %v2932
      %v3020 = vadd.f32 %v2047, %v3012
      %v3021 = vadd.f32 %v2049, %v3014
      %s3022 = scalar_lea.vmem %s1, 1024
      %v3023 = vld [vmem:[%s3022] sm:$0xff]
      %v3024 = vld [vmem:[%s3022 + $0x8] sm:$0xff]
      %v3025 = vld [vmem:[%s3022 + $0x10] sm:$0xff]
      %v3026 = vld [vmem:[%s3022 + $0x18] sm:$0xff]
      %v3027 = vld [vmem:[%s3022 + $0x20] sm:$0xff]
      %v3028 = vld [vmem:[%s3022 + $0x28] sm:$0xff]
      %v3029 = vld [vmem:[%s3022 + $0x30] sm:$0xff]
      %v3030 = vld [vmem:[%s3022 + $0x38] sm:$0xff]
      %v3031 = vld [vmem:[%s3022 + $0x40] sm:$0xff]
      %v3032 = vld [vmem:[%s3022 + $0x48] sm:$0xff]
      %v3033 = vld [vmem:[%s3022 + $0x50] sm:$0xff]
      %v3034 = vld [vmem:[%s3022 + $0x58] sm:$0xff]
      %v3035 = vld [vmem:[%s3022 + $0x60] sm:$0xff]
      %v3036 = vld [vmem:[%s3022 + $0x68] sm:$0xff]
      %v3037 = vld [vmem:[%s3022 + $0x70] sm:$0xff]
      %v3038 = vld [vmem:[%s3022 + $0x78] sm:$0xff]
      %v3039 = vld [vmem:[%s3022 + $0x80] sm:$0xff]
      %v3040 = vld [vmem:[%s3022 + $0x88] sm:$0xff]
      %v3041 = vld [vmem:[%s3022 + $0x90] sm:$0xff]
      %v3042 = vld [vmem:[%s3022 + $0x98] sm:$0xff]
      %v3043 = vld [vmem:[%s3022 + $0xa0] sm:$0xff]
      %v3044 = vld [vmem:[%s3022 + $0xa8] sm:$0xff]
      %v3045 = vld [vmem:[%s3022 + $0xb0] sm:$0xff]
      %v3046 = vld [vmem:[%s3022 + $0xb8] sm:$0xff]
      %v3047 = vld [vmem:[%s3022 + $0xc0] sm:$0xff]
      %v3048 = vld [vmem:[%s3022 + $0xc8] sm:$0xff]
      %v3049 = vld [vmem:[%s3022 + $0xd0] sm:$0xff]
      %v3050 = vld [vmem:[%s3022 + $0xd8] sm:$0xff]
      %v3051 = vld [vmem:[%s3022 + $0xe0] sm:$0xff]
      %v3052 = vld [vmem:[%s3022 + $0xe8] sm:$0xff]
      %v3053 = vld [vmem:[%s3022 + $0xf0] sm:$0xff]
      %v3054 = vld [vmem:[%s3022 + $0xf8] sm:$0xff]
      %v3055 = vld [vmem:[%s3022 + $0x100] sm:$0xff]
      %v3056 = vld [vmem:[%s3022 + $0x108] sm:$0xff]
      %v3057 = vld [vmem:[%s3022 + $0x110] sm:$0xff]
      %v3058 = vld [vmem:[%s3022 + $0x118] sm:$0xff]
      %v3059 = vld [vmem:[%s3022 + $0x120] sm:$0xff]
      %v3060 = vld [vmem:[%s3022 + $0x128] sm:$0xff]
      %v3061 = vld [vmem:[%s3022 + $0x130] sm:$0xff]
      %v3062 = vld [vmem:[%s3022 + $0x138] sm:$0xff]
      %v3063 = vld [vmem:[%s3022 + $0x140] sm:$0xff]
      %v3064 = vld [vmem:[%s3022 + $0x148] sm:$0xff]
      %v3065 = vld [vmem:[%s3022 + $0x150] sm:$0xff]
      %v3066 = vld [vmem:[%s3022 + $0x158] sm:$0xff]
      %v3067 = vld [vmem:[%s3022 + $0x160] sm:$0xff]
      %v3068 = vld [vmem:[%s3022 + $0x168] sm:$0xff]
      %v3069 = vld [vmem:[%s3022 + $0x170] sm:$0xff]
      %v3070 = vld [vmem:[%s3022 + $0x178] sm:$0xff]
      %v3071 = vld [vmem:[%s3022 + $0x180] sm:$0xff]
      %v3072 = vld [vmem:[%s3022 + $0x188] sm:$0xff]
      %v3073 = vld [vmem:[%s3022 + $0x190] sm:$0xff]
      %v3074 = vld [vmem:[%s3022 + $0x198] sm:$0xff]
      %v3075 = vld [vmem:[%s3022 + $0x1a0] sm:$0xff]
      %v3076 = vld [vmem:[%s3022 + $0x1a8] sm:$0xff]
      %v3077 = vld [vmem:[%s3022 + $0x1b0] sm:$0xff]
      %v3078 = vld [vmem:[%s3022 + $0x1b8] sm:$0xff]
      %v3079 = vld [vmem:[%s3022 + $0x1c0] sm:$0xff]
      %v3080 = vld [vmem:[%s3022 + $0x1c8] sm:$0xff]
      %v3081 = vld [vmem:[%s3022 + $0x1d0] sm:$0xff]
      %v3082 = vld [vmem:[%s3022 + $0x1d8] sm:$0xff]
      %v3083 = vld [vmem:[%s3022 + $0x1e0] sm:$0xff]
      %v3084 = vld [vmem:[%s3022 + $0x1e8] sm:$0xff]
      %v3085 = vld [vmem:[%s3022 + $0x1f0] sm:$0xff]
      %v3086 = vld [vmem:[%s3022 + $0x1f8] sm:$0xff]
      %v3087 = vld [vmem:[%s3022 + $0x200] sm:$0xff]
      %v3088 = vld [vmem:[%s3022 + $0x208] sm:$0xff]
      %v3089 = vld [vmem:[%s3022 + $0x210] sm:$0xff]
      %v3090 = vld [vmem:[%s3022 + $0x218] sm:$0xff]
      %v3091 = vld [vmem:[%s3022 + $0x220] sm:$0xff]
      %v3092 = vld [vmem:[%s3022 + $0x228] sm:$0xff]
      %v3093 = vld [vmem:[%s3022 + $0x230] sm:$0xff]
      %v3094 = vld [vmem:[%s3022 + $0x238] sm:$0xff]
      %v3095 = vld [vmem:[%s3022 + $0x240] sm:$0xff]
      %v3096 = vld [vmem:[%s3022 + $0x248] sm:$0xff]
      %v3097 = vld [vmem:[%s3022 + $0x250] sm:$0xff]
      %v3098 = vld [vmem:[%s3022 + $0x258] sm:$0xff]
      %v3099 = vld [vmem:[%s3022 + $0x260] sm:$0xff]
      %v3100 = vld [vmem:[%s3022 + $0x268] sm:$0xff]
      %v3101 = vld [vmem:[%s3022 + $0x270] sm:$0xff]
      %v3102 = vld [vmem:[%s3022 + $0x278] sm:$0xff]
      %v3103 = vld [vmem:[%s3022 + $0x280] sm:$0xff]
      %v3104 = vld [vmem:[%s3022 + $0x288] sm:$0xff]
      %v3105 = vld [vmem:[%s3022 + $0x290] sm:$0xff]
      %v3106 = vld [vmem:[%s3022 + $0x298] sm:$0xff]
      %v3107 = vld [vmem:[%s3022 + $0x2a0] sm:$0xff]
      %v3108 = vld [vmem:[%s3022 + $0x2a8] sm:$0xff]
      %v3109 = vld [vmem:[%s3022 + $0x2b0] sm:$0xff]
      %v3110 = vld [vmem:[%s3022 + $0x2b8] sm:$0xff]
      %v3111 = vld [vmem:[%s3022 + $0x2c0] sm:$0xff]
      %v3112 = vld [vmem:[%s3022 + $0x2c8] sm:$0xff]
      %v3113 = vld [vmem:[%s3022 + $0x2d0] sm:$0xff]
      %v3114 = vld [vmem:[%s3022 + $0x2d8] sm:$0xff]
      %v3115 = vld [vmem:[%s3022 + $0x2e0] sm:$0xff]
      %v3116 = vld [vmem:[%s3022 + $0x2e8] sm:$0xff]
      %v3117 = vld [vmem:[%s3022 + $0x2f0] sm:$0xff]
      %v3118 = vld [vmem:[%s3022 + $0x2f8] sm:$0xff]
      %v3119 = vld [vmem:[%s3022 + $0x300] sm:$0xff]
      %v3120 = vld [vmem:[%s3022 + $0x308] sm:$0xff]
      %v3121 = vld [vmem:[%s3022 + $0x310] sm:$0xff]
      %v3122 = vld [vmem:[%s3022 + $0x318] sm:$0xff]
      %v3123 = vld [vmem:[%s3022 + $0x320] sm:$0xff]
      %v3124 = vld [vmem:[%s3022 + $0x328] sm:$0xff]
      %v3125 = vld [vmem:[%s3022 + $0x330] sm:$0xff]
      %v3126 = vld [vmem:[%s3022 + $0x338] sm:$0xff]
      %v3127 = vld [vmem:[%s3022 + $0x340] sm:$0xff]
      %v3128 = vld [vmem:[%s3022 + $0x348] sm:$0xff]
      %v3129 = vld [vmem:[%s3022 + $0x350] sm:$0xff]
      %v3130 = vld [vmem:[%s3022 + $0x358] sm:$0xff]
      %v3131 = vld [vmem:[%s3022 + $0x360] sm:$0xff]
      %v3132 = vld [vmem:[%s3022 + $0x368] sm:$0xff]
      %v3133 = vld [vmem:[%s3022 + $0x370] sm:$0xff]
      %v3134 = vld [vmem:[%s3022 + $0x378] sm:$0xff]
      %v3135 = vld [vmem:[%s3022 + $0x380] sm:$0xff]
      %v3136 = vld [vmem:[%s3022 + $0x388] sm:$0xff]
      %v3137 = vld [vmem:[%s3022 + $0x390] sm:$0xff]
      %v3138 = vld [vmem:[%s3022 + $0x398] sm:$0xff]
      %v3139 = vld [vmem:[%s3022 + $0x3a0] sm:$0xff]
      %v3140 = vld [vmem:[%s3022 + $0x3a8] sm:$0xff]
      %v3141 = vld [vmem:[%s3022 + $0x3b0] sm:$0xff]
      %v3142 = vld [vmem:[%s3022 + $0x3b8] sm:$0xff]
      %v3143 = vld [vmem:[%s3022 + $0x3c0] sm:$0xff]
      %v3144 = vld [vmem:[%s3022 + $0x3c8] sm:$0xff]
      %v3145 = vld [vmem:[%s3022 + $0x3d0] sm:$0xff]
      %v3146 = vld [vmem:[%s3022 + $0x3d8] sm:$0xff]
      %v3147 = vld [vmem:[%s3022 + $0x3e0] sm:$0xff]
      %v3148 = vld [vmem:[%s3022 + $0x3e8] sm:$0xff]
      %v3149 = vld [vmem:[%s3022 + $0x3f0] sm:$0xff]
      %v3150 = vld [vmem:[%s3022 + $0x3f8] sm:$0xff]
      %s3151 = scalar_lea.vmem %s1, 3072
      %v3152 = vld [vmem:[%s3151] sm:$0xff]
      %v3153 = vld [vmem:[%s3151 + $0x8] sm:$0xff]
      %v3154 = vld [vmem:[%s3151 + $0x10] sm:$0xff]
      %v3155 = vld [vmem:[%s3151 + $0x18] sm:$0xff]
      %v3156 = vld [vmem:[%s3151 + $0x20] sm:$0xff]
      %v3157 = vld [vmem:[%s3151 + $0x28] sm:$0xff]
      %v3158 = vld [vmem:[%s3151 + $0x30] sm:$0xff]
      %v3159 = vld [vmem:[%s3151 + $0x38] sm:$0xff]
      %v3160 = vld [vmem:[%s3151 + $0x40] sm:$0xff]
      %v3161 = vld [vmem:[%s3151 + $0x48] sm:$0xff]
      %v3162 = vld [vmem:[%s3151 + $0x50] sm:$0xff]
      %v3163 = vld [vmem:[%s3151 + $0x58] sm:$0xff]
      %v3164 = vld [vmem:[%s3151 + $0x60] sm:$0xff]
      %v3165 = vld [vmem:[%s3151 + $0x68] sm:$0xff]
      %v3166 = vld [vmem:[%s3151 + $0x70] sm:$0xff]
      %v3167 = vld [vmem:[%s3151 + $0x78] sm:$0xff]
      %v3168 = vld [vmem:[%s3151 + $0x80] sm:$0xff]
      %v3169 = vld [vmem:[%s3151 + $0x88] sm:$0xff]
      %v3170 = vld [vmem:[%s3151 + $0x90] sm:$0xff]
      %v3171 = vld [vmem:[%s3151 + $0x98] sm:$0xff]
      %v3172 = vld [vmem:[%s3151 + $0xa0] sm:$0xff]
      %v3173 = vld [vmem:[%s3151 + $0xa8] sm:$0xff]
      %v3174 = vld [vmem:[%s3151 + $0xb0] sm:$0xff]
      %v3175 = vld [vmem:[%s3151 + $0xb8] sm:$0xff]
      %v3176 = vld [vmem:[%s3151 + $0xc0] sm:$0xff]
      %v3177 = vld [vmem:[%s3151 + $0xc8] sm:$0xff]
      %v3178 = vld [vmem:[%s3151 + $0xd0] sm:$0xff]
      %v3179 = vld [vmem:[%s3151 + $0xd8] sm:$0xff]
      %v3180 = vld [vmem:[%s3151 + $0xe0] sm:$0xff]
      %v3181 = vld [vmem:[%s3151 + $0xe8] sm:$0xff]
      %v3182 = vld [vmem:[%s3151 + $0xf0] sm:$0xff]
      %v3183 = vld [vmem:[%s3151 + $0xf8] sm:$0xff]
      %v3184 = vld [vmem:[%s3151 + $0x100] sm:$0xff]
      %v3185 = vld [vmem:[%s3151 + $0x108] sm:$0xff]
      %v3186 = vld [vmem:[%s3151 + $0x110] sm:$0xff]
      %v3187 = vld [vmem:[%s3151 + $0x118] sm:$0xff]
      %v3188 = vld [vmem:[%s3151 + $0x120] sm:$0xff]
      %v3189 = vld [vmem:[%s3151 + $0x128] sm:$0xff]
      %v3190 = vld [vmem:[%s3151 + $0x130] sm:$0xff]
      %v3191 = vld [vmem:[%s3151 + $0x138] sm:$0xff]
      %v3192 = vld [vmem:[%s3151 + $0x140] sm:$0xff]
      %v3193 = vld [vmem:[%s3151 + $0x148] sm:$0xff]
      %v3194 = vld [vmem:[%s3151 + $0x150] sm:$0xff]
      %v3195 = vld [vmem:[%s3151 + $0x158] sm:$0xff]
      %v3196 = vld [vmem:[%s3151 + $0x160] sm:$0xff]
      %v3197 = vld [vmem:[%s3151 + $0x168] sm:$0xff]
      %v3198 = vld [vmem:[%s3151 + $0x170] sm:$0xff]
      %v3199 = vld [vmem:[%s3151 + $0x178] sm:$0xff]
      %v3200 = vld [vmem:[%s3151 + $0x180] sm:$0xff]
      %v3201 = vld [vmem:[%s3151 + $0x188] sm:$0xff]
      %v3202 = vld [vmem:[%s3151 + $0x190] sm:$0xff]
      %v3203 = vld [vmem:[%s3151 + $0x198] sm:$0xff]
      %v3204 = vld [vmem:[%s3151 + $0x1a0] sm:$0xff]
      %v3205 = vld [vmem:[%s3151 + $0x1a8] sm:$0xff]
      %v3206 = vld [vmem:[%s3151 + $0x1b0] sm:$0xff]
      %v3207 = vld [vmem:[%s3151 + $0x1b8] sm:$0xff]
      %v3208 = vld [vmem:[%s3151 + $0x1c0] sm:$0xff]
      %v3209 = vld [vmem:[%s3151 + $0x1c8] sm:$0xff]
      %v3210 = vld [vmem:[%s3151 + $0x1d0] sm:$0xff]
      %v3211 = vld [vmem:[%s3151 + $0x1d8] sm:$0xff]
      %v3212 = vld [vmem:[%s3151 + $0x1e0] sm:$0xff]
      %v3213 = vld [vmem:[%s3151 + $0x1e8] sm:$0xff]
      %v3214 = vld [vmem:[%s3151 + $0x1f0] sm:$0xff]
      %v3215 = vld [vmem:[%s3151 + $0x1f8] sm:$0xff]
      %v3216 = vld [vmem:[%s3151 + $0x200] sm:$0xff]
      %v3217 = vld [vmem:[%s3151 + $0x208] sm:$0xff]
      %v3218 = vld [vmem:[%s3151 + $0x210] sm:$0xff]
      %v3219 = vld [vmem:[%s3151 + $0x218] sm:$0xff]
      %v3220 = vld [vmem:[%s3151 + $0x220] sm:$0xff]
      %v3221 = vld [vmem:[%s3151 + $0x228] sm:$0xff]
      %v3222 = vld [vmem:[%s3151 + $0x230] sm:$0xff]
      %v3223 = vld [vmem:[%s3151 + $0x238] sm:$0xff]
      %v3224 = vld [vmem:[%s3151 + $0x240] sm:$0xff]
      %v3225 = vld [vmem:[%s3151 + $0x248] sm:$0xff]
      %v3226 = vld [vmem:[%s3151 + $0x250] sm:$0xff]
      %v3227 = vld [vmem:[%s3151 + $0x258] sm:$0xff]
      %v3228 = vld [vmem:[%s3151 + $0x260] sm:$0xff]
      %v3229 = vld [vmem:[%s3151 + $0x268] sm:$0xff]
      %v3230 = vld [vmem:[%s3151 + $0x270] sm:$0xff]
      %v3231 = vld [vmem:[%s3151 + $0x278] sm:$0xff]
      %v3232 = vld [vmem:[%s3151 + $0x280] sm:$0xff]
      %v3233 = vld [vmem:[%s3151 + $0x288] sm:$0xff]
      %v3234 = vld [vmem:[%s3151 + $0x290] sm:$0xff]
      %v3235 = vld [vmem:[%s3151 + $0x298] sm:$0xff]
      %v3236 = vld [vmem:[%s3151 + $0x2a0] sm:$0xff]
      %v3237 = vld [vmem:[%s3151 + $0x2a8] sm:$0xff]
      %v3238 = vld [vmem:[%s3151 + $0x2b0] sm:$0xff]
      %v3239 = vld [vmem:[%s3151 + $0x2b8] sm:$0xff]
      %v3240 = vld [vmem:[%s3151 + $0x2c0] sm:$0xff]
      %v3241 = vld [vmem:[%s3151 + $0x2c8] sm:$0xff]
      %v3242 = vld [vmem:[%s3151 + $0x2d0] sm:$0xff]
      %v3243 = vld [vmem:[%s3151 + $0x2d8] sm:$0xff]
      %v3244 = vld [vmem:[%s3151 + $0x2e0] sm:$0xff]
      %v3245 = vld [vmem:[%s3151 + $0x2e8] sm:$0xff]
      %v3246 = vld [vmem:[%s3151 + $0x2f0] sm:$0xff]
      %v3247 = vld [vmem:[%s3151 + $0x2f8] sm:$0xff]
      %v3248 = vld [vmem:[%s3151 + $0x300] sm:$0xff]
      %v3249 = vld [vmem:[%s3151 + $0x308] sm:$0xff]
      %v3250 = vld [vmem:[%s3151 + $0x310] sm:$0xff]
      %v3251 = vld [vmem:[%s3151 + $0x318] sm:$0xff]
      %v3252 = vld [vmem:[%s3151 + $0x320] sm:$0xff]
      %v3253 = vld [vmem:[%s3151 + $0x328] sm:$0xff]
      %v3254 = vld [vmem:[%s3151 + $0x330] sm:$0xff]
      %v3255 = vld [vmem:[%s3151 + $0x338] sm:$0xff]
      %v3256 = vld [vmem:[%s3151 + $0x340] sm:$0xff]
      %v3257 = vld [vmem:[%s3151 + $0x348] sm:$0xff]
      %v3258 = vld [vmem:[%s3151 + $0x350] sm:$0xff]
      %v3259 = vld [vmem:[%s3151 + $0x358] sm:$0xff]
      %v3260 = vld [vmem:[%s3151 + $0x360] sm:$0xff]
      %v3261 = vld [vmem:[%s3151 + $0x368] sm:$0xff]
      %v3262 = vld [vmem:[%s3151 + $0x370] sm:$0xff]
      %v3263 = vld [vmem:[%s3151 + $0x378] sm:$0xff]
      %v3264 = vld [vmem:[%s3151 + $0x380] sm:$0xff]
      %v3265 = vld [vmem:[%s3151 + $0x388] sm:$0xff]
      %v3266 = vld [vmem:[%s3151 + $0x390] sm:$0xff]
      %v3267 = vld [vmem:[%s3151 + $0x398] sm:$0xff]
      %v3268 = vld [vmem:[%s3151 + $0x3a0] sm:$0xff]
      %v3269 = vld [vmem:[%s3151 + $0x3a8] sm:$0xff]
      %v3270 = vld [vmem:[%s3151 + $0x3b0] sm:$0xff]
      %v3271 = vld [vmem:[%s3151 + $0x3b8] sm:$0xff]
      %v3272 = vld [vmem:[%s3151 + $0x3c0] sm:$0xff]
      %v3273 = vld [vmem:[%s3151 + $0x3c8] sm:$0xff]
      %v3274 = vld [vmem:[%s3151 + $0x3d0] sm:$0xff]
      %v3275 = vld [vmem:[%s3151 + $0x3d8] sm:$0xff]
      %v3276 = vld [vmem:[%s3151 + $0x3e0] sm:$0xff]
      %v3277 = vld [vmem:[%s3151 + $0x3e8] sm:$0xff]
      %v3278 = vld [vmem:[%s3151 + $0x3f0] sm:$0xff]
      %v3279 = vld [vmem:[%s3151 + $0x3f8] sm:$0xff]
      %v3408 = vunpack.c.l.b16 %v3152
      %v3409 = vunpack.c.h.b16 %v3152
      %v3410 = vunpack.c.l.b16 %v3153
      %v3411 = vunpack.c.h.b16 %v3153
      %v3412 = vunpack.c.l.b16 %v3154
      %v3413 = vunpack.c.h.b16 %v3154
      %v3414 = vunpack.c.l.b16 %v3155
      %v3415 = vunpack.c.h.b16 %v3155
      %v3416 = vunpack.c.l.b16 %v3156
      %v3417 = vunpack.c.h.b16 %v3156
      %v3418 = vunpack.c.l.b16 %v3157
      %v3419 = vunpack.c.h.b16 %v3157
      %v3420 = vunpack.c.l.b16 %v3158
      %v3421 = vunpack.c.h.b16 %v3158
      %v3422 = vunpack.c.l.b16 %v3159
      %v3423 = vunpack.c.h.b16 %v3159
      %v3424 = vunpack.c.l.b16 %v3160
      %v3425 = vunpack.c.h.b16 %v3160
      %v3426 = vunpack.c.l.b16 %v3161
      %v3427 = vunpack.c.h.b16 %v3161
      %v3428 = vunpack.c.l.b16 %v3162
      %v3429 = vunpack.c.h.b16 %v3162
      %v3430 = vunpack.c.l.b16 %v3163
      %v3431 = vunpack.c.h.b16 %v3163
      %v3432 = vunpack.c.l.b16 %v3164
      %v3433 = vunpack.c.h.b16 %v3164
      %v3434 = vunpack.c.l.b16 %v3165
      %v3435 = vunpack.c.h.b16 %v3165
      %v3436 = vunpack.c.l.b16 %v3166
      %v3437 = vunpack.c.h.b16 %v3166
      %v3438 = vunpack.c.l.b16 %v3167
      %v3439 = vunpack.c.h.b16 %v3167
      %v3440 = vunpack.c.l.b16 %v3168
      %v3441 = vunpack.c.h.b16 %v3168
      %v3442 = vunpack.c.l.b16 %v3169
      %v3443 = vunpack.c.h.b16 %v3169
      %v3444 = vunpack.c.l.b16 %v3170
      %v3445 = vunpack.c.h.b16 %v3170
      %v3446 = vunpack.c.l.b16 %v3171
      %v3447 = vunpack.c.h.b16 %v3171
      %v3448 = vunpack.c.l.b16 %v3172
      %v3449 = vunpack.c.h.b16 %v3172
      %v3450 = vunpack.c.l.b16 %v3173
      %v3451 = vunpack.c.h.b16 %v3173
      %v3452 = vunpack.c.l.b16 %v3174
      %v3453 = vunpack.c.h.b16 %v3174
      %v3454 = vunpack.c.l.b16 %v3175
      %v3455 = vunpack.c.h.b16 %v3175
      %v3456 = vunpack.c.l.b16 %v3176
      %v3457 = vunpack.c.h.b16 %v3176
      %v3458 = vunpack.c.l.b16 %v3177
      %v3459 = vunpack.c.h.b16 %v3177
      %v3460 = vunpack.c.l.b16 %v3178
      %v3461 = vunpack.c.h.b16 %v3178
      %v3462 = vunpack.c.l.b16 %v3179
      %v3463 = vunpack.c.h.b16 %v3179
      %v3464 = vunpack.c.l.b16 %v3180
      %v3465 = vunpack.c.h.b16 %v3180
      %v3466 = vunpack.c.l.b16 %v3181
      %v3467 = vunpack.c.h.b16 %v3181
      %v3468 = vunpack.c.l.b16 %v3182
      %v3469 = vunpack.c.h.b16 %v3182
      %v3470 = vunpack.c.l.b16 %v3183
      %v3471 = vunpack.c.h.b16 %v3183
      %v3472 = vunpack.c.l.b16 %v3184
      %v3473 = vunpack.c.h.b16 %v3184
      %v3474 = vunpack.c.l.b16 %v3185
      %v3475 = vunpack.c.h.b16 %v3185
      %v3476 = vunpack.c.l.b16 %v3186
      %v3477 = vunpack.c.h.b16 %v3186
      %v3478 = vunpack.c.l.b16 %v3187
      %v3479 = vunpack.c.h.b16 %v3187
      %v3480 = vunpack.c.l.b16 %v3188
      %v3481 = vunpack.c.h.b16 %v3188
      %v3482 = vunpack.c.l.b16 %v3189
      %v3483 = vunpack.c.h.b16 %v3189
      %v3484 = vunpack.c.l.b16 %v3190
      %v3485 = vunpack.c.h.b16 %v3190
      %v3486 = vunpack.c.l.b16 %v3191
      %v3487 = vunpack.c.h.b16 %v3191
      %v3488 = vunpack.c.l.b16 %v3192
      %v3489 = vunpack.c.h.b16 %v3192
      %v3490 = vunpack.c.l.b16 %v3193
      %v3491 = vunpack.c.h.b16 %v3193
      %v3492 = vunpack.c.l.b16 %v3194
      %v3493 = vunpack.c.h.b16 %v3194
      %v3494 = vunpack.c.l.b16 %v3195
      %v3495 = vunpack.c.h.b16 %v3195
      %v3496 = vunpack.c.l.b16 %v3196
      %v3497 = vunpack.c.h.b16 %v3196
      %v3498 = vunpack.c.l.b16 %v3197
      %v3499 = vunpack.c.h.b16 %v3197
      %v3500 = vunpack.c.l.b16 %v3198
      %v3501 = vunpack.c.h.b16 %v3198
      %v3502 = vunpack.c.l.b16 %v3199
      %v3503 = vunpack.c.h.b16 %v3199
      %v3504 = vunpack.c.l.b16 %v3200
      %v3505 = vunpack.c.h.b16 %v3200
      %v3506 = vunpack.c.l.b16 %v3201
      %v3507 = vunpack.c.h.b16 %v3201
      %v3508 = vunpack.c.l.b16 %v3202
      %v3509 = vunpack.c.h.b16 %v3202
      %v3510 = vunpack.c.l.b16 %v3203
      %v3511 = vunpack.c.h.b16 %v3203
      %v3512 = vunpack.c.l.b16 %v3204
      %v3513 = vunpack.c.h.b16 %v3204
      %v3514 = vunpack.c.l.b16 %v3205
      %v3515 = vunpack.c.h.b16 %v3205
      %v3516 = vunpack.c.l.b16 %v3206
      %v3517 = vunpack.c.h.b16 %v3206
      %v3518 = vunpack.c.l.b16 %v3207
      %v3519 = vunpack.c.h.b16 %v3207
      %v3520 = vunpack.c.l.b16 %v3208
      %v3521 = vunpack.c.h.b16 %v3208
      %v3522 = vunpack.c.l.b16 %v3209
      %v3523 = vunpack.c.h.b16 %v3209
      %v3524 = vunpack.c.l.b16 %v3210
      %v3525 = vunpack.c.h.b16 %v3210
      %v3526 = vunpack.c.l.b16 %v3211
      %v3527 = vunpack.c.h.b16 %v3211
      %v3528 = vunpack.c.l.b16 %v3212
      %v3529 = vunpack.c.h.b16 %v3212
      %v3530 = vunpack.c.l.b16 %v3213
      %v3531 = vunpack.c.h.b16 %v3213
      %v3532 = vunpack.c.l.b16 %v3214
      %v3533 = vunpack.c.h.b16 %v3214
      %v3534 = vunpack.c.l.b16 %v3215
      %v3535 = vunpack.c.h.b16 %v3215
      %v3536 = vunpack.c.l.b16 %v3216
      %v3537 = vunpack.c.h.b16 %v3216
      %v3538 = vunpack.c.l.b16 %v3217
      %v3539 = vunpack.c.h.b16 %v3217
      %v3540 = vunpack.c.l.b16 %v3218
      %v3541 = vunpack.c.h.b16 %v3218
      %v3542 = vunpack.c.l.b16 %v3219
      %v3543 = vunpack.c.h.b16 %v3219
      %v3544 = vunpack.c.l.b16 %v3220
      %v3545 = vunpack.c.h.b16 %v3220
      %v3546 = vunpack.c.l.b16 %v3221
      %v3547 = vunpack.c.h.b16 %v3221
      %v3548 = vunpack.c.l.b16 %v3222
      %v3549 = vunpack.c.h.b16 %v3222
      %v3550 = vunpack.c.l.b16 %v3223
      %v3551 = vunpack.c.h.b16 %v3223
      %v3552 = vunpack.c.l.b16 %v3224
      %v3553 = vunpack.c.h.b16 %v3224
      %v3554 = vunpack.c.l.b16 %v3225
      %v3555 = vunpack.c.h.b16 %v3225
      %v3556 = vunpack.c.l.b16 %v3226
      %v3557 = vunpack.c.h.b16 %v3226
      %v3558 = vunpack.c.l.b16 %v3227
      %v3559 = vunpack.c.h.b16 %v3227
      %v3560 = vunpack.c.l.b16 %v3228
      %v3561 = vunpack.c.h.b16 %v3228
      %v3562 = vunpack.c.l.b16 %v3229
      %v3563 = vunpack.c.h.b16 %v3229
      %v3564 = vunpack.c.l.b16 %v3230
      %v3565 = vunpack.c.h.b16 %v3230
      %v3566 = vunpack.c.l.b16 %v3231
      %v3567 = vunpack.c.h.b16 %v3231
      %v3568 = vunpack.c.l.b16 %v3232
      %v3569 = vunpack.c.h.b16 %v3232
      %v3570 = vunpack.c.l.b16 %v3233
      %v3571 = vunpack.c.h.b16 %v3233
      %v3572 = vunpack.c.l.b16 %v3234
      %v3573 = vunpack.c.h.b16 %v3234
      %v3574 = vunpack.c.l.b16 %v3235
      %v3575 = vunpack.c.h.b16 %v3235
      %v3576 = vunpack.c.l.b16 %v3236
      %v3577 = vunpack.c.h.b16 %v3236
      %v3578 = vunpack.c.l.b16 %v3237
      %v3579 = vunpack.c.h.b16 %v3237
      %v3580 = vunpack.c.l.b16 %v3238
      %v3581 = vunpack.c.h.b16 %v3238
      %v3582 = vunpack.c.l.b16 %v3239
      %v3583 = vunpack.c.h.b16 %v3239
      %v3584 = vunpack.c.l.b16 %v3240
      %v3585 = vunpack.c.h.b16 %v3240
      %v3586 = vunpack.c.l.b16 %v3241
      %v3587 = vunpack.c.h.b16 %v3241
      %v3588 = vunpack.c.l.b16 %v3242
      %v3589 = vunpack.c.h.b16 %v3242
      %v3590 = vunpack.c.l.b16 %v3243
      %v3591 = vunpack.c.h.b16 %v3243
      %v3592 = vunpack.c.l.b16 %v3244
      %v3593 = vunpack.c.h.b16 %v3244
      %v3594 = vunpack.c.l.b16 %v3245
      %v3595 = vunpack.c.h.b16 %v3245
      %v3596 = vunpack.c.l.b16 %v3246
      %v3597 = vunpack.c.h.b16 %v3246
      %v3598 = vunpack.c.l.b16 %v3247
      %v3599 = vunpack.c.h.b16 %v3247
      %v3600 = vunpack.c.l.b16 %v3248
      %v3601 = vunpack.c.h.b16 %v3248
      %v3602 = vunpack.c.l.b16 %v3249
      %v3603 = vunpack.c.h.b16 %v3249
      %v3604 = vunpack.c.l.b16 %v3250
      %v3605 = vunpack.c.h.b16 %v3250
      %v3606 = vunpack.c.l.b16 %v3251
      %v3607 = vunpack.c.h.b16 %v3251
      %v3608 = vunpack.c.l.b16 %v3252
      %v3609 = vunpack.c.h.b16 %v3252
      %v3610 = vunpack.c.l.b16 %v3253
      %v3611 = vunpack.c.h.b16 %v3253
      %v3612 = vunpack.c.l.b16 %v3254
      %v3613 = vunpack.c.h.b16 %v3254
      %v3614 = vunpack.c.l.b16 %v3255
      %v3615 = vunpack.c.h.b16 %v3255
      %v3616 = vunpack.c.l.b16 %v3256
      %v3617 = vunpack.c.h.b16 %v3256
      %v3618 = vunpack.c.l.b16 %v3257
      %v3619 = vunpack.c.h.b16 %v3257
      %v3620 = vunpack.c.l.b16 %v3258
      %v3621 = vunpack.c.h.b16 %v3258
      %v3622 = vunpack.c.l.b16 %v3259
      %v3623 = vunpack.c.h.b16 %v3259
      %v3624 = vunpack.c.l.b16 %v3260
      %v3625 = vunpack.c.h.b16 %v3260
      %v3626 = vunpack.c.l.b16 %v3261
      %v3627 = vunpack.c.h.b16 %v3261
      %v3628 = vunpack.c.l.b16 %v3262
      %v3629 = vunpack.c.h.b16 %v3262
      %v3630 = vunpack.c.l.b16 %v3263
      %v3631 = vunpack.c.h.b16 %v3263
      %v3632 = vunpack.c.l.b16 %v3264
      %v3633 = vunpack.c.h.b16 %v3264
      %v3634 = vunpack.c.l.b16 %v3265
      %v3635 = vunpack.c.h.b16 %v3265
      %v3636 = vunpack.c.l.b16 %v3266
      %v3637 = vunpack.c.h.b16 %v3266
      %v3638 = vunpack.c.l.b16 %v3267
      %v3639 = vunpack.c.h.b16 %v3267
      %v3640 = vunpack.c.l.b16 %v3268
      %v3641 = vunpack.c.h.b16 %v3268
      %v3642 = vunpack.c.l.b16 %v3269
      %v3643 = vunpack.c.h.b16 %v3269
      %v3644 = vunpack.c.l.b16 %v3270
      %v3645 = vunpack.c.h.b16 %v3270
      %v3646 = vunpack.c.l.b16 %v3271
      %v3647 = vunpack.c.h.b16 %v3271
      %v3648 = vunpack.c.l.b16 %v3272
      %v3649 = vunpack.c.h.b16 %v3272
      %v3650 = vunpack.c.l.b16 %v3273
      %v3651 = vunpack.c.h.b16 %v3273
      %v3652 = vunpack.c.l.b16 %v3274
      %v3653 = vunpack.c.h.b16 %v3274
      %v3654 = vunpack.c.l.b16 %v3275
      %v3655 = vunpack.c.h.b16 %v3275
      %v3656 = vunpack.c.l.b16 %v3276
      %v3657 = vunpack.c.h.b16 %v3276
      %v3658 = vunpack.c.l.b16 %v3277
      %v3659 = vunpack.c.h.b16 %v3277
      %v3660 = vunpack.c.l.b16 %v3278
      %v3661 = vunpack.c.h.b16 %v3278
      %v3662 = vunpack.c.l.b16 %v3279
      %v3663 = vunpack.c.h.b16 %v3279
      %v3664 = vpack.c.b16 %v3412, %v3408
      %v3665 = vpack.c.b16 %v3413, %v3409
      %v3666 = vpack.c.b16 %v3414, %v3410
      %v3667 = vpack.c.b16 %v3415, %v3411
      %v3668 = vpack.c.b16 %v3420, %v3416
      %v3669 = vpack.c.b16 %v3421, %v3417
      %v3670 = vpack.c.b16 %v3422, %v3418
      %v3671 = vpack.c.b16 %v3423, %v3419
      %v3672 = vpack.c.b16 %v3428, %v3424
      %v3673 = vpack.c.b16 %v3429, %v3425
      %v3674 = vpack.c.b16 %v3430, %v3426
      %v3675 = vpack.c.b16 %v3431, %v3427
      %v3676 = vpack.c.b16 %v3436, %v3432
      %v3677 = vpack.c.b16 %v3437, %v3433
      %v3678 = vpack.c.b16 %v3438, %v3434
      %v3679 = vpack.c.b16 %v3439, %v3435
      %v3680 = vpack.c.b16 %v3444, %v3440
      %v3681 = vpack.c.b16 %v3445, %v3441
      %v3682 = vpack.c.b16 %v3446, %v3442
      %v3683 = vpack.c.b16 %v3447, %v3443
      %v3684 = vpack.c.b16 %v3452, %v3448
      %v3685 = vpack.c.b16 %v3453, %v3449
      %v3686 = vpack.c.b16 %v3454, %v3450
      %v3687 = vpack.c.b16 %v3455, %v3451
      %v3688 = vpack.c.b16 %v3460, %v3456
      %v3689 = vpack.c.b16 %v3461, %v3457
      %v3690 = vpack.c.b16 %v3462, %v3458
      %v3691 = vpack.c.b16 %v3463, %v3459
      %v3692 = vpack.c.b16 %v3468, %v3464
      %v3693 = vpack.c.b16 %v3469, %v3465
      %v3694 = vpack.c.b16 %v3470, %v3466
      %v3695 = vpack.c.b16 %v3471, %v3467
      %v3696 = vpack.c.b16 %v3476, %v3472
      %v3697 = vpack.c.b16 %v3477, %v3473
      %v3698 = vpack.c.b16 %v3478, %v3474
      %v3699 = vpack.c.b16 %v3479, %v3475
      %v3700 = vpack.c.b16 %v3484, %v3480
      %v3701 = vpack.c.b16 %v3485, %v3481
      %v3702 = vpack.c.b16 %v3486, %v3482
      %v3703 = vpack.c.b16 %v3487, %v3483
      %v3704 = vpack.c.b16 %v3492, %v3488
      %v3705 = vpack.c.b16 %v3493, %v3489
      %v3706 = vpack.c.b16 %v3494, %v3490
      %v3707 = vpack.c.b16 %v3495, %v3491
      %v3708 = vpack.c.b16 %v3500, %v3496
      %v3709 = vpack.c.b16 %v3501, %v3497
      %v3710 = vpack.c.b16 %v3502, %v3498
      %v3711 = vpack.c.b16 %v3503, %v3499
      %v3712 = vpack.c.b16 %v3508, %v3504
      %v3713 = vpack.c.b16 %v3509, %v3505
      %v3714 = vpack.c.b16 %v3510, %v3506
      %v3715 = vpack.c.b16 %v3511, %v3507
      %v3716 = vpack.c.b16 %v3516, %v3512
      %v3717 = vpack.c.b16 %v3517, %v3513
      %v3718 = vpack.c.b16 %v3518, %v3514
      %v3719 = vpack.c.b16 %v3519, %v3515
      %v3720 = vpack.c.b16 %v3524, %v3520
      %v3721 = vpack.c.b16 %v3525, %v3521
      %v3722 = vpack.c.b16 %v3526, %v3522
      %v3723 = vpack.c.b16 %v3527, %v3523
      %v3724 = vpack.c.b16 %v3532, %v3528
      %v3725 = vpack.c.b16 %v3533, %v3529
      %v3726 = vpack.c.b16 %v3534, %v3530
      %v3727 = vpack.c.b16 %v3535, %v3531
      %v3728 = vpack.c.b16 %v3540, %v3536
      %v3729 = vpack.c.b16 %v3541, %v3537
      %v3730 = vpack.c.b16 %v3542, %v3538
      %v3731 = vpack.c.b16 %v3543, %v3539
      %v3732 = vpack.c.b16 %v3548, %v3544
      %v3733 = vpack.c.b16 %v3549, %v3545
      %v3734 = vpack.c.b16 %v3550, %v3546
      %v3735 = vpack.c.b16 %v3551, %v3547
      %v3736 = vpack.c.b16 %v3556, %v3552
      %v3737 = vpack.c.b16 %v3557, %v3553
      %v3738 = vpack.c.b16 %v3558, %v3554
      %v3739 = vpack.c.b16 %v3559, %v3555
      %v3740 = vpack.c.b16 %v3564, %v3560
      %v3741 = vpack.c.b16 %v3565, %v3561
      %v3742 = vpack.c.b16 %v3566, %v3562
      %v3743 = vpack.c.b16 %v3567, %v3563
      %v3744 = vpack.c.b16 %v3572, %v3568
      %v3745 = vpack.c.b16 %v3573, %v3569
      %v3746 = vpack.c.b16 %v3574, %v3570
      %v3747 = vpack.c.b16 %v3575, %v3571
      %v3748 = vpack.c.b16 %v3580, %v3576
      %v3749 = vpack.c.b16 %v3581, %v3577
      %v3750 = vpack.c.b16 %v3582, %v3578
      %v3751 = vpack.c.b16 %v3583, %v3579
      %v3752 = vpack.c.b16 %v3588, %v3584
      %v3753 = vpack.c.b16 %v3589, %v3585
      %v3754 = vpack.c.b16 %v3590, %v3586
      %v3755 = vpack.c.b16 %v3591, %v3587
      %v3756 = vpack.c.b16 %v3596, %v3592
      %v3757 = vpack.c.b16 %v3597, %v3593
      %v3758 = vpack.c.b16 %v3598, %v3594
      %v3759 = vpack.c.b16 %v3599, %v3595
      %v3760 = vpack.c.b16 %v3604, %v3600
      %v3761 = vpack.c.b16 %v3605, %v3601
      %v3762 = vpack.c.b16 %v3606, %v3602
      %v3763 = vpack.c.b16 %v3607, %v3603
      %v3764 = vpack.c.b16 %v3612, %v3608
      %v3765 = vpack.c.b16 %v3613, %v3609
      %v3766 = vpack.c.b16 %v3614, %v3610
      %v3767 = vpack.c.b16 %v3615, %v3611
      %v3768 = vpack.c.b16 %v3620, %v3616
      %v3769 = vpack.c.b16 %v3621, %v3617
      %v3770 = vpack.c.b16 %v3622, %v3618
      %v3771 = vpack.c.b16 %v3623, %v3619
      %v3772 = vpack.c.b16 %v3628, %v3624
      %v3773 = vpack.c.b16 %v3629, %v3625
      %v3774 = vpack.c.b16 %v3630, %v3626
      %v3775 = vpack.c.b16 %v3631, %v3627
      %v3776 = vpack.c.b16 %v3636, %v3632
      %v3777 = vpack.c.b16 %v3637, %v3633
      %v3778 = vpack.c.b16 %v3638, %v3634
      %v3779 = vpack.c.b16 %v3639, %v3635
      %v3780 = vpack.c.b16 %v3644, %v3640
      %v3781 = vpack.c.b16 %v3645, %v3641
      %v3782 = vpack.c.b16 %v3646, %v3642
      %v3783 = vpack.c.b16 %v3647, %v3643
      %v3784 = vpack.c.b16 %v3652, %v3648
      %v3785 = vpack.c.b16 %v3653, %v3649
      %v3786 = vpack.c.b16 %v3654, %v3650
      %v3787 = vpack.c.b16 %v3655, %v3651
      %v3788 = vpack.c.b16 %v3660, %v3656
      %v3789 = vpack.c.b16 %v3661, %v3657
      %v3790 = vpack.c.b16 %v3662, %v3658
      %v3791 = vpack.c.b16 %v3663, %v3659
      %3920 = vmatprep.subr.bf16.mxu0 %v3665
      %3921 = vmatpush1.bf16.msra.mxu0 %v3664
      %3922 = vmatprep.subr.bf16.mxu0 %v3669
      %3923 = vmatpush1.bf16.msra.mxu0 %v3668
      %3924 = vmatprep.subr.bf16.mxu0 %v3673
      %3925 = vmatpush1.bf16.msra.mxu0 %v3672
      %3926 = vmatprep.subr.bf16.mxu0 %v3677
      %3927 = vmatpush1.bf16.msra.mxu0 %v3676
      %3928 = vmatprep.subr.bf16.mxu0 %v3681
      %3929 = vmatpush1.bf16.msra.mxu0 %v3680
      %3930 = vmatprep.subr.bf16.mxu0 %v3685
      %3931 = vmatpush1.bf16.msra.mxu0 %v3684
      %3932 = vmatprep.subr.bf16.mxu0 %v3689
      %3933 = vmatpush1.bf16.msra.mxu0 %v3688
      %3934 = vmatprep.subr.bf16.mxu0 %v3693
      %3935 = vmatpush1.bf16.msra.mxu0 %v3692
      %3936 = vmatprep.subr.bf16.mxu0 %v3697
      %3937 = vmatpush1.bf16.msra.mxu0 %v3696
      %3938 = vmatprep.subr.bf16.mxu0 %v3701
      %3939 = vmatpush1.bf16.msra.mxu0 %v3700
      %3940 = vmatprep.subr.bf16.mxu0 %v3705
      %3941 = vmatpush1.bf16.msra.mxu0 %v3704
      %3942 = vmatprep.subr.bf16.mxu0 %v3709
      %3943 = vmatpush1.bf16.msra.mxu0 %v3708
      %3944 = vmatprep.subr.bf16.mxu0 %v3713
      %3945 = vmatpush1.bf16.msra.mxu0 %v3712
      %3946 = vmatprep.subr.bf16.mxu0 %v3717
      %3947 = vmatpush1.bf16.msra.mxu0 %v3716
      %3948 = vmatprep.subr.bf16.mxu0 %v3721
      %3949 = vmatpush1.bf16.msra.mxu0 %v3720
      %3950 = vmatprep.subr.bf16.mxu0 %v3725
      %3951 = vmatpush1.bf16.msra.mxu0 %v3724
      %3952 = vmatprep.mubr.bf16.mxu0 %v185
      %3953 = vmatmul.mubr.bf16.gmra.mrb[0].mxu0 %v184
      %v3954 = vpop.f32.mrb[0].mxu0
      %v3955 = vadd.f32 0.0, %v3954
      %v3956 = vpop.f32.mrb[0].mxu0
      %v3957 = vadd.f32 0.0, %v3956
      %v3958 = vpop.f32.mrb[0].mxu0
      %v3959 = vpop.f32.mrb[0].mxu0
      %3960 = vdwg.mxu0
      %3961 = vmatprep.subr.bf16.mxu0 %v3729
      %3962 = vmatpush1.bf16.msra.mxu0 %v3728
      %3963 = vmatprep.subr.bf16.mxu0 %v3733
      %3964 = vmatpush1.bf16.msra.mxu0 %v3732
      %3965 = vmatprep.subr.bf16.mxu0 %v3737
      %3966 = vmatpush1.bf16.msra.mxu0 %v3736
      %3967 = vmatprep.subr.bf16.mxu0 %v3741
      %3968 = vmatpush1.bf16.msra.mxu0 %v3740
      %3969 = vmatprep.subr.bf16.mxu0 %v3745
      %3970 = vmatpush1.bf16.msra.mxu0 %v3744
      %3971 = vmatprep.subr.bf16.mxu0 %v3749
      %3972 = vmatpush1.bf16.msra.mxu0 %v3748
      %3973 = vmatprep.subr.bf16.mxu0 %v3753
      %3974 = vmatpush1.bf16.msra.mxu0 %v3752
      %3975 = vmatprep.subr.bf16.mxu0 %v3757
      %3976 = vmatpush1.bf16.msra.mxu0 %v3756
      %3977 = vmatprep.subr.bf16.mxu0 %v3761
      %3978 = vmatpush1.bf16.msra.mxu0 %v3760
      %3979 = vmatprep.subr.bf16.mxu0 %v3765
      %3980 = vmatpush1.bf16.msra.mxu0 %v3764
      %3981 = vmatprep.subr.bf16.mxu0 %v3769
      %3982 = vmatpush1.bf16.msra.mxu0 %v3768
      %3983 = vmatprep.subr.bf16.mxu0 %v3773
      %3984 = vmatpush1.bf16.msra.mxu0 %v3772
      %3985 = vmatprep.subr.bf16.mxu0 %v3777
      %3986 = vmatpush1.bf16.msra.mxu0 %v3776
      %3987 = vmatprep.subr.bf16.mxu0 %v3781
      %3988 = vmatpush1.bf16.msra.mxu0 %v3780
      %3989 = vmatprep.subr.bf16.mxu0 %v3785
      %3990 = vmatpush1.bf16.msra.mxu0 %v3784
      %3991 = vmatprep.subr.bf16.mxu0 %v3789
      %3992 = vmatpush1.bf16.msra.mxu0 %v3788
      %3993 = vmatprep.mubr.bf16.mxu0 %v187
      %3994 = vmatmul.mubr.bf16.gmra.mrb[0].mxu0 %v186
      %v3995 = vpop.f32.mrb[0].mxu0
      %v3996 = vadd.f32 %v3955, %v3995
      %v3997 = vpop.f32.mrb[0].mxu0
      %v3998 = vadd.f32 %v3957, %v3997
      %v3999 = vpop.f32.mrb[0].mxu0
      %v4000 = vpop.f32.mrb[0].mxu0
      %4001 = vdwg.mxu0
      %4002 = vmatprep.subr.bf16.mxu0 %v3667
      %4003 = vmatpush1.bf16.msra.mxu0 %v3666
      %4004 = vmatprep.subr.bf16.mxu0 %v3671
      %4005 = vmatpush1.bf16.msra.mxu0 %v3670
      %4006 = vmatprep.subr.bf16.mxu0 %v3675
      %4007 = vmatpush1.bf16.msra.mxu0 %v3674
      %4008 = vmatprep.subr.bf16.mxu0 %v3679
      %4009 = vmatpush1.bf16.msra.mxu0 %v3678
      %4010 = vmatprep.subr.bf16.mxu0 %v3683
      %4011 = vmatpush1.bf16.msra.mxu0 %v3682
      %4012 = vmatprep.subr.bf16.mxu0 %v3687
      %4013 = vmatpush1.bf16.msra.mxu0 %v3686
      %4014 = vmatprep.subr.bf16.mxu0 %v3691
      %4015 = vmatpush1.bf16.msra.mxu0 %v3690
      %4016 = vmatprep.subr.bf16.mxu0 %v3695
      %4017 = vmatpush1.bf16.msra.mxu0 %v3694
      %4018 = vmatprep.subr.bf16.mxu0 %v3699
      %4019 = vmatpush1.bf16.msra.mxu0 %v3698
      %4020 = vmatprep.subr.bf16.mxu0 %v3703
      %4021 = vmatpush1.bf16.msra.mxu0 %v3702
      %4022 = vmatprep.subr.bf16.mxu0 %v3707
      %4023 = vmatpush1.bf16.msra.mxu0 %v3706
      %4024 = vmatprep.subr.bf16.mxu0 %v3711
      %4025 = vmatpush1.bf16.msra.mxu0 %v3710
      %4026 = vmatprep.subr.bf16.mxu0 %v3715
      %4027 = vmatpush1.bf16.msra.mxu0 %v3714
      %4028 = vmatprep.subr.bf16.mxu0 %v3719
      %4029 = vmatpush1.bf16.msra.mxu0 %v3718
      %4030 = vmatprep.subr.bf16.mxu0 %v3723
      %4031 = vmatpush1.bf16.msra.mxu0 %v3722
      %4032 = vmatprep.subr.bf16.mxu0 %v3727
      %4033 = vmatpush1.bf16.msra.mxu0 %v3726
      %4034 = vmatprep.mubr.bf16.mxu0 %v185
      %4035 = vmatmul.mubr.bf16.gmra.mrb[0].mxu0 %v184
      %v4036 = vpop.f32.mrb[0].mxu0
      %v4037 = vadd.f32 0.0, %v4036
      %v4038 = vpop.f32.mrb[0].mxu0
      %v4039 = vadd.f32 0.0, %v4038
      %v4040 = vpop.f32.mrb[0].mxu0
      %v4041 = vpop.f32.mrb[0].mxu0
      %4042 = vdwg.mxu0
      %4043 = vmatprep.subr.bf16.mxu0 %v3731
      %4044 = vmatpush1.bf16.msra.mxu0 %v3730
      %4045 = vmatprep.subr.bf16.mxu0 %v3735
      %4046 = vmatpush1.bf16.msra.mxu0 %v3734
      %4047 = vmatprep.subr.bf16.mxu0 %v3739
      %4048 = vmatpush1.bf16.msra.mxu0 %v3738
      %4049 = vmatprep.subr.bf16.mxu0 %v3743
      %4050 = vmatpush1.bf16.msra.mxu0 %v3742
      %4051 = vmatprep.subr.bf16.mxu0 %v3747
      %4052 = vmatpush1.bf16.msra.mxu0 %v3746
      %4053 = vmatprep.subr.bf16.mxu0 %v3751
      %4054 = vmatpush1.bf16.msra.mxu0 %v3750
      %4055 = vmatprep.subr.bf16.mxu0 %v3755
      %4056 = vmatpush1.bf16.msra.mxu0 %v3754
      %4057 = vmatprep.subr.bf16.mxu0 %v3759
      %4058 = vmatpush1.bf16.msra.mxu0 %v3758
      %4059 = vmatprep.subr.bf16.mxu0 %v3763
      %4060 = vmatpush1.bf16.msra.mxu0 %v3762
      %4061 = vmatprep.subr.bf16.mxu0 %v3767
      %4062 = vmatpush1.bf16.msra.mxu0 %v3766
      %4063 = vmatprep.subr.bf16.mxu0 %v3771
      %4064 = vmatpush1.bf16.msra.mxu0 %v3770
      %4065 = vmatprep.subr.bf16.mxu0 %v3775
      %4066 = vmatpush1.bf16.msra.mxu0 %v3774
      %4067 = vmatprep.subr.bf16.mxu0 %v3779
      %4068 = vmatpush1.bf16.msra.mxu0 %v3778
      %4069 = vmatprep.subr.bf16.mxu0 %v3783
      %4070 = vmatpush1.bf16.msra.mxu0 %v3782
      %4071 = vmatprep.subr.bf16.mxu0 %v3787
      %4072 = vmatpush1.bf16.msra.mxu0 %v3786
      %4073 = vmatprep.subr.bf16.mxu0 %v3791
      %4074 = vmatpush1.bf16.msra.mxu0 %v3790
      %4075 = vmatprep.mubr.bf16.mxu0 %v187
      %4076 = vmatmul.mubr.bf16.gmra.mrb[0].mxu0 %v186
      %v4077 = vpop.f32.mrb[0].mxu0
      %v4078 = vadd.f32 %v4037, %v4077
      %v4079 = vpop.f32.mrb[0].mxu0
      %v4080 = vadd.f32 %v4039, %v4079
      %v4081 = vpop.f32.mrb[0].mxu0
      %v4082 = vpop.f32.mrb[0].mxu0
      %4083 = vdwg.mxu0
      %v4212 = vunpack.c.l.b16 %v3023
      %v4213 = vunpack.c.h.b16 %v3023
      %v4214 = vunpack.c.l.b16 %v3024
      %v4215 = vunpack.c.h.b16 %v3024
      %v4216 = vunpack.c.l.b16 %v3025
      %v4217 = vunpack.c.h.b16 %v3025
      %v4218 = vunpack.c.l.b16 %v3026
      %v4219 = vunpack.c.h.b16 %v3026
      %v4220 = vunpack.c.l.b16 %v3027
      %v4221 = vunpack.c.h.b16 %v3027
      %v4222 = vunpack.c.l.b16 %v3028
      %v4223 = vunpack.c.h.b16 %v3028
      %v4224 = vunpack.c.l.b16 %v3029
      %v4225 = vunpack.c.h.b16 %v3029
      %v4226 = vunpack.c.l.b16 %v3030
      %v4227 = vunpack.c.h.b16 %v3030
      %v4228 = vunpack.c.l.b16 %v3031
      %v4229 = vunpack.c.h.b16 %v3031
      %v4230 = vunpack.c.l.b16 %v3032
      %v4231 = vunpack.c.h.b16 %v3032
      %v4232 = vunpack.c.l.b16 %v3033
      %v4233 = vunpack.c.h.b16 %v3033
      %v4234 = vunpack.c.l.b16 %v3034
      %v4235 = vunpack.c.h.b16 %v3034
      %v4236 = vunpack.c.l.b16 %v3035
      %v4237 = vunpack.c.h.b16 %v3035
      %v4238 = vunpack.c.l.b16 %v3036
      %v4239 = vunpack.c.h.b16 %v3036
      %v4240 = vunpack.c.l.b16 %v3037
      %v4241 = vunpack.c.h.b16 %v3037
      %v4242 = vunpack.c.l.b16 %v3038
      %v4243 = vunpack.c.h.b16 %v3038
      %v4244 = vunpack.c.l.b16 %v3039
      %v4245 = vunpack.c.h.b16 %v3039
      %v4246 = vunpack.c.l.b16 %v3040
      %v4247 = vunpack.c.h.b16 %v3040
      %v4248 = vunpack.c.l.b16 %v3041
      %v4249 = vunpack.c.h.b16 %v3041
      %v4250 = vunpack.c.l.b16 %v3042
      %v4251 = vunpack.c.h.b16 %v3042
      %v4252 = vunpack.c.l.b16 %v3043
      %v4253 = vunpack.c.h.b16 %v3043
      %v4254 = vunpack.c.l.b16 %v3044
      %v4255 = vunpack.c.h.b16 %v3044
      %v4256 = vunpack.c.l.b16 %v3045
      %v4257 = vunpack.c.h.b16 %v3045
      %v4258 = vunpack.c.l.b16 %v3046
      %v4259 = vunpack.c.h.b16 %v3046
      %v4260 = vunpack.c.l.b16 %v3047
      %v4261 = vunpack.c.h.b16 %v3047
      %v4262 = vunpack.c.l.b16 %v3048
      %v4263 = vunpack.c.h.b16 %v3048
      %v4264 = vunpack.c.l.b16 %v3049
      %v4265 = vunpack.c.h.b16 %v3049
      %v4266 = vunpack.c.l.b16 %v3050
      %v4267 = vunpack.c.h.b16 %v3050
      %v4268 = vunpack.c.l.b16 %v3051
      %v4269 = vunpack.c.h.b16 %v3051
      %v4270 = vunpack.c.l.b16 %v3052
      %v4271 = vunpack.c.h.b16 %v3052
      %v4272 = vunpack.c.l.b16 %v3053
      %v4273 = vunpack.c.h.b16 %v3053
      %v4274 = vunpack.c.l.b16 %v3054
      %v4275 = vunpack.c.h.b16 %v3054
      %v4276 = vunpack.c.l.b16 %v3055
      %v4277 = vunpack.c.h.b16 %v3055
      %v4278 = vunpack.c.l.b16 %v3056
      %v4279 = vunpack.c.h.b16 %v3056
      %v4280 = vunpack.c.l.b16 %v3057
      %v4281 = vunpack.c.h.b16 %v3057
      %v4282 = vunpack.c.l.b16 %v3058
      %v4283 = vunpack.c.h.b16 %v3058
      %v4284 = vunpack.c.l.b16 %v3059
      %v4285 = vunpack.c.h.b16 %v3059
      %v4286 = vunpack.c.l.b16 %v3060
      %v4287 = vunpack.c.h.b16 %v3060
      %v4288 = vunpack.c.l.b16 %v3061
      %v4289 = vunpack.c.h.b16 %v3061
      %v4290 = vunpack.c.l.b16 %v3062
      %v4291 = vunpack.c.h.b16 %v3062
      %v4292 = vunpack.c.l.b16 %v3063
      %v4293 = vunpack.c.h.b16 %v3063
      %v4294 = vunpack.c.l.b16 %v3064
      %v4295 = vunpack.c.h.b16 %v3064
      %v4296 = vunpack.c.l.b16 %v3065
      %v4297 = vunpack.c.h.b16 %v3065
      %v4298 = vunpack.c.l.b16 %v3066
      %v4299 = vunpack.c.h.b16 %v3066
      %v4300 = vunpack.c.l.b16 %v3067
      %v4301 = vunpack.c.h.b16 %v3067
      %v4302 = vunpack.c.l.b16 %v3068
      %v4303 = vunpack.c.h.b16 %v3068
      %v4304 = vunpack.c.l.b16 %v3069
      %v4305 = vunpack.c.h.b16 %v3069
      %v4306 = vunpack.c.l.b16 %v3070
      %v4307 = vunpack.c.h.b16 %v3070
      %v4308 = vunpack.c.l.b16 %v3071
      %v4309 = vunpack.c.h.b16 %v3071
      %v4310 = vunpack.c.l.b16 %v3072
      %v4311 = vunpack.c.h.b16 %v3072
      %v4312 = vunpack.c.l.b16 %v3073
      %v4313 = vunpack.c.h.b16 %v3073
      %v4314 = vunpack.c.l.b16 %v3074
      %v4315 = vunpack.c.h.b16 %v3074
      %v4316 = vunpack.c.l.b16 %v3075
      %v4317 = vunpack.c.h.b16 %v3075
      %v4318 = vunpack.c.l.b16 %v3076
      %v4319 = vunpack.c.h.b16 %v3076
      %v4320 = vunpack.c.l.b16 %v3077
      %v4321 = vunpack.c.h.b16 %v3077
      %v4322 = vunpack.c.l.b16 %v3078
      %v4323 = vunpack.c.h.b16 %v3078
      %v4324 = vunpack.c.l.b16 %v3079
      %v4325 = vunpack.c.h.b16 %v3079
      %v4326 = vunpack.c.l.b16 %v3080
      %v4327 = vunpack.c.h.b16 %v3080
      %v4328 = vunpack.c.l.b16 %v3081
      %v4329 = vunpack.c.h.b16 %v3081
      %v4330 = vunpack.c.l.b16 %v3082
      %v4331 = vunpack.c.h.b16 %v3082
      %v4332 = vunpack.c.l.b16 %v3083
      %v4333 = vunpack.c.h.b16 %v3083
      %v4334 = vunpack.c.l.b16 %v3084
      %v4335 = vunpack.c.h.b16 %v3084
      %v4336 = vunpack.c.l.b16 %v3085
      %v4337 = vunpack.c.h.b16 %v3085
      %v4338 = vunpack.c.l.b16 %v3086
      %v4339 = vunpack.c.h.b16 %v3086
      %v4340 = vunpack.c.l.b16 %v3087
      %v4341 = vunpack.c.h.b16 %v3087
      %v4342 = vunpack.c.l.b16 %v3088
      %v4343 = vunpack.c.h.b16 %v3088
      %v4344 = vunpack.c.l.b16 %v3089
      %v4345 = vunpack.c.h.b16 %v3089
      %v4346 = vunpack.c.l.b16 %v3090
      %v4347 = vunpack.c.h.b16 %v3090
      %v4348 = vunpack.c.l.b16 %v3091
      %v4349 = vunpack.c.h.b16 %v3091
      %v4350 = vunpack.c.l.b16 %v3092
      %v4351 = vunpack.c.h.b16 %v3092
      %v4352 = vunpack.c.l.b16 %v3093
      %v4353 = vunpack.c.h.b16 %v3093
      %v4354 = vunpack.c.l.b16 %v3094
      %v4355 = vunpack.c.h.b16 %v3094
      %v4356 = vunpack.c.l.b16 %v3095
      %v4357 = vunpack.c.h.b16 %v3095
      %v4358 = vunpack.c.l.b16 %v3096
      %v4359 = vunpack.c.h.b16 %v3096
      %v4360 = vunpack.c.l.b16 %v3097
      %v4361 = vunpack.c.h.b16 %v3097
      %v4362 = vunpack.c.l.b16 %v3098
      %v4363 = vunpack.c.h.b16 %v3098
      %v4364 = vunpack.c.l.b16 %v3099
      %v4365 = vunpack.c.h.b16 %v3099
      %v4366 = vunpack.c.l.b16 %v3100
      %v4367 = vunpack.c.h.b16 %v3100
      %v4368 = vunpack.c.l.b16 %v3101
      %v4369 = vunpack.c.h.b16 %v3101
      %v4370 = vunpack.c.l.b16 %v3102
      %v4371 = vunpack.c.h.b16 %v3102
      %v4372 = vunpack.c.l.b16 %v3103
      %v4373 = vunpack.c.h.b16 %v3103
      %v4374 = vunpack.c.l.b16 %v3104
      %v4375 = vunpack.c.h.b16 %v3104
      %v4376 = vunpack.c.l.b16 %v3105
      %v4377 = vunpack.c.h.b16 %v3105
      %v4378 = vunpack.c.l.b16 %v3106
      %v4379 = vunpack.c.h.b16 %v3106
      %v4380 = vunpack.c.l.b16 %v3107
      %v4381 = vunpack.c.h.b16 %v3107
      %v4382 = vunpack.c.l.b16 %v3108
      %v4383 = vunpack.c.h.b16 %v3108
      %v4384 = vunpack.c.l.b16 %v3109
      %v4385 = vunpack.c.h.b16 %v3109
      %v4386 = vunpack.c.l.b16 %v3110
      %v4387 = vunpack.c.h.b16 %v3110
      %v4388 = vunpack.c.l.b16 %v3111
      %v4389 = vunpack.c.h.b16 %v3111
      %v4390 = vunpack.c.l.b16 %v3112
      %v4391 = vunpack.c.h.b16 %v3112
      %v4392 = vunpack.c.l.b16 %v3113
      %v4393 = vunpack.c.h.b16 %v3113
      %v4394 = vunpack.c.l.b16 %v3114
      %v4395 = vunpack.c.h.b16 %v3114
      %v4396 = vunpack.c.l.b16 %v3115
      %v4397 = vunpack.c.h.b16 %v3115
      %v4398 = vunpack.c.l.b16 %v3116
      %v4399 = vunpack.c.h.b16 %v3116
      %v4400 = vunpack.c.l.b16 %v3117
      %v4401 = vunpack.c.h.b16 %v3117
      %v4402 = vunpack.c.l.b16 %v3118
      %v4403 = vunpack.c.h.b16 %v3118
      %v4404 = vunpack.c.l.b16 %v3119
      %v4405 = vunpack.c.h.b16 %v3119
      %v4406 = vunpack.c.l.b16 %v3120
      %v4407 = vunpack.c.h.b16 %v3120
      %v4408 = vunpack.c.l.b16 %v3121
      %v4409 = vunpack.c.h.b16 %v3121
      %v4410 = vunpack.c.l.b16 %v3122
      %v4411 = vunpack.c.h.b16 %v3122
      %v4412 = vunpack.c.l.b16 %v3123
      %v4413 = vunpack.c.h.b16 %v3123
      %v4414 = vunpack.c.l.b16 %v3124
      %v4415 = vunpack.c.h.b16 %v3124
      %v4416 = vunpack.c.l.b16 %v3125
      %v4417 = vunpack.c.h.b16 %v3125
      %v4418 = vunpack.c.l.b16 %v3126
      %v4419 = vunpack.c.h.b16 %v3126
      %v4420 = vunpack.c.l.b16 %v3127
      %v4421 = vunpack.c.h.b16 %v3127
      %v4422 = vunpack.c.l.b16 %v3128
      %v4423 = vunpack.c.h.b16 %v3128
      %v4424 = vunpack.c.l.b16 %v3129
      %v4425 = vunpack.c.h.b16 %v3129
      %v4426 = vunpack.c.l.b16 %v3130
      %v4427 = vunpack.c.h.b16 %v3130
      %v4428 = vunpack.c.l.b16 %v3131
      %v4429 = vunpack.c.h.b16 %v3131
      %v4430 = vunpack.c.l.b16 %v3132
      %v4431 = vunpack.c.h.b16 %v3132
      %v4432 = vunpack.c.l.b16 %v3133
      %v4433 = vunpack.c.h.b16 %v3133
      %v4434 = vunpack.c.l.b16 %v3134
      %v4435 = vunpack.c.h.b16 %v3134
      %v4436 = vunpack.c.l.b16 %v3135
      %v4437 = vunpack.c.h.b16 %v3135
      %v4438 = vunpack.c.l.b16 %v3136
      %v4439 = vunpack.c.h.b16 %v3136
      %v4440 = vunpack.c.l.b16 %v3137
      %v4441 = vunpack.c.h.b16 %v3137
      %v4442 = vunpack.c.l.b16 %v3138
      %v4443 = vunpack.c.h.b16 %v3138
      %v4444 = vunpack.c.l.b16 %v3139
      %v4445 = vunpack.c.h.b16 %v3139
      %v4446 = vunpack.c.l.b16 %v3140
      %v4447 = vunpack.c.h.b16 %v3140
      %v4448 = vunpack.c.l.b16 %v3141
      %v4449 = vunpack.c.h.b16 %v3141
      %v4450 = vunpack.c.l.b16 %v3142
      %v4451 = vunpack.c.h.b16 %v3142
      %v4452 = vunpack.c.l.b16 %v3143
      %v4453 = vunpack.c.h.b16 %v3143
      %v4454 = vunpack.c.l.b16 %v3144
      %v4455 = vunpack.c.h.b16 %v3144
      %v4456 = vunpack.c.l.b16 %v3145
      %v4457 = vunpack.c.h.b16 %v3145
      %v4458 = vunpack.c.l.b16 %v3146
      %v4459 = vunpack.c.h.b16 %v3146
      %v4460 = vunpack.c.l.b16 %v3147
      %v4461 = vunpack.c.h.b16 %v3147
      %v4462 = vunpack.c.l.b16 %v3148
      %v4463 = vunpack.c.h.b16 %v3148
      %v4464 = vunpack.c.l.b16 %v3149
      %v4465 = vunpack.c.h.b16 %v3149
      %v4466 = vunpack.c.l.b16 %v3150
      %v4467 = vunpack.c.h.b16 %v3150
      %v4468 = vpack.c.b16 %v4216, %v4212
      %v4469 = vpack.c.b16 %v4217, %v4213
      %v4470 = vpack.c.b16 %v4218, %v4214
      %v4471 = vpack.c.b16 %v4219, %v4215
      %v4472 = vpack.c.b16 %v4224, %v4220
      %v4473 = vpack.c.b16 %v4225, %v4221
      %v4474 = vpack.c.b16 %v4226, %v4222
      %v4475 = vpack.c.b16 %v4227, %v4223
      %v4476 = vpack.c.b16 %v4232, %v4228
      %v4477 = vpack.c.b16 %v4233, %v4229
      %v4478 = vpack.c.b16 %v4234, %v4230
      %v4479 = vpack.c.b16 %v4235, %v4231
      %v4480 = vpack.c.b16 %v4240, %v4236
      %v4481 = vpack.c.b16 %v4241, %v4237
      %v4482 = vpack.c.b16 %v4242, %v4238
      %v4483 = vpack.c.b16 %v4243, %v4239
      %v4484 = vpack.c.b16 %v4248, %v4244
      %v4485 = vpack.c.b16 %v4249, %v4245
      %v4486 = vpack.c.b16 %v4250, %v4246
      %v4487 = vpack.c.b16 %v4251, %v4247
      %v4488 = vpack.c.b16 %v4256, %v4252
      %v4489 = vpack.c.b16 %v4257, %v4253
      %v4490 = vpack.c.b16 %v4258, %v4254
      %v4491 = vpack.c.b16 %v4259, %v4255
      %v4492 = vpack.c.b16 %v4264, %v4260
      %v4493 = vpack.c.b16 %v4265, %v4261
      %v4494 = vpack.c.b16 %v4266, %v4262
      %v4495 = vpack.c.b16 %v4267, %v4263
      %v4496 = vpack.c.b16 %v4272, %v4268
      %v4497 = vpack.c.b16 %v4273, %v4269
      %v4498 = vpack.c.b16 %v4274, %v4270
      %v4499 = vpack.c.b16 %v4275, %v4271
      %v4500 = vpack.c.b16 %v4280, %v4276
      %v4501 = vpack.c.b16 %v4281, %v4277
      %v4502 = vpack.c.b16 %v4282, %v4278
      %v4503 = vpack.c.b16 %v4283, %v4279
      %v4504 = vpack.c.b16 %v4288, %v4284
      %v4505 = vpack.c.b16 %v4289, %v4285
      %v4506 = vpack.c.b16 %v4290, %v4286
      %v4507 = vpack.c.b16 %v4291, %v4287
      %v4508 = vpack.c.b16 %v4296, %v4292
      %v4509 = vpack.c.b16 %v4297, %v4293
      %v4510 = vpack.c.b16 %v4298, %v4294
      %v4511 = vpack.c.b16 %v4299, %v4295
      %v4512 = vpack.c.b16 %v4304, %v4300
      %v4513 = vpack.c.b16 %v4305, %v4301
      %v4514 = vpack.c.b16 %v4306, %v4302
      %v4515 = vpack.c.b16 %v4307, %v4303
      %v4516 = vpack.c.b16 %v4312, %v4308
      %v4517 = vpack.c.b16 %v4313, %v4309
      %v4518 = vpack.c.b16 %v4314, %v4310
      %v4519 = vpack.c.b16 %v4315, %v4311
      %v4520 = vpack.c.b16 %v4320, %v4316
      %v4521 = vpack.c.b16 %v4321, %v4317
      %v4522 = vpack.c.b16 %v4322, %v4318
      %v4523 = vpack.c.b16 %v4323, %v4319
      %v4524 = vpack.c.b16 %v4328, %v4324
      %v4525 = vpack.c.b16 %v4329, %v4325
      %v4526 = vpack.c.b16 %v4330, %v4326
      %v4527 = vpack.c.b16 %v4331, %v4327
      %v4528 = vpack.c.b16 %v4336, %v4332
      %v4529 = vpack.c.b16 %v4337, %v4333
      %v4530 = vpack.c.b16 %v4338, %v4334
      %v4531 = vpack.c.b16 %v4339, %v4335
      %v4532 = vpack.c.b16 %v4344, %v4340
      %v4533 = vpack.c.b16 %v4345, %v4341
      %v4534 = vpack.c.b16 %v4346, %v4342
      %v4535 = vpack.c.b16 %v4347, %v4343
      %v4536 = vpack.c.b16 %v4352, %v4348
      %v4537 = vpack.c.b16 %v4353, %v4349
      %v4538 = vpack.c.b16 %v4354, %v4350
      %v4539 = vpack.c.b16 %v4355, %v4351
      %v4540 = vpack.c.b16 %v4360, %v4356
      %v4541 = vpack.c.b16 %v4361, %v4357
      %v4542 = vpack.c.b16 %v4362, %v4358
      %v4543 = vpack.c.b16 %v4363, %v4359
      %v4544 = vpack.c.b16 %v4368, %v4364
      %v4545 = vpack.c.b16 %v4369, %v4365
      %v4546 = vpack.c.b16 %v4370, %v4366
      %v4547 = vpack.c.b16 %v4371, %v4367
      %v4548 = vpack.c.b16 %v4376, %v4372
      %v4549 = vpack.c.b16 %v4377, %v4373
      %v4550 = vpack.c.b16 %v4378, %v4374
      %v4551 = vpack.c.b16 %v4379, %v4375
      %v4552 = vpack.c.b16 %v4384, %v4380
      %v4553 = vpack.c.b16 %v4385, %v4381
      %v4554 = vpack.c.b16 %v4386, %v4382
      %v4555 = vpack.c.b16 %v4387, %v4383
      %v4556 = vpack.c.b16 %v4392, %v4388
      %v4557 = vpack.c.b16 %v4393, %v4389
      %v4558 = vpack.c.b16 %v4394, %v4390
      %v4559 = vpack.c.b16 %v4395, %v4391
      %v4560 = vpack.c.b16 %v4400, %v4396
      %v4561 = vpack.c.b16 %v4401, %v4397
      %v4562 = vpack.c.b16 %v4402, %v4398
      %v4563 = vpack.c.b16 %v4403, %v4399
      %v4564 = vpack.c.b16 %v4408, %v4404
      %v4565 = vpack.c.b16 %v4409, %v4405
      %v4566 = vpack.c.b16 %v4410, %v4406
      %v4567 = vpack.c.b16 %v4411, %v4407
      %v4568 = vpack.c.b16 %v4416, %v4412
      %v4569 = vpack.c.b16 %v4417, %v4413
      %v4570 = vpack.c.b16 %v4418, %v4414
      %v4571 = vpack.c.b16 %v4419, %v4415
      %v4572 = vpack.c.b16 %v4424, %v4420
      %v4573 = vpack.c.b16 %v4425, %v4421
      %v4574 = vpack.c.b16 %v4426, %v4422
      %v4575 = vpack.c.b16 %v4427, %v4423
      %v4576 = vpack.c.b16 %v4432, %v4428
      %v4577 = vpack.c.b16 %v4433, %v4429
      %v4578 = vpack.c.b16 %v4434, %v4430
      %v4579 = vpack.c.b16 %v4435, %v4431
      %v4580 = vpack.c.b16 %v4440, %v4436
      %v4581 = vpack.c.b16 %v4441, %v4437
      %v4582 = vpack.c.b16 %v4442, %v4438
      %v4583 = vpack.c.b16 %v4443, %v4439
      %v4584 = vpack.c.b16 %v4448, %v4444
      %v4585 = vpack.c.b16 %v4449, %v4445
      %v4586 = vpack.c.b16 %v4450, %v4446
      %v4587 = vpack.c.b16 %v4451, %v4447
      %v4588 = vpack.c.b16 %v4456, %v4452
      %v4589 = vpack.c.b16 %v4457, %v4453
      %v4590 = vpack.c.b16 %v4458, %v4454
      %v4591 = vpack.c.b16 %v4459, %v4455
      %v4592 = vpack.c.b16 %v4464, %v4460
      %v4593 = vpack.c.b16 %v4465, %v4461
      %v4594 = vpack.c.b16 %v4466, %v4462
      %v4595 = vpack.c.b16 %v4467, %v4463
      %4724 = vmatprep.subr.bf16.mxu0 %v4469
      %4725 = vmatpush1.bf16.msra.mxu0 %v4468
      %4726 = vmatprep.subr.bf16.mxu0 %v4473
      %4727 = vmatpush1.bf16.msra.mxu0 %v4472
      %4728 = vmatprep.subr.bf16.mxu0 %v4477
      %4729 = vmatpush1.bf16.msra.mxu0 %v4476
      %4730 = vmatprep.subr.bf16.mxu0 %v4481
      %4731 = vmatpush1.bf16.msra.mxu0 %v4480
      %4732 = vmatprep.subr.bf16.mxu0 %v4485
      %4733 = vmatpush1.bf16.msra.mxu0 %v4484
      %4734 = vmatprep.subr.bf16.mxu0 %v4489
      %4735 = vmatpush1.bf16.msra.mxu0 %v4488
      %4736 = vmatprep.subr.bf16.mxu0 %v4493
      %4737 = vmatpush1.bf16.msra.mxu0 %v4492
      %4738 = vmatprep.subr.bf16.mxu0 %v4497
      %4739 = vmatpush1.bf16.msra.mxu0 %v4496
      %4740 = vmatprep.subr.bf16.mxu0 %v4501
      %4741 = vmatpush1.bf16.msra.mxu0 %v4500
      %4742 = vmatprep.subr.bf16.mxu0 %v4505
      %4743 = vmatpush1.bf16.msra.mxu0 %v4504
      %4744 = vmatprep.subr.bf16.mxu0 %v4509
      %4745 = vmatpush1.bf16.msra.mxu0 %v4508
      %4746 = vmatprep.subr.bf16.mxu0 %v4513
      %4747 = vmatpush1.bf16.msra.mxu0 %v4512
      %4748 = vmatprep.subr.bf16.mxu0 %v4517
      %4749 = vmatpush1.bf16.msra.mxu0 %v4516
      %4750 = vmatprep.subr.bf16.mxu0 %v4521
      %4751 = vmatpush1.bf16.msra.mxu0 %v4520
      %4752 = vmatprep.subr.bf16.mxu0 %v4525
      %4753 = vmatpush1.bf16.msra.mxu0 %v4524
      %4754 = vmatprep.subr.bf16.mxu0 %v4529
      %4755 = vmatpush1.bf16.msra.mxu0 %v4528
      %4756 = vmatprep.mubr.bf16.mxu0 %v176
      %4757 = vmatmul.mubr.bf16.gmra.mrb[0].mxu0 %v175
      %v4758 = vpop.f32.mrb[0].mxu0
      %v4759 = vadd.f32 %v3996, %v4758
      %v4760 = vpop.f32.mrb[0].mxu0
      %v4761 = vadd.f32 %v3998, %v4760
      %v4762 = vpop.f32.mrb[0].mxu0
      %v4763 = vpop.f32.mrb[0].mxu0
      %4764 = vdwg.mxu0
      %4765 = vmatprep.subr.bf16.mxu0 %v4533
      %4766 = vmatpush1.bf16.msra.mxu0 %v4532
      %4767 = vmatprep.subr.bf16.mxu0 %v4537
      %4768 = vmatpush1.bf16.msra.mxu0 %v4536
      %4769 = vmatprep.subr.bf16.mxu0 %v4541
      %4770 = vmatpush1.bf16.msra.mxu0 %v4540
      %4771 = vmatprep.subr.bf16.mxu0 %v4545
      %4772 = vmatpush1.bf16.msra.mxu0 %v4544
      %4773 = vmatprep.subr.bf16.mxu0 %v4549
      %4774 = vmatpush1.bf16.msra.mxu0 %v4548
      %4775 = vmatprep.subr.bf16.mxu0 %v4553
      %4776 = vmatpush1.bf16.msra.mxu0 %v4552
      %4777 = vmatprep.subr.bf16.mxu0 %v4557
      %4778 = vmatpush1.bf16.msra.mxu0 %v4556
      %4779 = vmatprep.subr.bf16.mxu0 %v4561
      %4780 = vmatpush1.bf16.msra.mxu0 %v4560
      %4781 = vmatprep.subr.bf16.mxu0 %v4565
      %4782 = vmatpush1.bf16.msra.mxu0 %v4564
      %4783 = vmatprep.subr.bf16.mxu0 %v4569
      %4784 = vmatpush1.bf16.msra.mxu0 %v4568
      %4785 = vmatprep.subr.bf16.mxu0 %v4573
      %4786 = vmatpush1.bf16.msra.mxu0 %v4572
      %4787 = vmatprep.subr.bf16.mxu0 %v4577
      %4788 = vmatpush1.bf16.msra.mxu0 %v4576
      %4789 = vmatprep.subr.bf16.mxu0 %v4581
      %4790 = vmatpush1.bf16.msra.mxu0 %v4580
      %4791 = vmatprep.subr.bf16.mxu0 %v4585
      %4792 = vmatpush1.bf16.msra.mxu0 %v4584
      %4793 = vmatprep.subr.bf16.mxu0 %v4589
      %4794 = vmatpush1.bf16.msra.mxu0 %v4588
      %4795 = vmatprep.subr.bf16.mxu0 %v4593
      %4796 = vmatpush1.bf16.msra.mxu0 %v4592
      %4797 = vmatprep.mubr.bf16.mxu0 %v178
      %4798 = vmatmul.mubr.bf16.gmra.mrb[0].mxu0 %v177
      %v4799 = vpop.f32.mrb[0].mxu0
      %v4800 = vadd.f32 %v4759, %v4799
      %v4801 = vpop.f32.mrb[0].mxu0
      %v4802 = vadd.f32 %v4761, %v4801
      %v4803 = vpop.f32.mrb[0].mxu0
      %v4804 = vpop.f32.mrb[0].mxu0
      %4805 = vdwg.mxu0
      %4806 = vmatprep.subr.bf16.mxu0 %v4471
      %4807 = vmatpush1.bf16.msra.mxu0 %v4470
      %4808 = vmatprep.subr.bf16.mxu0 %v4475
      %4809 = vmatpush1.bf16.msra.mxu0 %v4474
      %4810 = vmatprep.subr.bf16.mxu0 %v4479
      %4811 = vmatpush1.bf16.msra.mxu0 %v4478
      %4812 = vmatprep.subr.bf16.mxu0 %v4483
      %4813 = vmatpush1.bf16.msra.mxu0 %v4482
      %4814 = vmatprep.subr.bf16.mxu0 %v4487
      %4815 = vmatpush1.bf16.msra.mxu0 %v4486
      %4816 = vmatprep.subr.bf16.mxu0 %v4491
      %4817 = vmatpush1.bf16.msra.mxu0 %v4490
      %4818 = vmatprep.subr.bf16.mxu0 %v4495
      %4819 = vmatpush1.bf16.msra.mxu0 %v4494
      %4820 = vmatprep.subr.bf16.mxu0 %v4499
      %4821 = vmatpush1.bf16.msra.mxu0 %v4498
      %4822 = vmatprep.subr.bf16.mxu0 %v4503
      %4823 = vmatpush1.bf16.msra.mxu0 %v4502
      %4824 = vmatprep.subr.bf16.mxu0 %v4507
      %4825 = vmatpush1.bf16.msra.mxu0 %v4506
      %4826 = vmatprep.subr.bf16.mxu0 %v4511
      %4827 = vmatpush1.bf16.msra.mxu0 %v4510
      %4828 = vmatprep.subr.bf16.mxu0 %v4515
      %4829 = vmatpush1.bf16.msra.mxu0 %v4514
      %4830 = vmatprep.subr.bf16.mxu0 %v4519
      %4831 = vmatpush1.bf16.msra.mxu0 %v4518
      %4832 = vmatprep.subr.bf16.mxu0 %v4523
      %4833 = vmatpush1.bf16.msra.mxu0 %v4522
      %4834 = vmatprep.subr.bf16.mxu0 %v4527
      %4835 = vmatpush1.bf16.msra.mxu0 %v4526
      %4836 = vmatprep.subr.bf16.mxu0 %v4531
      %4837 = vmatpush1.bf16.msra.mxu0 %v4530
      %4838 = vmatprep.mubr.bf16.mxu0 %v176
      %4839 = vmatmul.mubr.bf16.gmra.mrb[0].mxu0 %v175
      %v4840 = vpop.f32.mrb[0].mxu0
      %v4841 = vadd.f32 %v4078, %v4840
      %v4842 = vpop.f32.mrb[0].mxu0
      %v4843 = vadd.f32 %v4080, %v4842
      %v4844 = vpop.f32.mrb[0].mxu0
      %v4845 = vpop.f32.mrb[0].mxu0
      %4846 = vdwg.mxu0
      %4847 = vmatprep.subr.bf16.mxu0 %v4535
      %4848 = vmatpush1.bf16.msra.mxu0 %v4534
      %4849 = vmatprep.subr.bf16.mxu0 %v4539
      %4850 = vmatpush1.bf16.msra.mxu0 %v4538
      %4851 = vmatprep.subr.bf16.mxu0 %v4543
      %4852 = vmatpush1.bf16.msra.mxu0 %v4542
      %4853 = vmatprep.subr.bf16.mxu0 %v4547
      %4854 = vmatpush1.bf16.msra.mxu0 %v4546
      %4855 = vmatprep.subr.bf16.mxu0 %v4551
      %4856 = vmatpush1.bf16.msra.mxu0 %v4550
      %4857 = vmatprep.subr.bf16.mxu0 %v4555
      %4858 = vmatpush1.bf16.msra.mxu0 %v4554
      %4859 = vmatprep.subr.bf16.mxu0 %v4559
      %4860 = vmatpush1.bf16.msra.mxu0 %v4558
      %4861 = vmatprep.subr.bf16.mxu0 %v4563
      %4862 = vmatpush1.bf16.msra.mxu0 %v4562
      %4863 = vmatprep.subr.bf16.mxu0 %v4567
      %4864 = vmatpush1.bf16.msra.mxu0 %v4566
      %4865 = vmatprep.subr.bf16.mxu0 %v4571
      %4866 = vmatpush1.bf16.msra.mxu0 %v4570
      %4867 = vmatprep.subr.bf16.mxu0 %v4575
      %4868 = vmatpush1.bf16.msra.mxu0 %v4574
      %4869 = vmatprep.subr.bf16.mxu0 %v4579
      %4870 = vmatpush1.bf16.msra.mxu0 %v4578
      %4871 = vmatprep.subr.bf16.mxu0 %v4583
      %4872 = vmatpush1.bf16.msra.mxu0 %v4582
      %4873 = vmatprep.subr.bf16.mxu0 %v4587
      %4874 = vmatpush1.bf16.msra.mxu0 %v4586
      %4875 = vmatprep.subr.bf16.mxu0 %v4591
      %4876 = vmatpush1.bf16.msra.mxu0 %v4590
      %4877 = vmatprep.subr.bf16.mxu0 %v4595
      %4878 = vmatpush1.bf16.msra.mxu0 %v4594
      %4879 = vmatprep.mubr.bf16.mxu0 %v178
      %4880 = vmatmul.mubr.bf16.gmra.mrb[0].mxu0 %v177
      %v4881 = vpop.f32.mrb[0].mxu0
      %v4882 = vadd.f32 %v4841, %v4881
      %v4883 = vpop.f32.mrb[0].mxu0
      %v4884 = vadd.f32 %v4843, %v4883
      %v4885 = vpop.f32.mrb[0].mxu0
      %v4886 = vpop.f32.mrb[0].mxu0
      %4887 = vdwg.mxu0
      %s4888 = scalar_lea.vmem %s1, 5120
      %v4889 = vld [vmem:[%s4888] sm:$0xff]
      %v4890 = vld [vmem:[%s4888 + $0x8] sm:$0xff]
      %v4891 = vld [vmem:[%s4888 + $0x10] sm:$0xff]
      %v4892 = vld [vmem:[%s4888 + $0x18] sm:$0xff]
      %v4893 = vld [vmem:[%s4888 + $0x20] sm:$0xff]
      %v4894 = vld [vmem:[%s4888 + $0x28] sm:$0xff]
      %v4895 = vld [vmem:[%s4888 + $0x30] sm:$0xff]
      %v4896 = vld [vmem:[%s4888 + $0x38] sm:$0xff]
      %v4897 = vld [vmem:[%s4888 + $0x40] sm:$0xff]
      %v4898 = vld [vmem:[%s4888 + $0x48] sm:$0xff]
      %v4899 = vld [vmem:[%s4888 + $0x50] sm:$0xff]
      %v4900 = vld [vmem:[%s4888 + $0x58] sm:$0xff]
      %v4901 = vld [vmem:[%s4888 + $0x60] sm:$0xff]
      %v4902 = vld [vmem:[%s4888 + $0x68] sm:$0xff]
      %v4903 = vld [vmem:[%s4888 + $0x70] sm:$0xff]
      %v4904 = vld [vmem:[%s4888 + $0x78] sm:$0xff]
      %v4905 = vld [vmem:[%s4888 + $0x80] sm:$0xff]
      %v4906 = vld [vmem:[%s4888 + $0x88] sm:$0xff]
      %v4907 = vld [vmem:[%s4888 + $0x90] sm:$0xff]
      %v4908 = vld [vmem:[%s4888 + $0x98] sm:$0xff]
      %v4909 = vld [vmem:[%s4888 + $0xa0] sm:$0xff]
      %v4910 = vld [vmem:[%s4888 + $0xa8] sm:$0xff]
      %v4911 = vld [vmem:[%s4888 + $0xb0] sm:$0xff]
      %v4912 = vld [vmem:[%s4888 + $0xb8] sm:$0xff]
      %v4913 = vld [vmem:[%s4888 + $0xc0] sm:$0xff]
      %v4914 = vld [vmem:[%s4888 + $0xc8] sm:$0xff]
      %v4915 = vld [vmem:[%s4888 + $0xd0] sm:$0xff]
      %v4916 = vld [vmem:[%s4888 + $0xd8] sm:$0xff]
      %v4917 = vld [vmem:[%s4888 + $0xe0] sm:$0xff]
      %v4918 = vld [vmem:[%s4888 + $0xe8] sm:$0xff]
      %v4919 = vld [vmem:[%s4888 + $0xf0] sm:$0xff]
      %v4920 = vld [vmem:[%s4888 + $0xf8] sm:$0xff]
      %v4921 = vld [vmem:[%s4888 + $0x100] sm:$0xff]
      %v4922 = vld [vmem:[%s4888 + $0x108] sm:$0xff]
      %v4923 = vld [vmem:[%s4888 + $0x110] sm:$0xff]
      %v4924 = vld [vmem:[%s4888 + $0x118] sm:$0xff]
      %v4925 = vld [vmem:[%s4888 + $0x120] sm:$0xff]
      %v4926 = vld [vmem:[%s4888 + $0x128] sm:$0xff]
      %v4927 = vld [vmem:[%s4888 + $0x130] sm:$0xff]
      %v4928 = vld [vmem:[%s4888 + $0x138] sm:$0xff]
      %v4929 = vld [vmem:[%s4888 + $0x140] sm:$0xff]
      %v4930 = vld [vmem:[%s4888 + $0x148] sm:$0xff]
      %v4931 = vld [vmem:[%s4888 + $0x150] sm:$0xff]
      %v4932 = vld [vmem:[%s4888 + $0x158] sm:$0xff]
      %v4933 = vld [vmem:[%s4888 + $0x160] sm:$0xff]
      %v4934 = vld [vmem:[%s4888 + $0x168] sm:$0xff]
      %v4935 = vld [vmem:[%s4888 + $0x170] sm:$0xff]
      %v4936 = vld [vmem:[%s4888 + $0x178] sm:$0xff]
      %v4937 = vld [vmem:[%s4888 + $0x180] sm:$0xff]
      %v4938 = vld [vmem:[%s4888 + $0x188] sm:$0xff]
      %v4939 = vld [vmem:[%s4888 + $0x190] sm:$0xff]
      %v4940 = vld [vmem:[%s4888 + $0x198] sm:$0xff]
      %v4941 = vld [vmem:[%s4888 + $0x1a0] sm:$0xff]
      %v4942 = vld [vmem:[%s4888 + $0x1a8] sm:$0xff]
      %v4943 = vld [vmem:[%s4888 + $0x1b0] sm:$0xff]
      %v4944 = vld [vmem:[%s4888 + $0x1b8] sm:$0xff]
      %v4945 = vld [vmem:[%s4888 + $0x1c0] sm:$0xff]
      %v4946 = vld [vmem:[%s4888 + $0x1c8] sm:$0xff]
      %v4947 = vld [vmem:[%s4888 + $0x1d0] sm:$0xff]
      %v4948 = vld [vmem:[%s4888 + $0x1d8] sm:$0xff]
      %v4949 = vld [vmem:[%s4888 + $0x1e0] sm:$0xff]
      %v4950 = vld [vmem:[%s4888 + $0x1e8] sm:$0xff]
      %v4951 = vld [vmem:[%s4888 + $0x1f0] sm:$0xff]
      %v4952 = vld [vmem:[%s4888 + $0x1f8] sm:$0xff]
      %v4953 = vld [vmem:[%s4888 + $0x200] sm:$0xff]
      %v4954 = vld [vmem:[%s4888 + $0x208] sm:$0xff]
      %v4955 = vld [vmem:[%s4888 + $0x210] sm:$0xff]
      %v4956 = vld [vmem:[%s4888 + $0x218] sm:$0xff]
      %v4957 = vld [vmem:[%s4888 + $0x220] sm:$0xff]
      %v4958 = vld [vmem:[%s4888 + $0x228] sm:$0xff]
      %v4959 = vld [vmem:[%s4888 + $0x230] sm:$0xff]
      %v4960 = vld [vmem:[%s4888 + $0x238] sm:$0xff]
      %v4961 = vld [vmem:[%s4888 + $0x240] sm:$0xff]
      %v4962 = vld [vmem:[%s4888 + $0x248] sm:$0xff]
      %v4963 = vld [vmem:[%s4888 + $0x250] sm:$0xff]
      %v4964 = vld [vmem:[%s4888 + $0x258] sm:$0xff]
      %v4965 = vld [vmem:[%s4888 + $0x260] sm:$0xff]
      %v4966 = vld [vmem:[%s4888 + $0x268] sm:$0xff]
      %v4967 = vld [vmem:[%s4888 + $0x270] sm:$0xff]
      %v4968 = vld [vmem:[%s4888 + $0x278] sm:$0xff]
      %v4969 = vld [vmem:[%s4888 + $0x280] sm:$0xff]
      %v4970 = vld [vmem:[%s4888 + $0x288] sm:$0xff]
      %v4971 = vld [vmem:[%s4888 + $0x290] sm:$0xff]
      %v4972 = vld [vmem:[%s4888 + $0x298] sm:$0xff]
      %v4973 = vld [vmem:[%s4888 + $0x2a0] sm:$0xff]
      %v4974 = vld [vmem:[%s4888 + $0x2a8] sm:$0xff]
      %v4975 = vld [vmem:[%s4888 + $0x2b0] sm:$0xff]
      %v4976 = vld [vmem:[%s4888 + $0x2b8] sm:$0xff]
      %v4977 = vld [vmem:[%s4888 + $0x2c0] sm:$0xff]
      %v4978 = vld [vmem:[%s4888 + $0x2c8] sm:$0xff]
      %v4979 = vld [vmem:[%s4888 + $0x2d0] sm:$0xff]
      %v4980 = vld [vmem:[%s4888 + $0x2d8] sm:$0xff]
      %v4981 = vld [vmem:[%s4888 + $0x2e0] sm:$0xff]
      %v4982 = vld [vmem:[%s4888 + $0x2e8] sm:$0xff]
      %v4983 = vld [vmem:[%s4888 + $0x2f0] sm:$0xff]
      %v4984 = vld [vmem:[%s4888 + $0x2f8] sm:$0xff]
      %v4985 = vld [vmem:[%s4888 + $0x300] sm:$0xff]
      %v4986 = vld [vmem:[%s4888 + $0x308] sm:$0xff]
      %v4987 = vld [vmem:[%s4888 + $0x310] sm:$0xff]
      %v4988 = vld [vmem:[%s4888 + $0x318] sm:$0xff]
      %v4989 = vld [vmem:[%s4888 + $0x320] sm:$0xff]
      %v4990 = vld [vmem:[%s4888 + $0x328] sm:$0xff]
      %v4991 = vld [vmem:[%s4888 + $0x330] sm:$0xff]
      %v4992 = vld [vmem:[%s4888 + $0x338] sm:$0xff]
      %v4993 = vld [vmem:[%s4888 + $0x340] sm:$0xff]
      %v4994 = vld [vmem:[%s4888 + $0x348] sm:$0xff]
      %v4995 = vld [vmem:[%s4888 + $0x350] sm:$0xff]
      %v4996 = vld [vmem:[%s4888 + $0x358] sm:$0xff]
      %v4997 = vld [vmem:[%s4888 + $0x360] sm:$0xff]
      %v4998 = vld [vmem:[%s4888 + $0x368] sm:$0xff]
      %v4999 = vld [vmem:[%s4888 + $0x370] sm:$0xff]
      %v5000 = vld [vmem:[%s4888 + $0x378] sm:$0xff]
      %v5001 = vld [vmem:[%s4888 + $0x380] sm:$0xff]
      %v5002 = vld [vmem:[%s4888 + $0x388] sm:$0xff]
      %v5003 = vld [vmem:[%s4888 + $0x390] sm:$0xff]
      %v5004 = vld [vmem:[%s4888 + $0x398] sm:$0xff]
      %v5005 = vld [vmem:[%s4888 + $0x3a0] sm:$0xff]
      %v5006 = vld [vmem:[%s4888 + $0x3a8] sm:$0xff]
      %v5007 = vld [vmem:[%s4888 + $0x3b0] sm:$0xff]
      %v5008 = vld [vmem:[%s4888 + $0x3b8] sm:$0xff]
      %v5009 = vld [vmem:[%s4888 + $0x3c0] sm:$0xff]
      %v5010 = vld [vmem:[%s4888 + $0x3c8] sm:$0xff]
      %v5011 = vld [vmem:[%s4888 + $0x3d0] sm:$0xff]
      %v5012 = vld [vmem:[%s4888 + $0x3d8] sm:$0xff]
      %v5013 = vld [vmem:[%s4888 + $0x3e0] sm:$0xff]
      %v5014 = vld [vmem:[%s4888 + $0x3e8] sm:$0xff]
      %v5015 = vld [vmem:[%s4888 + $0x3f0] sm:$0xff]
      %v5016 = vld [vmem:[%s4888 + $0x3f8] sm:$0xff]
      %v5145 = vunpack.c.l.b16 %v4889
      %v5146 = vunpack.c.h.b16 %v4889
      %v5147 = vunpack.c.l.b16 %v4890
      %v5148 = vunpack.c.h.b16 %v4890
      %v5149 = vunpack.c.l.b16 %v4891
      %v5150 = vunpack.c.h.b16 %v4891
      %v5151 = vunpack.c.l.b16 %v4892
      %v5152 = vunpack.c.h.b16 %v4892
      %v5153 = vunpack.c.l.b16 %v4893
      %v5154 = vunpack.c.h.b16 %v4893
      %v5155 = vunpack.c.l.b16 %v4894
      %v5156 = vunpack.c.h.b16 %v4894
      %v5157 = vunpack.c.l.b16 %v4895
      %v5158 = vunpack.c.h.b16 %v4895
      %v5159 = vunpack.c.l.b16 %v4896
      %v5160 = vunpack.c.h.b16 %v4896
      %v5161 = vunpack.c.l.b16 %v4897
      %v5162 = vunpack.c.h.b16 %v4897
      %v5163 = vunpack.c.l.b16 %v4898
      %v5164 = vunpack.c.h.b16 %v4898
      %v5165 = vunpack.c.l.b16 %v4899
      %v5166 = vunpack.c.h.b16 %v4899
      %v5167 = vunpack.c.l.b16 %v4900
      %v5168 = vunpack.c.h.b16 %v4900
      %v5169 = vunpack.c.l.b16 %v4901
      %v5170 = vunpack.c.h.b16 %v4901
      %v5171 = vunpack.c.l.b16 %v4902
      %v5172 = vunpack.c.h.b16 %v4902
      %v5173 = vunpack.c.l.b16 %v4903
      %v5174 = vunpack.c.h.b16 %v4903
      %v5175 = vunpack.c.l.b16 %v4904
      %v5176 = vunpack.c.h.b16 %v4904
      %v5177 = vunpack.c.l.b16 %v4905
      %v5178 = vunpack.c.h.b16 %v4905
      %v5179 = vunpack.c.l.b16 %v4906
      %v5180 = vunpack.c.h.b16 %v4906
      %v5181 = vunpack.c.l.b16 %v4907
      %v5182 = vunpack.c.h.b16 %v4907
      %v5183 = vunpack.c.l.b16 %v4908
      %v5184 = vunpack.c.h.b16 %v4908
      %v5185 = vunpack.c.l.b16 %v4909
      %v5186 = vunpack.c.h.b16 %v4909
      %v5187 = vunpack.c.l.b16 %v4910
      %v5188 = vunpack.c.h.b16 %v4910
      %v5189 = vunpack.c.l.b16 %v4911
      %v5190 = vunpack.c.h.b16 %v4911
      %v5191 = vunpack.c.l.b16 %v4912
      %v5192 = vunpack.c.h.b16 %v4912
      %v5193 = vunpack.c.l.b16 %v4913
      %v5194 = vunpack.c.h.b16 %v4913
      %v5195 = vunpack.c.l.b16 %v4914
      %v5196 = vunpack.c.h.b16 %v4914
      %v5197 = vunpack.c.l.b16 %v4915
      %v5198 = vunpack.c.h.b16 %v4915
      %v5199 = vunpack.c.l.b16 %v4916
      %v5200 = vunpack.c.h.b16 %v4916
      %v5201 = vunpack.c.l.b16 %v4917
      %v5202 = vunpack.c.h.b16 %v4917
      %v5203 = vunpack.c.l.b16 %v4918
      %v5204 = vunpack.c.h.b16 %v4918
      %v5205 = vunpack.c.l.b16 %v4919
      %v5206 = vunpack.c.h.b16 %v4919
      %v5207 = vunpack.c.l.b16 %v4920
      %v5208 = vunpack.c.h.b16 %v4920
      %v5209 = vunpack.c.l.b16 %v4921
      %v5210 = vunpack.c.h.b16 %v4921
      %v5211 = vunpack.c.l.b16 %v4922
      %v5212 = vunpack.c.h.b16 %v4922
      %v5213 = vunpack.c.l.b16 %v4923
      %v5214 = vunpack.c.h.b16 %v4923
      %v5215 = vunpack.c.l.b16 %v4924
      %v5216 = vunpack.c.h.b16 %v4924
      %v5217 = vunpack.c.l.b16 %v4925
      %v5218 = vunpack.c.h.b16 %v4925
      %v5219 = vunpack.c.l.b16 %v4926
      %v5220 = vunpack.c.h.b16 %v4926
      %v5221 = vunpack.c.l.b16 %v4927
      %v5222 = vunpack.c.h.b16 %v4927
      %v5223 = vunpack.c.l.b16 %v4928
      %v5224 = vunpack.c.h.b16 %v4928
      %v5225 = vunpack.c.l.b16 %v4929
      %v5226 = vunpack.c.h.b16 %v4929
      %v5227 = vunpack.c.l.b16 %v4930
      %v5228 = vunpack.c.h.b16 %v4930
      %v5229 = vunpack.c.l.b16 %v4931
      %v5230 = vunpack.c.h.b16 %v4931
      %v5231 = vunpack.c.l.b16 %v4932
      %v5232 = vunpack.c.h.b16 %v4932
      %v5233 = vunpack.c.l.b16 %v4933
      %v5234 = vunpack.c.h.b16 %v4933
      %v5235 = vunpack.c.l.b16 %v4934
      %v5236 = vunpack.c.h.b16 %v4934
      %v5237 = vunpack.c.l.b16 %v4935
      %v5238 = vunpack.c.h.b16 %v4935
      %v5239 = vunpack.c.l.b16 %v4936
      %v5240 = vunpack.c.h.b16 %v4936
      %v5241 = vunpack.c.l.b16 %v4937
      %v5242 = vunpack.c.h.b16 %v4937
      %v5243 = vunpack.c.l.b16 %v4938
      %v5244 = vunpack.c.h.b16 %v4938
      %v5245 = vunpack.c.l.b16 %v4939
      %v5246 = vunpack.c.h.b16 %v4939
      %v5247 = vunpack.c.l.b16 %v4940
      %v5248 = vunpack.c.h.b16 %v4940
      %v5249 = vunpack.c.l.b16 %v4941
      %v5250 = vunpack.c.h.b16 %v4941
      %v5251 = vunpack.c.l.b16 %v4942
      %v5252 = vunpack.c.h.b16 %v4942
      %v5253 = vunpack.c.l.b16 %v4943
      %v5254 = vunpack.c.h.b16 %v4943
      %v5255 = vunpack.c.l.b16 %v4944
      %v5256 = vunpack.c.h.b16 %v4944
      %v5257 = vunpack.c.l.b16 %v4945
      %v5258 = vunpack.c.h.b16 %v4945
      %v5259 = vunpack.c.l.b16 %v4946
      %v5260 = vunpack.c.h.b16 %v4946
      %v5261 = vunpack.c.l.b16 %v4947
      %v5262 = vunpack.c.h.b16 %v4947
      %v5263 = vunpack.c.l.b16 %v4948
      %v5264 = vunpack.c.h.b16 %v4948
      %v5265 = vunpack.c.l.b16 %v4949
      %v5266 = vunpack.c.h.b16 %v4949
      %v5267 = vunpack.c.l.b16 %v4950
      %v5268 = vunpack.c.h.b16 %v4950
      %v5269 = vunpack.c.l.b16 %v4951
      %v5270 = vunpack.c.h.b16 %v4951
      %v5271 = vunpack.c.l.b16 %v4952
      %v5272 = vunpack.c.h.b16 %v4952
      %v5273 = vunpack.c.l.b16 %v4953
      %v5274 = vunpack.c.h.b16 %v4953
      %v5275 = vunpack.c.l.b16 %v4954
      %v5276 = vunpack.c.h.b16 %v4954
      %v5277 = vunpack.c.l.b16 %v4955
      %v5278 = vunpack.c.h.b16 %v4955
      %v5279 = vunpack.c.l.b16 %v4956
      %v5280 = vunpack.c.h.b16 %v4956
      %v5281 = vunpack.c.l.b16 %v4957
      %v5282 = vunpack.c.h.b16 %v4957
      %v5283 = vunpack.c.l.b16 %v4958
      %v5284 = vunpack.c.h.b16 %v4958
      %v5285 = vunpack.c.l.b16 %v4959
      %v5286 = vunpack.c.h.b16 %v4959
      %v5287 = vunpack.c.l.b16 %v4960
      %v5288 = vunpack.c.h.b16 %v4960
      %v5289 = vunpack.c.l.b16 %v4961
      %v5290 = vunpack.c.h.b16 %v4961
      %v5291 = vunpack.c.l.b16 %v4962
      %v5292 = vunpack.c.h.b16 %v4962
      %v5293 = vunpack.c.l.b16 %v4963
      %v5294 = vunpack.c.h.b16 %v4963
      %v5295 = vunpack.c.l.b16 %v4964
      %v5296 = vunpack.c.h.b16 %v4964
      %v5297 = vunpack.c.l.b16 %v4965
      %v5298 = vunpack.c.h.b16 %v4965
      %v5299 = vunpack.c.l.b16 %v4966
      %v5300 = vunpack.c.h.b16 %v4966
      %v5301 = vunpack.c.l.b16 %v4967
      %v5302 = vunpack.c.h.b16 %v4967
      %v5303 = vunpack.c.l.b16 %v4968
      %v5304 = vunpack.c.h.b16 %v4968
      %v5305 = vunpack.c.l.b16 %v4969
      %v5306 = vunpack.c.h.b16 %v4969
      %v5307 = vunpack.c.l.b16 %v4970
      %v5308 = vunpack.c.h.b16 %v4970
      %v5309 = vunpack.c.l.b16 %v4971
      %v5310 = vunpack.c.h.b16 %v4971
      %v5311 = vunpack.c.l.b16 %v4972
      %v5312 = vunpack.c.h.b16 %v4972
      %v5313 = vunpack.c.l.b16 %v4973
      %v5314 = vunpack.c.h.b16 %v4973
      %v5315 = vunpack.c.l.b16 %v4974
      %v5316 = vunpack.c.h.b16 %v4974
      %v5317 = vunpack.c.l.b16 %v4975
      %v5318 = vunpack.c.h.b16 %v4975
      %v5319 = vunpack.c.l.b16 %v4976
      %v5320 = vunpack.c.h.b16 %v4976
      %v5321 = vunpack.c.l.b16 %v4977
      %v5322 = vunpack.c.h.b16 %v4977
      %v5323 = vunpack.c.l.b16 %v4978
      %v5324 = vunpack.c.h.b16 %v4978
      %v5325 = vunpack.c.l.b16 %v4979
      %v5326 = vunpack.c.h.b16 %v4979
      %v5327 = vunpack.c.l.b16 %v4980
      %v5328 = vunpack.c.h.b16 %v4980
      %v5329 = vunpack.c.l.b16 %v4981
      %v5330 = vunpack.c.h.b16 %v4981
      %v5331 = vunpack.c.l.b16 %v4982
      %v5332 = vunpack.c.h.b16 %v4982
      %v5333 = vunpack.c.l.b16 %v4983
      %v5334 = vunpack.c.h.b16 %v4983
      %v5335 = vunpack.c.l.b16 %v4984
      %v5336 = vunpack.c.h.b16 %v4984
      %v5337 = vunpack.c.l.b16 %v4985
      %v5338 = vunpack.c.h.b16 %v4985
      %v5339 = vunpack.c.l.b16 %v4986
      %v5340 = vunpack.c.h.b16 %v4986
      %v5341 = vunpack.c.l.b16 %v4987
      %v5342 = vunpack.c.h.b16 %v4987
      %v5343 = vunpack.c.l.b16 %v4988
      %v5344 = vunpack.c.h.b16 %v4988
      %v5345 = vunpack.c.l.b16 %v4989
      %v5346 = vunpack.c.h.b16 %v4989
      %v5347 = vunpack.c.l.b16 %v4990
      %v5348 = vunpack.c.h.b16 %v4990
      %v5349 = vunpack.c.l.b16 %v4991
      %v5350 = vunpack.c.h.b16 %v4991
      %v5351 = vunpack.c.l.b16 %v4992
      %v5352 = vunpack.c.h.b16 %v4992
      %v5353 = vunpack.c.l.b16 %v4993
      %v5354 = vunpack.c.h.b16 %v4993
      %v5355 = vunpack.c.l.b16 %v4994
      %v5356 = vunpack.c.h.b16 %v4994
      %v5357 = vunpack.c.l.b16 %v4995
      %v5358 = vunpack.c.h.b16 %v4995
      %v5359 = vunpack.c.l.b16 %v4996
      %v5360 = vunpack.c.h.b16 %v4996
      %v5361 = vunpack.c.l.b16 %v4997
      %v5362 = vunpack.c.h.b16 %v4997
      %v5363 = vunpack.c.l.b16 %v4998
      %v5364 = vunpack.c.h.b16 %v4998
      %v5365 = vunpack.c.l.b16 %v4999
      %v5366 = vunpack.c.h.b16 %v4999
      %v5367 = vunpack.c.l.b16 %v5000
      %v5368 = vunpack.c.h.b16 %v5000
      %v5369 = vunpack.c.l.b16 %v5001
      %v5370 = vunpack.c.h.b16 %v5001
      %v5371 = vunpack.c.l.b16 %v5002
      %v5372 = vunpack.c.h.b16 %v5002
      %v5373 = vunpack.c.l.b16 %v5003
      %v5374 = vunpack.c.h.b16 %v5003
      %v5375 = vunpack.c.l.b16 %v5004
      %v5376 = vunpack.c.h.b16 %v5004
      %v5377 = vunpack.c.l.b16 %v5005
      %v5378 = vunpack.c.h.b16 %v5005
      %v5379 = vunpack.c.l.b16 %v5006
      %v5380 = vunpack.c.h.b16 %v5006
      %v5381 = vunpack.c.l.b16 %v5007
      %v5382 = vunpack.c.h.b16 %v5007
      %v5383 = vunpack.c.l.b16 %v5008
      %v5384 = vunpack.c.h.b16 %v5008
      %v5385 = vunpack.c.l.b16 %v5009
      %v5386 = vunpack.c.h.b16 %v5009
      %v5387 = vunpack.c.l.b16 %v5010
      %v5388 = vunpack.c.h.b16 %v5010
      %v5389 = vunpack.c.l.b16 %v5011
      %v5390 = vunpack.c.h.b16 %v5011
      %v5391 = vunpack.c.l.b16 %v5012
      %v5392 = vunpack.c.h.b16 %v5012
      %v5393 = vunpack.c.l.b16 %v5013
      %v5394 = vunpack.c.h.b16 %v5013
      %v5395 = vunpack.c.l.b16 %v5014
      %v5396 = vunpack.c.h.b16 %v5014
      %v5397 = vunpack.c.l.b16 %v5015
      %v5398 = vunpack.c.h.b16 %v5015
      %v5399 = vunpack.c.l.b16 %v5016
      %v5400 = vunpack.c.h.b16 %v5016
      %v5401 = vpack.c.b16 %v5149, %v5145
      %v5402 = vpack.c.b16 %v5150, %v5146
      %v5403 = vpack.c.b16 %v5151, %v5147
      %v5404 = vpack.c.b16 %v5152, %v5148
      %v5405 = vpack.c.b16 %v5157, %v5153
      %v5406 = vpack.c.b16 %v5158, %v5154
      %v5407 = vpack.c.b16 %v5159, %v5155
      %v5408 = vpack.c.b16 %v5160, %v5156
      %v5409 = vpack.c.b16 %v5165, %v5161
      %v5410 = vpack.c.b16 %v5166, %v5162
      %v5411 = vpack.c.b16 %v5167, %v5163
      %v5412 = vpack.c.b16 %v5168, %v5164
      %v5413 = vpack.c.b16 %v5173, %v5169
      %v5414 = vpack.c.b16 %v5174, %v5170
      %v5415 = vpack.c.b16 %v5175, %v5171
      %v5416 = vpack.c.b16 %v5176, %v5172
      %v5417 = vpack.c.b16 %v5181, %v5177
      %v5418 = vpack.c.b16 %v5182, %v5178
      %v5419 = vpack.c.b16 %v5183, %v5179
      %v5420 = vpack.c.b16 %v5184, %v5180
      %v5421 = vpack.c.b16 %v5189, %v5185
      %v5422 = vpack.c.b16 %v5190, %v5186
      %v5423 = vpack.c.b16 %v5191, %v5187
      %v5424 = vpack.c.b16 %v5192, %v5188
      %v5425 = vpack.c.b16 %v5197, %v5193
      %v5426 = vpack.c.b16 %v5198, %v5194
      %v5427 = vpack.c.b16 %v5199, %v5195
      %v5428 = vpack.c.b16 %v5200, %v5196
      %v5429 = vpack.c.b16 %v5205, %v5201
      %v5430 = vpack.c.b16 %v5206, %v5202
      %v5431 = vpack.c.b16 %v5207, %v5203
      %v5432 = vpack.c.b16 %v5208, %v5204
      %v5433 = vpack.c.b16 %v5213, %v5209
      %v5434 = vpack.c.b16 %v5214, %v5210
      %v5435 = vpack.c.b16 %v5215, %v5211
      %v5436 = vpack.c.b16 %v5216, %v5212
      %v5437 = vpack.c.b16 %v5221, %v5217
      %v5438 = vpack.c.b16 %v5222, %v5218
      %v5439 = vpack.c.b16 %v5223, %v5219
      %v5440 = vpack.c.b16 %v5224, %v5220
      %v5441 = vpack.c.b16 %v5229, %v5225
      %v5442 = vpack.c.b16 %v5230, %v5226
      %v5443 = vpack.c.b16 %v5231, %v5227
      %v5444 = vpack.c.b16 %v5232, %v5228
      %v5445 = vpack.c.b16 %v5237, %v5233
      %v5446 = vpack.c.b16 %v5238, %v5234
      %v5447 = vpack.c.b16 %v5239, %v5235
      %v5448 = vpack.c.b16 %v5240, %v5236
      %v5449 = vpack.c.b16 %v5245, %v5241
      %v5450 = vpack.c.b16 %v5246, %v5242
      %v5451 = vpack.c.b16 %v5247, %v5243
      %v5452 = vpack.c.b16 %v5248, %v5244
      %v5453 = vpack.c.b16 %v5253, %v5249
      %v5454 = vpack.c.b16 %v5254, %v5250
      %v5455 = vpack.c.b16 %v5255, %v5251
      %v5456 = vpack.c.b16 %v5256, %v5252
      %v5457 = vpack.c.b16 %v5261, %v5257
      %v5458 = vpack.c.b16 %v5262, %v5258
      %v5459 = vpack.c.b16 %v5263, %v5259
      %v5460 = vpack.c.b16 %v5264, %v5260
      %v5461 = vpack.c.b16 %v5269, %v5265
      %v5462 = vpack.c.b16 %v5270, %v5266
      %v5463 = vpack.c.b16 %v5271, %v5267
      %v5464 = vpack.c.b16 %v5272, %v5268
      %v5465 = vpack.c.b16 %v5277, %v5273
      %v5466 = vpack.c.b16 %v5278, %v5274
      %v5467 = vpack.c.b16 %v5279, %v5275
      %v5468 = vpack.c.b16 %v5280, %v5276
      %v5469 = vpack.c.b16 %v5285, %v5281
      %v5470 = vpack.c.b16 %v5286, %v5282
      %v5471 = vpack.c.b16 %v5287, %v5283
      %v5472 = vpack.c.b16 %v5288, %v5284
      %v5473 = vpack.c.b16 %v5293, %v5289
      %v5474 = vpack.c.b16 %v5294, %v5290
      %v5475 = vpack.c.b16 %v5295, %v5291
      %v5476 = vpack.c.b16 %v5296, %v5292
      %v5477 = vpack.c.b16 %v5301, %v5297
      %v5478 = vpack.c.b16 %v5302, %v5298
      %v5479 = vpack.c.b16 %v5303, %v5299
      %v5480 = vpack.c.b16 %v5304, %v5300
      %v5481 = vpack.c.b16 %v5309, %v5305
      %v5482 = vpack.c.b16 %v5310, %v5306
      %v5483 = vpack.c.b16 %v5311, %v5307
      %v5484 = vpack.c.b16 %v5312, %v5308
      %v5485 = vpack.c.b16 %v5317, %v5313
      %v5486 = vpack.c.b16 %v5318, %v5314
      %v5487 = vpack.c.b16 %v5319, %v5315
      %v5488 = vpack.c.b16 %v5320, %v5316
      %v5489 = vpack.c.b16 %v5325, %v5321
      %v5490 = vpack.c.b16 %v5326, %v5322
      %v5491 = vpack.c.b16 %v5327, %v5323
      %v5492 = vpack.c.b16 %v5328, %v5324
      %v5493 = vpack.c.b16 %v5333, %v5329
      %v5494 = vpack.c.b16 %v5334, %v5330
      %v5495 = vpack.c.b16 %v5335, %v5331
      %v5496 = vpack.c.b16 %v5336, %v5332
      %v5497 = vpack.c.b16 %v5341, %v5337
      %v5498 = vpack.c.b16 %v5342, %v5338
      %v5499 = vpack.c.b16 %v5343, %v5339
      %v5500 = vpack.c.b16 %v5344, %v5340
      %v5501 = vpack.c.b16 %v5349, %v5345
      %v5502 = vpack.c.b16 %v5350, %v5346
      %v5503 = vpack.c.b16 %v5351, %v5347
      %v5504 = vpack.c.b16 %v5352, %v5348
      %v5505 = vpack.c.b16 %v5357, %v5353
      %v5506 = vpack.c.b16 %v5358, %v5354
      %v5507 = vpack.c.b16 %v5359, %v5355
      %v5508 = vpack.c.b16 %v5360, %v5356
      %v5509 = vpack.c.b16 %v5365, %v5361
      %v5510 = vpack.c.b16 %v5366, %v5362
      %v5511 = vpack.c.b16 %v5367, %v5363
      %v5512 = vpack.c.b16 %v5368, %v5364
      %v5513 = vpack.c.b16 %v5373, %v5369
      %v5514 = vpack.c.b16 %v5374, %v5370
      %v5515 = vpack.c.b16 %v5375, %v5371
      %v5516 = vpack.c.b16 %v5376, %v5372
      %v5517 = vpack.c.b16 %v5381, %v5377
      %v5518 = vpack.c.b16 %v5382, %v5378
      %v5519 = vpack.c.b16 %v5383, %v5379
      %v5520 = vpack.c.b16 %v5384, %v5380
      %v5521 = vpack.c.b16 %v5389, %v5385
      %v5522 = vpack.c.b16 %v5390, %v5386
      %v5523 = vpack.c.b16 %v5391, %v5387
      %v5524 = vpack.c.b16 %v5392, %v5388
      %v5525 = vpack.c.b16 %v5397, %v5393
      %v5526 = vpack.c.b16 %v5398, %v5394
      %v5527 = vpack.c.b16 %v5399, %v5395
      %v5528 = vpack.c.b16 %v5400, %v5396
      %5657 = vmatprep.subr.bf16.mxu0 %v5402
      %5658 = vmatpush1.bf16.msra.mxu0 %v5401
      %5659 = vmatprep.subr.bf16.mxu0 %v5406
      %5660 = vmatpush1.bf16.msra.mxu0 %v5405
      %5661 = vmatprep.subr.bf16.mxu0 %v5410
      %5662 = vmatpush1.bf16.msra.mxu0 %v5409
      %5663 = vmatprep.subr.bf16.mxu0 %v5414
      %5664 = vmatpush1.bf16.msra.mxu0 %v5413
      %5665 = vmatprep.subr.bf16.mxu0 %v5418
      %5666 = vmatpush1.bf16.msra.mxu0 %v5417
      %5667 = vmatprep.subr.bf16.mxu0 %v5422
      %5668 = vmatpush1.bf16.msra.mxu0 %v5421
      %5669 = vmatprep.subr.bf16.mxu0 %v5426
      %5670 = vmatpush1.bf16.msra.mxu0 %v5425
      %5671 = vmatprep.subr.bf16.mxu0 %v5430
      %5672 = vmatpush1.bf16.msra.mxu0 %v5429
      %5673 = vmatprep.subr.bf16.mxu0 %v5434
      %5674 = vmatpush1.bf16.msra.mxu0 %v5433
      %5675 = vmatprep.subr.bf16.mxu0 %v5438
      %5676 = vmatpush1.bf16.msra.mxu0 %v5437
      %5677 = vmatprep.subr.bf16.mxu0 %v5442
      %5678 = vmatpush1.bf16.msra.mxu0 %v5441
      %5679 = vmatprep.subr.bf16.mxu0 %v5446
      %5680 = vmatpush1.bf16.msra.mxu0 %v5445
      %5681 = vmatprep.subr.bf16.mxu0 %v5450
      %5682 = vmatpush1.bf16.msra.mxu0 %v5449
      %5683 = vmatprep.subr.bf16.mxu0 %v5454
      %5684 = vmatpush1.bf16.msra.mxu0 %v5453
      %5685 = vmatprep.subr.bf16.mxu0 %v5458
      %5686 = vmatpush1.bf16.msra.mxu0 %v5457
      %5687 = vmatprep.subr.bf16.mxu0 %v5462
      %5688 = vmatpush1.bf16.msra.mxu0 %v5461
      %5689 = vmatprep.mubr.bf16.mxu0 %v2195
      %5690 = vmatmul.mubr.bf16.gmra.mrb[0].mxu0 %v2188
      %v5691 = vpop.f32.mrb[0].mxu0
      %v5692 = vadd.f32 0.0, %v5691
      %v5693 = vpop.f32.mrb[0].mxu0
      %v5694 = vadd.f32 0.0, %v5693
      %v5695 = vpop.f32.mrb[0].mxu0
      %v5696 = vpop.f32.mrb[0].mxu0
      %5697 = vdwg.mxu0
      %5698 = vmatprep.subr.bf16.mxu0 %v5466
      %5699 = vmatpush1.bf16.msra.mxu0 %v5465
      %5700 = vmatprep.subr.bf16.mxu0 %v5470
      %5701 = vmatpush1.bf16.msra.mxu0 %v5469
      %5702 = vmatprep.subr.bf16.mxu0 %v5474
      %5703 = vmatpush1.bf16.msra.mxu0 %v5473
      %5704 = vmatprep.subr.bf16.mxu0 %v5478
      %5705 = vmatpush1.bf16.msra.mxu0 %v5477
      %5706 = vmatprep.subr.bf16.mxu0 %v5482
      %5707 = vmatpush1.bf16.msra.mxu0 %v5481
      %5708 = vmatprep.subr.bf16.mxu0 %v5486
      %5709 = vmatpush1.bf16.msra.mxu0 %v5485
      %5710 = vmatprep.subr.bf16.mxu0 %v5490
      %5711 = vmatpush1.bf16.msra.mxu0 %v5489
      %5712 = vmatprep.subr.bf16.mxu0 %v5494
      %5713 = vmatpush1.bf16.msra.mxu0 %v5493
      %5714 = vmatprep.subr.bf16.mxu0 %v5498
      %5715 = vmatpush1.bf16.msra.mxu0 %v5497
      %5716 = vmatprep.subr.bf16.mxu0 %v5502
      %5717 = vmatpush1.bf16.msra.mxu0 %v5501
      %5718 = vmatprep.subr.bf16.mxu0 %v5506
      %5719 = vmatpush1.bf16.msra.mxu0 %v5505
      %5720 = vmatprep.subr.bf16.mxu0 %v5510
      %5721 = vmatpush1.bf16.msra.mxu0 %v5509
      %5722 = vmatprep.subr.bf16.mxu0 %v5514
      %5723 = vmatpush1.bf16.msra.mxu0 %v5513
      %5724 = vmatprep.subr.bf16.mxu0 %v5518
      %5725 = vmatpush1.bf16.msra.mxu0 %v5517
      %5726 = vmatprep.subr.bf16.mxu0 %v5522
      %5727 = vmatpush1.bf16.msra.mxu0 %v5521
      %5728 = vmatprep.subr.bf16.mxu0 %v5526
      %5729 = vmatpush1.bf16.msra.mxu0 %v5525
      %5730 = vmatprep.mubr.bf16.mxu0 %v2209
      %5731 = vmatmul.mubr.bf16.gmra.mrb[0].mxu0 %v2202
      %v5732 = vpop.f32.mrb[0].mxu0
      %v5733 = vadd.f32 %v5692, %v5732
      %v5734 = vpop.f32.mrb[0].mxu0
      %v5735 = vadd.f32 %v5694, %v5734
      %v5736 = vpop.f32.mrb[0].mxu0
      %v5737 = vpop.f32.mrb[0].mxu0
      %5738 = vdwg.mxu0
      %5739 = vmatprep.subr.bf16.mxu0 %v5404
      %5740 = vmatpush1.bf16.msra.mxu0 %v5403
      %5741 = vmatprep.subr.bf16.mxu0 %v5408
      %5742 = vmatpush1.bf16.msra.mxu0 %v5407
      %5743 = vmatprep.subr.bf16.mxu0 %v5412
      %5744 = vmatpush1.bf16.msra.mxu0 %v5411
      %5745 = vmatprep.subr.bf16.mxu0 %v5416
      %5746 = vmatpush1.bf16.msra.mxu0 %v5415
      %5747 = vmatprep.subr.bf16.mxu0 %v5420
      %5748 = vmatpush1.bf16.msra.mxu0 %v5419
      %5749 = vmatprep.subr.bf16.mxu0 %v5424
      %5750 = vmatpush1.bf16.msra.mxu0 %v5423
      %5751 = vmatprep.subr.bf16.mxu0 %v5428
      %5752 = vmatpush1.bf16.msra.mxu0 %v5427
      %5753 = vmatprep.subr.bf16.mxu0 %v5432
      %5754 = vmatpush1.bf16.msra.mxu0 %v5431
      %5755 = vmatprep.subr.bf16.mxu0 %v5436
      %5756 = vmatpush1.bf16.msra.mxu0 %v5435
      %5757 = vmatprep.subr.bf16.mxu0 %v5440
      %5758 = vmatpush1.bf16.msra.mxu0 %v5439
      %5759 = vmatprep.subr.bf16.mxu0 %v5444
      %5760 = vmatpush1.bf16.msra.mxu0 %v5443
      %5761 = vmatprep.subr.bf16.mxu0 %v5448
      %5762 = vmatpush1.bf16.msra.mxu0 %v5447
      %5763 = vmatprep.subr.bf16.mxu0 %v5452
      %5764 = vmatpush1.bf16.msra.mxu0 %v5451
      %5765 = vmatprep.subr.bf16.mxu0 %v5456
      %5766 = vmatpush1.bf16.msra.mxu0 %v5455
      %5767 = vmatprep.subr.bf16.mxu0 %v5460
      %5768 = vmatpush1.bf16.msra.mxu0 %v5459
      %5769 = vmatprep.subr.bf16.mxu0 %v5464
      %5770 = vmatpush1.bf16.msra.mxu0 %v5463
      %5771 = vmatprep.mubr.bf16.mxu0 %v2195
      %5772 = vmatmul.mubr.bf16.gmra.mrb[0].mxu0 %v2188
      %v5773 = vpop.f32.mrb[0].mxu0
      %v5774 = vadd.f32 0.0, %v5773
      %v5775 = vpop.f32.mrb[0].mxu0
      %v5776 = vadd.f32 0.0, %v5775
      %v5777 = vpop.f32.mrb[0].mxu0
      %v5778 = vpop.f32.mrb[0].mxu0
      %5779 = vdwg.mxu0
      %5780 = vmatprep.subr.bf16.mxu0 %v5468
      %5781 = vmatpush1.bf16.msra.mxu0 %v5467
      %5782 = vmatprep.subr.bf16.mxu0 %v5472
      %5783 = vmatpush1.bf16.msra.mxu0 %v5471
      %5784 = vmatprep.subr.bf16.mxu0 %v5476
      %5785 = vmatpush1.bf16.msra.mxu0 %v5475
      %5786 = vmatprep.subr.bf16.mxu0 %v5480
      %5787 = vmatpush1.bf16.msra.mxu0 %v5479
      %5788 = vmatprep.subr.bf16.mxu0 %v5484
      %5789 = vmatpush1.bf16.msra.mxu0 %v5483
      %5790 = vmatprep.subr.bf16.mxu0 %v5488
      %5791 = vmatpush1.bf16.msra.mxu0 %v5487
      %5792 = vmatprep.subr.bf16.mxu0 %v5492
      %5793 = vmatpush1.bf16.msra.mxu0 %v5491
      %5794 = vmatprep.subr.bf16.mxu0 %v5496
      %5795 = vmatpush1.bf16.msra.mxu0 %v5495
      %5796 = vmatprep.subr.bf16.mxu0 %v5500
      %5797 = vmatpush1.bf16.msra.mxu0 %v5499
      %5798 = vmatprep.subr.bf16.mxu0 %v5504
      %5799 = vmatpush1.bf16.msra.mxu0 %v5503
      %5800 = vmatprep.subr.bf16.mxu0 %v5508
      %5801 = vmatpush1.bf16.msra.mxu0 %v5507
      %5802 = vmatprep.subr.bf16.mxu0 %v5512
      %5803 = vmatpush1.bf16.msra.mxu0 %v5511
      %5804 = vmatprep.subr.bf16.mxu0 %v5516
      %5805 = vmatpush1.bf16.msra.mxu0 %v5515
      %5806 = vmatprep.subr.bf16.mxu0 %v5520
      %5807 = vmatpush1.bf16.msra.mxu0 %v5519
      %5808 = vmatprep.subr.bf16.mxu0 %v5524
      %5809 = vmatpush1.bf16.msra.mxu0 %v5523
      %5810 = vmatprep.subr.bf16.mxu0 %v5528
      %5811 = vmatpush1.bf16.msra.mxu0 %v5527
      %5812 = vmatprep.mubr.bf16.mxu0 %v2209
      %5813 = vmatmul.mubr.bf16.gmra.mrb[0].mxu0 %v2202
      %v5814 = vpop.f32.mrb[0].mxu0
      %v5815 = vadd.f32 %v5774, %v5814
      %v5816 = vpop.f32.mrb[0].mxu0
      %v5817 = vadd.f32 %v5776, %v5816
      %v5818 = vpop.f32.mrb[0].mxu0
      %v5819 = vpop.f32.mrb[0].mxu0
      %5820 = vdwg.mxu0
      %v5821 = vadd.f32 %v4800, %v5733
      %v5822 = vadd.f32 %v4802, %v5735
      %v5823 = vadd.f32 %v4882, %v5815
      %v5824 = vadd.f32 %v4884, %v5817
      %v5825 = vmax.f32 %v3018, %v5821
      %v5826 = vmax.f32 %v3019, %v5822
      %v5827 = vmax.f32 %v3020, %v5823
      %v5828 = vmax.f32 %v3021, %v5824
      %5829 = vmatprep.subr.bf16.mxu0 %v830
      %5830 = vmatpush1.bf16.msra.mxu0 %v829
      %5831 = vmatprep.subr.bf16.mxu0 %v834
      %5832 = vmatpush1.bf16.msra.mxu0 %v833
      %5833 = vmatprep.subr.bf16.mxu0 %v838
      %5834 = vmatpush1.bf16.msra.mxu0 %v837
      %5835 = vmatprep.subr.bf16.mxu0 %v842
      %5836 = vmatpush1.bf16.msra.mxu0 %v841
      %5837 = vmatprep.subr.bf16.mxu0 %v846
      %5838 = vmatpush1.bf16.msra.mxu0 %v845
      %5839 = vmatprep.subr.bf16.mxu0 %v850
      %5840 = vmatpush1.bf16.msra.mxu0 %v849
      %5841 = vmatprep.subr.bf16.mxu0 %v854
      %5842 = vmatpush1.bf16.msra.mxu0 %v853
      %5843 = vmatprep.subr.bf16.mxu0 %v858
      %5844 = vmatpush1.bf16.msra.mxu0 %v857
      %5845 = vmatprep.subr.bf16.mxu0 %v862
      %5846 = vmatpush1.bf16.msra.mxu0 %v861
      %5847 = vmatprep.subr.bf16.mxu0 %v866
      %5848 = vmatpush1.bf16.msra.mxu0 %v865
      %5849 = vmatprep.subr.bf16.mxu0 %v870
      %5850 = vmatpush1.bf16.msra.mxu0 %v869
      %5851 = vmatprep.subr.bf16.mxu0 %v874
      %5852 = vmatpush1.bf16.msra.mxu0 %v873
      %5853 = vmatprep.subr.bf16.mxu0 %v878
      %5854 = vmatpush1.bf16.msra.mxu0 %v877
      %5855 = vmatprep.subr.bf16.mxu0 %v882
      %5856 = vmatpush1.bf16.msra.mxu0 %v881
      %5857 = vmatprep.subr.bf16.mxu0 %v886
      %5858 = vmatpush1.bf16.msra.mxu0 %v885
      %5859 = vmatprep.subr.bf16.mxu0 %v890
      %5860 = vmatpush1.bf16.msra.mxu0 %v889
      %5861 = vmatprep.mubr.bf16.mxu0 %v2195
      %5862 = vmatmul.mubr.bf16.gmra.mrb[0].mxu0 %v2188
      %v5863 = vpop.f32.mrb[0].mxu0
      %v5864 = vadd.f32 0.0, %v5863
      %v5865 = vpop.f32.mrb[0].mxu0
      %v5866 = vadd.f32 0.0, %v5865
      %v5867 = vpop.f32.mrb[0].mxu0
      %v5868 = vpop.f32.mrb[0].mxu0
      %5869 = vdwg.mxu0
      %5870 = vmatprep.subr.bf16.mxu0 %v894
      %5871 = vmatpush1.bf16.msra.mxu0 %v893
      %5872 = vmatprep.subr.bf16.mxu0 %v898
      %5873 = vmatpush1.bf16.msra.mxu0 %v897
      %5874 = vmatprep.subr.bf16.mxu0 %v902
      %5875 = vmatpush1.bf16.msra.mxu0 %v901
      %5876 = vmatprep.subr.bf16.mxu0 %v906
      %5877 = vmatpush1.bf16.msra.mxu0 %v905
      %5878 = vmatprep.subr.bf16.mxu0 %v910
      %5879 = vmatpush1.bf16.msra.mxu0 %v909
      %5880 = vmatprep.subr.bf16.mxu0 %v914
      %5881 = vmatpush1.bf16.msra.mxu0 %v913
      %5882 = vmatprep.subr.bf16.mxu0 %v918
      %5883 = vmatpush1.bf16.msra.mxu0 %v917
      %5884 = vmatprep.subr.bf16.mxu0 %v922
      %5885 = vmatpush1.bf16.msra.mxu0 %v921
      %5886 = vmatprep.subr.bf16.mxu0 %v926
      %5887 = vmatpush1.bf16.msra.mxu0 %v925
      %5888 = vmatprep.subr.bf16.mxu0 %v930
      %5889 = vmatpush1.bf16.msra.mxu0 %v929
      %5890 = vmatprep.subr.bf16.mxu0 %v934
      %5891 = vmatpush1.bf16.msra.mxu0 %v933
      %5892 = vmatprep.subr.bf16.mxu0 %v938
      %5893 = vmatpush1.bf16.msra.mxu0 %v937
      %5894 = vmatprep.subr.bf16.mxu0 %v942
      %5895 = vmatpush1.bf16.msra.mxu0 %v941
      %5896 = vmatprep.subr.bf16.mxu0 %v946
      %5897 = vmatpush1.bf16.msra.mxu0 %v945
      %5898 = vmatprep.subr.bf16.mxu0 %v950
      %5899 = vmatpush1.bf16.msra.mxu0 %v949
      %5900 = vmatprep.subr.bf16.mxu0 %v954
      %5901 = vmatpush1.bf16.msra.mxu0 %v953
      %5902 = vmatprep.mubr.bf16.mxu0 %v2209
      %5903 = vmatmul.mubr.bf16.gmra.mrb[0].mxu0 %v2202
      %v5904 = vpop.f32.mrb[0].mxu0
      %v5905 = vadd.f32 %v5864, %v5904
      %v5906 = vpop.f32.mrb[0].mxu0
      %v5907 = vadd.f32 %v5866, %v5906
      %v5908 = vpop.f32.mrb[0].mxu0
      %v5909 = vpop.f32.mrb[0].mxu0
      %5910 = vdwg.mxu0
      %5911 = vmatprep.subr.bf16.mxu0 %v832
      %5912 = vmatpush1.bf16.msra.mxu0 %v831
      %5913 = vmatprep.subr.bf16.mxu0 %v836
      %5914 = vmatpush1.bf16.msra.mxu0 %v835
      %5915 = vmatprep.subr.bf16.mxu0 %v840
      %5916 = vmatpush1.bf16.msra.mxu0 %v839
      %5917 = vmatprep.subr.bf16.mxu0 %v844
      %5918 = vmatpush1.bf16.msra.mxu0 %v843
      %5919 = vmatprep.subr.bf16.mxu0 %v848
      %5920 = vmatpush1.bf16.msra.mxu0 %v847
      %5921 = vmatprep.subr.bf16.mxu0 %v852
      %5922 = vmatpush1.bf16.msra.mxu0 %v851
      %5923 = vmatprep.subr.bf16.mxu0 %v856
      %5924 = vmatpush1.bf16.msra.mxu0 %v855
      %5925 = vmatprep.subr.bf16.mxu0 %v860
      %5926 = vmatpush1.bf16.msra.mxu0 %v859
      %5927 = vmatprep.subr.bf16.mxu0 %v864
      %5928 = vmatpush1.bf16.msra.mxu0 %v863
      %5929 = vmatprep.subr.bf16.mxu0 %v868
      %5930 = vmatpush1.bf16.msra.mxu0 %v867
      %5931 = vmatprep.subr.bf16.mxu0 %v872
      %5932 = vmatpush1.bf16.msra.mxu0 %v871
      %5933 = vmatprep.subr.bf16.mxu0 %v876
      %5934 = vmatpush1.bf16.msra.mxu0 %v875
      %5935 = vmatprep.subr.bf16.mxu0 %v880
      %5936 = vmatpush1.bf16.msra.mxu0 %v879
      %5937 = vmatprep.subr.bf16.mxu0 %v884
      %5938 = vmatpush1.bf16.msra.mxu0 %v883
      %5939 = vmatprep.subr.bf16.mxu0 %v888
      %5940 = vmatpush1.bf16.msra.mxu0 %v887
      %5941 = vmatprep.subr.bf16.mxu0 %v892
      %5942 = vmatpush1.bf16.msra.mxu0 %v891
      %5943 = vmatprep.mubr.bf16.mxu0 %v2195
      %5944 = vmatmul.mubr.bf16.gmra.mrb[0].mxu0 %v2188
      %v5945 = vpop.f32.mrb[0].mxu0
      %v5946 = vadd.f32 0.0, %v5945
      %v5947 = vpop.f32.mrb[0].mxu0
      %v5948 = vadd.f32 0.0, %v5947
      %v5949 = vpop.f32.mrb[0].mxu0
      %v5950 = vpop.f32.mrb[0].mxu0
      %5951 = vdwg.mxu0
      %5952 = vmatprep.subr.bf16.mxu0 %v896
      %5953 = vmatpush1.bf16.msra.mxu0 %v895
      %5954 = vmatprep.subr.bf16.mxu0 %v900
      %5955 = vmatpush1.bf16.msra.mxu0 %v899
      %5956 = vmatprep.subr.bf16.mxu0 %v904
      %5957 = vmatpush1.bf16.msra.mxu0 %v903
      %5958 = vmatprep.subr.bf16.mxu0 %v908
      %5959 = vmatpush1.bf16.msra.mxu0 %v907
      %5960 = vmatprep.subr.bf16.mxu0 %v912
      %5961 = vmatpush1.bf16.msra.mxu0 %v911
      %5962 = vmatprep.subr.bf16.mxu0 %v916
      %5963 = vmatpush1.bf16.msra.mxu0 %v915
      %5964 = vmatprep.subr.bf16.mxu0 %v920
      %5965 = vmatpush1.bf16.msra.mxu0 %v919
      %5966 = vmatprep.subr.bf16.mxu0 %v924
      %5967 = vmatpush1.bf16.msra.mxu0 %v923
      %5968 = vmatprep.subr.bf16.mxu0 %v928
      %5969 = vmatpush1.bf16.msra.mxu0 %v927
      %5970 = vmatprep.subr.bf16.mxu0 %v932
      %5971 = vmatpush1.bf16.msra.mxu0 %v931
      %5972 = vmatprep.subr.bf16.mxu0 %v936
      %5973 = vmatpush1.bf16.msra.mxu0 %v935
      %5974 = vmatprep.subr.bf16.mxu0 %v940
      %5975 = vmatpush1.bf16.msra.mxu0 %v939
      %5976 = vmatprep.subr.bf16.mxu0 %v944
      %5977 = vmatpush1.bf16.msra.mxu0 %v943
      %5978 = vmatprep.subr.bf16.mxu0 %v948
      %5979 = vmatpush1.bf16.msra.mxu0 %v947
      %5980 = vmatprep.subr.bf16.mxu0 %v952
      %5981 = vmatpush1.bf16.msra.mxu0 %v951
      %5982 = vmatprep.subr.bf16.mxu0 %v956
      %5983 = vmatpush1.bf16.msra.mxu0 %v955
      %5984 = vmatprep.mubr.bf16.mxu0 %v2209
      %5985 = vmatmul.mubr.bf16.gmra.mrb[0].mxu0 %v2202
      %v5986 = vpop.f32.mrb[0].mxu0
      %v5987 = vadd.f32 %v5946, %v5986
      %v5988 = vpop.f32.mrb[0].mxu0
      %v5989 = vadd.f32 %v5948, %v5988
      %v5990 = vpop.f32.mrb[0].mxu0
      %v5991 = vpop.f32.mrb[0].mxu0
      %5992 = vdwg.mxu0
      %5993 = vmatprep.subr.bf16.mxu0 %v1634
      %5994 = vmatpush1.bf16.msra.mxu0 %v1633
      %5995 = vmatprep.subr.bf16.mxu0 %v1638
      %5996 = vmatpush1.bf16.msra.mxu0 %v1637
      %5997 = vmatprep.subr.bf16.mxu0 %v1642
      %5998 = vmatpush1.bf16.msra.mxu0 %v1641
      %5999 = vmatprep.subr.bf16.mxu0 %v1646
      %6000 = vmatpush1.bf16.msra.mxu0 %v1645
      %6001 = vmatprep.subr.bf16.mxu0 %v1650
      %6002 = vmatpush1.bf16.msra.mxu0 %v1649
      %6003 = vmatprep.subr.bf16.mxu0 %v1654
      %6004 = vmatpush1.bf16.msra.mxu0 %v1653
      %6005 = vmatprep.subr.bf16.mxu0 %v1658
      %6006 = vmatpush1.bf16.msra.mxu0 %v1657
      %6007 = vmatprep.subr.bf16.mxu0 %v1662
      %6008 = vmatpush1.bf16.msra.mxu0 %v1661
      %6009 = vmatprep.subr.bf16.mxu0 %v1666
      %6010 = vmatpush1.bf16.msra.mxu0 %v1665
      %6011 = vmatprep.subr.bf16.mxu0 %v1670
      %6012 = vmatpush1.bf16.msra.mxu0 %v1669
      %6013 = vmatprep.subr.bf16.mxu0 %v1674
      %6014 = vmatpush1.bf16.msra.mxu0 %v1673
      %6015 = vmatprep.subr.bf16.mxu0 %v1678
      %6016 = vmatpush1.bf16.msra.mxu0 %v1677
      %6017 = vmatprep.subr.bf16.mxu0 %v1682
      %6018 = vmatpush1.bf16.msra.mxu0 %v1681
      %6019 = vmatprep.subr.bf16.mxu0 %v1686
      %6020 = vmatpush1.bf16.msra.mxu0 %v1685
      %6021 = vmatprep.subr.bf16.mxu0 %v1690
      %6022 = vmatpush1.bf16.msra.mxu0 %v1689
      %6023 = vmatprep.subr.bf16.mxu0 %v1694
      %6024 = vmatpush1.bf16.msra.mxu0 %v1693
      %6025 = vmatprep.mubr.bf16.mxu0 %v185
      %6026 = vmatmul.mubr.bf16.gmra.mrb[0].mxu0 %v184
      %v6027 = vpop.f32.mrb[0].mxu0
      %v6028 = vadd.f32 %v5905, %v6027
      %v6029 = vpop.f32.mrb[0].mxu0
      %v6030 = vadd.f32 %v5907, %v6029
      %v6031 = vpop.f32.mrb[0].mxu0
      %v6032 = vpop.f32.mrb[0].mxu0
      %6033 = vdwg.mxu0
      %6034 = vmatprep.subr.bf16.mxu0 %v1698
      %6035 = vmatpush1.bf16.msra.mxu0 %v1697
      %6036 = vmatprep.subr.bf16.mxu0 %v1702
      %6037 = vmatpush1.bf16.msra.mxu0 %v1701
      %6038 = vmatprep.subr.bf16.mxu0 %v1706
      %6039 = vmatpush1.bf16.msra.mxu0 %v1705
      %6040 = vmatprep.subr.bf16.mxu0 %v1710
      %6041 = vmatpush1.bf16.msra.mxu0 %v1709
      %6042 = vmatprep.subr.bf16.mxu0 %v1714
      %6043 = vmatpush1.bf16.msra.mxu0 %v1713
      %6044 = vmatprep.subr.bf16.mxu0 %v1718
      %6045 = vmatpush1.bf16.msra.mxu0 %v1717
      %6046 = vmatprep.subr.bf16.mxu0 %v1722
      %6047 = vmatpush1.bf16.msra.mxu0 %v1721
      %6048 = vmatprep.subr.bf16.mxu0 %v1726
      %6049 = vmatpush1.bf16.msra.mxu0 %v1725
      %6050 = vmatprep.subr.bf16.mxu0 %v1730
      %6051 = vmatpush1.bf16.msra.mxu0 %v1729
      %6052 = vmatprep.subr.bf16.mxu0 %v1734
      %6053 = vmatpush1.bf16.msra.mxu0 %v1733
      %6054 = vmatprep.subr.bf16.mxu0 %v1738
      %6055 = vmatpush1.bf16.msra.mxu0 %v1737
      %6056 = vmatprep.subr.bf16.mxu0 %v1742
      %6057 = vmatpush1.bf16.msra.mxu0 %v1741
      %6058 = vmatprep.subr.bf16.mxu0 %v1746
      %6059 = vmatpush1.bf16.msra.mxu0 %v1745
      %6060 = vmatprep.subr.bf16.mxu0 %v1750
      %6061 = vmatpush1.bf16.msra.mxu0 %v1749
      %6062 = vmatprep.subr.bf16.mxu0 %v1754
      %6063 = vmatpush1.bf16.msra.mxu0 %v1753
      %6064 = vmatprep.subr.bf16.mxu0 %v1758
      %6065 = vmatpush1.bf16.msra.mxu0 %v1757
      %6066 = vmatprep.mubr.bf16.mxu0 %v187
      %6067 = vmatmul.mubr.bf16.gmra.mrb[0].mxu0 %v186
      %v6068 = vpop.f32.mrb[0].mxu0
      %v6069 = vadd.f32 %v6028, %v6068
      %v6070 = vpop.f32.mrb[0].mxu0
      %v6071 = vadd.f32 %v6030, %v6070
      %v6072 = vpop.f32.mrb[0].mxu0
      %v6073 = vpop.f32.mrb[0].mxu0
      %6074 = vdwg.mxu0
      %6075 = vmatprep.subr.bf16.mxu0 %v1636
      %6076 = vmatpush1.bf16.msra.mxu0 %v1635
      %6077 = vmatprep.subr.bf16.mxu0 %v1640
      %6078 = vmatpush1.bf16.msra.mxu0 %v1639
      %6079 = vmatprep.subr.bf16.mxu0 %v1644
      %6080 = vmatpush1.bf16.msra.mxu0 %v1643
      %6081 = vmatprep.subr.bf16.mxu0 %v1648
      %6082 = vmatpush1.bf16.msra.mxu0 %v1647
      %6083 = vmatprep.subr.bf16.mxu0 %v1652
      %6084 = vmatpush1.bf16.msra.mxu0 %v1651
      %6085 = vmatprep.subr.bf16.mxu0 %v1656
      %6086 = vmatpush1.bf16.msra.mxu0 %v1655
      %6087 = vmatprep.subr.bf16.mxu0 %v1660
      %6088 = vmatpush1.bf16.msra.mxu0 %v1659
      %6089 = vmatprep.subr.bf16.mxu0 %v1664
      %6090 = vmatpush1.bf16.msra.mxu0 %v1663
      %6091 = vmatprep.subr.bf16.mxu0 %v1668
      %6092 = vmatpush1.bf16.msra.mxu0 %v1667
      %6093 = vmatprep.subr.bf16.mxu0 %v1672
      %6094 = vmatpush1.bf16.msra.mxu0 %v1671
      %6095 = vmatprep.subr.bf16.mxu0 %v1676
      %6096 = vmatpush1.bf16.msra.mxu0 %v1675
      %6097 = vmatprep.subr.bf16.mxu0 %v1680
      %6098 = vmatpush1.bf16.msra.mxu0 %v1679
      %6099 = vmatprep.subr.bf16.mxu0 %v1684
      %6100 = vmatpush1.bf16.msra.mxu0 %v1683
      %6101 = vmatprep.subr.bf16.mxu0 %v1688
      %6102 = vmatpush1.bf16.msra.mxu0 %v1687
      %6103 = vmatprep.subr.bf16.mxu0 %v1692
      %6104 = vmatpush1.bf16.msra.mxu0 %v1691
      %6105 = vmatprep.subr.bf16.mxu0 %v1696
      %6106 = vmatpush1.bf16.msra.mxu0 %v1695
      %6107 = vmatprep.mubr.bf16.mxu0 %v185
      %6108 = vmatmul.mubr.bf16.gmra.mrb[0].mxu0 %v184
      %v6109 = vpop.f32.mrb[0].mxu0
      %v6110 = vadd.f32 %v5987, %v6109
      %v6111 = vpop.f32.mrb[0].mxu0
      %v6112 = vadd.f32 %v5989, %v6111
      %v6113 = vpop.f32.mrb[0].mxu0
      %v6114 = vpop.f32.mrb[0].mxu0
      %6115 = vdwg.mxu0
      %6116 = vmatprep.subr.bf16.mxu0 %v1700
      %6117 = vmatpush1.bf16.msra.mxu0 %v1699
      %6118 = vmatprep.subr.bf16.mxu0 %v1704
      %6119 = vmatpush1.bf16.msra.mxu0 %v1703
      %6120 = vmatprep.subr.bf16.mxu0 %v1708
      %6121 = vmatpush1.bf16.msra.mxu0 %v1707
      %6122 = vmatprep.subr.bf16.mxu0 %v1712
      %6123 = vmatpush1.bf16.msra.mxu0 %v1711
      %6124 = vmatprep.subr.bf16.mxu0 %v1716
      %6125 = vmatpush1.bf16.msra.mxu0 %v1715
      %6126 = vmatprep.subr.bf16.mxu0 %v1720
      %6127 = vmatpush1.bf16.msra.mxu0 %v1719
      %6128 = vmatprep.subr.bf16.mxu0 %v1724
      %6129 = vmatpush1.bf16.msra.mxu0 %v1723
      %6130 = vmatprep.subr.bf16.mxu0 %v1728
      %6131 = vmatpush1.bf16.msra.mxu0 %v1727
      %6132 = vmatprep.subr.bf16.mxu0 %v1732
      %6133 = vmatpush1.bf16.msra.mxu0 %v1731
      %6134 = vmatprep.subr.bf16.mxu0 %v1736
      %6135 = vmatpush1.bf16.msra.mxu0 %v1735
      %6136 = vmatprep.subr.bf16.mxu0 %v1740
      %6137 = vmatpush1.bf16.msra.mxu0 %v1739
      %6138 = vmatprep.subr.bf16.mxu0 %v1744
      %6139 = vmatpush1.bf16.msra.mxu0 %v1743
      %6140 = vmatprep.subr.bf16.mxu0 %v1748
      %6141 = vmatpush1.bf16.msra.mxu0 %v1747
      %6142 = vmatprep.subr.bf16.mxu0 %v1752
      %6143 = vmatpush1.bf16.msra.mxu0 %v1751
      %6144 = vmatprep.subr.bf16.mxu0 %v1756
      %6145 = vmatpush1.bf16.msra.mxu0 %v1755
      %6146 = vmatprep.subr.bf16.mxu0 %v1760
      %6147 = vmatpush1.bf16.msra.mxu0 %v1759
      %6148 = vmatprep.mubr.bf16.mxu0 %v187
      %6149 = vmatmul.mubr.bf16.gmra.mrb[0].mxu0 %v186
      %v6150 = vpop.f32.mrb[0].mxu0
      %v6151 = vadd.f32 %v6110, %v6150
      %v6152 = vpop.f32.mrb[0].mxu0
      %v6153 = vadd.f32 %v6112, %v6152
      %v6154 = vpop.f32.mrb[0].mxu0
      %v6155 = vpop.f32.mrb[0].mxu0
      %6156 = vdwg.mxu0
      %v6158 = vshrl.u32 %v184, 16
      %v6160 = vshll.u32 %v184, 16
      %v6162 = vrot.slane %v6160, 1
      %v6163 = vor.u32 %v6158, %v6162
      %v6165 = vshrl.u32 %v185, 16
      %v6167 = vshll.u32 %v185, 16
      %v6169 = vrot.slane %v6167, 1
      %v6170 = vor.u32 %v6165, %v6169
      %v6172 = vshrl.u32 %v186, 16
      %v6174 = vshll.u32 %v186, 16
      %v6176 = vrot.slane %v6174, 1
      %v6177 = vor.u32 %v6172, %v6176
      %v6179 = vshrl.u32 %v187, 16
      %v6181 = vshll.u32 %v187, 16
      %v6183 = vrot.slane %v6181, 1
      %v6184 = vor.u32 %v6179, %v6183
      %6189 = vmatprep.subr.bf16.mxu0 %v2599
      %6190 = vmatpush1.bf16.msra.mxu0 %v2598
      %6191 = vmatprep.subr.bf16.mxu0 %v2603
      %6192 = vmatpush1.bf16.msra.mxu0 %v2602
      %6193 = vmatprep.subr.bf16.mxu0 %v2607
      %6194 = vmatpush1.bf16.msra.mxu0 %v2606
      %6195 = vmatprep.subr.bf16.mxu0 %v2611
      %6196 = vmatpush1.bf16.msra.mxu0 %v2610
      %6197 = vmatprep.subr.bf16.mxu0 %v2615
      %6198 = vmatpush1.bf16.msra.mxu0 %v2614
      %6199 = vmatprep.subr.bf16.mxu0 %v2619
      %6200 = vmatpush1.bf16.msra.mxu0 %v2618
      %6201 = vmatprep.subr.bf16.mxu0 %v2623
      %6202 = vmatpush1.bf16.msra.mxu0 %v2622
      %6203 = vmatprep.subr.bf16.mxu0 %v2627
      %6204 = vmatpush1.bf16.msra.mxu0 %v2626
      %6205 = vmatprep.subr.bf16.mxu0 %v2631
      %6206 = vmatpush1.bf16.msra.mxu0 %v2630
      %6207 = vmatprep.subr.bf16.mxu0 %v2635
      %6208 = vmatpush1.bf16.msra.mxu0 %v2634
      %6209 = vmatprep.subr.bf16.mxu0 %v2639
      %6210 = vmatpush1.bf16.msra.mxu0 %v2638
      %6211 = vmatprep.subr.bf16.mxu0 %v2643
      %6212 = vmatpush1.bf16.msra.mxu0 %v2642
      %6213 = vmatprep.subr.bf16.mxu0 %v2647
      %6214 = vmatpush1.bf16.msra.mxu0 %v2646
      %6215 = vmatprep.subr.bf16.mxu0 %v2651
      %6216 = vmatpush1.bf16.msra.mxu0 %v2650
      %6217 = vmatprep.subr.bf16.mxu0 %v2655
      %6218 = vmatpush1.bf16.msra.mxu0 %v2654
      %6219 = vmatprep.subr.bf16.mxu0 %v2659
      %6220 = vmatpush1.bf16.msra.mxu0 %v2658
      %6221 = vmatprep.mubr.bf16.mxu0 %v6170
      %6222 = vmatmul.mubr.bf16.gmra.mrb[0].mxu0 %v6163
      %v6223 = vpop.f32.mrb[0].mxu0
      %v6224 = vadd.f32 0.0, %v6223
      %v6225 = vpop.f32.mrb[0].mxu0
      %v6226 = vadd.f32 0.0, %v6225
      %v6227 = vpop.f32.mrb[0].mxu0
      %v6228 = vpop.f32.mrb[0].mxu0
      %6229 = vdwg.mxu0
      %6230 = vmatprep.subr.bf16.mxu0 %v2663
      %6231 = vmatpush1.bf16.msra.mxu0 %v2662
      %6232 = vmatprep.subr.bf16.mxu0 %v2667
      %6233 = vmatpush1.bf16.msra.mxu0 %v2666
      %6234 = vmatprep.subr.bf16.mxu0 %v2671
      %6235 = vmatpush1.bf16.msra.mxu0 %v2670
      %6236 = vmatprep.subr.bf16.mxu0 %v2675
      %6237 = vmatpush1.bf16.msra.mxu0 %v2674
      %6238 = vmatprep.subr.bf16.mxu0 %v2679
      %6239 = vmatpush1.bf16.msra.mxu0 %v2678
      %6240 = vmatprep.subr.bf16.mxu0 %v2683
      %6241 = vmatpush1.bf16.msra.mxu0 %v2682
      %6242 = vmatprep.subr.bf16.mxu0 %v2687
      %6243 = vmatpush1.bf16.msra.mxu0 %v2686
      %6244 = vmatprep.subr.bf16.mxu0 %v2691
      %6245 = vmatpush1.bf16.msra.mxu0 %v2690
      %6246 = vmatprep.subr.bf16.mxu0 %v2695
      %6247 = vmatpush1.bf16.msra.mxu0 %v2694
      %6248 = vmatprep.subr.bf16.mxu0 %v2699
      %6249 = vmatpush1.bf16.msra.mxu0 %v2698
      %6250 = vmatprep.subr.bf16.mxu0 %v2703
      %6251 = vmatpush1.bf16.msra.mxu0 %v2702
      %6252 = vmatprep.subr.bf16.mxu0 %v2707
      %6253 = vmatpush1.bf16.msra.mxu0 %v2706
      %6254 = vmatprep.subr.bf16.mxu0 %v2711
      %6255 = vmatpush1.bf16.msra.mxu0 %v2710
      %6256 = vmatprep.subr.bf16.mxu0 %v2715
      %6257 = vmatpush1.bf16.msra.mxu0 %v2714
      %6258 = vmatprep.subr.bf16.mxu0 %v2719
      %6259 = vmatpush1.bf16.msra.mxu0 %v2718
      %6260 = vmatprep.subr.bf16.mxu0 %v2723
      %6261 = vmatpush1.bf16.msra.mxu0 %v2722
      %6262 = vmatprep.mubr.bf16.mxu0 %v6184
      %6263 = vmatmul.mubr.bf16.gmra.mrb[0].mxu0 %v6177
      %v6264 = vpop.f32.mrb[0].mxu0
      %v6265 = vadd.f32 %v6224, %v6264
      %v6266 = vpop.f32.mrb[0].mxu0
      %v6267 = vadd.f32 %v6226, %v6266
      %v6268 = vpop.f32.mrb[0].mxu0
      %v6269 = vpop.f32.mrb[0].mxu0
      %6270 = vdwg.mxu0
      %6271 = vmatprep.subr.bf16.mxu0 %v2601
      %6272 = vmatpush1.bf16.msra.mxu0 %v2600
      %6273 = vmatprep.subr.bf16.mxu0 %v2605
      %6274 = vmatpush1.bf16.msra.mxu0 %v2604
      %6275 = vmatprep.subr.bf16.mxu0 %v2609
      %6276 = vmatpush1.bf16.msra.mxu0 %v2608
      %6277 = vmatprep.subr.bf16.mxu0 %v2613
      %6278 = vmatpush1.bf16.msra.mxu0 %v2612
      %6279 = vmatprep.subr.bf16.mxu0 %v2617
      %6280 = vmatpush1.bf16.msra.mxu0 %v2616
      %6281 = vmatprep.subr.bf16.mxu0 %v2621
      %6282 = vmatpush1.bf16.msra.mxu0 %v2620
      %6283 = vmatprep.subr.bf16.mxu0 %v2625
      %6284 = vmatpush1.bf16.msra.mxu0 %v2624
      %6285 = vmatprep.subr.bf16.mxu0 %v2629
      %6286 = vmatpush1.bf16.msra.mxu0 %v2628
      %6287 = vmatprep.subr.bf16.mxu0 %v2633
      %6288 = vmatpush1.bf16.msra.mxu0 %v2632
      %6289 = vmatprep.subr.bf16.mxu0 %v2637
      %6290 = vmatpush1.bf16.msra.mxu0 %v2636
      %6291 = vmatprep.subr.bf16.mxu0 %v2641
      %6292 = vmatpush1.bf16.msra.mxu0 %v2640
      %6293 = vmatprep.subr.bf16.mxu0 %v2645
      %6294 = vmatpush1.bf16.msra.mxu0 %v2644
      %6295 = vmatprep.subr.bf16.mxu0 %v2649
      %6296 = vmatpush1.bf16.msra.mxu0 %v2648
      %6297 = vmatprep.subr.bf16.mxu0 %v2653
      %6298 = vmatpush1.bf16.msra.mxu0 %v2652
      %6299 = vmatprep.subr.bf16.mxu0 %v2657
      %6300 = vmatpush1.bf16.msra.mxu0 %v2656
      %6301 = vmatprep.subr.bf16.mxu0 %v2661
      %6302 = vmatpush1.bf16.msra.mxu0 %v2660
      %6303 = vmatprep.mubr.bf16.mxu0 %v6170
      %6304 = vmatmul.mubr.bf16.gmra.mrb[0].mxu0 %v6163
      %v6305 = vpop.f32.mrb[0].mxu0
      %v6306 = vadd.f32 0.0, %v6305
      %v6307 = vpop.f32.mrb[0].mxu0
      %v6308 = vadd.f32 0.0, %v6307
      %v6309 = vpop.f32.mrb[0].mxu0
      %v6310 = vpop.f32.mrb[0].mxu0
      %6311 = vdwg.mxu0
      %6312 = vmatprep.subr.bf16.mxu0 %v2665
      %6313 = vmatpush1.bf16.msra.mxu0 %v2664
      %6314 = vmatprep.subr.bf16.mxu0 %v2669
      %6315 = vmatpush1.bf16.msra.mxu0 %v2668
      %6316 = vmatprep.subr.bf16.mxu0 %v2673
      %6317 = vmatpush1.bf16.msra.mxu0 %v2672
      %6318 = vmatprep.subr.bf16.mxu0 %v2677
      %6319 = vmatpush1.bf16.msra.mxu0 %v2676
      %6320 = vmatprep.subr.bf16.mxu0 %v2681
      %6321 = vmatpush1.bf16.msra.mxu0 %v2680
      %6322 = vmatprep.subr.bf16.mxu0 %v2685
      %6323 = vmatpush1.bf16.msra.mxu0 %v2684
      %6324 = vmatprep.subr.bf16.mxu0 %v2689
      %6325 = vmatpush1.bf16.msra.mxu0 %v2688
      %6326 = vmatprep.subr.bf16.mxu0 %v2693
      %6327 = vmatpush1.bf16.msra.mxu0 %v2692
      %6328 = vmatprep.subr.bf16.mxu0 %v2697
      %6329 = vmatpush1.bf16.msra.mxu0 %v2696
      %6330 = vmatprep.subr.bf16.mxu0 %v2701
      %6331 = vmatpush1.bf16.msra.mxu0 %v2700
      %6332 = vmatprep.subr.bf16.mxu0 %v2705
      %6333 = vmatpush1.bf16.msra.mxu0 %v2704
      %6334 = vmatprep.subr.bf16.mxu0 %v2709
      %6335 = vmatpush1.bf16.msra.mxu0 %v2708
      %6336 = vmatprep.subr.bf16.mxu0 %v2713
      %6337 = vmatpush1.bf16.msra.mxu0 %v2712
      %6338 = vmatprep.subr.bf16.mxu0 %v2717
      %6339 = vmatpush1.bf16.msra.mxu0 %v2716
      %6340 = vmatprep.subr.bf16.mxu0 %v2721
      %6341 = vmatpush1.bf16.msra.mxu0 %v2720
      %6342 = vmatprep.subr.bf16.mxu0 %v2725
      %6343 = vmatpush1.bf16.msra.mxu0 %v2724
      %6344 = vmatprep.mubr.bf16.mxu0 %v6184
      %6345 = vmatmul.mubr.bf16.gmra.mrb[0].mxu0 %v6177
      %v6346 = vpop.f32.mrb[0].mxu0
      %v6347 = vadd.f32 %v6306, %v6346
      %v6348 = vpop.f32.mrb[0].mxu0
      %v6349 = vadd.f32 %v6308, %v6348
      %v6350 = vpop.f32.mrb[0].mxu0
      %v6351 = vpop.f32.mrb[0].mxu0
      %6352 = vdwg.mxu0
      %v6353 = vadd.f32 %v6069, %v6265
      %v6354 = vadd.f32 %v6071, %v6267
      %v6355 = vadd.f32 %v6151, %v6347
      %v6356 = vadd.f32 %v6153, %v6349
      %v6357 = vmax.f32 %v5825, %v6353
      %v6358 = vmax.f32 %v5826, %v6354
      %v6359 = vmax.f32 %v5827, %v6355
      %v6360 = vmax.f32 %v5828, %v6356
      %6361 = vmatprep.subr.bf16.mxu0 %v3665
      %6362 = vmatpush1.bf16.msra.mxu0 %v3664
      %6363 = vmatprep.subr.bf16.mxu0 %v3669
      %6364 = vmatpush1.bf16.msra.mxu0 %v3668
      %6365 = vmatprep.subr.bf16.mxu0 %v3673
      %6366 = vmatpush1.bf16.msra.mxu0 %v3672
      %6367 = vmatprep.subr.bf16.mxu0 %v3677
      %6368 = vmatpush1.bf16.msra.mxu0 %v3676
      %6369 = vmatprep.subr.bf16.mxu0 %v3681
      %6370 = vmatpush1.bf16.msra.mxu0 %v3680
      %6371 = vmatprep.subr.bf16.mxu0 %v3685
      %6372 = vmatpush1.bf16.msra.mxu0 %v3684
      %6373 = vmatprep.subr.bf16.mxu0 %v3689
      %6374 = vmatpush1.bf16.msra.mxu0 %v3688
      %6375 = vmatprep.subr.bf16.mxu0 %v3693
      %6376 = vmatpush1.bf16.msra.mxu0 %v3692
      %6377 = vmatprep.subr.bf16.mxu0 %v3697
      %6378 = vmatpush1.bf16.msra.mxu0 %v3696
      %6379 = vmatprep.subr.bf16.mxu0 %v3701
      %6380 = vmatpush1.bf16.msra.mxu0 %v3700
      %6381 = vmatprep.subr.bf16.mxu0 %v3705
      %6382 = vmatpush1.bf16.msra.mxu0 %v3704
      %6383 = vmatprep.subr.bf16.mxu0 %v3709
      %6384 = vmatpush1.bf16.msra.mxu0 %v3708
      %6385 = vmatprep.subr.bf16.mxu0 %v3713
      %6386 = vmatpush1.bf16.msra.mxu0 %v3712
      %6387 = vmatprep.subr.bf16.mxu0 %v3717
      %6388 = vmatpush1.bf16.msra.mxu0 %v3716
      %6389 = vmatprep.subr.bf16.mxu0 %v3721
      %6390 = vmatpush1.bf16.msra.mxu0 %v3720
      %6391 = vmatprep.subr.bf16.mxu0 %v3725
      %6392 = vmatpush1.bf16.msra.mxu0 %v3724
      %6393 = vmatprep.mubr.bf16.mxu0 %v2195
      %6394 = vmatmul.mubr.bf16.gmra.mrb[0].mxu0 %v2188
      %v6395 = vpop.f32.mrb[0].mxu0
      %v6396 = vadd.f32 0.0, %v6395
      %v6397 = vpop.f32.mrb[0].mxu0
      %v6398 = vadd.f32 0.0, %v6397
      %v6399 = vpop.f32.mrb[0].mxu0
      %v6400 = vpop.f32.mrb[0].mxu0
      %6401 = vdwg.mxu0
      %6402 = vmatprep.subr.bf16.mxu0 %v3729
      %6403 = vmatpush1.bf16.msra.mxu0 %v3728
      %6404 = vmatprep.subr.bf16.mxu0 %v3733
      %6405 = vmatpush1.bf16.msra.mxu0 %v3732
      %6406 = vmatprep.subr.bf16.mxu0 %v3737
      %6407 = vmatpush1.bf16.msra.mxu0 %v3736
      %6408 = vmatprep.subr.bf16.mxu0 %v3741
      %6409 = vmatpush1.bf16.msra.mxu0 %v3740
      %6410 = vmatprep.subr.bf16.mxu0 %v3745
      %6411 = vmatpush1.bf16.msra.mxu0 %v3744
      %6412 = vmatprep.subr.bf16.mxu0 %v3749
      %6413 = vmatpush1.bf16.msra.mxu0 %v3748
      %6414 = vmatprep.subr.bf16.mxu0 %v3753
      %6415 = vmatpush1.bf16.msra.mxu0 %v3752
      %6416 = vmatprep.subr.bf16.mxu0 %v3757
      %6417 = vmatpush1.bf16.msra.mxu0 %v3756
      %6418 = vmatprep.subr.bf16.mxu0 %v3761
      %6419 = vmatpush1.bf16.msra.mxu0 %v3760
      %6420 = vmatprep.subr.bf16.mxu0 %v3765
      %6421 = vmatpush1.bf16.msra.mxu0 %v3764
      %6422 = vmatprep.subr.bf16.mxu0 %v3769
      %6423 = vmatpush1.bf16.msra.mxu0 %v3768
      %6424 = vmatprep.subr.bf16.mxu0 %v3773
      %6425 = vmatpush1.bf16.msra.mxu0 %v3772
      %6426 = vmatprep.subr.bf16.mxu0 %v3777
      %6427 = vmatpush1.bf16.msra.mxu0 %v3776
      %6428 = vmatprep.subr.bf16.mxu0 %v3781
      %6429 = vmatpush1.bf16.msra.mxu0 %v3780
      %6430 = vmatprep.subr.bf16.mxu0 %v3785
      %6431 = vmatpush1.bf16.msra.mxu0 %v3784
      %6432 = vmatprep.subr.bf16.mxu0 %v3789
      %6433 = vmatpush1.bf16.msra.mxu0 %v3788
      %6434 = vmatprep.mubr.bf16.mxu0 %v2209
      %6435 = vmatmul.mubr.bf16.gmra.mrb[0].mxu0 %v2202
      %v6436 = vpop.f32.mrb[0].mxu0
      %v6437 = vadd.f32 %v6396, %v6436
      %v6438 = vpop.f32.mrb[0].mxu0
      %v6439 = vadd.f32 %v6398, %v6438
      %v6440 = vpop.f32.mrb[0].mxu0
      %v6441 = vpop.f32.mrb[0].mxu0
      %6442 = vdwg.mxu0
      %6443 = vmatprep.subr.bf16.mxu0 %v3667
      %6444 = vmatpush1.bf16.msra.mxu0 %v3666
      %6445 = vmatprep.subr.bf16.mxu0 %v3671
      %6446 = vmatpush1.bf16.msra.mxu0 %v3670
      %6447 = vmatprep.subr.bf16.mxu0 %v3675
      %6448 = vmatpush1.bf16.msra.mxu0 %v3674
      %6449 = vmatprep.subr.bf16.mxu0 %v3679
      %6450 = vmatpush1.bf16.msra.mxu0 %v3678
      %6451 = vmatprep.subr.bf16.mxu0 %v3683
      %6452 = vmatpush1.bf16.msra.mxu0 %v3682
      %6453 = vmatprep.subr.bf16.mxu0 %v3687
      %6454 = vmatpush1.bf16.msra.mxu0 %v3686
      %6455 = vmatprep.subr.bf16.mxu0 %v3691
      %6456 = vmatpush1.bf16.msra.mxu0 %v3690
      %6457 = vmatprep.subr.bf16.mxu0 %v3695
      %6458 = vmatpush1.bf16.msra.mxu0 %v3694
      %6459 = vmatprep.subr.bf16.mxu0 %v3699
      %6460 = vmatpush1.bf16.msra.mxu0 %v3698
      %6461 = vmatprep.subr.bf16.mxu0 %v3703
      %6462 = vmatpush1.bf16.msra.mxu0 %v3702
      %6463 = vmatprep.subr.bf16.mxu0 %v3707
      %6464 = vmatpush1.bf16.msra.mxu0 %v3706
      %6465 = vmatprep.subr.bf16.mxu0 %v3711
      %6466 = vmatpush1.bf16.msra.mxu0 %v3710
      %6467 = vmatprep.subr.bf16.mxu0 %v3715
      %6468 = vmatpush1.bf16.msra.mxu0 %v3714
      %6469 = vmatprep.subr.bf16.mxu0 %v3719
      %6470 = vmatpush1.bf16.msra.mxu0 %v3718
      %6471 = vmatprep.subr.bf16.mxu0 %v3723
      %6472 = vmatpush1.bf16.msra.mxu0 %v3722
      %6473 = vmatprep.subr.bf16.mxu0 %v3727
      %6474 = vmatpush1.bf16.msra.mxu0 %v3726
      %6475 = vmatprep.mubr.bf16.mxu0 %v2195
      %6476 = vmatmul.mubr.bf16.gmra.mrb[0].mxu0 %v2188
      %v6477 = vpop.f32.mrb[0].mxu0
      %v6478 = vadd.f32 0.0, %v6477
      %v6479 = vpop.f32.mrb[0].mxu0
      %v6480 = vadd.f32 0.0, %v6479
      %v6481 = vpop.f32.mrb[0].mxu0
      %v6482 = vpop.f32.mrb[0].mxu0
      %6483 = vdwg.mxu0
      %6484 = vmatprep.subr.bf16.mxu0 %v3731
      %6485 = vmatpush1.bf16.msra.mxu0 %v3730
      %6486 = vmatprep.subr.bf16.mxu0 %v3735
      %6487 = vmatpush1.bf16.msra.mxu0 %v3734
      %6488 = vmatprep.subr.bf16.mxu0 %v3739
      %6489 = vmatpush1.bf16.msra.mxu0 %v3738
      %6490 = vmatprep.subr.bf16.mxu0 %v3743
      %6491 = vmatpush1.bf16.msra.mxu0 %v3742
      %6492 = vmatprep.subr.bf16.mxu0 %v3747
      %6493 = vmatpush1.bf16.msra.mxu0 %v3746
      %6494 = vmatprep.subr.bf16.mxu0 %v3751
      %6495 = vmatpush1.bf16.msra.mxu0 %v3750
      %6496 = vmatprep.subr.bf16.mxu0 %v3755
      %6497 = vmatpush1.bf16.msra.mxu0 %v3754
      %6498 = vmatprep.subr.bf16.mxu0 %v3759
      %6499 = vmatpush1.bf16.msra.mxu0 %v3758
      %6500 = vmatprep.subr.bf16.mxu0 %v3763
      %6501 = vmatpush1.bf16.msra.mxu0 %v3762
      %6502 = vmatprep.subr.bf16.mxu0 %v3767
      %6503 = vmatpush1.bf16.msra.mxu0 %v3766
      %6504 = vmatprep.subr.bf16.mxu0 %v3771
      %6505 = vmatpush1.bf16.msra.mxu0 %v3770
      %6506 = vmatprep.subr.bf16.mxu0 %v3775
      %6507 = vmatpush1.bf16.msra.mxu0 %v3774
      %6508 = vmatprep.subr.bf16.mxu0 %v3779
      %6509 = vmatpush1.bf16.msra.mxu0 %v3778
      %6510 = vmatprep.subr.bf16.mxu0 %v3783
      %6511 = vmatpush1.bf16.msra.mxu0 %v3782
      %6512 = vmatprep.subr.bf16.mxu0 %v3787
      %6513 = vmatpush1.bf16.msra.mxu0 %v3786
      %6514 = vmatprep.subr.bf16.mxu0 %v3791
      %6515 = vmatpush1.bf16.msra.mxu0 %v3790
      %6516 = vmatprep.mubr.bf16.mxu0 %v2209
      %6517 = vmatmul.mubr.bf16.gmra.mrb[0].mxu0 %v2202
      %v6518 = vpop.f32.mrb[0].mxu0
      %v6519 = vadd.f32 %v6478, %v6518
      %v6520 = vpop.f32.mrb[0].mxu0
      %v6521 = vadd.f32 %v6480, %v6520
      %v6522 = vpop.f32.mrb[0].mxu0
      %v6523 = vpop.f32.mrb[0].mxu0
      %6524 = vdwg.mxu0
      %6525 = vmatprep.subr.bf16.mxu0 %v4469
      %6526 = vmatpush1.bf16.msra.mxu0 %v4468
      %6527 = vmatprep.subr.bf16.mxu0 %v4473
      %6528 = vmatpush1.bf16.msra.mxu0 %v4472
      %6529 = vmatprep.subr.bf16.mxu0 %v4477
      %6530 = vmatpush1.bf16.msra.mxu0 %v4476
      %6531 = vmatprep.subr.bf16.mxu0 %v4481
      %6532 = vmatpush1.bf16.msra.mxu0 %v4480
      %6533 = vmatprep.subr.bf16.mxu0 %v4485
      %6534 = vmatpush1.bf16.msra.mxu0 %v4484
      %6535 = vmatprep.subr.bf16.mxu0 %v4489
      %6536 = vmatpush1.bf16.msra.mxu0 %v4488
      %6537 = vmatprep.subr.bf16.mxu0 %v4493
      %6538 = vmatpush1.bf16.msra.mxu0 %v4492
      %6539 = vmatprep.subr.bf16.mxu0 %v4497
      %6540 = vmatpush1.bf16.msra.mxu0 %v4496
      %6541 = vmatprep.subr.bf16.mxu0 %v4501
      %6542 = vmatpush1.bf16.msra.mxu0 %v4500
      %6543 = vmatprep.subr.bf16.mxu0 %v4505
      %6544 = vmatpush1.bf16.msra.mxu0 %v4504
      %6545 = vmatprep.subr.bf16.mxu0 %v4509
      %6546 = vmatpush1.bf16.msra.mxu0 %v4508
      %6547 = vmatprep.subr.bf16.mxu0 %v4513
      %6548 = vmatpush1.bf16.msra.mxu0 %v4512
      %6549 = vmatprep.subr.bf16.mxu0 %v4517
      %6550 = vmatpush1.bf16.msra.mxu0 %v4516
      %6551 = vmatprep.subr.bf16.mxu0 %v4521
      %6552 = vmatpush1.bf16.msra.mxu0 %v4520
      %6553 = vmatprep.subr.bf16.mxu0 %v4525
      %6554 = vmatpush1.bf16.msra.mxu0 %v4524
      %6555 = vmatprep.subr.bf16.mxu0 %v4529
      %6556 = vmatpush1.bf16.msra.mxu0 %v4528
      %6557 = vmatprep.mubr.bf16.mxu0 %v185
      %6558 = vmatmul.mubr.bf16.gmra.mrb[0].mxu0 %v184
      %v6559 = vpop.f32.mrb[0].mxu0
      %v6560 = vadd.f32 %v6437, %v6559
      %v6561 = vpop.f32.mrb[0].mxu0
      %v6562 = vadd.f32 %v6439, %v6561
      %v6563 = vpop.f32.mrb[0].mxu0
      %v6564 = vpop.f32.mrb[0].mxu0
      %6565 = vdwg.mxu0
      %6566 = vmatprep.subr.bf16.mxu0 %v4533
      %6567 = vmatpush1.bf16.msra.mxu0 %v4532
      %6568 = vmatprep.subr.bf16.mxu0 %v4537
      %6569 = vmatpush1.bf16.msra.mxu0 %v4536
      %6570 = vmatprep.subr.bf16.mxu0 %v4541
      %6571 = vmatpush1.bf16.msra.mxu0 %v4540
      %6572 = vmatprep.subr.bf16.mxu0 %v4545
      %6573 = vmatpush1.bf16.msra.mxu0 %v4544
      %6574 = vmatprep.subr.bf16.mxu0 %v4549
      %6575 = vmatpush1.bf16.msra.mxu0 %v4548
      %6576 = vmatprep.subr.bf16.mxu0 %v4553
      %6577 = vmatpush1.bf16.msra.mxu0 %v4552
      %6578 = vmatprep.subr.bf16.mxu0 %v4557
      %6579 = vmatpush1.bf16.msra.mxu0 %v4556
      %6580 = vmatprep.subr.bf16.mxu0 %v4561
      %6581 = vmatpush1.bf16.msra.mxu0 %v4560
      %6582 = vmatprep.subr.bf16.mxu0 %v4565
      %6583 = vmatpush1.bf16.msra.mxu0 %v4564
      %6584 = vmatprep.subr.bf16.mxu0 %v4569
      %6585 = vmatpush1.bf16.msra.mxu0 %v4568
      %6586 = vmatprep.subr.bf16.mxu0 %v4573
      %6587 = vmatpush1.bf16.msra.mxu0 %v4572
      %6588 = vmatprep.subr.bf16.mxu0 %v4577
      %6589 = vmatpush1.bf16.msra.mxu0 %v4576
      %6590 = vmatprep.subr.bf16.mxu0 %v4581
      %6591 = vmatpush1.bf16.msra.mxu0 %v4580
      %6592 = vmatprep.subr.bf16.mxu0 %v4585
      %6593 = vmatpush1.bf16.msra.mxu0 %v4584
      %6594 = vmatprep.subr.bf16.mxu0 %v4589
      %6595 = vmatpush1.bf16.msra.mxu0 %v4588
      %6596 = vmatprep.subr.bf16.mxu0 %v4593
      %6597 = vmatpush1.bf16.msra.mxu0 %v4592
      %6598 = vmatprep.mubr.bf16.mxu0 %v187
      %6599 = vmatmul.mubr.bf16.gmra.mrb[0].mxu0 %v186
      %v6600 = vpop.f32.mrb[0].mxu0
      %v6601 = vadd.f32 %v6560, %v6600
      %v6602 = vpop.f32.mrb[0].mxu0
      %v6603 = vadd.f32 %v6562, %v6602
      %v6604 = vpop.f32.mrb[0].mxu0
      %v6605 = vpop.f32.mrb[0].mxu0
      %6606 = vdwg.mxu0
      %6607 = vmatprep.subr.bf16.mxu0 %v4471
      %6608 = vmatpush1.bf16.msra.mxu0 %v4470
      %6609 = vmatprep.subr.bf16.mxu0 %v4475
      %6610 = vmatpush1.bf16.msra.mxu0 %v4474
      %6611 = vmatprep.subr.bf16.mxu0 %v4479
      %6612 = vmatpush1.bf16.msra.mxu0 %v4478
      %6613 = vmatprep.subr.bf16.mxu0 %v4483
      %6614 = vmatpush1.bf16.msra.mxu0 %v4482
      %6615 = vmatprep.subr.bf16.mxu0 %v4487
      %6616 = vmatpush1.bf16.msra.mxu0 %v4486
      %6617 = vmatprep.subr.bf16.mxu0 %v4491
      %6618 = vmatpush1.bf16.msra.mxu0 %v4490
      %6619 = vmatprep.subr.bf16.mxu0 %v4495
      %6620 = vmatpush1.bf16.msra.mxu0 %v4494
      %6621 = vmatprep.subr.bf16.mxu0 %v4499
      %6622 = vmatpush1.bf16.msra.mxu0 %v4498
      %6623 = vmatprep.subr.bf16.mxu0 %v4503
      %6624 = vmatpush1.bf16.msra.mxu0 %v4502
      %6625 = vmatprep.subr.bf16.mxu0 %v4507
      %6626 = vmatpush1.bf16.msra.mxu0 %v4506
      %6627 = vmatprep.subr.bf16.mxu0 %v4511
      %6628 = vmatpush1.bf16.msra.mxu0 %v4510
      %6629 = vmatprep.subr.bf16.mxu0 %v4515
      %6630 = vmatpush1.bf16.msra.mxu0 %v4514
      %6631 = vmatprep.subr.bf16.mxu0 %v4519
      %6632 = vmatpush1.bf16.msra.mxu0 %v4518
      %6633 = vmatprep.subr.bf16.mxu0 %v4523
      %6634 = vmatpush1.bf16.msra.mxu0 %v4522
      %6635 = vmatprep.subr.bf16.mxu0 %v4527
      %6636 = vmatpush1.bf16.msra.mxu0 %v4526
      %6637 = vmatprep.subr.bf16.mxu0 %v4531
      %6638 = vmatpush1.bf16.msra.mxu0 %v4530
      %6639 = vmatprep.mubr.bf16.mxu0 %v185
      %6640 = vmatmul.mubr.bf16.gmra.mrb[0].mxu0 %v184
      %v6641 = vpop.f32.mrb[0].mxu0
      %v6642 = vadd.f32 %v6519, %v6641
      %v6643 = vpop.f32.mrb[0].mxu0
      %v6644 = vadd.f32 %v6521, %v6643
      %v6645 = vpop.f32.mrb[0].mxu0
      %v6646 = vpop.f32.mrb[0].mxu0
      %6647 = vdwg.mxu0
      %6648 = vmatprep.subr.bf16.mxu0 %v4535
      %6649 = vmatpush1.bf16.msra.mxu0 %v4534
      %6650 = vmatprep.subr.bf16.mxu0 %v4539
      %6651 = vmatpush1.bf16.msra.mxu0 %v4538
      %6652 = vmatprep.subr.bf16.mxu0 %v4543
      %6653 = vmatpush1.bf16.msra.mxu0 %v4542
      %6654 = vmatprep.subr.bf16.mxu0 %v4547
      %6655 = vmatpush1.bf16.msra.mxu0 %v4546
      %6656 = vmatprep.subr.bf16.mxu0 %v4551
      %6657 = vmatpush1.bf16.msra.mxu0 %v4550
      %6658 = vmatprep.subr.bf16.mxu0 %v4555
      %6659 = vmatpush1.bf16.msra.mxu0 %v4554
      %6660 = vmatprep.subr.bf16.mxu0 %v4559
      %6661 = vmatpush1.bf16.msra.mxu0 %v4558
      %6662 = vmatprep.subr.bf16.mxu0 %v4563
      %6663 = vmatpush1.bf16.msra.mxu0 %v4562
      %6664 = vmatprep.subr.bf16.mxu0 %v4567
      %6665 = vmatpush1.bf16.msra.mxu0 %v4566
      %6666 = vmatprep.subr.bf16.mxu0 %v4571
      %6667 = vmatpush1.bf16.msra.mxu0 %v4570
      %6668 = vmatprep.subr.bf16.mxu0 %v4575
      %6669 = vmatpush1.bf16.msra.mxu0 %v4574
      %6670 = vmatprep.subr.bf16.mxu0 %v4579
      %6671 = vmatpush1.bf16.msra.mxu0 %v4578
      %6672 = vmatprep.subr.bf16.mxu0 %v4583
      %6673 = vmatpush1.bf16.msra.mxu0 %v4582
      %6674 = vmatprep.subr.bf16.mxu0 %v4587
      %6675 = vmatpush1.bf16.msra.mxu0 %v4586
      %6676 = vmatprep.subr.bf16.mxu0 %v4591
      %6677 = vmatpush1.bf16.msra.mxu0 %v4590
      %6678 = vmatprep.subr.bf16.mxu0 %v4595
      %6679 = vmatpush1.bf16.msra.mxu0 %v4594
      %6680 = vmatprep.mubr.bf16.mxu0 %v187
      %6681 = vmatmul.mubr.bf16.gmra.mrb[0].mxu0 %v186
      %v6682 = vpop.f32.mrb[0].mxu0
      %v6683 = vadd.f32 %v6642, %v6682
      %v6684 = vpop.f32.mrb[0].mxu0
      %v6685 = vadd.f32 %v6644, %v6684
      %v6686 = vpop.f32.mrb[0].mxu0
      %v6687 = vpop.f32.mrb[0].mxu0
      %6688 = vdwg.mxu0
      %6689 = vmatprep.subr.bf16.mxu0 %v5402
      %6690 = vmatpush1.bf16.msra.mxu0 %v5401
      %6691 = vmatprep.subr.bf16.mxu0 %v5406
      %6692 = vmatpush1.bf16.msra.mxu0 %v5405
      %6693 = vmatprep.subr.bf16.mxu0 %v5410
      %6694 = vmatpush1.bf16.msra.mxu0 %v5409
      %6695 = vmatprep.subr.bf16.mxu0 %v5414
      %6696 = vmatpush1.bf16.msra.mxu0 %v5413
      %6697 = vmatprep.subr.bf16.mxu0 %v5418
      %6698 = vmatpush1.bf16.msra.mxu0 %v5417
      %6699 = vmatprep.subr.bf16.mxu0 %v5422
      %6700 = vmatpush1.bf16.msra.mxu0 %v5421
      %6701 = vmatprep.subr.bf16.mxu0 %v5426
      %6702 = vmatpush1.bf16.msra.mxu0 %v5425
      %6703 = vmatprep.subr.bf16.mxu0 %v5430
      %6704 = vmatpush1.bf16.msra.mxu0 %v5429
      %6705 = vmatprep.subr.bf16.mxu0 %v5434
      %6706 = vmatpush1.bf16.msra.mxu0 %v5433
      %6707 = vmatprep.subr.bf16.mxu0 %v5438
      %6708 = vmatpush1.bf16.msra.mxu0 %v5437
      %6709 = vmatprep.subr.bf16.mxu0 %v5442
      %6710 = vmatpush1.bf16.msra.mxu0 %v5441
      %6711 = vmatprep.subr.bf16.mxu0 %v5446
      %6712 = vmatpush1.bf16.msra.mxu0 %v5445
      %6713 = vmatprep.subr.bf16.mxu0 %v5450
      %6714 = vmatpush1.bf16.msra.mxu0 %v5449
      %6715 = vmatprep.subr.bf16.mxu0 %v5454
      %6716 = vmatpush1.bf16.msra.mxu0 %v5453
      %6717 = vmatprep.subr.bf16.mxu0 %v5458
      %6718 = vmatpush1.bf16.msra.mxu0 %v5457
      %6719 = vmatprep.subr.bf16.mxu0 %v5462
      %6720 = vmatpush1.bf16.msra.mxu0 %v5461
      %6721 = vmatprep.mubr.bf16.mxu0 %v6170
      %6722 = vmatmul.mubr.bf16.gmra.mrb[0].mxu0 %v6163
      %v6723 = vpop.f32.mrb[0].mxu0
      %v6724 = vadd.f32 0.0, %v6723
      %v6725 = vpop.f32.mrb[0].mxu0
      %v6726 = vadd.f32 0.0, %v6725
      %v6727 = vpop.f32.mrb[0].mxu0
      %v6728 = vpop.f32.mrb[0].mxu0
      %6729 = vdwg.mxu0
      %6730 = vmatprep.subr.bf16.mxu0 %v5466
      %6731 = vmatpush1.bf16.msra.mxu0 %v5465
      %6732 = vmatprep.subr.bf16.mxu0 %v5470
      %6733 = vmatpush1.bf16.msra.mxu0 %v5469
      %6734 = vmatprep.subr.bf16.mxu0 %v5474
      %6735 = vmatpush1.bf16.msra.mxu0 %v5473
      %6736 = vmatprep.subr.bf16.mxu0 %v5478
      %6737 = vmatpush1.bf16.msra.mxu0 %v5477
      %6738 = vmatprep.subr.bf16.mxu0 %v5482
      %6739 = vmatpush1.bf16.msra.mxu0 %v5481
      %6740 = vmatprep.subr.bf16.mxu0 %v5486
      %6741 = vmatpush1.bf16.msra.mxu0 %v5485
      %6742 = vmatprep.subr.bf16.mxu0 %v5490
      %6743 = vmatpush1.bf16.msra.mxu0 %v5489
      %6744 = vmatprep.subr.bf16.mxu0 %v5494
      %6745 = vmatpush1.bf16.msra.mxu0 %v5493
      %6746 = vmatprep.subr.bf16.mxu0 %v5498
      %6747 = vmatpush1.bf16.msra.mxu0 %v5497
      %6748 = vmatprep.subr.bf16.mxu0 %v5502
      %6749 = vmatpush1.bf16.msra.mxu0 %v5501
      %6750 = vmatprep.subr.bf16.mxu0 %v5506
      %6751 = vmatpush1.bf16.msra.mxu0 %v5505
      %6752 = vmatprep.subr.bf16.mxu0 %v5510
      %6753 = vmatpush1.bf16.msra.mxu0 %v5509
      %6754 = vmatprep.subr.bf16.mxu0 %v5514
      %6755 = vmatpush1.bf16.msra.mxu0 %v5513
      %6756 = vmatprep.subr.bf16.mxu0 %v5518
      %6757 = vmatpush1.bf16.msra.mxu0 %v5517
      %6758 = vmatprep.subr.bf16.mxu0 %v5522
      %6759 = vmatpush1.bf16.msra.mxu0 %v5521
      %6760 = vmatprep.subr.bf16.mxu0 %v5526
      %6761 = vmatpush1.bf16.msra.mxu0 %v5525
      %6762 = vmatprep.mubr.bf16.mxu0 %v6184
      %6763 = vmatmul.mubr.bf16.gmra.mrb[0].mxu0 %v6177
      %v6764 = vpop.f32.mrb[0].mxu0
      %v6765 = vadd.f32 %v6724, %v6764
      %v6766 = vpop.f32.mrb[0].mxu0
      %v6767 = vadd.f32 %v6726, %v6766
      %v6768 = vpop.f32.mrb[0].mxu0
      %v6769 = vpop.f32.mrb[0].mxu0
      %6770 = vdwg.mxu0
      %6771 = vmatprep.subr.bf16.mxu0 %v5404
      %6772 = vmatpush1.bf16.msra.mxu0 %v5403
      %6773 = vmatprep.subr.bf16.mxu0 %v5408
      %6774 = vmatpush1.bf16.msra.mxu0 %v5407
      %6775 = vmatprep.subr.bf16.mxu0 %v5412
      %6776 = vmatpush1.bf16.msra.mxu0 %v5411
      %6777 = vmatprep.subr.bf16.mxu0 %v5416
      %6778 = vmatpush1.bf16.msra.mxu0 %v5415
      %6779 = vmatprep.subr.bf16.mxu0 %v5420
      %6780 = vmatpush1.bf16.msra.mxu0 %v5419
      %6781 = vmatprep.subr.bf16.mxu0 %v5424
      %6782 = vmatpush1.bf16.msra.mxu0 %v5423
      %6783 = vmatprep.subr.bf16.mxu0 %v5428
      %6784 = vmatpush1.bf16.msra.mxu0 %v5427
      %6785 = vmatprep.subr.bf16.mxu0 %v5432
      %6786 = vmatpush1.bf16.msra.mxu0 %v5431
      %6787 = vmatprep.subr.bf16.mxu0 %v5436
      %6788 = vmatpush1.bf16.msra.mxu0 %v5435
      %6789 = vmatprep.subr.bf16.mxu0 %v5440
      %6790 = vmatpush1.bf16.msra.mxu0 %v5439
      %6791 = vmatprep.subr.bf16.mxu0 %v5444
      %6792 = vmatpush1.bf16.msra.mxu0 %v5443
      %6793 = vmatprep.subr.bf16.mxu0 %v5448
      %6794 = vmatpush1.bf16.msra.mxu0 %v5447
      %6795 = vmatprep.subr.bf16.mxu0 %v5452
      %6796 = vmatpush1.bf16.msra.mxu0 %v5451
      %6797 = vmatprep.subr.bf16.mxu0 %v5456
      %6798 = vmatpush1.bf16.msra.mxu0 %v5455
      %6799 = vmatprep.subr.bf16.mxu0 %v5460
      %6800 = vmatpush1.bf16.msra.mxu0 %v5459
      %6801 = vmatprep.subr.bf16.mxu0 %v5464
      %6802 = vmatpush1.bf16.msra.mxu0 %v5463
      %6803 = vmatprep.mubr.bf16.mxu0 %v6170
      %6804 = vmatmul.mubr.bf16.gmra.mrb[0].mxu0 %v6163
      %v6805 = vpop.f32.mrb[0].mxu0
      %v6806 = vadd.f32 0.0, %v6805
      %v6807 = vpop.f32.mrb[0].mxu0
      %v6808 = vadd.f32 0.0, %v6807
      %v6809 = vpop.f32.mrb[0].mxu0
      %v6810 = vpop.f32.mrb[0].mxu0
      %6811 = vdwg.mxu0
      %6812 = vmatprep.subr.bf16.mxu0 %v5468
      %6813 = vmatpush1.bf16.msra.mxu0 %v5467
      %6814 = vmatprep.subr.bf16.mxu0 %v5472
      %6815 = vmatpush1.bf16.msra.mxu0 %v5471
      %6816 = vmatprep.subr.bf16.mxu0 %v5476
      %6817 = vmatpush1.bf16.msra.mxu0 %v5475
      %6818 = vmatprep.subr.bf16.mxu0 %v5480
      %6819 = vmatpush1.bf16.msra.mxu0 %v5479
      %6820 = vmatprep.subr.bf16.mxu0 %v5484
      %6821 = vmatpush1.bf16.msra.mxu0 %v5483
      %6822 = vmatprep.subr.bf16.mxu0 %v5488
      %6823 = vmatpush1.bf16.msra.mxu0 %v5487
      %6824 = vmatprep.subr.bf16.mxu0 %v5492
      %6825 = vmatpush1.bf16.msra.mxu0 %v5491
      %6826 = vmatprep.subr.bf16.mxu0 %v5496
      %6827 = vmatpush1.bf16.msra.mxu0 %v5495
      %6828 = vmatprep.subr.bf16.mxu0 %v5500
      %6829 = vmatpush1.bf16.msra.mxu0 %v5499
      %6830 = vmatprep.subr.bf16.mxu0 %v5504
      %6831 = vmatpush1.bf16.msra.mxu0 %v5503
      %6832 = vmatprep.subr.bf16.mxu0 %v5508
      %6833 = vmatpush1.bf16.msra.mxu0 %v5507
      %6834 = vmatprep.subr.bf16.mxu0 %v5512
      %6835 = vmatpush1.bf16.msra.mxu0 %v5511
      %6836 = vmatprep.subr.bf16.mxu0 %v5516
      %6837 = vmatpush1.bf16.msra.mxu0 %v5515
      %6838 = vmatprep.subr.bf16.mxu0 %v5520
      %6839 = vmatpush1.bf16.msra.mxu0 %v5519
      %6840 = vmatprep.subr.bf16.mxu0 %v5524
      %6841 = vmatpush1.bf16.msra.mxu0 %v5523
      %6842 = vmatprep.subr.bf16.mxu0 %v5528
      %6843 = vmatpush1.bf16.msra.mxu0 %v5527
      %6844 = vmatprep.mubr.bf16.mxu0 %v6184
      %6845 = vmatmul.mubr.bf16.gmra.mrb[0].mxu0 %v6177
      %v6846 = vpop.f32.mrb[0].mxu0
      %v6847 = vadd.f32 %v6806, %v6846
      %v6848 = vpop.f32.mrb[0].mxu0
      %v6849 = vadd.f32 %v6808, %v6848
      %v6850 = vpop.f32.mrb[0].mxu0
      %v6851 = vpop.f32.mrb[0].mxu0
      %6852 = vdwg.mxu0
      %v6853 = vadd.f32 %v6601, %v6765
      %v6854 = vadd.f32 %v6603, %v6767
      %v6855 = vadd.f32 %v6683, %v6847
      %v6856 = vadd.f32 %v6685, %v6849
      %v6857 = vmax.f32 %v6357, %v6853
      %v6858 = vmax.f32 %v6358, %v6854
      %v6859 = vmax.f32 %v6359, %v6855
      %v6860 = vmax.f32 %v6360, %v6856
      %v6861 = vld [vmem:[%s2] sm:$0xf]
      %v6863 = vlaneseq
      %v6864 = vshrl.u32 %v6863, 7
      %v6865 = vsub.s32 0, %v6864
      %v6866 = vrot.slane %v6861, %v6865
      %v6867 = vlaneseq
      %v6868 = vshrl.u32 %v6867, 7
      %v6869 = vsub.s32 1, %v6868
      %v6870 = vrot.slane %v6861, %v6869
      %v6871 = vlaneseq
      %v6872 = vshrl.u32 %v6871, 7
      %v6873 = vsub.s32 2, %v6872
      %v6874 = vrot.slane %v6861, %v6873
      %v6875 = vlaneseq
      %v6876 = vshrl.u32 %v6875, 7
      %v6877 = vsub.s32 3, %v6876
      %v6878 = vrot.slane %v6861, %v6877
      %v6883 = vadd.f32 %v6857, %v6866
      %v6884 = vadd.f32 %v6858, %v6870
      %v6885 = vadd.f32 %v6859, %v6874
      %v6886 = vadd.f32 %v6860, %v6878
      %v6887 = vmax.f32 %v6883, 0.0
      %v6888 = vmax.f32 %v6884, 0.0
      %v6889 = vmax.f32 %v6885, 0.0
      %v6890 = vmax.f32 %v6886, 0.0
      %6891 = vst [vmem:[%s170] sm:$0x7f] %v6887
      %6892 = vst [vmem:[%s170 + $0x8] sm:$0x7f] %v6888
      %6893 = vst [vmem:[%s170 + $0x10] sm:$0x7f] %v6889
      %vm6894 = vcmask 522240
      %6895 = vst.msk [vmem:[%s170 + $0x18] sm:$0x7f] %vm6894, %v6890
      %p6896 = scmp.lt.s32.totalorder %s14, 1
      %s6897 = scalar_select %p6896, %s14, 1
      %s6898 = smul.addr %s6897, 4
      %s6899 = smul.addr %s6898, 8
      %s6900 = scalar_lea.vmem %s3, %s6899
      // Predicated region
      $region33: #{digit_classifier_forward.4} parent=31 // pred_check
        %p6901 = pneg %p100
      $region34: #{digit_classifier_forward.4} parent=31 // pred_check_branch
        %6903 = sbr.rel (%p6901) target = $region36
      $region35: #{digit_classifier_forward.4} parent=31 // pred_region
        _
      $region36: #{digit_classifier_forward.4} parent=31 // pred_fallthru
        _
    $region32: #{digit_classifier_forward.4} parent=5 // pred_fallthru
      _
    %p6904 = scmp.le.s32.totalorder 2, %s9
    // Predicated region
    $region37: #{digit_classifier_forward.4} parent=5 // pred_check
      %p6905 = pneg %p6904
    $region38: #{digit_classifier_forward.4} parent=5 // pred_check_branch
      %6907 = sbr.rel (%p6905) target = $region40
    $region39: #{digit_classifier_forward.4} parent=5 // pred_region
      %s6908 = ssub.s32 %s9, 2
      // Predicated region
      $region41: #{digit_classifier_forward.4} parent=39 // pred_check
        %p6909 = pneg %p106
      $region42: #{digit_classifier_forward.4} parent=39 // pred_check_branch
        %6911 = sbr.rel (%p6909) target = $region44
      $region43: #{digit_classifier_forward.4} parent=39 // pred_region
        %p6912 = scmp.lt.s32.totalorder %s15, 1
        %s6913 = scalar_select %p6912, %s15, 1
        %s6914 = smul.addr %s6913, 4
        %s6915 = smul.addr %s6914, 8
        %s6916 = scalar_lea.vmem %s3, %s6915
      $region44: #{digit_classifier_forward.4} parent=39 // pred_fallthru
        _
    $region40: #{digit_classifier_forward.4} parent=5 // pred_fallthru
      _
  $region6: #{digit_classifier_forward.4} parent=0 // loop_footer
    %s13 = sadd.s32 1, %s9
  $region7: #{digit_classifier_forward.4} parent=0 // loop_footer_branch
    %8 = sbr.rel target = $region3
  $region8: #{digit_classifier_forward.4} parent=0 // loop_exit
    _

</llo_original>
